<compile_context>
chip_gen: v7x
topology: tpu7x:2x2x1
jax: 0.10.0
libtpu: 0.0.40
codegen_flags: <defaults>
</compile_context>

<pallas_src>
import functools
import math

import jax
import jax.numpy as jnp
from jax import lax
from jax.experimental import pallas as pl
from jax.experimental.pallas import tpu as pltpu


# ----------------------------- fused Pallas kernel -----------------------------

def _fused_transformer_kernel(
    src_ref,                    # (BS, F)   padded + batch-folded input (rows b*S are dummy -> cls)
    pe_ref,                     # (BS, D)   positional encoding, tiled over batch
    cls_ref,                    # (1, D)    cls token
    cls_mask_ref,               # (BS, 1)   1.0 at cls rows, else 0.0
    attn_bias_ref,              # (BS, BS)  0 within a sequence / -1e30 across sequences
    sel_ref,                    # (B, BS)   one-hot rows selecting each sequence's cls position
    mlp_w1_ref, mlp_b1_ref,     # (F, 2D), (1, 2D)
    mlp_w2_ref, mlp_b2_ref,     # (2D, D), (1, D)
    wq_ref, bq_ref,             # (L, H, D, dh), (L, H, 1, dh)   (1/sqrt(dh) folded in)
    wk_ref, bk_ref,             # (L, H, D, dh), (L, H, 1, dh)
    wv_ref, bv_ref,             # (L, H, D, dh), (L, H, 1, dh)
    wo_ref, bo_ref,             # (L, H, dh, D), (L, 1, D)
    ln1_g_ref, ln1_b_ref,       # (L, 1, D)
    l1_w_ref, l1_b_ref,         # (L, D, FF), (L, 1, FF)
    l2_w_ref, l2_b_ref,         # (L, FF, D), (L, 1, D)
    ln2_g_ref, ln2_b_ref,       # (L, 1, D)
    fc_w_ref, fc_b_ref,         # (D, C), (1, C)
    o_ref,                      # (B, C)
    *,
    eps,
):
    L, H = wq_ref.shape[0], wq_ref.shape[1]

    def layernorm(y, g, b):
        mu = jnp.mean(y, axis=-1, keepdims=True)
        d = y - mu
        var = jnp.mean(d * d, axis=-1, keepdims=True)
        return (d * lax.rsqrt(var + eps)) * g + b

    # ---- pos_mlp on the whole (BS, F) slab: Linear(F->2D) + ReLU + Linear(2D->D) ----
    h = jnp.dot(src_ref[...], mlp_w1_ref[...],
                preferred_element_type=jnp.float32) + mlp_b1_ref[...]
    h = jnp.maximum(h, 0.0)
    h = jnp.dot(h, mlp_w2_ref[...],
                preferred_element_type=jnp.float32) + mlp_b2_ref[...]          # (BS, D)

    # ---- cls token at position 0 of each sequence + positional encoding (dropout p=0) ----
    x = jnp.where(cls_mask_ref[...] != 0.0, cls_ref[...], h) + pe_ref[...]     # (BS, D)

    attn_bias = attn_bias_ref[...]                                             # (BS, BS)

    # ---- transformer encoder stack (post-LN, relu FFN, dropout=0) ----
    for l in range(L):
        attn = None
        for hh in range(H):
            # Per-head projections via pre-split weight refs (leading-dim indexing, no
            # lane slicing of a live qkv value).  Scale is already folded into wq/bq.
            q = jnp.dot(x, wq_ref[l, hh], preferred_element_type=jnp.float32) + bq_ref[l, hh]
            k = jnp.dot(x, wk_ref[l, hh], preferred_element_type=jnp.float32) + bk_ref[l, hh]
            v = jnp.dot(x, wv_ref[l, hh], preferred_element_type=jnp.float32) + bv_ref[l, hh]

            # q @ k^T over the folded batch; cross-sequence pairs masked by attn_bias.
            s = lax.dot_general(q, k, (((1,), (1,)), ((), ())),
                                preferred_element_type=jnp.float32) + attn_bias  # (BS, BS)
            s = s - jnp.max(s, axis=-1, keepdims=True)
            p = jnp.exp(s)
            inv = pl.reciprocal(jnp.sum(p, axis=-1, keepdims=True), approx=True)
            o = jnp.dot(p, v, preferred_element_type=jnp.float32) * inv          # (BS, dh)

            # Partial output projection per head (replaces head concat + single out matmul).
            part = jnp.dot(o, wo_ref[l, hh], preferred_element_type=jnp.float32)  # (BS, D)
            attn = part if attn is None else attn + part

        attn = attn + bo_ref[l]
        x = layernorm(x + attn, ln1_g_ref[l], ln1_b_ref[l])

        ff = jnp.dot(x, l1_w_ref[l], preferred_element_type=jnp.float32) + l1_b_ref[l]
        ff = jnp.maximum(ff, 0.0)
        ff = jnp.dot(ff, l2_w_ref[l], preferred_element_type=jnp.float32) + l2_b_ref[l]
        x = layernorm(x + ff, ln2_g_ref[l], ln2_b_ref[l])

    # ---- classifier head: gather cls rows with one tiny matmul, single (B, C) store ----
    cls_rows = jnp.dot(sel_ref[...], x, preferred_element_type=jnp.float32)       # (B, D)
    o_ref[...] = (jnp.dot(cls_rows, fc_w_ref[...], preferred_element_type=jnp.float32)
                  + fc_b_ref[...])


# ----------------------------- wrapper -----------------------------

def transformer_forward(kparams, src):
    """src: (B, V, feat) -> logits (B, n_classes).  One fused pallas_call."""
    B, V, _ = src.shape
    S = V + 1
    BS = B * S
    C = kparams["fc_w"].shape[1]

    # Prepend a dummy row per batch (replaced in-kernel by the cls token), then fold the
    # batch: activations are a single (B*S, .) slab everywhere inside the kernel.
    src_pad = jnp.pad(src.astype(jnp.float32), ((0, 0), (1, 0), (0, 0))).reshape(BS, -1)
    pe_tiled = jnp.tile(kparams["pe"][:S], (B, 1))                               # (BS, D)

    # Tiny shape-only helpers (constant-folded by XLA; keeps int div/mod out of the kernel).
    pos = jnp.arange(BS, dtype=jnp.int32) % S
    seq = jnp.arange(BS, dtype=jnp.int32) // S
    cls_mask = (pos == 0).astype(jnp.float32)[:, None]                           # (BS, 1)
    attn_bias = jnp.where(seq[:, None] == seq[None, :],
                          jnp.float32(0.0), jnp.float32(-1e30))                  # (BS, BS)
    sel = (jnp.arange(BS, dtype=jnp.int32)[None, :]
           == (jnp.arange(B, dtype=jnp.int32) * S)[:, None]).astype(jnp.float32)  # (B, BS)

    inputs = (
        src_pad, pe_tiled, kparams["cls_token"], cls_mask, attn_bias, sel,
        kparams["mlp_w1"], kparams["mlp_b1"], kparams["mlp_w2"], kparams["mlp_b2"],
        kparams["wq"], kparams["bq"], kparams["wk"], kparams["bk"],
        kparams["wv"], kparams["bv"], kparams["wo"], kparams["bo"],
        kparams["ln1_g"], kparams["ln1_b"],
        kparams["l1_w"], kparams["l1_b"], kparams["l2_w"], kparams["l2_b"],
        kparams["ln2_g"], kparams["ln2_b"],
        kparams["fc_w"], kparams["fc_b"],
    )

    def full_spec(a):
        zeros = (0,) * a.ndim
        return pl.BlockSpec(a.shape, lambda i, z=zeros: z)

    # TODO(synk): on v7x (2 TensorCores) at larger B, move B onto a parallel grid axis
    # (src BlockSpec (1, S, F), constant weight index_maps) instead of batch-folding.
    return pl.pallas_call(
        functools.partial(_fused_transformer_kernel, eps=1e-5),
        out_shape=jax.ShapeDtypeStruct((B, C), jnp.float32),
        grid=(1,),
        in_specs=[full_spec(a) for a in inputs],
        out_specs=pl.BlockSpec((B, C), lambda i: (0, 0)),
        compiler_params=pltpu.CompilerParams(dimension_semantics=("arbitrary",)),
    )(*inputs)


# ----------------------------- params -----------------------------

def make_pe(max_len, d_model):
    position = jnp.arange(max_len, dtype=jnp.float32)[:, None]
    div_term = jnp.exp(
        jnp.arange(0, d_model, 2, dtype=jnp.float32) * (-math.log(10000.0) / d_model)
    )
    pe = jnp.zeros((max_len, d_model), jnp.float32)
    pe = pe.at[:, 0::2].set(jnp.sin(position * div_term))
    pe = pe.at[:, 1::2].set(jnp.cos(position * div_term))
    return pe                                                                     # (max_len, D)


def init_params(key, feat, d_model, nheads, ffn_dim, nlayers, n_classes, max_len=1024):
    """PyTorch-like stacked parameter layout ((in, out) weights, QKV packed in in_w)."""
    ks = jax.random.split(key, 4 + 4 * nlayers)

    def nrm(k, shape, scale=0.05):
        return (scale * jax.random.normal(k, shape)).astype(jnp.float32)

    params = {
        "mlp_w1": nrm(ks[0], (feat, 2 * d_model)),
        "mlp_b1": jnp.zeros((1, 2 * d_model), jnp.float32),
        "mlp_w2": nrm(ks[1], (2 * d_model, d_model)),
        "mlp_b2": jnp.zeros((1, d_model), jnp.float32),
        "cls_token": nrm(ks[2], (1, d_model), scale=1.0),
        "pe": make_pe(max_len, d_model),
        "fc_w": nrm(ks[3], (d_model, n_classes)),
        "fc_b": jnp.zeros((1, n_classes), jnp.float32),
        "in_w": jnp.stack([nrm(ks[4 + 4 * l + 0], (d_model, 3 * d_model)) for l in range(nlayers)]),
        "in_b": jnp.zeros((nlayers, 1, 3 * d_model), jnp.float32),
        "out_w": jnp.stack([nrm(ks[4 + 4 * l + 1], (d_model, d_model)) for l in range(nlayers)]),
        "out_b": jnp.zeros((nlayers, 1, d_model), jnp.float32),
        "ln1_g": jnp.ones((nlayers, 1, d_model), jnp.float32),
        "ln1_b": jnp.zeros((nlayers, 1, d_model), jnp.float32),
        "l1_w": jnp.stack([nrm(ks[4 + 4 * l + 2], (d_model, ffn_dim)) for l in range(nlayers)]),
        "l1_b": jnp.zeros((nlayers, 1, ffn_dim), jnp.float32),
        "l2_w": jnp.stack([nrm(ks[4 + 4 * l + 3], (ffn_dim, d_model)) for l in range(nlayers)]),
        "l2_b": jnp.zeros((nlayers, 1, d_model), jnp.float32),
        "ln2_g": jnp.ones((nlayers, 1, d_model), jnp.float32),
        "ln2_b": jnp.zeros((nlayers, 1, d_model), jnp.float32),
    }
    return params


def prepare_params(params, *, nheads):
    """One-time (outside jit) conversion to the kernel layout: per-head Q/K/V/O splits and
    1/sqrt(dh) folded into the Q weights/biases."""
    d_model = params["mlp_w2"].shape[1]
    nlayers = params["in_w"].shape[0]
    dh = d_model // nheads
    scale = 1.0 / math.sqrt(dh)

    in_w = params["in_w"]    # (L, D, 3D); columns ordered [Q | K | V], (in, out) layout
    in_b = params["in_b"]    # (L, 1, 3D)

    def w_heads(w):          # (L, D, D) -> (L, H, D, dh)
        return jnp.transpose(w.reshape(nlayers, d_model, nheads, dh), (0, 2, 1, 3))

    def b_heads(b):          # (L, 1, D) -> (L, H, 1, dh)
        return jnp.transpose(b.reshape(nlayers, 1, nheads, dh), (0, 2, 1, 3))

    kp = {
        "pe": params["pe"],
        "cls_token": params["cls_token"],
        "mlp_w1": params["mlp_w1"], "mlp_b1": params["mlp_b1"],
        "mlp_w2": params["mlp_w2"], "mlp_b2": params["mlp_b2"],
        "wq": w_heads(in_w[:, :, 0:d_model]) * scale,
        "bq": b_heads(in_b[:, :, 0:d_model]) * scale,
        "wk": w_heads(in_w[:, :, d_model:2 * d_model]),
        "bk": b_heads(in_b[:, :, d_model:2 * d_model]),
        "wv": w_heads(in_w[:, :, 2 * d_model:3 * d_model]),
        "bv": b_heads(in_b[:, :, 2 * d_model:3 * d_model]),
        "wo": params["out_w"].reshape(nlayers, nheads, dh, d_model),  # rows h*dh:(h+1)*dh = head h
        "bo": params["out_b"],
        "ln1_g": params["ln1_g"], "ln1_b": params["ln1_b"],
        "l1_w": params["l1_w"], "l1_b": params["l1_b"],
        "l2_w": params["l2_w"], "l2_b": params["l2_b"],
        "ln2_g": params["ln2_g"], "ln2_b": params["ln2_b"],
        "fc_w": params["fc_w"], "fc_b": params["fc_b"],
    }
    return jax.tree_util.tree_map(lambda a: jnp.asarray(a, jnp.float32), kp)


# ----------------------------- driver -----------------------------

if __name__ == "__main__":
    # Small shapes: batch=2, vertices=8, feature_dim=3,
    # model_size=32, nheads=4, hidden_dim=64, nlayers=2, n_classes=10
    B, V, FEAT = 2, 8, 3
    D, H, FF, L, C = 32, 4, 64, 2, 10

    key = jax.random.PRNGKey(0)
    pkey, xkey = jax.random.split(key)
    params = init_params(pkey, FEAT, D, H, FF, L, C)
    kparams = prepare_params(params, nheads=H)        # one-time layout prep, outside jit
    src = jax.random.normal(xkey, (B, V, FEAT), dtype=jnp.float32)

    fwd = jax.jit(transformer_forward)
    out = fwd(kparams, src)
    jax.block_until_ready(out)
    assert out.shape == (B, C), out.shape
    assert bool(jnp.all(jnp.isfinite(out)))
    print("KERNEL_OK")
</pallas_src>

<mosaic_0001>
module attributes {stable_mosaic.version = 11 : i64} {
  func.func @_fused_transformer_kernel(%arg0: i32, %arg1: memref<18x3xf32, #tpu.memory_space<vmem>>, %arg2: memref<18x32xf32, #tpu.memory_space<vmem>>, %arg3: memref<1x32xf32, #tpu.memory_space<vmem>>, %arg4: memref<18x1xf32, #tpu.memory_space<vmem>>, %arg5: memref<18x18xf32, #tpu.memory_space<vmem>>, %arg6: memref<2x18xf32, #tpu.memory_space<vmem>>, %arg7: memref<3x64xf32, #tpu.memory_space<vmem>>, %arg8: memref<1x64xf32, #tpu.memory_space<vmem>>, %arg9: memref<64x32xf32, #tpu.memory_space<vmem>>, %arg10: memref<1x32xf32, #tpu.memory_space<vmem>>, %arg11: memref<2x4x32x8xf32, #tpu.memory_space<vmem>>, %arg12: memref<2x4x1x8xf32, #tpu.memory_space<vmem>>, %arg13: memref<2x4x32x8xf32, #tpu.memory_space<vmem>>, %arg14: memref<2x4x1x8xf32, #tpu.memory_space<vmem>>, %arg15: memref<2x4x32x8xf32, #tpu.memory_space<vmem>>, %arg16: memref<2x4x1x8xf32, #tpu.memory_space<vmem>>, %arg17: memref<2x4x8x32xf32, #tpu.memory_space<vmem>>, %arg18: memref<2x1x32xf32, #tpu.memory_space<vmem>>, %arg19: memref<2x1x32xf32, #tpu.memory_space<vmem>>, %arg20: memref<2x1x32xf32, #tpu.memory_space<vmem>>, %arg21: memref<2x32x64xf32, #tpu.memory_space<vmem>>, %arg22: memref<2x1x64xf32, #tpu.memory_space<vmem>>, %arg23: memref<2x64x32xf32, #tpu.memory_space<vmem>>, %arg24: memref<2x1x32xf32, #tpu.memory_space<vmem>>, %arg25: memref<2x1x32xf32, #tpu.memory_space<vmem>>, %arg26: memref<2x1x32xf32, #tpu.memory_space<vmem>>, %arg27: memref<32x10xf32, #tpu.memory_space<vmem>>, %arg28: memref<1x10xf32, #tpu.memory_space<vmem>>, %arg29: memref<2x10xf32, #tpu.memory_space<vmem>>) attributes {dimension_semantics = [#tpu.dimension_semantics<arbitrary>], iteration_bounds = array<i64: 1>, scalar_prefetch = 0 : i64, scratch_operands = 0 : i64, tpu.core_type = #tpu.core_type<tc>, window_params = [{pipeline_mode = #tpu.pipeline_mode<synchronous>, transform_indices = @transform_0, window_bounds = array<i64: 18, 3>}, {pipeline_mode = #tpu.pipeline_mode<synchronous>, transform_indices = @transform_1, window_bounds = array<i64: 18, 32>}, {pipeline_mode = #tpu.pipeline_mode<synchronous>, transform_indices = @transform_2, window_bounds = array<i64: 1, 32>}, {pipeline_mode = #tpu.pipeline_mode<synchronous>, transform_indices = @transform_3, window_bounds = array<i64: 18, 1>}, {pipeline_mode = #tpu.pipeline_mode<synchronous>, transform_indices = @transform_4, window_bounds = array<i64: 18, 18>}, {pipeline_mode = #tpu.pipeline_mode<synchronous>, transform_indices = @transform_5, window_bounds = array<i64: 2, 18>}, {pipeline_mode = #tpu.pipeline_mode<synchronous>, transform_indices = @transform_6, window_bounds = array<i64: 3, 64>}, {pipeline_mode = #tpu.pipeline_mode<synchronous>, transform_indices = @transform_7, window_bounds = array<i64: 1, 64>}, {pipeline_mode = #tpu.pipeline_mode<synchronous>, transform_indices = @transform_8, window_bounds = array<i64: 64, 32>}, {pipeline_mode = #tpu.pipeline_mode<synchronous>, transform_indices = @transform_9, window_bounds = array<i64: 1, 32>}, {pipeline_mode = #tpu.pipeline_mode<synchronous>, transform_indices = @transform_10, window_bounds = array<i64: 2, 4, 32, 8>}, {pipeline_mode = #tpu.pipeline_mode<synchronous>, transform_indices = @transform_11, window_bounds = array<i64: 2, 4, 1, 8>}, {pipeline_mode = #tpu.pipeline_mode<synchronous>, transform_indices = @transform_12, window_bounds = array<i64: 2, 4, 32, 8>}, {pipeline_mode = #tpu.pipeline_mode<synchronous>, transform_indices = @transform_13, window_bounds = array<i64: 2, 4, 1, 8>}, {pipeline_mode = #tpu.pipeline_mode<synchronous>, transform_indices = @transform_14, window_bounds = array<i64: 2, 4, 32, 8>}, {pipeline_mode = #tpu.pipeline_mode<synchronous>, transform_indices = @transform_15, window_bounds = array<i64: 2, 4, 1, 8>}, {pipeline_mode = #tpu.pipeline_mode<synchronous>, transform_indices = @transform_16, window_bounds = array<i64: 2, 4, 8, 32>}, {pipeline_mode = #tpu.pipeline_mode<synchronous>, transform_indices = @transform_17, window_bounds = array<i64: 2, 1, 32>}, {pipeline_mode = #tpu.pipeline_mode<synchronous>, transform_indices = @transform_18, window_bounds = array<i64: 2, 1, 32>}, {pipeline_mode = #tpu.pipeline_mode<synchronous>, transform_indices = @transform_19, window_bounds = array<i64: 2, 1, 32>}, {pipeline_mode = #tpu.pipeline_mode<synchronous>, transform_indices = @transform_20, window_bounds = array<i64: 2, 32, 64>}, {pipeline_mode = #tpu.pipeline_mode<synchronous>, transform_indices = @transform_21, window_bounds = array<i64: 2, 1, 64>}, {pipeline_mode = #tpu.pipeline_mode<synchronous>, transform_indices = @transform_22, window_bounds = array<i64: 2, 64, 32>}, {pipeline_mode = #tpu.pipeline_mode<synchronous>, transform_indices = @transform_23, window_bounds = array<i64: 2, 1, 32>}, {pipeline_mode = #tpu.pipeline_mode<synchronous>, transform_indices = @transform_24, window_bounds = array<i64: 2, 1, 32>}, {pipeline_mode = #tpu.pipeline_mode<synchronous>, transform_indices = @transform_25, window_bounds = array<i64: 2, 1, 32>}, {pipeline_mode = #tpu.pipeline_mode<synchronous>, transform_indices = @transform_26, window_bounds = array<i64: 32, 10>}, {pipeline_mode = #tpu.pipeline_mode<synchronous>, transform_indices = @transform_27, window_bounds = array<i64: 1, 10>}, {pipeline_mode = #tpu.pipeline_mode<synchronous>, transform_indices = @transform_28, window_bounds = array<i64: 2, 10>}]} {
    %c0 = arith.constant 0 : index
    %c0_0 = arith.constant 0 : index
    %0 = vector.load %arg1[%c0, %c0_0] : memref<18x3xf32, #tpu.memory_space<vmem>>, vector<18x3xf32>
    %c0_1 = arith.constant 0 : index
    %c0_2 = arith.constant 0 : index
    %1 = vector.load %arg7[%c0_1, %c0_2] : memref<3x64xf32, #tpu.memory_space<vmem>>, vector<3x64xf32>
    %cst = arith.constant dense<0.000000e+00> : vector<18x64xf32>
    %2 = tpu.matmul %0, %1, %cst {dimension_numbers = #tpu.dot_dimension_numbers<[1], [0], [0], [1], [0, 0, 1, 1], [], []>} : vector<18x3xf32>, vector<3x64xf32>, vector<18x64xf32> -> vector<18x64xf32>
    %c0_3 = arith.constant 0 : index
    %c0_4 = arith.constant 0 : index
    %3 = vector.load %arg8[%c0_3, %c0_4] : memref<1x64xf32, #tpu.memory_space<vmem>>, vector<1x64xf32>
    %4 = vector.broadcast %3 : vector<1x64xf32> to vector<18x64xf32>
    %5 = arith.addf %2, %4 : vector<18x64xf32>
    %cst_5 = arith.constant 0.000000e+00 : f32
    %6 = vector.broadcast %cst_5 : f32 to vector<18x64xf32>
    %7 = arith.maximumf %5, %6 : vector<18x64xf32>
    %c0_6 = arith.constant 0 : index
    %c0_7 = arith.constant 0 : index
    %8 = vector.load %arg9[%c0_6, %c0_7] : memref<64x32xf32, #tpu.memory_space<vmem>>, vector<64x32xf32>
    %cst_8 = arith.constant dense<0.000000e+00> : vector<18x32xf32>
    %9 = tpu.matmul %7, %8, %cst_8 {dimension_numbers = #tpu.dot_dimension_numbers<[1], [0], [0], [1], [0, 0, 1, 1], [], []>} : vector<18x64xf32>, vector<64x32xf32>, vector<18x32xf32> -> vector<18x32xf32>
    %c0_9 = arith.constant 0 : index
    %c0_10 = arith.constant 0 : index
    %10 = vector.load %arg10[%c0_9, %c0_10] : memref<1x32xf32, #tpu.memory_space<vmem>>, vector<1x32xf32>
    %11 = vector.broadcast %10 : vector<1x32xf32> to vector<18x32xf32>
    %12 = arith.addf %9, %11 : vector<18x32xf32>
    %c0_11 = arith.constant 0 : index
    %c0_12 = arith.constant 0 : index
    %13 = vector.load %arg4[%c0_11, %c0_12] : memref<18x1xf32, #tpu.memory_space<vmem>>, vector<18x1xf32>
    %cst_13 = arith.constant 0.000000e+00 : f32
    %14 = vector.broadcast %cst_13 : f32 to vector<18x1xf32>
    %15 = arith.cmpf one, %13, %14 : vector<18x1xf32>
    %c0_14 = arith.constant 0 : index
    %c0_15 = arith.constant 0 : index
    %16 = vector.load %arg3[%c0_14, %c0_15] : memref<1x32xf32, #tpu.memory_space<vmem>>, vector<1x32xf32>
    %17 = vector.shape_cast %15 : vector<18x1xi1> to vector<18x1xi1>
    %18 = vector.broadcast %17 : vector<18x1xi1> to vector<18x32xi1>
    %19 = vector.shape_cast %16 : vector<1x32xf32> to vector<1x32xf32>
    %20 = vector.broadcast %19 : vector<1x32xf32> to vector<18x32xf32>
    %21 = arith.select %18, %20, %12 : vector<18x32xi1>, vector<18x32xf32>
    %c0_16 = arith.constant 0 : index
    %c0_17 = arith.constant 0 : index
    %22 = vector.load %arg2[%c0_16, %c0_17] : memref<18x32xf32, #tpu.memory_space<vmem>>, vector<18x32xf32>
    %23 = arith.addf %21, %22 : vector<18x32xf32>
    %c0_18 = arith.constant 0 : index
    %c0_19 = arith.constant 0 : index
    %24 = vector.load %arg5[%c0_18, %c0_19] : memref<18x18xf32, #tpu.memory_space<vmem>>, vector<18x18xf32>
    %c0_20 = arith.constant 0 : index
    %c0_21 = arith.constant 0 : index
    %c0_22 = arith.constant 0 : index
    %c0_23 = arith.constant 0 : index
    %25 = vector.load %arg11[%c0_20, %c0_21, %c0_22, %c0_23] : memref<2x4x32x8xf32, #tpu.memory_space<vmem>>, vector<1x1x32x8xf32>
    %26 = vector.shape_cast %25 : vector<1x1x32x8xf32> to vector<32x8xf32>
    %cst_24 = arith.constant dense<0.000000e+00> : vector<18x8xf32>
    %27 = tpu.matmul %23, %26, %cst_24 {dimension_numbers = #tpu.dot_dimension_numbers<[1], [0], [0], [1], [0, 0, 1, 1], [], []>} : vector<18x32xf32>, vector<32x8xf32>, vector<18x8xf32> -> vector<18x8xf32>
    %c0_25 = arith.constant 0 : index
    %c0_26 = arith.constant 0 : index
    %c0_27 = arith.constant 0 : index
    %c0_28 = arith.constant 0 : index
    %28 = vector.load %arg12[%c0_25, %c0_26, %c0_27, %c0_28] : memref<2x4x1x8xf32, #tpu.memory_space<vmem>>, vector<1x1x1x8xf32>
    %29 = vector.shape_cast %28 : vector<1x1x1x8xf32> to vector<1x8xf32>
    %30 = vector.broadcast %29 : vector<1x8xf32> to vector<18x8xf32>
    %31 = arith.addf %27, %30 : vector<18x8xf32>
    %c0_29 = arith.constant 0 : index
    %c0_30 = arith.constant 0 : index
    %c0_31 = arith.constant 0 : index
    %c0_32 = arith.constant 0 : index
    %32 = vector.load %arg13[%c0_29, %c0_30, %c0_31, %c0_32] : memref<2x4x32x8xf32, #tpu.memory_space<vmem>>, vector<1x1x32x8xf32>
    %33 = vector.shape_cast %32 : vector<1x1x32x8xf32> to vector<32x8xf32>
    %cst_33 = arith.constant dense<0.000000e+00> : vector<18x8xf32>
    %34 = tpu.matmul %23, %33, %cst_33 {dimension_numbers = #tpu.dot_dimension_numbers<[1], [0], [0], [1], [0, 0, 1, 1], [], []>} : vector<18x32xf32>, vector<32x8xf32>, vector<18x8xf32> -> vector<18x8xf32>
    %c0_34 = arith.constant 0 : index
    %c0_35 = arith.constant 0 : index
    %c0_36 = arith.constant 0 : index
    %c0_37 = arith.constant 0 : index
    %35 = vector.load %arg14[%c0_34, %c0_35, %c0_36, %c0_37] : memref<2x4x1x8xf32, #tpu.memory_space<vmem>>, vector<1x1x1x8xf32>
    %36 = vector.shape_cast %35 : vector<1x1x1x8xf32> to vector<1x8xf32>
    %37 = vector.broadcast %36 : vector<1x8xf32> to vector<18x8xf32>
    %38 = arith.addf %34, %37 : vector<18x8xf32>
    %c0_38 = arith.constant 0 : index
    %c0_39 = arith.constant 0 : index
    %c0_40 = arith.constant 0 : index
    %c0_41 = arith.constant 0 : index
    %39 = vector.load %arg15[%c0_38, %c0_39, %c0_40, %c0_41] : memref<2x4x32x8xf32, #tpu.memory_space<vmem>>, vector<1x1x32x8xf32>
    %40 = vector.shape_cast %39 : vector<1x1x32x8xf32> to vector<32x8xf32>
    %cst_42 = arith.constant dense<0.000000e+00> : vector<18x8xf32>
    %41 = tpu.matmul %23, %40, %cst_42 {dimension_numbers = #tpu.dot_dimension_numbers<[1], [0], [0], [1], [0, 0, 1, 1], [], []>} : vector<18x32xf32>, vector<32x8xf32>, vector<18x8xf32> -> vector<18x8xf32>
    %c0_43 = arith.constant 0 : index
    %c0_44 = arith.constant 0 : index
    %c0_45 = arith.constant 0 : index
    %c0_46 = arith.constant 0 : index
    %42 = vector.load %arg16[%c0_43, %c0_44, %c0_45, %c0_46] : memref<2x4x1x8xf32, #tpu.memory_space<vmem>>, vector<1x1x1x8xf32>
    %43 = vector.shape_cast %42 : vector<1x1x1x8xf32> to vector<1x8xf32>
    %44 = vector.broadcast %43 : vector<1x8xf32> to vector<18x8xf32>
    %45 = arith.addf %41, %44 : vector<18x8xf32>
    %cst_47 = arith.constant dense<0.000000e+00> : vector<18x18xf32>
    %46 = tpu.matmul %31, %38, %cst_47 {dimension_numbers = #tpu.dot_dimension_numbers<[1], [1], [0], [0], [0, 0, 1, 0], [], []>} : vector<18x8xf32>, vector<18x8xf32>, vector<18x18xf32> -> vector<18x18xf32>
    %47 = arith.addf %46, %24 : vector<18x18xf32>
    %cst_48 = arith.constant dense<0xFF800000> : vector<18xf32>
    %48 = vector.multi_reduction <maximumf>, %47, %cst_48 [1] : vector<18x18xf32> to vector<18xf32>
    %49 = vector.shape_cast %48 : vector<18xf32> to vector<18x1xf32>
    %50 = vector.broadcast %49 : vector<18x1xf32> to vector<18x18xf32>
    %51 = arith.subf %47, %50 : vector<18x18xf32>
    %52 = math.exp %51 : vector<18x18xf32>
    %cst_49 = arith.constant dense<0.000000e+00> : vector<18xf32>
    %53 = vector.multi_reduction <add>, %52, %cst_49 [1] : vector<18x18xf32> to vector<18xf32>
    %54 = vector.shape_cast %53 : vector<18xf32> to vector<18x1xf32>
    %55 = tpu.reciprocal %54 {approx = true} : vector<18x1xf32> -> vector<18x1xf32>
    %cst_50 = arith.constant dense<0.000000e+00> : vector<18x8xf32>
    %56 = tpu.matmul %52, %45, %cst_50 {dimension_numbers = #tpu.dot_dimension_numbers<[1], [0], [0], [1], [0, 0, 1, 1], [], []>} : vector<18x18xf32>, vector<18x8xf32>, vector<18x8xf32> -> vector<18x8xf32>
    %57 = vector.broadcast %55 : vector<18x1xf32> to vector<18x8xf32>
    %58 = arith.mulf %56, %57 : vector<18x8xf32>
    %c0_51 = arith.constant 0 : index
    %c0_52 = arith.constant 0 : index
    %c0_53 = arith.constant 0 : index
    %c0_54 = arith.constant 0 : index
    %59 = vector.load %arg17[%c0_51, %c0_52, %c0_53, %c0_54] : memref<2x4x8x32xf32, #tpu.memory_space<vmem>>, vector<1x1x8x32xf32>
    %60 = vector.shape_cast %59 : vector<1x1x8x32xf32> to vector<8x32xf32>
    %cst_55 = arith.constant dense<0.000000e+00> : vector<18x32xf32>
    %61 = tpu.matmul %58, %60, %cst_55 {dimension_numbers = #tpu.dot_dimension_numbers<[1], [0], [0], [1], [0, 0, 1, 1], [], []>} : vector<18x8xf32>, vector<8x32xf32>, vector<18x32xf32> -> vector<18x32xf32>
    %c0_56 = arith.constant 0 : index
    %c1 = arith.constant 1 : index
    %c0_57 = arith.constant 0 : index
    %c0_58 = arith.constant 0 : index
    %62 = vector.load %arg11[%c0_56, %c1, %c0_57, %c0_58] : memref<2x4x32x8xf32, #tpu.memory_space<vmem>>, vector<1x1x32x8xf32>
    %63 = vector.shape_cast %62 : vector<1x1x32x8xf32> to vector<32x8xf32>
    %cst_59 = arith.constant dense<0.000000e+00> : vector<18x8xf32>
    %64 = tpu.matmul %23, %63, %cst_59 {dimension_numbers = #tpu.dot_dimension_numbers<[1], [0], [0], [1], [0, 0, 1, 1], [], []>} : vector<18x32xf32>, vector<32x8xf32>, vector<18x8xf32> -> vector<18x8xf32>
    %c0_60 = arith.constant 0 : index
    %c1_61 = arith.constant 1 : index
    %c0_62 = arith.constant 0 : index
    %c0_63 = arith.constant 0 : index
    %65 = vector.load %arg12[%c0_60, %c1_61, %c0_62, %c0_63] : memref<2x4x1x8xf32, #tpu.memory_space<vmem>>, vector<1x1x1x8xf32>
    %66 = vector.shape_cast %65 : vector<1x1x1x8xf32> to vector<1x8xf32>
    %67 = vector.broadcast %66 : vector<1x8xf32> to vector<18x8xf32>
    %68 = arith.addf %64, %67 : vector<18x8xf32>
    %c0_64 = arith.constant 0 : index
    %c1_65 = arith.constant 1 : index
    %c0_66 = arith.constant 0 : index
    %c0_67 = arith.constant 0 : index
    %69 = vector.load %arg13[%c0_64, %c1_65, %c0_66, %c0_67] : memref<2x4x32x8xf32, #tpu.memory_space<vmem>>, vector<1x1x32x8xf32>
    %70 = vector.shape_cast %69 : vector<1x1x32x8xf32> to vector<32x8xf32>
    %cst_68 = arith.constant dense<0.000000e+00> : vector<18x8xf32>
    %71 = tpu.matmul %23, %70, %cst_68 {dimension_numbers = #tpu.dot_dimension_numbers<[1], [0], [0], [1], [0, 0, 1, 1], [], []>} : vector<18x32xf32>, vector<32x8xf32>, vector<18x8xf32> -> vector<18x8xf32>
    %c0_69 = arith.constant 0 : index
    %c1_70 = arith.constant 1 : index
    %c0_71 = arith.constant 0 : index
    %c0_72 = arith.constant 0 : index
    %72 = vector.load %arg14[%c0_69, %c1_70, %c0_71, %c0_72] : memref<2x4x1x8xf32, #tpu.memory_space<vmem>>, vector<1x1x1x8xf32>
    %73 = vector.shape_cast %72 : vector<1x1x1x8xf32> to vector<1x8xf32>
    %74 = vector.broadcast %73 : vector<1x8xf32> to vector<18x8xf32>
    %75 = arith.addf %71, %74 : vector<18x8xf32>
    %c0_73 = arith.constant 0 : index
    %c1_74 = arith.constant 1 : index
    %c0_75 = arith.constant 0 : index
    %c0_76 = arith.constant 0 : index
    %76 = vector.load %arg15[%c0_73, %c1_74, %c0_75, %c0_76] : memref<2x4x32x8xf32, #tpu.memory_space<vmem>>, vector<1x1x32x8xf32>
    %77 = vector.shape_cast %76 : vector<1x1x32x8xf32> to vector<32x8xf32>
    %cst_77 = arith.constant dense<0.000000e+00> : vector<18x8xf32>
    %78 = tpu.matmul %23, %77, %cst_77 {dimension_numbers = #tpu.dot_dimension_numbers<[1], [0], [0], [1], [0, 0, 1, 1], [], []>} : vector<18x32xf32>, vector<32x8xf32>, vector<18x8xf32> -> vector<18x8xf32>
    %c0_78 = arith.constant 0 : index
    %c1_79 = arith.constant 1 : index
    %c0_80 = arith.constant 0 : index
    %c0_81 = arith.constant 0 : index
    %79 = vector.load %arg16[%c0_78, %c1_79, %c0_80, %c0_81] : memref<2x4x1x8xf32, #tpu.memory_space<vmem>>, vector<1x1x1x8xf32>
    %80 = vector.shape_cast %79 : vector<1x1x1x8xf32> to vector<1x8xf32>
    %81 = vector.broadcast %80 : vector<1x8xf32> to vector<18x8xf32>
    %82 = arith.addf %78, %81 : vector<18x8xf32>
    %cst_82 = arith.constant dense<0.000000e+00> : vector<18x18xf32>
    %83 = tpu.matmul %68, %75, %cst_82 {dimension_numbers = #tpu.dot_dimension_numbers<[1], [1], [0], [0], [0, 0, 1, 0], [], []>} : vector<18x8xf32>, vector<18x8xf32>, vector<18x18xf32> -> vector<18x18xf32>
    %84 = arith.addf %83, %24 : vector<18x18xf32>
    %cst_83 = arith.constant dense<0xFF800000> : vector<18xf32>
    %85 = vector.multi_reduction <maximumf>, %84, %cst_83 [1] : vector<18x18xf32> to vector<18xf32>
    %86 = vector.shape_cast %85 : vector<18xf32> to vector<18x1xf32>
    %87 = vector.broadcast %86 : vector<18x1xf32> to vector<18x18xf32>
    %88 = arith.subf %84, %87 : vector<18x18xf32>
    %89 = math.exp %88 : vector<18x18xf32>
    %cst_84 = arith.constant dense<0.000000e+00> : vector<18xf32>
    %90 = vector.multi_reduction <add>, %89, %cst_84 [1] : vector<18x18xf32> to vector<18xf32>
    %91 = vector.shape_cast %90 : vector<18xf32> to vector<18x1xf32>
    %92 = tpu.reciprocal %91 {approx = true} : vector<18x1xf32> -> vector<18x1xf32>
    %cst_85 = arith.constant dense<0.000000e+00> : vector<18x8xf32>
    %93 = tpu.matmul %89, %82, %cst_85 {dimension_numbers = #tpu.dot_dimension_numbers<[1], [0], [0], [1], [0, 0, 1, 1], [], []>} : vector<18x18xf32>, vector<18x8xf32>, vector<18x8xf32> -> vector<18x8xf32>
    %94 = vector.broadcast %92 : vector<18x1xf32> to vector<18x8xf32>
    %95 = arith.mulf %93, %94 : vector<18x8xf32>
    %c0_86 = arith.constant 0 : index
    %c1_87 = arith.constant 1 : index
    %c0_88 = arith.constant 0 : index
    %c0_89 = arith.constant 0 : index
    %96 = vector.load %arg17[%c0_86, %c1_87, %c0_88, %c0_89] : memref<2x4x8x32xf32, #tpu.memory_space<vmem>>, vector<1x1x8x32xf32>
    %97 = vector.shape_cast %96 : vector<1x1x8x32xf32> to vector<8x32xf32>
    %cst_90 = arith.constant dense<0.000000e+00> : vector<18x32xf32>
    %98 = tpu.matmul %95, %97, %cst_90 {dimension_numbers = #tpu.dot_dimension_numbers<[1], [0], [0], [1], [0, 0, 1, 1], [], []>} : vector<18x8xf32>, vector<8x32xf32>, vector<18x32xf32> -> vector<18x32xf32>
    %99 = arith.addf %61, %98 : vector<18x32xf32>
    %c0_91 = arith.constant 0 : index
    %c2 = arith.constant 2 : index
    %c0_92 = arith.constant 0 : index
    %c0_93 = arith.constant 0 : index
    %100 = vector.load %arg11[%c0_91, %c2, %c0_92, %c0_93] : memref<2x4x32x8xf32, #tpu.memory_space<vmem>>, vector<1x1x32x8xf32>
    %101 = vector.shape_cast %100 : vector<1x1x32x8xf32> to vector<32x8xf32>
    %cst_94 = arith.constant dense<0.000000e+00> : vector<18x8xf32>
    %102 = tpu.matmul %23, %101, %cst_94 {dimension_numbers = #tpu.dot_dimension_numbers<[1], [0], [0], [1], [0, 0, 1, 1], [], []>} : vector<18x32xf32>, vector<32x8xf32>, vector<18x8xf32> -> vector<18x8xf32>
    %c0_95 = arith.constant 0 : index
    %c2_96 = arith.constant 2 : index
    %c0_97 = arith.constant 0 : index
    %c0_98 = arith.constant 0 : index
    %103 = vector.load %arg12[%c0_95, %c2_96, %c0_97, %c0_98] : memref<2x4x1x8xf32, #tpu.memory_space<vmem>>, vector<1x1x1x8xf32>
    %104 = vector.shape_cast %103 : vector<1x1x1x8xf32> to vector<1x8xf32>
    %105 = vector.broadcast %104 : vector<1x8xf32> to vector<18x8xf32>
    %106 = arith.addf %102, %105 : vector<18x8xf32>
    %c0_99 = arith.constant 0 : index
    %c2_100 = arith.constant 2 : index
    %c0_101 = arith.constant 0 : index
    %c0_102 = arith.constant 0 : index
    %107 = vector.load %arg13[%c0_99, %c2_100, %c0_101, %c0_102] : memref<2x4x32x8xf32, #tpu.memory_space<vmem>>, vector<1x1x32x8xf32>
    %108 = vector.shape_cast %107 : vector<1x1x32x8xf32> to vector<32x8xf32>
    %cst_103 = arith.constant dense<0.000000e+00> : vector<18x8xf32>
    %109 = tpu.matmul %23, %108, %cst_103 {dimension_numbers = #tpu.dot_dimension_numbers<[1], [0], [0], [1], [0, 0, 1, 1], [], []>} : vector<18x32xf32>, vector<32x8xf32>, vector<18x8xf32> -> vector<18x8xf32>
    %c0_104 = arith.constant 0 : index
    %c2_105 = arith.constant 2 : index
    %c0_106 = arith.constant 0 : index
    %c0_107 = arith.constant 0 : index
    %110 = vector.load %arg14[%c0_104, %c2_105, %c0_106, %c0_107] : memref<2x4x1x8xf32, #tpu.memory_space<vmem>>, vector<1x1x1x8xf32>
    %111 = vector.shape_cast %110 : vector<1x1x1x8xf32> to vector<1x8xf32>
    %112 = vector.broadcast %111 : vector<1x8xf32> to vector<18x8xf32>
    %113 = arith.addf %109, %112 : vector<18x8xf32>
    %c0_108 = arith.constant 0 : index
    %c2_109 = arith.constant 2 : index
    %c0_110 = arith.constant 0 : index
    %c0_111 = arith.constant 0 : index
    %114 = vector.load %arg15[%c0_108, %c2_109, %c0_110, %c0_111] : memref<2x4x32x8xf32, #tpu.memory_space<vmem>>, vector<1x1x32x8xf32>
    %115 = vector.shape_cast %114 : vector<1x1x32x8xf32> to vector<32x8xf32>
    %cst_112 = arith.constant dense<0.000000e+00> : vector<18x8xf32>
    %116 = tpu.matmul %23, %115, %cst_112 {dimension_numbers = #tpu.dot_dimension_numbers<[1], [0], [0], [1], [0, 0, 1, 1], [], []>} : vector<18x32xf32>, vector<32x8xf32>, vector<18x8xf32> -> vector<18x8xf32>
    %c0_113 = arith.constant 0 : index
    %c2_114 = arith.constant 2 : index
    %c0_115 = arith.constant 0 : index
    %c0_116 = arith.constant 0 : index
    %117 = vector.load %arg16[%c0_113, %c2_114, %c0_115, %c0_116] : memref<2x4x1x8xf32, #tpu.memory_space<vmem>>, vector<1x1x1x8xf32>
    %118 = vector.shape_cast %117 : vector<1x1x1x8xf32> to vector<1x8xf32>
    %119 = vector.broadcast %118 : vector<1x8xf32> to vector<18x8xf32>
    %120 = arith.addf %116, %119 : vector<18x8xf32>
    %cst_117 = arith.constant dense<0.000000e+00> : vector<18x18xf32>
    %121 = tpu.matmul %106, %113, %cst_117 {dimension_numbers = #tpu.dot_dimension_numbers<[1], [1], [0], [0], [0, 0, 1, 0], [], []>} : vector<18x8xf32>, vector<18x8xf32>, vector<18x18xf32> -> vector<18x18xf32>
    %122 = arith.addf %121, %24 : vector<18x18xf32>
    %cst_118 = arith.constant dense<0xFF800000> : vector<18xf32>
    %123 = vector.multi_reduction <maximumf>, %122, %cst_118 [1] : vector<18x18xf32> to vector<18xf32>
    %124 = vector.shape_cast %123 : vector<18xf32> to vector<18x1xf32>
    %125 = vector.broadcast %124 : vector<18x1xf32> to vector<18x18xf32>
    %126 = arith.subf %122, %125 : vector<18x18xf32>
    %127 = math.exp %126 : vector<18x18xf32>
    %cst_119 = arith.constant dense<0.000000e+00> : vector<18xf32>
    %128 = vector.multi_reduction <add>, %127, %cst_119 [1] : vector<18x18xf32> to vector<18xf32>
    %129 = vector.shape_cast %128 : vector<18xf32> to vector<18x1xf32>
    %130 = tpu.reciprocal %129 {approx = true} : vector<18x1xf32> -> vector<18x1xf32>
    %cst_120 = arith.constant dense<0.000000e+00> : vector<18x8xf32>
    %131 = tpu.matmul %127, %120, %cst_120 {dimension_numbers = #tpu.dot_dimension_numbers<[1], [0], [0], [1], [0, 0, 1, 1], [], []>} : vector<18x18xf32>, vector<18x8xf32>, vector<18x8xf32> -> vector<18x8xf32>
    %132 = vector.broadcast %130 : vector<18x1xf32> to vector<18x8xf32>
    %133 = arith.mulf %131, %132 : vector<18x8xf32>
    %c0_121 = arith.constant 0 : index
    %c2_122 = arith.constant 2 : index
    %c0_123 = arith.constant 0 : index
    %c0_124 = arith.constant 0 : index
    %134 = vector.load %arg17[%c0_121, %c2_122, %c0_123, %c0_124] : memref<2x4x8x32xf32, #tpu.memory_space<vmem>>, vector<1x1x8x32xf32>
    %135 = vector.shape_cast %134 : vector<1x1x8x32xf32> to vector<8x32xf32>
    %cst_125 = arith.constant dense<0.000000e+00> : vector<18x32xf32>
    %136 = tpu.matmul %133, %135, %cst_125 {dimension_numbers = #tpu.dot_dimension_numbers<[1], [0], [0], [1], [0, 0, 1, 1], [], []>} : vector<18x8xf32>, vector<8x32xf32>, vector<18x32xf32> -> vector<18x32xf32>
    %137 = arith.addf %99, %136 : vector<18x32xf32>
    %c0_126 = arith.constant 0 : index
    %c3 = arith.constant 3 : index
    %c0_127 = arith.constant 0 : index
    %c0_128 = arith.constant 0 : index
    %138 = vector.load %arg11[%c0_126, %c3, %c0_127, %c0_128] : memref<2x4x32x8xf32, #tpu.memory_space<vmem>>, vector<1x1x32x8xf32>
    %139 = vector.shape_cast %138 : vector<1x1x32x8xf32> to vector<32x8xf32>
    %cst_129 = arith.constant dense<0.000000e+00> : vector<18x8xf32>
    %140 = tpu.matmul %23, %139, %cst_129 {dimension_numbers = #tpu.dot_dimension_numbers<[1], [0], [0], [1], [0, 0, 1, 1], [], []>} : vector<18x32xf32>, vector<32x8xf32>, vector<18x8xf32> -> vector<18x8xf32>
    %c0_130 = arith.constant 0 : index
    %c3_131 = arith.constant 3 : index
    %c0_132 = arith.constant 0 : index
    %c0_133 = arith.constant 0 : index
    %141 = vector.load %arg12[%c0_130, %c3_131, %c0_132, %c0_133] : memref<2x4x1x8xf32, #tpu.memory_space<vmem>>, vector<1x1x1x8xf32>
    %142 = vector.shape_cast %141 : vector<1x1x1x8xf32> to vector<1x8xf32>
    %143 = vector.broadcast %142 : vector<1x8xf32> to vector<18x8xf32>
    %144 = arith.addf %140, %143 : vector<18x8xf32>
    %c0_134 = arith.constant 0 : index
    %c3_135 = arith.constant 3 : index
    %c0_136 = arith.constant 0 : index
    %c0_137 = arith.constant 0 : index
    %145 = vector.load %arg13[%c0_134, %c3_135, %c0_136, %c0_137] : memref<2x4x32x8xf32, #tpu.memory_space<vmem>>, vector<1x1x32x8xf32>
    %146 = vector.shape_cast %145 : vector<1x1x32x8xf32> to vector<32x8xf32>
    %cst_138 = arith.constant dense<0.000000e+00> : vector<18x8xf32>
    %147 = tpu.matmul %23, %146, %cst_138 {dimension_numbers = #tpu.dot_dimension_numbers<[1], [0], [0], [1], [0, 0, 1, 1], [], []>} : vector<18x32xf32>, vector<32x8xf32>, vector<18x8xf32> -> vector<18x8xf32>
    %c0_139 = arith.constant 0 : index
    %c3_140 = arith.constant 3 : index
    %c0_141 = arith.constant 0 : index
    %c0_142 = arith.constant 0 : index
    %148 = vector.load %arg14[%c0_139, %c3_140, %c0_141, %c0_142] : memref<2x4x1x8xf32, #tpu.memory_space<vmem>>, vector<1x1x1x8xf32>
    %149 = vector.shape_cast %148 : vector<1x1x1x8xf32> to vector<1x8xf32>
    %150 = vector.broadcast %149 : vector<1x8xf32> to vector<18x8xf32>
    %151 = arith.addf %147, %150 : vector<18x8xf32>
    %c0_143 = arith.constant 0 : index
    %c3_144 = arith.constant 3 : index
    %c0_145 = arith.constant 0 : index
    %c0_146 = arith.constant 0 : index
    %152 = vector.load %arg15[%c0_143, %c3_144, %c0_145, %c0_146] : memref<2x4x32x8xf32, #tpu.memory_space<vmem>>, vector<1x1x32x8xf32>
    %153 = vector.shape_cast %152 : vector<1x1x32x8xf32> to vector<32x8xf32>
    %cst_147 = arith.constant dense<0.000000e+00> : vector<18x8xf32>
    %154 = tpu.matmul %23, %153, %cst_147 {dimension_numbers = #tpu.dot_dimension_numbers<[1], [0], [0], [1], [0, 0, 1, 1], [], []>} : vector<18x32xf32>, vector<32x8xf32>, vector<18x8xf32> -> vector<18x8xf32>
    %c0_148 = arith.constant 0 : index
    %c3_149 = arith.constant 3 : index
    %c0_150 = arith.constant 0 : index
    %c0_151 = arith.constant 0 : index
    %155 = vector.load %arg16[%c0_148, %c3_149, %c0_150, %c0_151] : memref<2x4x1x8xf32, #tpu.memory_space<vmem>>, vector<1x1x1x8xf32>
    %156 = vector.shape_cast %155 : vector<1x1x1x8xf32> to vector<1x8xf32>
    %157 = vector.broadcast %156 : vector<1x8xf32> to vector<18x8xf32>
    %158 = arith.addf %154, %157 : vector<18x8xf32>
    %cst_152 = arith.constant dense<0.000000e+00> : vector<18x18xf32>
    %159 = tpu.matmul %144, %151, %cst_152 {dimension_numbers = #tpu.dot_dimension_numbers<[1], [1], [0], [0], [0, 0, 1, 0], [], []>} : vector<18x8xf32>, vector<18x8xf32>, vector<18x18xf32> -> vector<18x18xf32>
    %160 = arith.addf %159, %24 : vector<18x18xf32>
    %cst_153 = arith.constant dense<0xFF800000> : vector<18xf32>
    %161 = vector.multi_reduction <maximumf>, %160, %cst_153 [1] : vector<18x18xf32> to vector<18xf32>
    %162 = vector.shape_cast %161 : vector<18xf32> to vector<18x1xf32>
    %163 = vector.broadcast %162 : vector<18x1xf32> to vector<18x18xf32>
    %164 = arith.subf %160, %163 : vector<18x18xf32>
    %165 = math.exp %164 : vector<18x18xf32>
    %cst_154 = arith.constant dense<0.000000e+00> : vector<18xf32>
    %166 = vector.multi_reduction <add>, %165, %cst_154 [1] : vector<18x18xf32> to vector<18xf32>
    %167 = vector.shape_cast %166 : vector<18xf32> to vector<18x1xf32>
    %168 = tpu.reciprocal %167 {approx = true} : vector<18x1xf32> -> vector<18x1xf32>
    %cst_155 = arith.constant dense<0.000000e+00> : vector<18x8xf32>
    %169 = tpu.matmul %165, %158, %cst_155 {dimension_numbers = #tpu.dot_dimension_numbers<[1], [0], [0], [1], [0, 0, 1, 1], [], []>} : vector<18x18xf32>, vector<18x8xf32>, vector<18x8xf32> -> vector<18x8xf32>
    %170 = vector.broadcast %168 : vector<18x1xf32> to vector<18x8xf32>
    %171 = arith.mulf %169, %170 : vector<18x8xf32>
    %c0_156 = arith.constant 0 : index
    %c3_157 = arith.constant 3 : index
    %c0_158 = arith.constant 0 : index
    %c0_159 = arith.constant 0 : index
    %172 = vector.load %arg17[%c0_156, %c3_157, %c0_158, %c0_159] : memref<2x4x8x32xf32, #tpu.memory_space<vmem>>, vector<1x1x8x32xf32>
    %173 = vector.shape_cast %172 : vector<1x1x8x32xf32> to vector<8x32xf32>
    %cst_160 = arith.constant dense<0.000000e+00> : vector<18x32xf32>
    %174 = tpu.matmul %171, %173, %cst_160 {dimension_numbers = #tpu.dot_dimension_numbers<[1], [0], [0], [1], [0, 0, 1, 1], [], []>} : vector<18x8xf32>, vector<8x32xf32>, vector<18x32xf32> -> vector<18x32xf32>
    %175 = arith.addf %137, %174 : vector<18x32xf32>
    %c0_161 = arith.constant 0 : index
    %c0_162 = arith.constant 0 : index
    %c0_163 = arith.constant 0 : index
    %176 = vector.load %arg18[%c0_161, %c0_162, %c0_163] : memref<2x1x32xf32, #tpu.memory_space<vmem>>, vector<1x1x32xf32>
    %177 = vector.shape_cast %176 : vector<1x1x32xf32> to vector<1x32xf32>
    %178 = vector.broadcast %177 : vector<1x32xf32> to vector<18x32xf32>
    %179 = arith.addf %175, %178 : vector<18x32xf32>
    %180 = arith.addf %23, %179 : vector<18x32xf32>
    %c0_164 = arith.constant 0 : index
    %c0_165 = arith.constant 0 : index
    %c0_166 = arith.constant 0 : index
    %181 = vector.load %arg19[%c0_164, %c0_165, %c0_166] : memref<2x1x32xf32, #tpu.memory_space<vmem>>, vector<1x1x32xf32>
    %182 = vector.shape_cast %181 : vector<1x1x32xf32> to vector<1x32xf32>
    %c0_167 = arith.constant 0 : index
    %c0_168 = arith.constant 0 : index
    %c0_169 = arith.constant 0 : index
    %183 = vector.load %arg20[%c0_167, %c0_168, %c0_169] : memref<2x1x32xf32, #tpu.memory_space<vmem>>, vector<1x1x32xf32>
    %184 = vector.shape_cast %183 : vector<1x1x32xf32> to vector<1x32xf32>
    %cst_170 = arith.constant dense<0.000000e+00> : vector<18xf32>
    %185 = vector.multi_reduction <add>, %180, %cst_170 [1] : vector<18x32xf32> to vector<18xf32>
    %186 = vector.shape_cast %185 : vector<18xf32> to vector<18x1xf32>
    %cst_171 = arith.constant 3.200000e+01 : f32
    %187 = vector.broadcast %cst_171 : f32 to vector<18x1xf32>
    %188 = arith.divf %186, %187 : vector<18x1xf32>
    %189 = vector.broadcast %188 : vector<18x1xf32> to vector<18x32xf32>
    %190 = arith.subf %180, %189 : vector<18x32xf32>
    %191 = arith.mulf %190, %190 : vector<18x32xf32>
    %cst_172 = arith.constant dense<0.000000e+00> : vector<18xf32>
    %192 = vector.multi_reduction <add>, %191, %cst_172 [1] : vector<18x32xf32> to vector<18xf32>
    %193 = vector.shape_cast %192 : vector<18xf32> to vector<18x1xf32>
    %cst_173 = arith.constant 3.200000e+01 : f32
    %194 = vector.broadcast %cst_173 : f32 to vector<18x1xf32>
    %195 = arith.divf %193, %194 : vector<18x1xf32>
    %cst_174 = arith.constant 9.99999974E-6 : f32
    %196 = vector.broadcast %cst_174 : f32 to vector<18x1xf32>
    %197 = arith.addf %195, %196 : vector<18x1xf32>
    %198 = math.rsqrt %197 : vector<18x1xf32>
    %199 = vector.broadcast %198 : vector<18x1xf32> to vector<18x32xf32>
    %200 = arith.mulf %190, %199 : vector<18x32xf32>
    %201 = vector.broadcast %182 : vector<1x32xf32> to vector<18x32xf32>
    %202 = arith.mulf %200, %201 : vector<18x32xf32>
    %203 = vector.broadcast %184 : vector<1x32xf32> to vector<18x32xf32>
    %204 = arith.addf %202, %203 : vector<18x32xf32>
    %c0_175 = arith.constant 0 : index
    %c0_176 = arith.constant 0 : index
    %c0_177 = arith.constant 0 : index
    %205 = vector.load %arg21[%c0_175, %c0_176, %c0_177] : memref<2x32x64xf32, #tpu.memory_space<vmem>>, vector<1x32x64xf32>
    %206 = vector.shape_cast %205 : vector<1x32x64xf32> to vector<32x64xf32>
    %cst_178 = arith.constant dense<0.000000e+00> : vector<18x64xf32>
    %207 = tpu.matmul %204, %206, %cst_178 {dimension_numbers = #tpu.dot_dimension_numbers<[1], [0], [0], [1], [0, 0, 1, 1], [], []>} : vector<18x32xf32>, vector<32x64xf32>, vector<18x64xf32> -> vector<18x64xf32>
    %c0_179 = arith.constant 0 : index
    %c0_180 = arith.constant 0 : index
    %c0_181 = arith.constant 0 : index
    %208 = vector.load %arg22[%c0_179, %c0_180, %c0_181] : memref<2x1x64xf32, #tpu.memory_space<vmem>>, vector<1x1x64xf32>
    %209 = vector.shape_cast %208 : vector<1x1x64xf32> to vector<1x64xf32>
    %210 = vector.broadcast %209 : vector<1x64xf32> to vector<18x64xf32>
    %211 = arith.addf %207, %210 : vector<18x64xf32>
    %cst_182 = arith.constant 0.000000e+00 : f32
    %212 = vector.broadcast %cst_182 : f32 to vector<18x64xf32>
    %213 = arith.maximumf %211, %212 : vector<18x64xf32>
    %c0_183 = arith.constant 0 : index
    %c0_184 = arith.constant 0 : index
    %c0_185 = arith.constant 0 : index
    %214 = vector.load %arg23[%c0_183, %c0_184, %c0_185] : memref<2x64x32xf32, #tpu.memory_space<vmem>>, vector<1x64x32xf32>
    %215 = vector.shape_cast %214 : vector<1x64x32xf32> to vector<64x32xf32>
    %cst_186 = arith.constant dense<0.000000e+00> : vector<18x32xf32>
    %216 = tpu.matmul %213, %215, %cst_186 {dimension_numbers = #tpu.dot_dimension_numbers<[1], [0], [0], [1], [0, 0, 1, 1], [], []>} : vector<18x64xf32>, vector<64x32xf32>, vector<18x32xf32> -> vector<18x32xf32>
    %c0_187 = arith.constant 0 : index
    %c0_188 = arith.constant 0 : index
    %c0_189 = arith.constant 0 : index
    %217 = vector.load %arg24[%c0_187, %c0_188, %c0_189] : memref<2x1x32xf32, #tpu.memory_space<vmem>>, vector<1x1x32xf32>
    %218 = vector.shape_cast %217 : vector<1x1x32xf32> to vector<1x32xf32>
    %219 = vector.broadcast %218 : vector<1x32xf32> to vector<18x32xf32>
    %220 = arith.addf %216, %219 : vector<18x32xf32>
    %221 = arith.addf %204, %220 : vector<18x32xf32>
    %c0_190 = arith.constant 0 : index
    %c0_191 = arith.constant 0 : index
    %c0_192 = arith.constant 0 : index
    %222 = vector.load %arg25[%c0_190, %c0_191, %c0_192] : memref<2x1x32xf32, #tpu.memory_space<vmem>>, vector<1x1x32xf32>
    %223 = vector.shape_cast %222 : vector<1x1x32xf32> to vector<1x32xf32>
    %c0_193 = arith.constant 0 : index
    %c0_194 = arith.constant 0 : index
    %c0_195 = arith.constant 0 : index
    %224 = vector.load %arg26[%c0_193, %c0_194, %c0_195] : memref<2x1x32xf32, #tpu.memory_space<vmem>>, vector<1x1x32xf32>
    %225 = vector.shape_cast %224 : vector<1x1x32xf32> to vector<1x32xf32>
    %cst_196 = arith.constant dense<0.000000e+00> : vector<18xf32>
    %226 = vector.multi_reduction <add>, %221, %cst_196 [1] : vector<18x32xf32> to vector<18xf32>
    %227 = vector.shape_cast %226 : vector<18xf32> to vector<18x1xf32>
    %cst_197 = arith.constant 3.200000e+01 : f32
    %228 = vector.broadcast %cst_197 : f32 to vector<18x1xf32>
    %229 = arith.divf %227, %228 : vector<18x1xf32>
    %230 = vector.broadcast %229 : vector<18x1xf32> to vector<18x32xf32>
    %231 = arith.subf %221, %230 : vector<18x32xf32>
    %232 = arith.mulf %231, %231 : vector<18x32xf32>
    %cst_198 = arith.constant dense<0.000000e+00> : vector<18xf32>
    %233 = vector.multi_reduction <add>, %232, %cst_198 [1] : vector<18x32xf32> to vector<18xf32>
    %234 = vector.shape_cast %233 : vector<18xf32> to vector<18x1xf32>
    %cst_199 = arith.constant 3.200000e+01 : f32
    %235 = vector.broadcast %cst_199 : f32 to vector<18x1xf32>
    %236 = arith.divf %234, %235 : vector<18x1xf32>
    %cst_200 = arith.constant 9.99999974E-6 : f32
    %237 = vector.broadcast %cst_200 : f32 to vector<18x1xf32>
    %238 = arith.addf %236, %237 : vector<18x1xf32>
    %239 = math.rsqrt %238 : vector<18x1xf32>
    %240 = vector.broadcast %239 : vector<18x1xf32> to vector<18x32xf32>
    %241 = arith.mulf %231, %240 : vector<18x32xf32>
    %242 = vector.broadcast %223 : vector<1x32xf32> to vector<18x32xf32>
    %243 = arith.mulf %241, %242 : vector<18x32xf32>
    %244 = vector.broadcast %225 : vector<1x32xf32> to vector<18x32xf32>
    %245 = arith.addf %243, %244 : vector<18x32xf32>
    %c1_201 = arith.constant 1 : index
    %c0_202 = arith.constant 0 : index
    %c0_203 = arith.constant 0 : index
    %c0_204 = arith.constant 0 : index
    %246 = vector.load %arg11[%c1_201, %c0_202, %c0_203, %c0_204] : memref<2x4x32x8xf32, #tpu.memory_space<vmem>>, vector<1x1x32x8xf32>
    %247 = vector.shape_cast %246 : vector<1x1x32x8xf32> to vector<32x8xf32>
    %cst_205 = arith.constant dense<0.000000e+00> : vector<18x8xf32>
    %248 = tpu.matmul %245, %247, %cst_205 {dimension_numbers = #tpu.dot_dimension_numbers<[1], [0], [0], [1], [0, 0, 1, 1], [], []>} : vector<18x32xf32>, vector<32x8xf32>, vector<18x8xf32> -> vector<18x8xf32>
    %c1_206 = arith.constant 1 : index
    %c0_207 = arith.constant 0 : index
    %c0_208 = arith.constant 0 : index
    %c0_209 = arith.constant 0 : index
    %249 = vector.load %arg12[%c1_206, %c0_207, %c0_208, %c0_209] : memref<2x4x1x8xf32, #tpu.memory_space<vmem>>, vector<1x1x1x8xf32>
    %250 = vector.shape_cast %249 : vector<1x1x1x8xf32> to vector<1x8xf32>
    %251 = vector.broadcast %250 : vector<1x8xf32> to vector<18x8xf32>
    %252 = arith.addf %248, %251 : vector<18x8xf32>
    %c1_210 = arith.constant 1 : index
    %c0_211 = arith.constant 0 : index
    %c0_212 = arith.constant 0 : index
    %c0_213 = arith.constant 0 : index
    %253 = vector.load %arg13[%c1_210, %c0_211, %c0_212, %c0_213] : memref<2x4x32x8xf32, #tpu.memory_space<vmem>>, vector<1x1x32x8xf32>
    %254 = vector.shape_cast %253 : vector<1x1x32x8xf32> to vector<32x8xf32>
    %cst_214 = arith.constant dense<0.000000e+00> : vector<18x8xf32>
    %255 = tpu.matmul %245, %254, %cst_214 {dimension_numbers = #tpu.dot_dimension_numbers<[1], [0], [0], [1], [0, 0, 1, 1], [], []>} : vector<18x32xf32>, vector<32x8xf32>, vector<18x8xf32> -> vector<18x8xf32>
    %c1_215 = arith.constant 1 : index
    %c0_216 = arith.constant 0 : index
    %c0_217 = arith.constant 0 : index
    %c0_218 = arith.constant 0 : index
    %256 = vector.load %arg14[%c1_215, %c0_216, %c0_217, %c0_218] : memref<2x4x1x8xf32, #tpu.memory_space<vmem>>, vector<1x1x1x8xf32>
    %257 = vector.shape_cast %256 : vector<1x1x1x8xf32> to vector<1x8xf32>
    %258 = vector.broadcast %257 : vector<1x8xf32> to vector<18x8xf32>
    %259 = arith.addf %255, %258 : vector<18x8xf32>
    %c1_219 = arith.constant 1 : index
    %c0_220 = arith.constant 0 : index
    %c0_221 = arith.constant 0 : index
    %c0_222 = arith.constant 0 : index
    %260 = vector.load %arg15[%c1_219, %c0_220, %c0_221, %c0_222] : memref<2x4x32x8xf32, #tpu.memory_space<vmem>>, vector<1x1x32x8xf32>
    %261 = vector.shape_cast %260 : vector<1x1x32x8xf32> to vector<32x8xf32>
    %cst_223 = arith.constant dense<0.000000e+00> : vector<18x8xf32>
    %262 = tpu.matmul %245, %261, %cst_223 {dimension_numbers = #tpu.dot_dimension_numbers<[1], [0], [0], [1], [0, 0, 1, 1], [], []>} : vector<18x32xf32>, vector<32x8xf32>, vector<18x8xf32> -> vector<18x8xf32>
    %c1_224 = arith.constant 1 : index
    %c0_225 = arith.constant 0 : index
    %c0_226 = arith.constant 0 : index
    %c0_227 = arith.constant 0 : index
    %263 = vector.load %arg16[%c1_224, %c0_225, %c0_226, %c0_227] : memref<2x4x1x8xf32, #tpu.memory_space<vmem>>, vector<1x1x1x8xf32>
    %264 = vector.shape_cast %263 : vector<1x1x1x8xf32> to vector<1x8xf32>
    %265 = vector.broadcast %264 : vector<1x8xf32> to vector<18x8xf32>
    %266 = arith.addf %262, %265 : vector<18x8xf32>
    %cst_228 = arith.constant dense<0.000000e+00> : vector<18x18xf32>
    %267 = tpu.matmul %252, %259, %cst_228 {dimension_numbers = #tpu.dot_dimension_numbers<[1], [1], [0], [0], [0, 0, 1, 0], [], []>} : vector<18x8xf32>, vector<18x8xf32>, vector<18x18xf32> -> vector<18x18xf32>
    %268 = arith.addf %267, %24 : vector<18x18xf32>
    %cst_229 = arith.constant dense<0xFF800000> : vector<18xf32>
    %269 = vector.multi_reduction <maximumf>, %268, %cst_229 [1] : vector<18x18xf32> to vector<18xf32>
    %270 = vector.shape_cast %269 : vector<18xf32> to vector<18x1xf32>
    %271 = vector.broadcast %270 : vector<18x1xf32> to vector<18x18xf32>
    %272 = arith.subf %268, %271 : vector<18x18xf32>
    %273 = math.exp %272 : vector<18x18xf32>
    %cst_230 = arith.constant dense<0.000000e+00> : vector<18xf32>
    %274 = vector.multi_reduction <add>, %273, %cst_230 [1] : vector<18x18xf32> to vector<18xf32>
    %275 = vector.shape_cast %274 : vector<18xf32> to vector<18x1xf32>
    %276 = tpu.reciprocal %275 {approx = true} : vector<18x1xf32> -> vector<18x1xf32>
    %cst_231 = arith.constant dense<0.000000e+00> : vector<18x8xf32>
    %277 = tpu.matmul %273, %266, %cst_231 {dimension_numbers = #tpu.dot_dimension_numbers<[1], [0], [0], [1], [0, 0, 1, 1], [], []>} : vector<18x18xf32>, vector<18x8xf32>, vector<18x8xf32> -> vector<18x8xf32>
    %278 = vector.broadcast %276 : vector<18x1xf32> to vector<18x8xf32>
    %279 = arith.mulf %277, %278 : vector<18x8xf32>
    %c1_232 = arith.constant 1 : index
    %c0_233 = arith.constant 0 : index
    %c0_234 = arith.constant 0 : index
    %c0_235 = arith.constant 0 : index
    %280 = vector.load %arg17[%c1_232, %c0_233, %c0_234, %c0_235] : memref<2x4x8x32xf32, #tpu.memory_space<vmem>>, vector<1x1x8x32xf32>
    %281 = vector.shape_cast %280 : vector<1x1x8x32xf32> to vector<8x32xf32>
    %cst_236 = arith.constant dense<0.000000e+00> : vector<18x32xf32>
    %282 = tpu.matmul %279, %281, %cst_236 {dimension_numbers = #tpu.dot_dimension_numbers<[1], [0], [0], [1], [0, 0, 1, 1], [], []>} : vector<18x8xf32>, vector<8x32xf32>, vector<18x32xf32> -> vector<18x32xf32>
    %c1_237 = arith.constant 1 : index
    %c1_238 = arith.constant 1 : index
    %c0_239 = arith.constant 0 : index
    %c0_240 = arith.constant 0 : index
    %283 = vector.load %arg11[%c1_237, %c1_238, %c0_239, %c0_240] : memref<2x4x32x8xf32, #tpu.memory_space<vmem>>, vector<1x1x32x8xf32>
    %284 = vector.shape_cast %283 : vector<1x1x32x8xf32> to vector<32x8xf32>
    %cst_241 = arith.constant dense<0.000000e+00> : vector<18x8xf32>
    %285 = tpu.matmul %245, %284, %cst_241 {dimension_numbers = #tpu.dot_dimension_numbers<[1], [0], [0], [1], [0, 0, 1, 1], [], []>} : vector<18x32xf32>, vector<32x8xf32>, vector<18x8xf32> -> vector<18x8xf32>
    %c1_242 = arith.constant 1 : index
    %c1_243 = arith.constant 1 : index
    %c0_244 = arith.constant 0 : index
    %c0_245 = arith.constant 0 : index
    %286 = vector.load %arg12[%c1_242, %c1_243, %c0_244, %c0_245] : memref<2x4x1x8xf32, #tpu.memory_space<vmem>>, vector<1x1x1x8xf32>
    %287 = vector.shape_cast %286 : vector<1x1x1x8xf32> to vector<1x8xf32>
    %288 = vector.broadcast %287 : vector<1x8xf32> to vector<18x8xf32>
    %289 = arith.addf %285, %288 : vector<18x8xf32>
    %c1_246 = arith.constant 1 : index
    %c1_247 = arith.constant 1 : index
    %c0_248 = arith.constant 0 : index
    %c0_249 = arith.constant 0 : index
    %290 = vector.load %arg13[%c1_246, %c1_247, %c0_248, %c0_249] : memref<2x4x32x8xf32, #tpu.memory_space<vmem>>, vector<1x1x32x8xf32>
    %291 = vector.shape_cast %290 : vector<1x1x32x8xf32> to vector<32x8xf32>
    %cst_250 = arith.constant dense<0.000000e+00> : vector<18x8xf32>
    %292 = tpu.matmul %245, %291, %cst_250 {dimension_numbers = #tpu.dot_dimension_numbers<[1], [0], [0], [1], [0, 0, 1, 1], [], []>} : vector<18x32xf32>, vector<32x8xf32>, vector<18x8xf32> -> vector<18x8xf32>
    %c1_251 = arith.constant 1 : index
    %c1_252 = arith.constant 1 : index
    %c0_253 = arith.constant 0 : index
    %c0_254 = arith.constant 0 : index
    %293 = vector.load %arg14[%c1_251, %c1_252, %c0_253, %c0_254] : memref<2x4x1x8xf32, #tpu.memory_space<vmem>>, vector<1x1x1x8xf32>
    %294 = vector.shape_cast %293 : vector<1x1x1x8xf32> to vector<1x8xf32>
    %295 = vector.broadcast %294 : vector<1x8xf32> to vector<18x8xf32>
    %296 = arith.addf %292, %295 : vector<18x8xf32>
    %c1_255 = arith.constant 1 : index
    %c1_256 = arith.constant 1 : index
    %c0_257 = arith.constant 0 : index
    %c0_258 = arith.constant 0 : index
    %297 = vector.load %arg15[%c1_255, %c1_256, %c0_257, %c0_258] : memref<2x4x32x8xf32, #tpu.memory_space<vmem>>, vector<1x1x32x8xf32>
    %298 = vector.shape_cast %297 : vector<1x1x32x8xf32> to vector<32x8xf32>
    %cst_259 = arith.constant dense<0.000000e+00> : vector<18x8xf32>
    %299 = tpu.matmul %245, %298, %cst_259 {dimension_numbers = #tpu.dot_dimension_numbers<[1], [0], [0], [1], [0, 0, 1, 1], [], []>} : vector<18x32xf32>, vector<32x8xf32>, vector<18x8xf32> -> vector<18x8xf32>
    %c1_260 = arith.constant 1 : index
    %c1_261 = arith.constant 1 : index
    %c0_262 = arith.constant 0 : index
    %c0_263 = arith.constant 0 : index
    %300 = vector.load %arg16[%c1_260, %c1_261, %c0_262, %c0_263] : memref<2x4x1x8xf32, #tpu.memory_space<vmem>>, vector<1x1x1x8xf32>
    %301 = vector.shape_cast %300 : vector<1x1x1x8xf32> to vector<1x8xf32>
    %302 = vector.broadcast %301 : vector<1x8xf32> to vector<18x8xf32>
    %303 = arith.addf %299, %302 : vector<18x8xf32>
    %cst_264 = arith.constant dense<0.000000e+00> : vector<18x18xf32>
    %304 = tpu.matmul %289, %296, %cst_264 {dimension_numbers = #tpu.dot_dimension_numbers<[1], [1], [0], [0], [0, 0, 1, 0], [], []>} : vector<18x8xf32>, vector<18x8xf32>, vector<18x18xf32> -> vector<18x18xf32>
    %305 = arith.addf %304, %24 : vector<18x18xf32>
    %cst_265 = arith.constant dense<0xFF800000> : vector<18xf32>
    %306 = vector.multi_reduction <maximumf>, %305, %cst_265 [1] : vector<18x18xf32> to vector<18xf32>
    %307 = vector.shape_cast %306 : vector<18xf32> to vector<18x1xf32>
    %308 = vector.broadcast %307 : vector<18x1xf32> to vector<18x18xf32>
    %309 = arith.subf %305, %308 : vector<18x18xf32>
    %310 = math.exp %309 : vector<18x18xf32>
    %cst_266 = arith.constant dense<0.000000e+00> : vector<18xf32>
    %311 = vector.multi_reduction <add>, %310, %cst_266 [1] : vector<18x18xf32> to vector<18xf32>
    %312 = vector.shape_cast %311 : vector<18xf32> to vector<18x1xf32>
    %313 = tpu.reciprocal %312 {approx = true} : vector<18x1xf32> -> vector<18x1xf32>
    %cst_267 = arith.constant dense<0.000000e+00> : vector<18x8xf32>
    %314 = tpu.matmul %310, %303, %cst_267 {dimension_numbers = #tpu.dot_dimension_numbers<[1], [0], [0], [1], [0, 0, 1, 1], [], []>} : vector<18x18xf32>, vector<18x8xf32>, vector<18x8xf32> -> vector<18x8xf32>
    %315 = vector.broadcast %313 : vector<18x1xf32> to vector<18x8xf32>
    %316 = arith.mulf %314, %315 : vector<18x8xf32>
    %c1_268 = arith.constant 1 : index
    %c1_269 = arith.constant 1 : index
    %c0_270 = arith.constant 0 : index
    %c0_271 = arith.constant 0 : index
    %317 = vector.load %arg17[%c1_268, %c1_269, %c0_270, %c0_271] : memref<2x4x8x32xf32, #tpu.memory_space<vmem>>, vector<1x1x8x32xf32>
    %318 = vector.shape_cast %317 : vector<1x1x8x32xf32> to vector<8x32xf32>
    %cst_272 = arith.constant dense<0.000000e+00> : vector<18x32xf32>
    %319 = tpu.matmul %316, %318, %cst_272 {dimension_numbers = #tpu.dot_dimension_numbers<[1], [0], [0], [1], [0, 0, 1, 1], [], []>} : vector<18x8xf32>, vector<8x32xf32>, vector<18x32xf32> -> vector<18x32xf32>
    %320 = arith.addf %282, %319 : vector<18x32xf32>
    %c1_273 = arith.constant 1 : index
    %c2_274 = arith.constant 2 : index
    %c0_275 = arith.constant 0 : index
    %c0_276 = arith.constant 0 : index
    %321 = vector.load %arg11[%c1_273, %c2_274, %c0_275, %c0_276] : memref<2x4x32x8xf32, #tpu.memory_space<vmem>>, vector<1x1x32x8xf32>
    %322 = vector.shape_cast %321 : vector<1x1x32x8xf32> to vector<32x8xf32>
    %cst_277 = arith.constant dense<0.000000e+00> : vector<18x8xf32>
    %323 = tpu.matmul %245, %322, %cst_277 {dimension_numbers = #tpu.dot_dimension_numbers<[1], [0], [0], [1], [0, 0, 1, 1], [], []>} : vector<18x32xf32>, vector<32x8xf32>, vector<18x8xf32> -> vector<18x8xf32>
    %c1_278 = arith.constant 1 : index
    %c2_279 = arith.constant 2 : index
    %c0_280 = arith.constant 0 : index
    %c0_281 = arith.constant 0 : index
    %324 = vector.load %arg12[%c1_278, %c2_279, %c0_280, %c0_281] : memref<2x4x1x8xf32, #tpu.memory_space<vmem>>, vector<1x1x1x8xf32>
    %325 = vector.shape_cast %324 : vector<1x1x1x8xf32> to vector<1x8xf32>
    %326 = vector.broadcast %325 : vector<1x8xf32> to vector<18x8xf32>
    %327 = arith.addf %323, %326 : vector<18x8xf32>
    %c1_282 = arith.constant 1 : index
    %c2_283 = arith.constant 2 : index
    %c0_284 = arith.constant 0 : index
    %c0_285 = arith.constant 0 : index
    %328 = vector.load %arg13[%c1_282, %c2_283, %c0_284, %c0_285] : memref<2x4x32x8xf32, #tpu.memory_space<vmem>>, vector<1x1x32x8xf32>
    %329 = vector.shape_cast %328 : vector<1x1x32x8xf32> to vector<32x8xf32>
    %cst_286 = arith.constant dense<0.000000e+00> : vector<18x8xf32>
    %330 = tpu.matmul %245, %329, %cst_286 {dimension_numbers = #tpu.dot_dimension_numbers<[1], [0], [0], [1], [0, 0, 1, 1], [], []>} : vector<18x32xf32>, vector<32x8xf32>, vector<18x8xf32> -> vector<18x8xf32>
    %c1_287 = arith.constant 1 : index
    %c2_288 = arith.constant 2 : index
    %c0_289 = arith.constant 0 : index
    %c0_290 = arith.constant 0 : index
    %331 = vector.load %arg14[%c1_287, %c2_288, %c0_289, %c0_290] : memref<2x4x1x8xf32, #tpu.memory_space<vmem>>, vector<1x1x1x8xf32>
    %332 = vector.shape_cast %331 : vector<1x1x1x8xf32> to vector<1x8xf32>
    %333 = vector.broadcast %332 : vector<1x8xf32> to vector<18x8xf32>
    %334 = arith.addf %330, %333 : vector<18x8xf32>
    %c1_291 = arith.constant 1 : index
    %c2_292 = arith.constant 2 : index
    %c0_293 = arith.constant 0 : index
    %c0_294 = arith.constant 0 : index
    %335 = vector.load %arg15[%c1_291, %c2_292, %c0_293, %c0_294] : memref<2x4x32x8xf32, #tpu.memory_space<vmem>>, vector<1x1x32x8xf32>
    %336 = vector.shape_cast %335 : vector<1x1x32x8xf32> to vector<32x8xf32>
    %cst_295 = arith.constant dense<0.000000e+00> : vector<18x8xf32>
    %337 = tpu.matmul %245, %336, %cst_295 {dimension_numbers = #tpu.dot_dimension_numbers<[1], [0], [0], [1], [0, 0, 1, 1], [], []>} : vector<18x32xf32>, vector<32x8xf32>, vector<18x8xf32> -> vector<18x8xf32>
    %c1_296 = arith.constant 1 : index
    %c2_297 = arith.constant 2 : index
    %c0_298 = arith.constant 0 : index
    %c0_299 = arith.constant 0 : index
    %338 = vector.load %arg16[%c1_296, %c2_297, %c0_298, %c0_299] : memref<2x4x1x8xf32, #tpu.memory_space<vmem>>, vector<1x1x1x8xf32>
    %339 = vector.shape_cast %338 : vector<1x1x1x8xf32> to vector<1x8xf32>
    %340 = vector.broadcast %339 : vector<1x8xf32> to vector<18x8xf32>
    %341 = arith.addf %337, %340 : vector<18x8xf32>
    %cst_300 = arith.constant dense<0.000000e+00> : vector<18x18xf32>
    %342 = tpu.matmul %327, %334, %cst_300 {dimension_numbers = #tpu.dot_dimension_numbers<[1], [1], [0], [0], [0, 0, 1, 0], [], []>} : vector<18x8xf32>, vector<18x8xf32>, vector<18x18xf32> -> vector<18x18xf32>
    %343 = arith.addf %342, %24 : vector<18x18xf32>
    %cst_301 = arith.constant dense<0xFF800000> : vector<18xf32>
    %344 = vector.multi_reduction <maximumf>, %343, %cst_301 [1] : vector<18x18xf32> to vector<18xf32>
    %345 = vector.shape_cast %344 : vector<18xf32> to vector<18x1xf32>
    %346 = vector.broadcast %345 : vector<18x1xf32> to vector<18x18xf32>
    %347 = arith.subf %343, %346 : vector<18x18xf32>
    %348 = math.exp %347 : vector<18x18xf32>
    %cst_302 = arith.constant dense<0.000000e+00> : vector<18xf32>
    %349 = vector.multi_reduction <add>, %348, %cst_302 [1] : vector<18x18xf32> to vector<18xf32>
    %350 = vector.shape_cast %349 : vector<18xf32> to vector<18x1xf32>
    %351 = tpu.reciprocal %350 {approx = true} : vector<18x1xf32> -> vector<18x1xf32>
    %cst_303 = arith.constant dense<0.000000e+00> : vector<18x8xf32>
    %352 = tpu.matmul %348, %341, %cst_303 {dimension_numbers = #tpu.dot_dimension_numbers<[1], [0], [0], [1], [0, 0, 1, 1], [], []>} : vector<18x18xf32>, vector<18x8xf32>, vector<18x8xf32> -> vector<18x8xf32>
    %353 = vector.broadcast %351 : vector<18x1xf32> to vector<18x8xf32>
    %354 = arith.mulf %352, %353 : vector<18x8xf32>
    %c1_304 = arith.constant 1 : index
    %c2_305 = arith.constant 2 : index
    %c0_306 = arith.constant 0 : index
    %c0_307 = arith.constant 0 : index
    %355 = vector.load %arg17[%c1_304, %c2_305, %c0_306, %c0_307] : memref<2x4x8x32xf32, #tpu.memory_space<vmem>>, vector<1x1x8x32xf32>
    %356 = vector.shape_cast %355 : vector<1x1x8x32xf32> to vector<8x32xf32>
    %cst_308 = arith.constant dense<0.000000e+00> : vector<18x32xf32>
    %357 = tpu.matmul %354, %356, %cst_308 {dimension_numbers = #tpu.dot_dimension_numbers<[1], [0], [0], [1], [0, 0, 1, 1], [], []>} : vector<18x8xf32>, vector<8x32xf32>, vector<18x32xf32> -> vector<18x32xf32>
    %358 = arith.addf %320, %357 : vector<18x32xf32>
    %c1_309 = arith.constant 1 : index
    %c3_310 = arith.constant 3 : index
    %c0_311 = arith.constant 0 : index
    %c0_312 = arith.constant 0 : index
    %359 = vector.load %arg11[%c1_309, %c3_310, %c0_311, %c0_312] : memref<2x4x32x8xf32, #tpu.memory_space<vmem>>, vector<1x1x32x8xf32>
    %360 = vector.shape_cast %359 : vector<1x1x32x8xf32> to vector<32x8xf32>
    %cst_313 = arith.constant dense<0.000000e+00> : vector<18x8xf32>
    %361 = tpu.matmul %245, %360, %cst_313 {dimension_numbers = #tpu.dot_dimension_numbers<[1], [0], [0], [1], [0, 0, 1, 1], [], []>} : vector<18x32xf32>, vector<32x8xf32>, vector<18x8xf32> -> vector<18x8xf32>
    %c1_314 = arith.constant 1 : index
    %c3_315 = arith.constant 3 : index
    %c0_316 = arith.constant 0 : index
    %c0_317 = arith.constant 0 : index
    %362 = vector.load %arg12[%c1_314, %c3_315, %c0_316, %c0_317] : memref<2x4x1x8xf32, #tpu.memory_space<vmem>>, vector<1x1x1x8xf32>
    %363 = vector.shape_cast %362 : vector<1x1x1x8xf32> to vector<1x8xf32>
    %364 = vector.broadcast %363 : vector<1x8xf32> to vector<18x8xf32>
    %365 = arith.addf %361, %364 : vector<18x8xf32>
    %c1_318 = arith.constant 1 : index
    %c3_319 = arith.constant 3 : index
    %c0_320 = arith.constant 0 : index
    %c0_321 = arith.constant 0 : index
    %366 = vector.load %arg13[%c1_318, %c3_319, %c0_320, %c0_321] : memref<2x4x32x8xf32, #tpu.memory_space<vmem>>, vector<1x1x32x8xf32>
    %367 = vector.shape_cast %366 : vector<1x1x32x8xf32> to vector<32x8xf32>
    %cst_322 = arith.constant dense<0.000000e+00> : vector<18x8xf32>
    %368 = tpu.matmul %245, %367, %cst_322 {dimension_numbers = #tpu.dot_dimension_numbers<[1], [0], [0], [1], [0, 0, 1, 1], [], []>} : vector<18x32xf32>, vector<32x8xf32>, vector<18x8xf32> -> vector<18x8xf32>
    %c1_323 = arith.constant 1 : index
    %c3_324 = arith.constant 3 : index
    %c0_325 = arith.constant 0 : index
    %c0_326 = arith.constant 0 : index
    %369 = vector.load %arg14[%c1_323, %c3_324, %c0_325, %c0_326] : memref<2x4x1x8xf32, #tpu.memory_space<vmem>>, vector<1x1x1x8xf32>
    %370 = vector.shape_cast %369 : vector<1x1x1x8xf32> to vector<1x8xf32>
    %371 = vector.broadcast %370 : vector<1x8xf32> to vector<18x8xf32>
    %372 = arith.addf %368, %371 : vector<18x8xf32>
    %c1_327 = arith.constant 1 : index
    %c3_328 = arith.constant 3 : index
    %c0_329 = arith.constant 0 : index
    %c0_330 = arith.constant 0 : index
    %373 = vector.load %arg15[%c1_327, %c3_328, %c0_329, %c0_330] : memref<2x4x32x8xf32, #tpu.memory_space<vmem>>, vector<1x1x32x8xf32>
    %374 = vector.shape_cast %373 : vector<1x1x32x8xf32> to vector<32x8xf32>
    %cst_331 = arith.constant dense<0.000000e+00> : vector<18x8xf32>
    %375 = tpu.matmul %245, %374, %cst_331 {dimension_numbers = #tpu.dot_dimension_numbers<[1], [0], [0], [1], [0, 0, 1, 1], [], []>} : vector<18x32xf32>, vector<32x8xf32>, vector<18x8xf32> -> vector<18x8xf32>
    %c1_332 = arith.constant 1 : index
    %c3_333 = arith.constant 3 : index
    %c0_334 = arith.constant 0 : index
    %c0_335 = arith.constant 0 : index
    %376 = vector.load %arg16[%c1_332, %c3_333, %c0_334, %c0_335] : memref<2x4x1x8xf32, #tpu.memory_space<vmem>>, vector<1x1x1x8xf32>
    %377 = vector.shape_cast %376 : vector<1x1x1x8xf32> to vector<1x8xf32>
    %378 = vector.broadcast %377 : vector<1x8xf32> to vector<18x8xf32>
    %379 = arith.addf %375, %378 : vector<18x8xf32>
    %cst_336 = arith.constant dense<0.000000e+00> : vector<18x18xf32>
    %380 = tpu.matmul %365, %372, %cst_336 {dimension_numbers = #tpu.dot_dimension_numbers<[1], [1], [0], [0], [0, 0, 1, 0], [], []>} : vector<18x8xf32>, vector<18x8xf32>, vector<18x18xf32> -> vector<18x18xf32>
    %381 = arith.addf %380, %24 : vector<18x18xf32>
    %cst_337 = arith.constant dense<0xFF800000> : vector<18xf32>
    %382 = vector.multi_reduction <maximumf>, %381, %cst_337 [1] : vector<18x18xf32> to vector<18xf32>
    %383 = vector.shape_cast %382 : vector<18xf32> to vector<18x1xf32>
    %384 = vector.broadcast %383 : vector<18x1xf32> to vector<18x18xf32>
    %385 = arith.subf %381, %384 : vector<18x18xf32>
    %386 = math.exp %385 : vector<18x18xf32>
    %cst_338 = arith.constant dense<0.000000e+00> : vector<18xf32>
    %387 = vector.multi_reduction <add>, %386, %cst_338 [1] : vector<18x18xf32> to vector<18xf32>
    %388 = vector.shape_cast %387 : vector<18xf32> to vector<18x1xf32>
    %389 = tpu.reciprocal %388 {approx = true} : vector<18x1xf32> -> vector<18x1xf32>
    %cst_339 = arith.constant dense<0.000000e+00> : vector<18x8xf32>
    %390 = tpu.matmul %386, %379, %cst_339 {dimension_numbers = #tpu.dot_dimension_numbers<[1], [0], [0], [1], [0, 0, 1, 1], [], []>} : vector<18x18xf32>, vector<18x8xf32>, vector<18x8xf32> -> vector<18x8xf32>
    %391 = vector.broadcast %389 : vector<18x1xf32> to vector<18x8xf32>
    %392 = arith.mulf %390, %391 : vector<18x8xf32>
    %c1_340 = arith.constant 1 : index
    %c3_341 = arith.constant 3 : index
    %c0_342 = arith.constant 0 : index
    %c0_343 = arith.constant 0 : index
    %393 = vector.load %arg17[%c1_340, %c3_341, %c0_342, %c0_343] : memref<2x4x8x32xf32, #tpu.memory_space<vmem>>, vector<1x1x8x32xf32>
    %394 = vector.shape_cast %393 : vector<1x1x8x32xf32> to vector<8x32xf32>
    %cst_344 = arith.constant dense<0.000000e+00> : vector<18x32xf32>
    %395 = tpu.matmul %392, %394, %cst_344 {dimension_numbers = #tpu.dot_dimension_numbers<[1], [0], [0], [1], [0, 0, 1, 1], [], []>} : vector<18x8xf32>, vector<8x32xf32>, vector<18x32xf32> -> vector<18x32xf32>
    %396 = arith.addf %358, %395 : vector<18x32xf32>
    %c1_345 = arith.constant 1 : index
    %c0_346 = arith.constant 0 : index
    %c0_347 = arith.constant 0 : index
    %397 = vector.load %arg18[%c1_345, %c0_346, %c0_347] : memref<2x1x32xf32, #tpu.memory_space<vmem>>, vector<1x1x32xf32>
    %398 = vector.shape_cast %397 : vector<1x1x32xf32> to vector<1x32xf32>
    %399 = vector.broadcast %398 : vector<1x32xf32> to vector<18x32xf32>
    %400 = arith.addf %396, %399 : vector<18x32xf32>
    %401 = arith.addf %245, %400 : vector<18x32xf32>
    %c1_348 = arith.constant 1 : index
    %c0_349 = arith.constant 0 : index
    %c0_350 = arith.constant 0 : index
    %402 = vector.load %arg19[%c1_348, %c0_349, %c0_350] : memref<2x1x32xf32, #tpu.memory_space<vmem>>, vector<1x1x32xf32>
    %403 = vector.shape_cast %402 : vector<1x1x32xf32> to vector<1x32xf32>
    %c1_351 = arith.constant 1 : index
    %c0_352 = arith.constant 0 : index
    %c0_353 = arith.constant 0 : index
    %404 = vector.load %arg20[%c1_351, %c0_352, %c0_353] : memref<2x1x32xf32, #tpu.memory_space<vmem>>, vector<1x1x32xf32>
    %405 = vector.shape_cast %404 : vector<1x1x32xf32> to vector<1x32xf32>
    %cst_354 = arith.constant dense<0.000000e+00> : vector<18xf32>
    %406 = vector.multi_reduction <add>, %401, %cst_354 [1] : vector<18x32xf32> to vector<18xf32>
    %407 = vector.shape_cast %406 : vector<18xf32> to vector<18x1xf32>
    %cst_355 = arith.constant 3.200000e+01 : f32
    %408 = vector.broadcast %cst_355 : f32 to vector<18x1xf32>
    %409 = arith.divf %407, %408 : vector<18x1xf32>
    %410 = vector.broadcast %409 : vector<18x1xf32> to vector<18x32xf32>
    %411 = arith.subf %401, %410 : vector<18x32xf32>
    %412 = arith.mulf %411, %411 : vector<18x32xf32>
    %cst_356 = arith.constant dense<0.000000e+00> : vector<18xf32>
    %413 = vector.multi_reduction <add>, %412, %cst_356 [1] : vector<18x32xf32> to vector<18xf32>
    %414 = vector.shape_cast %413 : vector<18xf32> to vector<18x1xf32>
    %cst_357 = arith.constant 3.200000e+01 : f32
    %415 = vector.broadcast %cst_357 : f32 to vector<18x1xf32>
    %416 = arith.divf %414, %415 : vector<18x1xf32>
    %cst_358 = arith.constant 9.99999974E-6 : f32
    %417 = vector.broadcast %cst_358 : f32 to vector<18x1xf32>
    %418 = arith.addf %416, %417 : vector<18x1xf32>
    %419 = math.rsqrt %418 : vector<18x1xf32>
    %420 = vector.broadcast %419 : vector<18x1xf32> to vector<18x32xf32>
    %421 = arith.mulf %411, %420 : vector<18x32xf32>
    %422 = vector.broadcast %403 : vector<1x32xf32> to vector<18x32xf32>
    %423 = arith.mulf %421, %422 : vector<18x32xf32>
    %424 = vector.broadcast %405 : vector<1x32xf32> to vector<18x32xf32>
    %425 = arith.addf %423, %424 : vector<18x32xf32>
    %c1_359 = arith.constant 1 : index
    %c0_360 = arith.constant 0 : index
    %c0_361 = arith.constant 0 : index
    %426 = vector.load %arg21[%c1_359, %c0_360, %c0_361] : memref<2x32x64xf32, #tpu.memory_space<vmem>>, vector<1x32x64xf32>
    %427 = vector.shape_cast %426 : vector<1x32x64xf32> to vector<32x64xf32>
    %cst_362 = arith.constant dense<0.000000e+00> : vector<18x64xf32>
    %428 = tpu.matmul %425, %427, %cst_362 {dimension_numbers = #tpu.dot_dimension_numbers<[1], [0], [0], [1], [0, 0, 1, 1], [], []>} : vector<18x32xf32>, vector<32x64xf32>, vector<18x64xf32> -> vector<18x64xf32>
    %c1_363 = arith.constant 1 : index
    %c0_364 = arith.constant 0 : index
    %c0_365 = arith.constant 0 : index
    %429 = vector.load %arg22[%c1_363, %c0_364, %c0_365] : memref<2x1x64xf32, #tpu.memory_space<vmem>>, vector<1x1x64xf32>
    %430 = vector.shape_cast %429 : vector<1x1x64xf32> to vector<1x64xf32>
    %431 = vector.broadcast %430 : vector<1x64xf32> to vector<18x64xf32>
    %432 = arith.addf %428, %431 : vector<18x64xf32>
    %cst_366 = arith.constant 0.000000e+00 : f32
    %433 = vector.broadcast %cst_366 : f32 to vector<18x64xf32>
    %434 = arith.maximumf %432, %433 : vector<18x64xf32>
    %c1_367 = arith.constant 1 : index
    %c0_368 = arith.constant 0 : index
    %c0_369 = arith.constant 0 : index
    %435 = vector.load %arg23[%c1_367, %c0_368, %c0_369] : memref<2x64x32xf32, #tpu.memory_space<vmem>>, vector<1x64x32xf32>
    %436 = vector.shape_cast %435 : vector<1x64x32xf32> to vector<64x32xf32>
    %cst_370 = arith.constant dense<0.000000e+00> : vector<18x32xf32>
    %437 = tpu.matmul %434, %436, %cst_370 {dimension_numbers = #tpu.dot_dimension_numbers<[1], [0], [0], [1], [0, 0, 1, 1], [], []>} : vector<18x64xf32>, vector<64x32xf32>, vector<18x32xf32> -> vector<18x32xf32>
    %c1_371 = arith.constant 1 : index
    %c0_372 = arith.constant 0 : index
    %c0_373 = arith.constant 0 : index
    %438 = vector.load %arg24[%c1_371, %c0_372, %c0_373] : memref<2x1x32xf32, #tpu.memory_space<vmem>>, vector<1x1x32xf32>
    %439 = vector.shape_cast %438 : vector<1x1x32xf32> to vector<1x32xf32>
    %440 = vector.broadcast %439 : vector<1x32xf32> to vector<18x32xf32>
    %441 = arith.addf %437, %440 : vector<18x32xf32>
    %442 = arith.addf %425, %441 : vector<18x32xf32>
    %c1_374 = arith.constant 1 : index
    %c0_375 = arith.constant 0 : index
    %c0_376 = arith.constant 0 : index
    %443 = vector.load %arg25[%c1_374, %c0_375, %c0_376] : memref<2x1x32xf32, #tpu.memory_space<vmem>>, vector<1x1x32xf32>
    %444 = vector.shape_cast %443 : vector<1x1x32xf32> to vector<1x32xf32>
    %c1_377 = arith.constant 1 : index
    %c0_378 = arith.constant 0 : index
    %c0_379 = arith.constant 0 : index
    %445 = vector.load %arg26[%c1_377, %c0_378, %c0_379] : memref<2x1x32xf32, #tpu.memory_space<vmem>>, vector<1x1x32xf32>
    %446 = vector.shape_cast %445 : vector<1x1x32xf32> to vector<1x32xf32>
    %cst_380 = arith.constant dense<0.000000e+00> : vector<18xf32>
    %447 = vector.multi_reduction <add>, %442, %cst_380 [1] : vector<18x32xf32> to vector<18xf32>
    %448 = vector.shape_cast %447 : vector<18xf32> to vector<18x1xf32>
    %cst_381 = arith.constant 3.200000e+01 : f32
    %449 = vector.broadcast %cst_381 : f32 to vector<18x1xf32>
    %450 = arith.divf %448, %449 : vector<18x1xf32>
    %451 = vector.broadcast %450 : vector<18x1xf32> to vector<18x32xf32>
    %452 = arith.subf %442, %451 : vector<18x32xf32>
    %453 = arith.mulf %452, %452 : vector<18x32xf32>
    %cst_382 = arith.constant dense<0.000000e+00> : vector<18xf32>
    %454 = vector.multi_reduction <add>, %453, %cst_382 [1] : vector<18x32xf32> to vector<18xf32>
    %455 = vector.shape_cast %454 : vector<18xf32> to vector<18x1xf32>
    %cst_383 = arith.constant 3.200000e+01 : f32
    %456 = vector.broadcast %cst_383 : f32 to vector<18x1xf32>
    %457 = arith.divf %455, %456 : vector<18x1xf32>
    %cst_384 = arith.constant 9.99999974E-6 : f32
    %458 = vector.broadcast %cst_384 : f32 to vector<18x1xf32>
    %459 = arith.addf %457, %458 : vector<18x1xf32>
    %460 = math.rsqrt %459 : vector<18x1xf32>
    %461 = vector.broadcast %460 : vector<18x1xf32> to vector<18x32xf32>
    %462 = arith.mulf %452, %461 : vector<18x32xf32>
    %463 = vector.broadcast %444 : vector<1x32xf32> to vector<18x32xf32>
    %464 = arith.mulf %462, %463 : vector<18x32xf32>
    %465 = vector.broadcast %446 : vector<1x32xf32> to vector<18x32xf32>
    %466 = arith.addf %464, %465 : vector<18x32xf32>
    %c0_385 = arith.constant 0 : index
    %c0_386 = arith.constant 0 : index
    %467 = vector.load %arg6[%c0_385, %c0_386] : memref<2x18xf32, #tpu.memory_space<vmem>>, vector<2x18xf32>
    %cst_387 = arith.constant dense<0.000000e+00> : vector<2x32xf32>
    %468 = tpu.matmul %467, %466, %cst_387 {dimension_numbers = #tpu.dot_dimension_numbers<[1], [0], [0], [1], [0, 0, 1, 1], [], []>} : vector<2x18xf32>, vector<18x32xf32>, vector<2x32xf32> -> vector<2x32xf32>
    %c0_388 = arith.constant 0 : index
    %c0_389 = arith.constant 0 : index
    %469 = vector.load %arg27[%c0_388, %c0_389] : memref<32x10xf32, #tpu.memory_space<vmem>>, vector<32x10xf32>
    %cst_390 = arith.constant dense<0.000000e+00> : vector<2x10xf32>
    %470 = tpu.matmul %468, %469, %cst_390 {dimension_numbers = #tpu.dot_dimension_numbers<[1], [0], [0], [1], [0, 0, 1, 1], [], []>} : vector<2x32xf32>, vector<32x10xf32>, vector<2x10xf32> -> vector<2x10xf32>
    %c0_391 = arith.constant 0 : index
    %c0_392 = arith.constant 0 : index
    %471 = vector.load %arg28[%c0_391, %c0_392] : memref<1x10xf32, #tpu.memory_space<vmem>>, vector<1x10xf32>
    %472 = vector.broadcast %471 : vector<1x10xf32> to vector<2x10xf32>
    %473 = arith.addf %470, %472 : vector<2x10xf32>
    %c0_393 = arith.constant 0 : index
    %c0_394 = arith.constant 0 : index
    %474 = vector.load %arg29[%c0_393, %c0_394] : memref<2x10xf32, #tpu.memory_space<vmem>>, vector<2x10xf32>
    tpu.vector_store %arg29[%c0_393, %c0_394], %473 {strides = array<i32>} : memref<2x10xf32, #tpu.memory_space<vmem>>, vector<2x10xf32>,
    return
  }
  func.func @transform_0(%arg0: i32) -> (i32, i32) {
    %c0_i32 = arith.constant 0 : i32
    %c0_i32_0 = arith.constant 0 : i32
    %c0_i32_1 = arith.constant 0 : i32
    return %c0_i32, %c0_i32_0 : i32, i32
  }
  func.func @transform_1(%arg0: i32) -> (i32, i32) {
    %c0_i32 = arith.constant 0 : i32
    %c0_i32_0 = arith.constant 0 : i32
    %c0_i32_1 = arith.constant 0 : i32
    return %c0_i32, %c0_i32_0 : i32, i32
  }
  func.func @transform_2(%arg0: i32) -> (i32, i32) {
    %c0_i32 = arith.constant 0 : i32
    %c0_i32_0 = arith.constant 0 : i32
    %c0_i32_1 = arith.constant 0 : i32
    return %c0_i32, %c0_i32_0 : i32, i32
  }
  func.func @transform_3(%arg0: i32) -> (i32, i32) {
    %c0_i32 = arith.constant 0 : i32
    %c0_i32_0 = arith.constant 0 : i32
    %c0_i32_1 = arith.constant 0 : i32
    return %c0_i32, %c0_i32_0 : i32, i32
  }
  func.func @transform_4(%arg0: i32) -> (i32, i32) {
    %c0_i32 = arith.constant 0 : i32
    %c0_i32_0 = arith.constant 0 : i32
    %c0_i32_1 = arith.constant 0 : i32
    return %c0_i32, %c0_i32_0 : i32, i32
  }
  func.func @transform_5(%arg0: i32) -> (i32, i32) {
    %c0_i32 = arith.constant 0 : i32
    %c0_i32_0 = arith.constant 0 : i32
    %c0_i32_1 = arith.constant 0 : i32
    return %c0_i32, %c0_i32_0 : i32, i32
  }
  func.func @transform_6(%arg0: i32) -> (i32, i32) {
    %c0_i32 = arith.constant 0 : i32
    %c0_i32_0 = arith.constant 0 : i32
    %c0_i32_1 = arith.constant 0 : i32
    return %c0_i32, %c0_i32_0 : i32, i32
  }
  func.func @transform_7(%arg0: i32) -> (i32, i32) {
    %c0_i32 = arith.constant 0 : i32
    %c0_i32_0 = arith.constant 0 : i32
    %c0_i32_1 = arith.constant 0 : i32
    return %c0_i32, %c0_i32_0 : i32, i32
  }
  func.func @transform_8(%arg0: i32) -> (i32, i32) {
    %c0_i32 = arith.constant 0 : i32
    %c0_i32_0 = arith.constant 0 : i32
    %c0_i32_1 = arith.constant 0 : i32
    return %c0_i32, %c0_i32_0 : i32, i32
  }
  func.func @transform_9(%arg0: i32) -> (i32, i32) {
    %c0_i32 = arith.constant 0 : i32
    %c0_i32_0 = arith.constant 0 : i32
    %c0_i32_1 = arith.constant 0 : i32
    return %c0_i32, %c0_i32_0 : i32, i32
  }
  func.func @transform_10(%arg0: i32) -> (i32, i32, i32, i32) {
    %c0_i32 = arith.constant 0 : i32
    %c0_i32_0 = arith.constant 0 : i32
    %c0_i32_1 = arith.constant 0 : i32
    %c0_i32_2 = arith.constant 0 : i32
    %c0_i32_3 = arith.constant 0 : i32
    return %c0_i32, %c0_i32_0, %c0_i32_1, %c0_i32_2 : i32, i32, i32, i32
  }
  func.func @transform_11(%arg0: i32) -> (i32, i32, i32, i32) {
    %c0_i32 = arith.constant 0 : i32
    %c0_i32_0 = arith.constant 0 : i32
    %c0_i32_1 = arith.constant 0 : i32
    %c0_i32_2 = arith.constant 0 : i32
    %c0_i32_3 = arith.constant 0 : i32
    return %c0_i32, %c0_i32_0, %c0_i32_1, %c0_i32_2 : i32, i32, i32, i32
  }
  func.func @transform_12(%arg0: i32) -> (i32, i32, i32, i32) {
    %c0_i32 = arith.constant 0 : i32
    %c0_i32_0 = arith.constant 0 : i32
    %c0_i32_1 = arith.constant 0 : i32
    %c0_i32_2 = arith.constant 0 : i32
    %c0_i32_3 = arith.constant 0 : i32
    return %c0_i32, %c0_i32_0, %c0_i32_1, %c0_i32_2 : i32, i32, i32, i32
  }
  func.func @transform_13(%arg0: i32) -> (i32, i32, i32, i32) {
    %c0_i32 = arith.constant 0 : i32
    %c0_i32_0 = arith.constant 0 : i32
    %c0_i32_1 = arith.constant 0 : i32
    %c0_i32_2 = arith.constant 0 : i32
    %c0_i32_3 = arith.constant 0 : i32
    return %c0_i32, %c0_i32_0, %c0_i32_1, %c0_i32_2 : i32, i32, i32, i32
  }
  func.func @transform_14(%arg0: i32) -> (i32, i32, i32, i32) {
    %c0_i32 = arith.constant 0 : i32
    %c0_i32_0 = arith.constant 0 : i32
    %c0_i32_1 = arith.constant 0 : i32
    %c0_i32_2 = arith.constant 0 : i32
    %c0_i32_3 = arith.constant 0 : i32
    return %c0_i32, %c0_i32_0, %c0_i32_1, %c0_i32_2 : i32, i32, i32, i32
  }
  func.func @transform_15(%arg0: i32) -> (i32, i32, i32, i32) {
    %c0_i32 = arith.constant 0 : i32
    %c0_i32_0 = arith.constant 0 : i32
    %c0_i32_1 = arith.constant 0 : i32
    %c0_i32_2 = arith.constant 0 : i32
    %c0_i32_3 = arith.constant 0 : i32
    return %c0_i32, %c0_i32_0, %c0_i32_1, %c0_i32_2 : i32, i32, i32, i32
  }
  func.func @transform_16(%arg0: i32) -> (i32, i32, i32, i32) {
    %c0_i32 = arith.constant 0 : i32
    %c0_i32_0 = arith.constant 0 : i32
    %c0_i32_1 = arith.constant 0 : i32
    %c0_i32_2 = arith.constant 0 : i32
    %c0_i32_3 = arith.constant 0 : i32
    return %c0_i32, %c0_i32_0, %c0_i32_1, %c0_i32_2 : i32, i32, i32, i32
  }
  func.func @transform_17(%arg0: i32) -> (i32, i32, i32) {
    %c0_i32 = arith.constant 0 : i32
    %c0_i32_0 = arith.constant 0 : i32
    %c0_i32_1 = arith.constant 0 : i32
    %c0_i32_2 = arith.constant 0 : i32
    return %c0_i32, %c0_i32_0, %c0_i32_1 : i32, i32, i32
  }
  func.func @transform_18(%arg0: i32) -> (i32, i32, i32) {
    %c0_i32 = arith.constant 0 : i32
    %c0_i32_0 = arith.constant 0 : i32
    %c0_i32_1 = arith.constant 0 : i32
    %c0_i32_2 = arith.constant 0 : i32
    return %c0_i32, %c0_i32_0, %c0_i32_1 : i32, i32, i32
  }
  func.func @transform_19(%arg0: i32) -> (i32, i32, i32) {
    %c0_i32 = arith.constant 0 : i32
    %c0_i32_0 = arith.constant 0 : i32
    %c0_i32_1 = arith.constant 0 : i32
    %c0_i32_2 = arith.constant 0 : i32
    return %c0_i32, %c0_i32_0, %c0_i32_1 : i32, i32, i32
  }
  func.func @transform_20(%arg0: i32) -> (i32, i32, i32) {
    %c0_i32 = arith.constant 0 : i32
    %c0_i32_0 = arith.constant 0 : i32
    %c0_i32_1 = arith.constant 0 : i32
    %c0_i32_2 = arith.constant 0 : i32
    return %c0_i32, %c0_i32_0, %c0_i32_1 : i32, i32, i32
  }
  func.func @transform_21(%arg0: i32) -> (i32, i32, i32) {
    %c0_i32 = arith.constant 0 : i32
    %c0_i32_0 = arith.constant 0 : i32
    %c0_i32_1 = arith.constant 0 : i32
    %c0_i32_2 = arith.constant 0 : i32
    return %c0_i32, %c0_i32_0, %c0_i32_1 : i32, i32, i32
  }
  func.func @transform_22(%arg0: i32) -> (i32, i32, i32) {
    %c0_i32 = arith.constant 0 : i32
    %c0_i32_0 = arith.constant 0 : i32
    %c0_i32_1 = arith.constant 0 : i32
    %c0_i32_2 = arith.constant 0 : i32
    return %c0_i32, %c0_i32_0, %c0_i32_1 : i32, i32, i32
  }
  func.func @transform_23(%arg0: i32) -> (i32, i32, i32) {
    %c0_i32 = arith.constant 0 : i32
    %c0_i32_0 = arith.constant 0 : i32
    %c0_i32_1 = arith.constant 0 : i32
    %c0_i32_2 = arith.constant 0 : i32
    return %c0_i32, %c0_i32_0, %c0_i32_1 : i32, i32, i32
  }
  func.func @transform_24(%arg0: i32) -> (i32, i32, i32) {
    %c0_i32 = arith.constant 0 : i32
    %c0_i32_0 = arith.constant 0 : i32
    %c0_i32_1 = arith.constant 0 : i32
    %c0_i32_2 = arith.constant 0 : i32
    return %c0_i32, %c0_i32_0, %c0_i32_1 : i32, i32, i32
  }
  func.func @transform_25(%arg0: i32) -> (i32, i32, i32) {
    %c0_i32 = arith.constant 0 : i32
    %c0_i32_0 = arith.constant 0 : i32
    %c0_i32_1 = arith.constant 0 : i32
    %c0_i32_2 = arith.constant 0 : i32
    return %c0_i32, %c0_i32_0, %c0_i32_1 : i32, i32, i32
  }
  func.func @transform_26(%arg0: i32) -> (i32, i32) {
    %c0_i32 = arith.constant 0 : i32
    %c0_i32_0 = arith.constant 0 : i32
    %c0_i32_1 = arith.constant 0 : i32
    return %c0_i32, %c0_i32_0 : i32, i32
  }
  func.func @transform_27(%arg0: i32) -> (i32, i32) {
    %c0_i32 = arith.constant 0 : i32
    %c0_i32_0 = arith.constant 0 : i32
    %c0_i32_1 = arith.constant 0 : i32
    return %c0_i32, %c0_i32_0 : i32, i32
  }
  func.func @transform_28(%arg0: i32) -> (i32, i32) {
    %c0_i32 = arith.constant 0 : i32
    %c0_i32_0 = arith.constant 0 : i32
    %c0_i32_1 = arith.constant 0 : i32
    return %c0_i32, %c0_i32_0 : i32, i32
  }
}

</mosaic_0001>

<llo_original>
// kernel: tile.9
$region0: #{tile.9}
  %s0 = inlined_call_operand.vmem [shape: f32[2,9,32], index: 0, kind: input, shape index: {}]
  %s1 = inlined_call_operand.vmem [shape: f32[18,32], index: 1, kind: output, shape index: {}]
  %v2 = vld [vmem:[%s0] sm:$0xff]
  %vm3 = vcmask 261120
  %4 = vst.msk [vmem:[%s1] sm:$0xff] %vm3, %v2
  %s5 = scalar_lea.vmem %s0, 8
  %s6 = smov 3
  %v7 = vld [vmem:[%s5] ss:$8 sm:%s6]
  %vm8 = vcmask 261120
  %s9 = scalar_lea.vmem %s1, 8
  %10 = vst.msk [vmem:[%s9] sm:$0x3] %vm8, %v7
  %s11 = scalar_lea.vmem %s0, 17
  %v12 = vld [vmem:[%s11] sm:$0xff]
  %vm13 = vcmask 261120
  %s14 = scalar_lea.vmem %s1, 10
  %15 = vst.msk [vmem:[%s14] sm:$0xff] %vm13, %v12

// kernel: transformer_forward.1
$region0: #{transformer_forward.1}
  #allocation0 [shape = 'u32[]', space=smem, size = 0x4, offset = 0x4, fixed_abs, tag = 'smem constant byte address 0x4 - core index']
  #allocation1 [shape = 'u32[144,128]{1,0:T(1,128)}', space=vmem, size = 0x12000, scoped, tag = 'internal scratch']
  %s0 = inlined_call_operand.vmem [shape: f32[18,3], index: 0, kind: input, shape index: {}]
  %s1 = inlined_call_operand.vmem [shape: f32[18,32], index: 1, kind: input, shape index: {}]
  %s2 = inlined_call_operand.vmem [shape: f32[1,32], index: 2, kind: input, shape index: {}]
  %s3 = inlined_call_operand.vmem [shape: f32[18,1], index: 3, kind: input, shape index: {}]
  %s4 = inlined_call_operand.vmem [shape: f32[18,18], index: 4, kind: input, shape index: {}]
  %s5 = inlined_call_operand.vmem [shape: f32[2,18], index: 5, kind: input, shape index: {}]
  %s6 = inlined_call_operand.vmem [shape: f32[3,64], index: 6, kind: input, shape index: {}]
  %s7 = inlined_call_operand.vmem [shape: f32[1,64], index: 7, kind: input, shape index: {}]
  %s8 = inlined_call_operand.vmem [shape: f32[64,32], index: 8, kind: input, shape index: {}]
  %s9 = inlined_call_operand.vmem [shape: f32[1,32], index: 9, kind: input, shape index: {}]
  %s10 = inlined_call_operand.vmem [shape: f32[2,4,32,8], index: 10, kind: input, shape index: {}]
  %s11 = inlined_call_operand.vmem [shape: f32[2,4,1,8], index: 11, kind: input, shape index: {}]
  %s12 = inlined_call_operand.vmem [shape: f32[2,4,32,8], index: 12, kind: input, shape index: {}]
  %s13 = inlined_call_operand.vmem [shape: f32[2,4,1,8], index: 13, kind: input, shape index: {}]
  %s14 = inlined_call_operand.vmem [shape: f32[2,4,32,8], index: 14, kind: input, shape index: {}]
  %s15 = inlined_call_operand.vmem [shape: f32[2,4,1,8], index: 15, kind: input, shape index: {}]
  %s16 = inlined_call_operand.vmem [shape: f32[2,4,8,32], index: 16, kind: input, shape index: {}]
  %s17 = inlined_call_operand.vmem [shape: f32[2,1,32], index: 17, kind: input, shape index: {}]
  %s18 = inlined_call_operand.vmem [shape: f32[2,1,32], index: 18, kind: input, shape index: {}]
  %s19 = inlined_call_operand.vmem [shape: f32[2,1,32], index: 19, kind: input, shape index: {}]
  %s20 = inlined_call_operand.vmem [shape: f32[2,32,64], index: 20, kind: input, shape index: {}]
  %s21 = inlined_call_operand.vmem [shape: f32[2,1,64], index: 21, kind: input, shape index: {}]
  %s22 = inlined_call_operand.vmem [shape: f32[2,64,32], index: 22, kind: input, shape index: {}]
  %s23 = inlined_call_operand.vmem [shape: f32[2,1,32], index: 23, kind: input, shape index: {}]
  %s24 = inlined_call_operand.vmem [shape: f32[2,1,32], index: 24, kind: input, shape index: {}]
  %s25 = inlined_call_operand.vmem [shape: f32[2,1,32], index: 25, kind: input, shape index: {}]
  %s26 = inlined_call_operand.vmem [shape: f32[32,10], index: 26, kind: input, shape index: {}]
  %s27 = inlined_call_operand.vmem [shape: f32[1,10], index: 27, kind: input, shape index: {}]
  %s28 = inlined_call_operand.hbm [shape: f32[2,10], index: 28, kind: output, shape index: {}]
  %s29 = sld [smem:[#allocation0]]
  $region122: #{transformer_forward.1} parent=0
    _
  %s31 = ssub.s32 1, %s29
  %s32 = scalar_select 0, %s31, %s29
  $region1: #{transformer_forward.1} parent=0
    #allocation2 [shape = 'u8[1024]{0}', space=vmem, size = 0x400, scoped, tag = 'output window, operand 0, single buffered']
    #allocation3 [shape = 's32[1]{0}', space=sflag, size = 0x4, scoped, tag = 'scoped memory for transformer_forward.1']
    %33 = vsyncpa [#allocation3], 0
    // Predicated region
    $region2: #{transformer_forward.1} parent=1 // pred_check
      _
    $region3: #{transformer_forward.1} parent=1 // pred_check_branch
      %35 = sbr.rel (0) target = $region5
    $region4: #{transformer_forward.1} parent=1 // pred_region
      _
    $region5: #{transformer_forward.1} parent=1 // pred_fallthru
      _
    // Predicated region
    $region6: #{transformer_forward.1} parent=1 // pred_check
      _
    $region7: #{transformer_forward.1} parent=1 // pred_check_branch
      %37 = sbr.rel (0) target = $region9
    $region8: #{transformer_forward.1} parent=1 // pred_region
      _
    $region9: #{transformer_forward.1} parent=1 // pred_fallthru
      _
    // Predicated region
    $region10: #{transformer_forward.1} parent=1 // pred_check
      _
    $region11: #{transformer_forward.1} parent=1 // pred_check_branch
      %39 = sbr.rel (0) target = $region13
    $region12: #{transformer_forward.1} parent=1 // pred_region
      _
    $region13: #{transformer_forward.1} parent=1 // pred_fallthru
      _
    // Predicated region
    $region14: #{transformer_forward.1} parent=1 // pred_check
      _
    $region15: #{transformer_forward.1} parent=1 // pred_check_branch
      %41 = sbr.rel (0) target = $region17
    $region16: #{transformer_forward.1} parent=1 // pred_region
      _
    $region17: #{transformer_forward.1} parent=1 // pred_fallthru
      _
    // Predicated region
    $region18: #{transformer_forward.1} parent=1 // pred_check
      _
    $region19: #{transformer_forward.1} parent=1 // pred_check_branch
      %43 = sbr.rel (0) target = $region21
    $region20: #{transformer_forward.1} parent=1 // pred_region
      _
    $region21: #{transformer_forward.1} parent=1 // pred_fallthru
      _
    // Predicated region
    $region22: #{transformer_forward.1} parent=1 // pred_check
      _
    $region23: #{transformer_forward.1} parent=1 // pred_check_branch
      %45 = sbr.rel (0) target = $region25
    $region24: #{transformer_forward.1} parent=1 // pred_region
      _
    $region25: #{transformer_forward.1} parent=1 // pred_fallthru
      _
    // Predicated region
    $region26: #{transformer_forward.1} parent=1 // pred_check
      _
    $region27: #{transformer_forward.1} parent=1 // pred_check_branch
      %47 = sbr.rel (0) target = $region29
    $region28: #{transformer_forward.1} parent=1 // pred_region
      _
    $region29: #{transformer_forward.1} parent=1 // pred_fallthru
      _
    // Predicated region
    $region30: #{transformer_forward.1} parent=1 // pred_check
      _
    $region31: #{transformer_forward.1} parent=1 // pred_check_branch
      %49 = sbr.rel (0) target = $region33
    $region32: #{transformer_forward.1} parent=1 // pred_region
      _
    $region33: #{transformer_forward.1} parent=1 // pred_fallthru
      _
    // Predicated region
    $region34: #{transformer_forward.1} parent=1 // pred_check
      _
    $region35: #{transformer_forward.1} parent=1 // pred_check_branch
      %51 = sbr.rel (0) target = $region37
    $region36: #{transformer_forward.1} parent=1 // pred_region
      _
    $region37: #{transformer_forward.1} parent=1 // pred_fallthru
      _
    // Predicated region
    $region38: #{transformer_forward.1} parent=1 // pred_check
      _
    $region39: #{transformer_forward.1} parent=1 // pred_check_branch
      %53 = sbr.rel (0) target = $region41
    $region40: #{transformer_forward.1} parent=1 // pred_region
      _
    $region41: #{transformer_forward.1} parent=1 // pred_fallthru
      _
    // Predicated region
    $region42: #{transformer_forward.1} parent=1 // pred_check
      _
    $region43: #{transformer_forward.1} parent=1 // pred_check_branch
      %55 = sbr.rel (0) target = $region45
    $region44: #{transformer_forward.1} parent=1 // pred_region
      _
    $region45: #{transformer_forward.1} parent=1 // pred_fallthru
      _
    // Predicated region
    $region46: #{transformer_forward.1} parent=1 // pred_check
      _
    $region47: #{transformer_forward.1} parent=1 // pred_check_branch
      %57 = sbr.rel (0) target = $region49
    $region48: #{transformer_forward.1} parent=1 // pred_region
      _
    $region49: #{transformer_forward.1} parent=1 // pred_fallthru
      _
    // Predicated region
    $region50: #{transformer_forward.1} parent=1 // pred_check
      _
    $region51: #{transformer_forward.1} parent=1 // pred_check_branch
      %59 = sbr.rel (0) target = $region53
    $region52: #{transformer_forward.1} parent=1 // pred_region
      _
    $region53: #{transformer_forward.1} parent=1 // pred_fallthru
      _
    // Predicated region
    $region54: #{transformer_forward.1} parent=1 // pred_check
      _
    $region55: #{transformer_forward.1} parent=1 // pred_check_branch
      %61 = sbr.rel (0) target = $region57
    $region56: #{transformer_forward.1} parent=1 // pred_region
      _
    $region57: #{transformer_forward.1} parent=1 // pred_fallthru
      _
    // Predicated region
    $region58: #{transformer_forward.1} parent=1 // pred_check
      _
    $region59: #{transformer_forward.1} parent=1 // pred_check_branch
      %63 = sbr.rel (0) target = $region61
    $region60: #{transformer_forward.1} parent=1 // pred_region
      _
    $region61: #{transformer_forward.1} parent=1 // pred_fallthru
      _
    // Predicated region
    $region62: #{transformer_forward.1} parent=1 // pred_check
      _
    $region63: #{transformer_forward.1} parent=1 // pred_check_branch
      %65 = sbr.rel (0) target = $region65
    $region64: #{transformer_forward.1} parent=1 // pred_region
      _
    $region65: #{transformer_forward.1} parent=1 // pred_fallthru
      _
    // Predicated region
    $region66: #{transformer_forward.1} parent=1 // pred_check
      _
    $region67: #{transformer_forward.1} parent=1 // pred_check_branch
      %67 = sbr.rel (0) target = $region69
    $region68: #{transformer_forward.1} parent=1 // pred_region
      _
    $region69: #{transformer_forward.1} parent=1 // pred_fallthru
      _
    // Predicated region
    $region70: #{transformer_forward.1} parent=1 // pred_check
      _
    $region71: #{transformer_forward.1} parent=1 // pred_check_branch
      %69 = sbr.rel (0) target = $region73
    $region72: #{transformer_forward.1} parent=1 // pred_region
      _
    $region73: #{transformer_forward.1} parent=1 // pred_fallthru
      _
    // Predicated region
    $region74: #{transformer_forward.1} parent=1 // pred_check
      _
    $region75: #{transformer_forward.1} parent=1 // pred_check_branch
      %71 = sbr.rel (0) target = $region77
    $region76: #{transformer_forward.1} parent=1 // pred_region
      _
    $region77: #{transformer_forward.1} parent=1 // pred_fallthru
      _
    // Predicated region
    $region78: #{transformer_forward.1} parent=1 // pred_check
      _
    $region79: #{transformer_forward.1} parent=1 // pred_check_branch
      %73 = sbr.rel (0) target = $region81
    $region80: #{transformer_forward.1} parent=1 // pred_region
      _
    $region81: #{transformer_forward.1} parent=1 // pred_fallthru
      _
    // Predicated region
    $region82: #{transformer_forward.1} parent=1 // pred_check
      _
    $region83: #{transformer_forward.1} parent=1 // pred_check_branch
      %75 = sbr.rel (0) target = $region85
    $region84: #{transformer_forward.1} parent=1 // pred_region
      _
    $region85: #{transformer_forward.1} parent=1 // pred_fallthru
      _
    // Predicated region
    $region86: #{transformer_forward.1} parent=1 // pred_check
      _
    $region87: #{transformer_forward.1} parent=1 // pred_check_branch
      %77 = sbr.rel (0) target = $region89
    $region88: #{transformer_forward.1} parent=1 // pred_region
      _
    $region89: #{transformer_forward.1} parent=1 // pred_fallthru
      _
    // Predicated region
    $region90: #{transformer_forward.1} parent=1 // pred_check
      _
    $region91: #{transformer_forward.1} parent=1 // pred_check_branch
      %79 = sbr.rel (0) target = $region93
    $region92: #{transformer_forward.1} parent=1 // pred_region
      _
    $region93: #{transformer_forward.1} parent=1 // pred_fallthru
      _
    // Predicated region
    $region94: #{transformer_forward.1} parent=1 // pred_check
      _
    $region95: #{transformer_forward.1} parent=1 // pred_check_branch
      %81 = sbr.rel (0) target = $region97
    $region96: #{transformer_forward.1} parent=1 // pred_region
      _
    $region97: #{transformer_forward.1} parent=1 // pred_fallthru
      _
    // Predicated region
    $region98: #{transformer_forward.1} parent=1 // pred_check
      _
    $region99: #{transformer_forward.1} parent=1 // pred_check_branch
      %83 = sbr.rel (0) target = $region101
    $region100: #{transformer_forward.1} parent=1 // pred_region
      _
    $region101: #{transformer_forward.1} parent=1 // pred_fallthru
      _
    // Predicated region
    $region102: #{transformer_forward.1} parent=1 // pred_check
      _
    $region103: #{transformer_forward.1} parent=1 // pred_check_branch
      %85 = sbr.rel (0) target = $region105
    $region104: #{transformer_forward.1} parent=1 // pred_region
      _
    $region105: #{transformer_forward.1} parent=1 // pred_fallthru
      _
    // Predicated region
    $region106: #{transformer_forward.1} parent=1 // pred_check
      _
    $region107: #{transformer_forward.1} parent=1 // pred_check_branch
      %87 = sbr.rel (0) target = $region109
    $region108: #{transformer_forward.1} parent=1 // pred_region
      _
    $region109: #{transformer_forward.1} parent=1 // pred_fallthru
      _
    // Predicated region
    $region110: #{transformer_forward.1} parent=1 // pred_check
      _
    $region111: #{transformer_forward.1} parent=1 // pred_check_branch
      %89 = sbr.rel (0) target = $region113
    $region112: #{transformer_forward.1} parent=1 // pred_region
      _
    $region113: #{transformer_forward.1} parent=1 // pred_fallthru
      _
    %v90 = vld [vmem:[%s0] sm:$0xff]
    %v91 = vld [vmem:[%s0 + $0x8] sm:$0xff]
    %v92 = vld [vmem:[%s0 + $0x10] sm:$0x3]
    %v93 = vld [vmem:[%s6] sm:$0x7]
    %v94 = vld [vmem:[%s7] sm:$0x1]
    %v96 = vlaneseq
    %v97 = vshrl.u32 %v96, 7
    %v98 = vsub.s32 0, %v97
    %v99 = vrot.slane %v94, %v98
    %vm101 = vcmask 23552
    %v103 = vsel %vm101, %v90, 0
    %v106 = vsel %vm101, %v91, 0
    %v109 = vsel %vm101, %v92, 0
    %vm111 = vcmask 1042432
    %v113 = vsel %vm111, %v93, 0
    %115 = vmatprep.subr.mxu0 0.0
    %116 = vmatpush1.msra.mxu0 %v113
    %117 = vmatprep.subr.mxu0 0.0
    %118 = vmatpush1.msra.mxu0 0.0
    %119 = vmatprep.subr.mxu0 0.0
    %120 = vmatpush1.msra.mxu0 0.0
    %121 = vmatprep.subr.mxu0 0.0
    %122 = vmatpush1.msra.mxu0 0.0
    %123 = vmatprep.subr.mxu0 0.0
    %124 = vmatpush1.msra.mxu0 0.0
    %125 = vmatprep.subr.mxu0 0.0
    %126 = vmatpush1.msra.mxu0 0.0
    %127 = vmatprep.subr.mxu0 0.0
    %128 = vmatpush1.msra.mxu0 0.0
    %129 = vmatprep.subr.mxu0 0.0
    %130 = vmatpush1.msra.mxu0 0.0
    %131 = vmatprep.subr.mxu0 0.0
    %132 = vmatpush1.msra.mxu0 0.0
    %133 = vmatprep.subr.mxu0 0.0
    %134 = vmatpush1.msra.mxu0 0.0
    %135 = vmatprep.subr.mxu0 0.0
    %136 = vmatpush1.msra.mxu0 0.0
    %137 = vmatprep.subr.mxu0 0.0
    %138 = vmatpush1.msra.mxu0 0.0
    %139 = vmatprep.subr.mxu0 0.0
    %140 = vmatpush1.msra.mxu0 0.0
    %141 = vmatprep.subr.mxu0 0.0
    %142 = vmatpush1.msra.mxu0 0.0
    %143 = vmatprep.subr.mxu0 0.0
    %144 = vmatpush1.msra.mxu0 0.0
    %145 = vmatprep.subr.mxu0 0.0
    %146 = vmatpush1.msra.mxu0 0.0
    %147 = vmatprep.subr.mxu0 0.0
    %148 = vmatpush1.msra.mxu0 0.0
    %149 = vmatprep.subr.mxu0 0.0
    %150 = vmatpush1.msra.mxu0 0.0
    %151 = vmatprep.subr.mxu0 0.0
    %152 = vmatpush1.msra.mxu0 0.0
    %153 = vmatprep.subr.mxu0 0.0
    %154 = vmatpush1.msra.mxu0 0.0
    %155 = vmatprep.subr.mxu0 0.0
    %156 = vmatpush1.msra.mxu0 0.0
    %157 = vmatprep.subr.mxu0 0.0
    %158 = vmatpush1.msra.mxu0 0.0
    %159 = vmatprep.subr.mxu0 0.0
    %160 = vmatpush1.msra.mxu0 0.0
    %161 = vmatprep.subr.mxu0 0.0
    %162 = vmatpush1.msra.mxu0 0.0
    %163 = vmatprep.subr.mxu0 0.0
    %164 = vmatpush1.msra.mxu0 0.0
    %165 = vmatprep.subr.mxu0 0.0
    %166 = vmatpush1.msra.mxu0 0.0
    %167 = vmatprep.subr.mxu0 0.0
    %168 = vmatpush1.msra.mxu0 0.0
    %169 = vmatprep.subr.mxu0 0.0
    %170 = vmatpush1.msra.mxu0 0.0
    %171 = vmatprep.subr.mxu0 0.0
    %172 = vmatpush1.msra.mxu0 0.0
    %173 = vmatprep.subr.mxu0 0.0
    %174 = vmatpush1.msra.mxu0 0.0
    %175 = vmatprep.subr.mxu0 0.0
    %176 = vmatpush1.msra.mxu0 0.0
    %177 = vmatprep.subr.mxu0 0.0
    %178 = vmatpush1.msra.mxu0 0.0
    %179 = vmatprep.mubr.f32.mxu0 0.0
    %180 = vmatmul.mubr.f32.gmra.mrb[0].mxu0 %v103
    %v181 = vpop.f32.mrb[0].mxu0
    %v182 = vadd.f32 %v99, %v181
    %v183 = vpop.f32.mrb[0].mxu0
    %184 = vmatprep.mubr.f32.mxu0 0.0
    %185 = vmatmul.mubr.f32.gmra.mrb[0].mxu0 %v106
    %v186 = vpop.f32.mrb[0].mxu0
    %v187 = vadd.f32 %v99, %v186
    %v188 = vpop.f32.mrb[0].mxu0
    %189 = vmatprep.mubr.f32.mxu0 0.0
    %190 = vmatmul.mubr.f32.gmra.mrb[0].mxu0 %v109
    %v191 = vpop.f32.mrb[0].mxu0
    %v192 = vadd.f32 %v99, %v191
    %v193 = vpop.f32.mrb[0].mxu0
    %194 = vdwg.mxu0
    %v195 = vmax.f32 %v182, 0.0
    %v196 = vmax.f32 %v187, 0.0
    %v197 = vmax.f32 %v192, 0.0
    %v198 = vld [vmem:[%s8] sm:$0xff]
    %v199 = vld [vmem:[%s8 + $0x8] sm:$0xff]
    %v200 = vld [vmem:[%s8 + $0x10] sm:$0xff]
    %v201 = vld [vmem:[%s8 + $0x18] sm:$0xff]
    %v202 = vld [vmem:[%s8 + $0x20] sm:$0xff]
    %v203 = vld [vmem:[%s8 + $0x28] sm:$0xff]
    %v204 = vld [vmem:[%s8 + $0x30] sm:$0xff]
    %v205 = vld [vmem:[%s8 + $0x38] sm:$0xff]
    %v206 = vld [vmem:[%s9] sm:$0x1]
    %v208 = vlaneseq
    %v209 = vshrl.u32 %v208, 7
    %v210 = vsub.s32 0, %v209
    %v211 = vrot.slane %v206, %v210
    %vm213 = vcmask 523264
    %v215 = vsel %vm213, %v195, 0
    %v218 = vsel %vm213, %v196, 0
    %v221 = vsel %vm213, %v197, 0
    %223 = vmatprep.subr.mxu0 0.0
    %224 = vmatpush1.msra.mxu0 %v198
    %225 = vmatprep.subr.mxu0 0.0
    %226 = vmatpush1.msra.mxu0 %v199
    %227 = vmatprep.subr.mxu0 0.0
    %228 = vmatpush1.msra.mxu0 %v200
    %229 = vmatprep.subr.mxu0 0.0
    %230 = vmatpush1.msra.mxu0 %v201
    %231 = vmatprep.subr.mxu0 0.0
    %232 = vmatpush1.msra.mxu0 %v202
    %233 = vmatprep.subr.mxu0 0.0
    %234 = vmatpush1.msra.mxu0 %v203
    %235 = vmatprep.subr.mxu0 0.0
    %236 = vmatpush1.msra.mxu0 %v204
    %237 = vmatprep.subr.mxu0 0.0
    %238 = vmatpush1.msra.mxu0 %v205
    %239 = vmatprep.subr.mxu0 0.0
    %240 = vmatpush1.msra.mxu0 0.0
    %241 = vmatprep.subr.mxu0 0.0
    %242 = vmatpush1.msra.mxu0 0.0
    %243 = vmatprep.subr.mxu0 0.0
    %244 = vmatpush1.msra.mxu0 0.0
    %245 = vmatprep.subr.mxu0 0.0
    %246 = vmatpush1.msra.mxu0 0.0
    %247 = vmatprep.subr.mxu0 0.0
    %248 = vmatpush1.msra.mxu0 0.0
    %249 = vmatprep.subr.mxu0 0.0
    %250 = vmatpush1.msra.mxu0 0.0
    %251 = vmatprep.subr.mxu0 0.0
    %252 = vmatpush1.msra.mxu0 0.0
    %253 = vmatprep.subr.mxu0 0.0
    %254 = vmatpush1.msra.mxu0 0.0
    %255 = vmatprep.subr.mxu0 0.0
    %256 = vmatpush1.msra.mxu0 0.0
    %257 = vmatprep.subr.mxu0 0.0
    %258 = vmatpush1.msra.mxu0 0.0
    %259 = vmatprep.subr.mxu0 0.0
    %260 = vmatpush1.msra.mxu0 0.0
    %261 = vmatprep.subr.mxu0 0.0
    %262 = vmatpush1.msra.mxu0 0.0
    %263 = vmatprep.subr.mxu0 0.0
    %264 = vmatpush1.msra.mxu0 0.0
    %265 = vmatprep.subr.mxu0 0.0
    %266 = vmatpush1.msra.mxu0 0.0
    %267 = vmatprep.subr.mxu0 0.0
    %268 = vmatpush1.msra.mxu0 0.0
    %269 = vmatprep.subr.mxu0 0.0
    %270 = vmatpush1.msra.mxu0 0.0
    %271 = vmatprep.subr.mxu0 0.0
    %272 = vmatpush1.msra.mxu0 0.0
    %273 = vmatprep.subr.mxu0 0.0
    %274 = vmatpush1.msra.mxu0 0.0
    %275 = vmatprep.subr.mxu0 0.0
    %276 = vmatpush1.msra.mxu0 0.0
    %277 = vmatprep.subr.mxu0 0.0
    %278 = vmatpush1.msra.mxu0 0.0
    %279 = vmatprep.subr.mxu0 0.0
    %280 = vmatpush1.msra.mxu0 0.0
    %281 = vmatprep.subr.mxu0 0.0
    %282 = vmatpush1.msra.mxu0 0.0
    %283 = vmatprep.subr.mxu0 0.0
    %284 = vmatpush1.msra.mxu0 0.0
    %285 = vmatprep.subr.mxu0 0.0
    %286 = vmatpush1.msra.mxu0 0.0
    %287 = vmatprep.mubr.f32.mxu0 0.0
    %288 = vmatmul.mubr.f32.gmra.mrb[0].mxu0 %v215
    %v289 = vpop.f32.mrb[0].mxu0
    %v290 = vadd.f32 %v211, %v289
    %v291 = vpop.f32.mrb[0].mxu0
    %292 = vmatprep.mubr.f32.mxu0 0.0
    %293 = vmatmul.mubr.f32.gmra.mrb[0].mxu0 %v218
    %v294 = vpop.f32.mrb[0].mxu0
    %v295 = vadd.f32 %v211, %v294
    %v296 = vpop.f32.mrb[0].mxu0
    %297 = vmatprep.mubr.f32.mxu0 0.0
    %298 = vmatmul.mubr.f32.gmra.mrb[0].mxu0 %v221
    %v299 = vpop.f32.mrb[0].mxu0
    %v300 = vadd.f32 %v211, %v299
    %v301 = vpop.f32.mrb[0].mxu0
    %302 = vdwg.mxu0
    %v303 = vld [vmem:[%s3] sm:$0xff]
    %v304 = vld [vmem:[%s3 + $0x8] sm:$0xff]
    %v305 = vld [vmem:[%s3 + $0x10] sm:$0x3]
    %vm306 = vcmp.ne.f32.partialorder %v303, 0.0
    %vm307 = vcmp.ne.f32.partialorder %v304, 0.0
    %vm308 = vcmp.ne.f32.partialorder %v305, 0.0
    %v309 = vld [vmem:[%s2] sm:$0x1]
    %v310 = vsel %vm306, 1, 0
    %v311 = vsel %vm307, 1, 0
    %v312 = vsel %vm308, 1, 0
    %313 = vset.pattern.permute.xlu0 0
    %314 = vperm.xlu0 %313, %v310
    %v315 = vpop.permute.xlu0 %314
    %316 = vset.pattern.permute.xlu0 0
    %317 = vperm.xlu0 %316, %v311
    %v318 = vpop.permute.xlu0 %317
    %319 = vset.pattern.permute.xlu0 0
    %320 = vperm.xlu0 %319, %v312
    %v321 = vpop.permute.xlu0 %320
    %vm322 = vcmp.eq.s32.totalorder %v315, 1
    %vm323 = vcmp.eq.s32.totalorder %v318, 1
    %vm324 = vcmp.eq.s32.totalorder %v321, 1
    %v326 = vlaneseq
    %v327 = vshrl.u32 %v326, 7
    %v328 = vsub.s32 0, %v327
    %v329 = vrot.slane %v309, %v328
    %v331 = vsel %vm322, %v329, %v290
    %v332 = vsel %vm323, %v329, %v295
    %v333 = vsel %vm324, %v329, %v300
    %v334 = vld [vmem:[%s1] sm:$0xff]
    %v335 = vld [vmem:[%s1 + $0x8] sm:$0xff]
    %v336 = vld [vmem:[%s1 + $0x10] sm:$0x3]
    %v337 = vadd.f32 %v331, %v334
    %v338 = vadd.f32 %v332, %v335
    %v339 = vadd.f32 %v333, %v336
    %v340 = vld [vmem:[%s4] sm:$0xff]
    %v341 = vld [vmem:[%s4 + $0x8] sm:$0xff]
    %v342 = vld [vmem:[%s4 + $0x10] sm:$0x3]
    %v343 = vld [vmem:[%s10] sm:$0xff]
    %v344 = vld [vmem:[%s10 + $0x8] sm:$0xff]
    %v345 = vld [vmem:[%s10 + $0x10] sm:$0xff]
    %v346 = vld [vmem:[%s10 + $0x18] sm:$0xff]
    %v347 = vld [vmem:[%s11] sm:$0x1]
    %v349 = vlaneseq
    %v350 = vshrl.u32 %v349, 7
    %v351 = vsub.s32 0, %v350
    %v352 = vrot.slane %v347, %v351
    %vm354 = vcmask 261120
    %v356 = vsel %vm354, %v337, 0
    %v359 = vsel %vm354, %v338, 0
    %v362 = vsel %vm354, %v339, 0
    %364 = vmatprep.subr.mxu0 0.0
    %365 = vmatpush1.msra.mxu0 %v343
    %366 = vmatprep.subr.mxu0 0.0
    %367 = vmatpush1.msra.mxu0 %v344
    %368 = vmatprep.subr.mxu0 0.0
    %369 = vmatpush1.msra.mxu0 %v345
    %370 = vmatprep.subr.mxu0 0.0
    %371 = vmatpush1.msra.mxu0 %v346
    %372 = vmatprep.subr.mxu0 0.0
    %373 = vmatpush1.msra.mxu0 0.0
    %374 = vmatprep.subr.mxu0 0.0
    %375 = vmatpush1.msra.mxu0 0.0
    %376 = vmatprep.subr.mxu0 0.0
    %377 = vmatpush1.msra.mxu0 0.0
    %378 = vmatprep.subr.mxu0 0.0
    %379 = vmatpush1.msra.mxu0 0.0
    %380 = vmatprep.subr.mxu0 0.0
    %381 = vmatpush1.msra.mxu0 0.0
    %382 = vmatprep.subr.mxu0 0.0
    %383 = vmatpush1.msra.mxu0 0.0
    %384 = vmatprep.subr.mxu0 0.0
    %385 = vmatpush1.msra.mxu0 0.0
    %386 = vmatprep.subr.mxu0 0.0
    %387 = vmatpush1.msra.mxu0 0.0
    %388 = vmatprep.subr.mxu0 0.0
    %389 = vmatpush1.msra.mxu0 0.0
    %390 = vmatprep.subr.mxu0 0.0
    %391 = vmatpush1.msra.mxu0 0.0
    %392 = vmatprep.subr.mxu0 0.0
    %393 = vmatpush1.msra.mxu0 0.0
    %394 = vmatprep.subr.mxu0 0.0
    %395 = vmatpush1.msra.mxu0 0.0
    %396 = vmatprep.subr.mxu0 0.0
    %397 = vmatpush1.msra.mxu0 0.0
    %398 = vmatprep.subr.mxu0 0.0
    %399 = vmatpush1.msra.mxu0 0.0
    %400 = vmatprep.subr.mxu0 0.0
    %401 = vmatpush1.msra.mxu0 0.0
    %402 = vmatprep.subr.mxu0 0.0
    %403 = vmatpush1.msra.mxu0 0.0
    %404 = vmatprep.subr.mxu0 0.0
    %405 = vmatpush1.msra.mxu0 0.0
    %406 = vmatprep.subr.mxu0 0.0
    %407 = vmatpush1.msra.mxu0 0.0
    %408 = vmatprep.subr.mxu0 0.0
    %409 = vmatpush1.msra.mxu0 0.0
    %410 = vmatprep.subr.mxu0 0.0
    %411 = vmatpush1.msra.mxu0 0.0
    %412 = vmatprep.subr.mxu0 0.0
    %413 = vmatpush1.msra.mxu0 0.0
    %414 = vmatprep.subr.mxu0 0.0
    %415 = vmatpush1.msra.mxu0 0.0
    %416 = vmatprep.subr.mxu0 0.0
    %417 = vmatpush1.msra.mxu0 0.0
    %418 = vmatprep.subr.mxu0 0.0
    %419 = vmatpush1.msra.mxu0 0.0
    %420 = vmatprep.subr.mxu0 0.0
    %421 = vmatpush1.msra.mxu0 0.0
    %422 = vmatprep.subr.mxu0 0.0
    %423 = vmatpush1.msra.mxu0 0.0
    %424 = vmatprep.subr.mxu0 0.0
    %425 = vmatpush1.msra.mxu0 0.0
    %426 = vmatprep.subr.mxu0 0.0
    %427 = vmatpush1.msra.mxu0 0.0
    %428 = vmatprep.mubr.f32.mxu0 0.0
    %429 = vmatmul.mubr.f32.gmra.mrb[0].mxu0 %v356
    %v430 = vpop.f32.mrb[0].mxu0
    %v431 = vadd.f32 %v352, %v430
    %v432 = vpop.f32.mrb[0].mxu0
    %433 = vmatprep.mubr.f32.mxu0 0.0
    %434 = vmatmul.mubr.f32.gmra.mrb[0].mxu0 %v359
    %v435 = vpop.f32.mrb[0].mxu0
    %v436 = vadd.f32 %v352, %v435
    %v437 = vpop.f32.mrb[0].mxu0
    %438 = vmatprep.mubr.f32.mxu0 0.0
    %439 = vmatmul.mubr.f32.gmra.mrb[0].mxu0 %v362
    %v440 = vpop.f32.mrb[0].mxu0
    %v441 = vadd.f32 %v352, %v440
    %v442 = vpop.f32.mrb[0].mxu0
    %443 = vdwg.mxu0
    %v444 = vld [vmem:[%s12] sm:$0xff]
    %v445 = vld [vmem:[%s12 + $0x8] sm:$0xff]
    %v446 = vld [vmem:[%s12 + $0x10] sm:$0xff]
    %v447 = vld [vmem:[%s12 + $0x18] sm:$0xff]
    %v448 = vld [vmem:[%s13] sm:$0x1]
    %v450 = vlaneseq
    %v451 = vshrl.u32 %v450, 7
    %v452 = vsub.s32 0, %v451
    %v453 = vrot.slane %v448, %v452
    %455 = vmatprep.subr.mxu0 0.0
    %456 = vmatpush1.msra.mxu0 %v444
    %457 = vmatprep.subr.mxu0 0.0
    %458 = vmatpush1.msra.mxu0 %v445
    %459 = vmatprep.subr.mxu0 0.0
    %460 = vmatpush1.msra.mxu0 %v446
    %461 = vmatprep.subr.mxu0 0.0
    %462 = vmatpush1.msra.mxu0 %v447
    %463 = vmatprep.subr.mxu0 0.0
    %464 = vmatpush1.msra.mxu0 0.0
    %465 = vmatprep.subr.mxu0 0.0
    %466 = vmatpush1.msra.mxu0 0.0
    %467 = vmatprep.subr.mxu0 0.0
    %468 = vmatpush1.msra.mxu0 0.0
    %469 = vmatprep.subr.mxu0 0.0
    %470 = vmatpush1.msra.mxu0 0.0
    %471 = vmatprep.subr.mxu0 0.0
    %472 = vmatpush1.msra.mxu0 0.0
    %473 = vmatprep.subr.mxu0 0.0
    %474 = vmatpush1.msra.mxu0 0.0
    %475 = vmatprep.subr.mxu0 0.0
    %476 = vmatpush1.msra.mxu0 0.0
    %477 = vmatprep.subr.mxu0 0.0
    %478 = vmatpush1.msra.mxu0 0.0
    %479 = vmatprep.subr.mxu0 0.0
    %480 = vmatpush1.msra.mxu0 0.0
    %481 = vmatprep.subr.mxu0 0.0
    %482 = vmatpush1.msra.mxu0 0.0
    %483 = vmatprep.subr.mxu0 0.0
    %484 = vmatpush1.msra.mxu0 0.0
    %485 = vmatprep.subr.mxu0 0.0
    %486 = vmatpush1.msra.mxu0 0.0
    %487 = vmatprep.subr.mxu0 0.0
    %488 = vmatpush1.msra.mxu0 0.0
    %489 = vmatprep.subr.mxu0 0.0
    %490 = vmatpush1.msra.mxu0 0.0
    %491 = vmatprep.subr.mxu0 0.0
    %492 = vmatpush1.msra.mxu0 0.0
    %493 = vmatprep.subr.mxu0 0.0
    %494 = vmatpush1.msra.mxu0 0.0
    %495 = vmatprep.subr.mxu0 0.0
    %496 = vmatpush1.msra.mxu0 0.0
    %497 = vmatprep.subr.mxu0 0.0
    %498 = vmatpush1.msra.mxu0 0.0
    %499 = vmatprep.subr.mxu0 0.0
    %500 = vmatpush1.msra.mxu0 0.0
    %501 = vmatprep.subr.mxu0 0.0
    %502 = vmatpush1.msra.mxu0 0.0
    %503 = vmatprep.subr.mxu0 0.0
    %504 = vmatpush1.msra.mxu0 0.0
    %505 = vmatprep.subr.mxu0 0.0
    %506 = vmatpush1.msra.mxu0 0.0
    %507 = vmatprep.subr.mxu0 0.0
    %508 = vmatpush1.msra.mxu0 0.0
    %509 = vmatprep.subr.mxu0 0.0
    %510 = vmatpush1.msra.mxu0 0.0
    %511 = vmatprep.subr.mxu0 0.0
    %512 = vmatpush1.msra.mxu0 0.0
    %513 = vmatprep.subr.mxu0 0.0
    %514 = vmatpush1.msra.mxu0 0.0
    %515 = vmatprep.subr.mxu0 0.0
    %516 = vmatpush1.msra.mxu0 0.0
    %517 = vmatprep.subr.mxu0 0.0
    %518 = vmatpush1.msra.mxu0 0.0
    %519 = vmatprep.mubr.f32.mxu0 0.0
    %520 = vmatmul.mubr.f32.gmra.mrb[0].mxu0 %v356
    %v521 = vpop.f32.mrb[0].mxu0
    %v522 = vadd.f32 %v453, %v521
    %v523 = vpop.f32.mrb[0].mxu0
    %524 = vmatprep.mubr.f32.mxu0 0.0
    %525 = vmatmul.mubr.f32.gmra.mrb[0].mxu0 %v359
    %v526 = vpop.f32.mrb[0].mxu0
    %v527 = vadd.f32 %v453, %v526
    %v528 = vpop.f32.mrb[0].mxu0
    %529 = vmatprep.mubr.f32.mxu0 0.0
    %530 = vmatmul.mubr.f32.gmra.mrb[0].mxu0 %v362
    %v531 = vpop.f32.mrb[0].mxu0
    %v532 = vadd.f32 %v453, %v531
    %v533 = vpop.f32.mrb[0].mxu0
    %534 = vdwg.mxu0
    %v535 = vld [vmem:[%s14] sm:$0xff]
    %v536 = vld [vmem:[%s14 + $0x8] sm:$0xff]
    %v537 = vld [vmem:[%s14 + $0x10] sm:$0xff]
    %v538 = vld [vmem:[%s14 + $0x18] sm:$0xff]
    %v539 = vld [vmem:[%s15] sm:$0x1]
    %v541 = vlaneseq
    %v542 = vshrl.u32 %v541, 7
    %v543 = vsub.s32 0, %v542
    %v544 = vrot.slane %v539, %v543
    %546 = vmatprep.subr.mxu0 0.0
    %547 = vmatpush1.msra.mxu0 %v535
    %548 = vmatprep.subr.mxu0 0.0
    %549 = vmatpush1.msra.mxu0 %v536
    %550 = vmatprep.subr.mxu0 0.0
    %551 = vmatpush1.msra.mxu0 %v537
    %552 = vmatprep.subr.mxu0 0.0
    %553 = vmatpush1.msra.mxu0 %v538
    %554 = vmatprep.subr.mxu0 0.0
    %555 = vmatpush1.msra.mxu0 0.0
    %556 = vmatprep.subr.mxu0 0.0
    %557 = vmatpush1.msra.mxu0 0.0
    %558 = vmatprep.subr.mxu0 0.0
    %559 = vmatpush1.msra.mxu0 0.0
    %560 = vmatprep.subr.mxu0 0.0
    %561 = vmatpush1.msra.mxu0 0.0
    %562 = vmatprep.subr.mxu0 0.0
    %563 = vmatpush1.msra.mxu0 0.0
    %564 = vmatprep.subr.mxu0 0.0
    %565 = vmatpush1.msra.mxu0 0.0
    %566 = vmatprep.subr.mxu0 0.0
    %567 = vmatpush1.msra.mxu0 0.0
    %568 = vmatprep.subr.mxu0 0.0
    %569 = vmatpush1.msra.mxu0 0.0
    %570 = vmatprep.subr.mxu0 0.0
    %571 = vmatpush1.msra.mxu0 0.0
    %572 = vmatprep.subr.mxu0 0.0
    %573 = vmatpush1.msra.mxu0 0.0
    %574 = vmatprep.subr.mxu0 0.0
    %575 = vmatpush1.msra.mxu0 0.0
    %576 = vmatprep.subr.mxu0 0.0
    %577 = vmatpush1.msra.mxu0 0.0
    %578 = vmatprep.subr.mxu0 0.0
    %579 = vmatpush1.msra.mxu0 0.0
    %580 = vmatprep.subr.mxu0 0.0
    %581 = vmatpush1.msra.mxu0 0.0
    %582 = vmatprep.subr.mxu0 0.0
    %583 = vmatpush1.msra.mxu0 0.0
    %584 = vmatprep.subr.mxu0 0.0
    %585 = vmatpush1.msra.mxu0 0.0
    %586 = vmatprep.subr.mxu0 0.0
    %587 = vmatpush1.msra.mxu0 0.0
    %588 = vmatprep.subr.mxu0 0.0
    %589 = vmatpush1.msra.mxu0 0.0
    %590 = vmatprep.subr.mxu0 0.0
    %591 = vmatpush1.msra.mxu0 0.0
    %592 = vmatprep.subr.mxu0 0.0
    %593 = vmatpush1.msra.mxu0 0.0
    %594 = vmatprep.subr.mxu0 0.0
    %595 = vmatpush1.msra.mxu0 0.0
    %596 = vmatprep.subr.mxu0 0.0
    %597 = vmatpush1.msra.mxu0 0.0
    %598 = vmatprep.subr.mxu0 0.0
    %599 = vmatpush1.msra.mxu0 0.0
    %600 = vmatprep.subr.mxu0 0.0
    %601 = vmatpush1.msra.mxu0 0.0
    %602 = vmatprep.subr.mxu0 0.0
    %603 = vmatpush1.msra.mxu0 0.0
    %604 = vmatprep.subr.mxu0 0.0
    %605 = vmatpush1.msra.mxu0 0.0
    %606 = vmatprep.subr.mxu0 0.0
    %607 = vmatpush1.msra.mxu0 0.0
    %608 = vmatprep.subr.mxu0 0.0
    %609 = vmatpush1.msra.mxu0 0.0
    %610 = vmatprep.mubr.f32.mxu0 0.0
    %611 = vmatmul.mubr.f32.gmra.mrb[0].mxu0 %v356
    %v612 = vpop.f32.mrb[0].mxu0
    %v613 = vadd.f32 %v544, %v612
    %v614 = vpop.f32.mrb[0].mxu0
    %615 = vmatprep.mubr.f32.mxu0 0.0
    %616 = vmatmul.mubr.f32.gmra.mrb[0].mxu0 %v359
    %v617 = vpop.f32.mrb[0].mxu0
    %v618 = vadd.f32 %v544, %v617
    %v619 = vpop.f32.mrb[0].mxu0
    %620 = vmatprep.mubr.f32.mxu0 0.0
    %621 = vmatmul.mubr.f32.gmra.mrb[0].mxu0 %v362
    %v622 = vpop.f32.mrb[0].mxu0
    %v623 = vadd.f32 %v544, %v622
    %v624 = vpop.f32.mrb[0].mxu0
    %625 = vdwg.mxu0
    %vm626 = vcmask 64512
    %v628 = vsel %vm626, %v431, 0
    %v631 = vsel %vm626, %v436, 0
    %v634 = vsel %vm626, %v441, 0
    %v637 = vsel %vm626, %v522, 0
    %v640 = vsel %vm626, %v527, 0
    %v643 = vsel %vm626, %v532, 0
    %645 = vmatprep.subr.mxu0 0.0
    %646 = vmatpush1.xpose.msra.mxu0 %v637
    %647 = vmatprep.subr.mxu0 0.0
    %648 = vmatpush1.xpose.msra.mxu0 %v640
    %649 = vmatprep.subr.mxu0 0.0
    %650 = vmatpush1.xpose.msra.mxu0 %v643
    %651 = vmatprep.subr.mxu0 0.0
    %652 = vmatpush1.xpose.msra.mxu0 0.0
    %653 = vmatprep.subr.mxu0 0.0
    %654 = vmatpush1.xpose.msra.mxu0 0.0
    %655 = vmatprep.subr.mxu0 0.0
    %656 = vmatpush1.xpose.msra.mxu0 0.0
    %657 = vmatprep.subr.mxu0 0.0
    %658 = vmatpush1.xpose.msra.mxu0 0.0
    %659 = vmatprep.subr.mxu0 0.0
    %660 = vmatpush1.xpose.msra.mxu0 0.0
    %661 = vmatprep.subr.mxu0 0.0
    %662 = vmatpush1.xpose.msra.mxu0 0.0
    %663 = vmatprep.subr.mxu0 0.0
    %664 = vmatpush1.xpose.msra.mxu0 0.0
    %665 = vmatprep.subr.mxu0 0.0
    %666 = vmatpush1.xpose.msra.mxu0 0.0
    %667 = vmatprep.subr.mxu0 0.0
    %668 = vmatpush1.xpose.msra.mxu0 0.0
    %669 = vmatprep.subr.mxu0 0.0
    %670 = vmatpush1.xpose.msra.mxu0 0.0
    %671 = vmatprep.subr.mxu0 0.0
    %672 = vmatpush1.xpose.msra.mxu0 0.0
    %673 = vmatprep.subr.mxu0 0.0
    %674 = vmatpush1.xpose.msra.mxu0 0.0
    %675 = vmatprep.subr.mxu0 0.0
    %676 = vmatpush1.xpose.msra.mxu0 0.0
    %677 = vmatprep.subr.mxu0 0.0
    %678 = vmatpush1.xpose.msra.mxu0 0.0
    %679 = vmatprep.subr.mxu0 0.0
    %680 = vmatpush1.xpose.msra.mxu0 0.0
    %681 = vmatprep.subr.mxu0 0.0
    %682 = vmatpush1.xpose.msra.mxu0 0.0
    %683 = vmatprep.subr.mxu0 0.0
    %684 = vmatpush1.xpose.msra.mxu0 0.0
    %685 = vmatprep.subr.mxu0 0.0
    %686 = vmatpush1.xpose.msra.mxu0 0.0
    %687 = vmatprep.subr.mxu0 0.0
    %688 = vmatpush1.xpose.msra.mxu0 0.0
    %689 = vmatprep.subr.mxu0 0.0
    %690 = vmatpush1.xpose.msra.mxu0 0.0
    %691 = vmatprep.subr.mxu0 0.0
    %692 = vmatpush1.xpose.msra.mxu0 0.0
    %693 = vmatprep.subr.mxu0 0.0
    %694 = vmatpush1.xpose.msra.mxu0 0.0
    %695 = vmatprep.subr.mxu0 0.0
    %696 = vmatpush1.xpose.msra.mxu0 0.0
    %697 = vmatprep.subr.mxu0 0.0
    %698 = vmatpush1.xpose.msra.mxu0 0.0
    %699 = vmatprep.subr.mxu0 0.0
    %700 = vmatpush1.xpose.msra.mxu0 0.0
    %701 = vmatprep.subr.mxu0 0.0
    %702 = vmatpush1.xpose.msra.mxu0 0.0
    %703 = vmatprep.subr.mxu0 0.0
    %704 = vmatpush1.xpose.msra.mxu0 0.0
    %705 = vmatprep.subr.mxu0 0.0
    %706 = vmatpush1.xpose.msra.mxu0 0.0
    %707 = vmatprep.subr.mxu0 0.0
    %708 = vmatpush1.xpose.msra.mxu0 0.0
    %709 = vmatprep.mubr.f32.mxu0 0.0
    %710 = vmatmul.mubr.f32.gmra.mrb[0].mxu0 %v628
    %v711 = vpop.f32.mrb[0].mxu0
    %v712 = vadd.f32 %v340, %v711
    %v713 = vpop.f32.mrb[0].mxu0
    %714 = vmatprep.mubr.f32.mxu0 0.0
    %715 = vmatmul.mubr.f32.gmra.mrb[0].mxu0 %v631
    %v716 = vpop.f32.mrb[0].mxu0
    %v717 = vadd.f32 %v341, %v716
    %v718 = vpop.f32.mrb[0].mxu0
    %719 = vmatprep.mubr.f32.mxu0 0.0
    %720 = vmatmul.mubr.f32.gmra.mrb[0].mxu0 %v634
    %v721 = vpop.f32.mrb[0].mxu0
    %v722 = vadd.f32 %v342, %v721
    %v723 = vpop.f32.mrb[0].mxu0
    %724 = vdwg.mxu0
    %vm725 = vcmask 146432
    %v726 = vsel %vm725, %v712, -inf
    %727 = vmax.xlane.f32.xlu0 %v726
    %v728 = vpop.xlane.xlu0 %727
    %v729 = vsel %vm725, %v717, -inf
    %730 = vmax.xlane.f32.xlu0 %v729
    %v731 = vpop.xlane.xlu0 %730
    %vm732 = vcmask 140288
    %v733 = vsel %vm732, %v722, -inf
    %734 = vmax.xlane.f32.xlu0 %v733
    %v735 = vpop.xlane.xlu0 %734
    %v736 = vsub.f32 %v712, %v728
    %v737 = vsub.f32 %v717, %v731
    %v738 = vsub.f32 %v722, %v735
    %v739 = vmul.f32 %v736, 1.442695
    %v740 = vpow.pop %v739
    %v741 = vmul.f32 %v737, 1.442695
    %v742 = vpow.pop %v741
    %v743 = vmul.f32 %v738, 1.442695
    %v744 = vpow.pop %v743
    %v745 = vsel %vm725, %v740, 0.0
    %746 = vadd.xlane.f32.xlu0 %v745
    %v747 = vpop.xlane.xlu0 %746
    %v748 = vsel %vm725, %v742, 0.0
    %749 = vadd.xlane.f32.xlu0 %v748
    %v750 = vpop.xlane.xlu0 %749
    %v751 = vsel %vm732, %v744, 0.0
    %752 = vadd.xlane.f32.xlu0 %v751
    %v753 = vpop.xlane.xlu0 %752
    %v754 = vrcp.pop %v747
    %v755 = vrcp.pop %v750
    %v756 = vrcp.pop %v753
    %v758 = vsel %vm725, %v740, 0
    %v761 = vsel %vm725, %v742, 0
    %v764 = vsel %vm725, %v744, 0
    %vm766 = vcmask 1041408
    %v768 = vsel %vm766, %v623, 0
    %770 = vmatprep.subr.mxu0 0.0
    %771 = vmatpush1.msra.mxu0 %v613
    %772 = vmatprep.subr.mxu0 0.0
    %773 = vmatpush1.msra.mxu0 %v618
    %774 = vmatprep.subr.mxu0 0.0
    %775 = vmatpush1.msra.mxu0 %v768
    %776 = vmatprep.subr.mxu0 0.0
    %777 = vmatpush1.msra.mxu0 0.0
    %778 = vmatprep.subr.mxu0 0.0
    %779 = vmatpush1.msra.mxu0 0.0
    %780 = vmatprep.subr.mxu0 0.0
    %781 = vmatpush1.msra.mxu0 0.0
    %782 = vmatprep.subr.mxu0 0.0
    %783 = vmatpush1.msra.mxu0 0.0
    %784 = vmatprep.subr.mxu0 0.0
    %785 = vmatpush1.msra.mxu0 0.0
    %786 = vmatprep.subr.mxu0 0.0
    %787 = vmatpush1.msra.mxu0 0.0
    %788 = vmatprep.subr.mxu0 0.0
    %789 = vmatpush1.msra.mxu0 0.0
    %790 = vmatprep.subr.mxu0 0.0
    %791 = vmatpush1.msra.mxu0 0.0
    %792 = vmatprep.subr.mxu0 0.0
    %793 = vmatpush1.msra.mxu0 0.0
    %794 = vmatprep.subr.mxu0 0.0
    %795 = vmatpush1.msra.mxu0 0.0
    %796 = vmatprep.subr.mxu0 0.0
    %797 = vmatpush1.msra.mxu0 0.0
    %798 = vmatprep.subr.mxu0 0.0
    %799 = vmatpush1.msra.mxu0 0.0
    %800 = vmatprep.subr.mxu0 0.0
    %801 = vmatpush1.msra.mxu0 0.0
    %802 = vmatprep.subr.mxu0 0.0
    %803 = vmatpush1.msra.mxu0 0.0
    %804 = vmatprep.subr.mxu0 0.0
    %805 = vmatpush1.msra.mxu0 0.0
    %806 = vmatprep.subr.mxu0 0.0
    %807 = vmatpush1.msra.mxu0 0.0
    %808 = vmatprep.subr.mxu0 0.0
    %809 = vmatpush1.msra.mxu0 0.0
    %810 = vmatprep.subr.mxu0 0.0
    %811 = vmatpush1.msra.mxu0 0.0
    %812 = vmatprep.subr.mxu0 0.0
    %813 = vmatpush1.msra.mxu0 0.0
    %814 = vmatprep.subr.mxu0 0.0
    %815 = vmatpush1.msra.mxu0 0.0
    %816 = vmatprep.subr.mxu0 0.0
    %817 = vmatpush1.msra.mxu0 0.0
    %818 = vmatprep.subr.mxu0 0.0
    %819 = vmatpush1.msra.mxu0 0.0
    %820 = vmatprep.subr.mxu0 0.0
    %821 = vmatpush1.msra.mxu0 0.0
    %822 = vmatprep.subr.mxu0 0.0
    %823 = vmatpush1.msra.mxu0 0.0
    %824 = vmatprep.subr.mxu0 0.0
    %825 = vmatpush1.msra.mxu0 0.0
    %826 = vmatprep.subr.mxu0 0.0
    %827 = vmatpush1.msra.mxu0 0.0
    %828 = vmatprep.subr.mxu0 0.0
    %829 = vmatpush1.msra.mxu0 0.0
    %830 = vmatprep.subr.mxu0 0.0
    %831 = vmatpush1.msra.mxu0 0.0
    %832 = vmatprep.subr.mxu0 0.0
    %833 = vmatpush1.msra.mxu0 0.0
    %834 = vmatprep.mubr.f32.mxu0 0.0
    %835 = vmatmul.mubr.f32.gmra.mrb[0].mxu0 %v758
    %v836 = vpop.f32.mrb[0].mxu0
    %v837 = vadd.f32 0.0, %v836
    %v838 = vpop.f32.mrb[0].mxu0
    %839 = vmatprep.mubr.f32.mxu0 0.0
    %840 = vmatmul.mubr.f32.gmra.mrb[0].mxu0 %v761
    %v841 = vpop.f32.mrb[0].mxu0
    %v842 = vadd.f32 0.0, %v841
    %v843 = vpop.f32.mrb[0].mxu0
    %844 = vmatprep.mubr.f32.mxu0 0.0
    %845 = vmatmul.mubr.f32.gmra.mrb[0].mxu0 %v764
    %v846 = vpop.f32.mrb[0].mxu0
    %v847 = vadd.f32 0.0, %v846
    %v848 = vpop.f32.mrb[0].mxu0
    %849 = vdwg.mxu0
    %v850 = vmul.f32 %v837, %v754
    %v851 = vmul.f32 %v842, %v755
    %v852 = vmul.f32 %v847, %v756
    %v853 = vld [vmem:[%s16] sm:$0xff]
    %s854 = scalar_lea.vmem %s10, 32
    %v855 = vld [vmem:[%s854] sm:$0xff]
    %v856 = vld [vmem:[%s854 + $0x8] sm:$0xff]
    %v857 = vld [vmem:[%s854 + $0x10] sm:$0xff]
    %v858 = vld [vmem:[%s854 + $0x18] sm:$0xff]
    %s859 = scalar_lea.vmem %s11, 1
    %v860 = vld [vmem:[%s859] sm:$0x1]
    %v862 = vlaneseq
    %v863 = vshrl.u32 %v862, 7
    %v864 = vsub.s32 0, %v863
    %v865 = vrot.slane %v860, %v864
    %867 = vmatprep.subr.mxu0 0.0
    %868 = vmatpush1.msra.mxu0 %v855
    %869 = vmatprep.subr.mxu0 0.0
    %870 = vmatpush1.msra.mxu0 %v856
    %871 = vmatprep.subr.mxu0 0.0
    %872 = vmatpush1.msra.mxu0 %v857
    %873 = vmatprep.subr.mxu0 0.0
    %874 = vmatpush1.msra.mxu0 %v858
    %875 = vmatprep.subr.mxu0 0.0
    %876 = vmatpush1.msra.mxu0 0.0
    %877 = vmatprep.subr.mxu0 0.0
    %878 = vmatpush1.msra.mxu0 0.0
    %879 = vmatprep.subr.mxu0 0.0
    %880 = vmatpush1.msra.mxu0 0.0
    %881 = vmatprep.subr.mxu0 0.0
    %882 = vmatpush1.msra.mxu0 0.0
    %883 = vmatprep.subr.mxu0 0.0
    %884 = vmatpush1.msra.mxu0 0.0
    %885 = vmatprep.subr.mxu0 0.0
    %886 = vmatpush1.msra.mxu0 0.0
    %887 = vmatprep.subr.mxu0 0.0
    %888 = vmatpush1.msra.mxu0 0.0
    %889 = vmatprep.subr.mxu0 0.0
    %890 = vmatpush1.msra.mxu0 0.0
    %891 = vmatprep.subr.mxu0 0.0
    %892 = vmatpush1.msra.mxu0 0.0
    %893 = vmatprep.subr.mxu0 0.0
    %894 = vmatpush1.msra.mxu0 0.0
    %895 = vmatprep.subr.mxu0 0.0
    %896 = vmatpush1.msra.mxu0 0.0
    %897 = vmatprep.subr.mxu0 0.0
    %898 = vmatpush1.msra.mxu0 0.0
    %899 = vmatprep.subr.mxu0 0.0
    %900 = vmatpush1.msra.mxu0 0.0
    %901 = vmatprep.subr.mxu0 0.0
    %902 = vmatpush1.msra.mxu0 0.0
    %903 = vmatprep.subr.mxu0 0.0
    %904 = vmatpush1.msra.mxu0 0.0
    %905 = vmatprep.subr.mxu0 0.0
    %906 = vmatpush1.msra.mxu0 0.0
    %907 = vmatprep.subr.mxu0 0.0
    %908 = vmatpush1.msra.mxu0 0.0
    %909 = vmatprep.subr.mxu0 0.0
    %910 = vmatpush1.msra.mxu0 0.0
    %911 = vmatprep.subr.mxu0 0.0
    %912 = vmatpush1.msra.mxu0 0.0
    %913 = vmatprep.subr.mxu0 0.0
    %914 = vmatpush1.msra.mxu0 0.0
    %915 = vmatprep.subr.mxu0 0.0
    %916 = vmatpush1.msra.mxu0 0.0
    %917 = vmatprep.subr.mxu0 0.0
    %918 = vmatpush1.msra.mxu0 0.0
    %919 = vmatprep.subr.mxu0 0.0
    %920 = vmatpush1.msra.mxu0 0.0
    %921 = vmatprep.subr.mxu0 0.0
    %922 = vmatpush1.msra.mxu0 0.0
    %923 = vmatprep.subr.mxu0 0.0
    %924 = vmatpush1.msra.mxu0 0.0
    %925 = vmatprep.subr.mxu0 0.0
    %926 = vmatpush1.msra.mxu0 0.0
    %927 = vmatprep.subr.mxu0 0.0
    %928 = vmatpush1.msra.mxu0 0.0
    %929 = vmatprep.subr.mxu0 0.0
    %930 = vmatpush1.msra.mxu0 0.0
    %931 = vmatprep.mubr.f32.mxu0 0.0
    %932 = vmatmul.mubr.f32.gmra.mrb[0].mxu0 %v356
    %v933 = vpop.f32.mrb[0].mxu0
    %v934 = vadd.f32 %v865, %v933
    %v935 = vpop.f32.mrb[0].mxu0
    %936 = vmatprep.mubr.f32.mxu0 0.0
    %937 = vmatmul.mubr.f32.gmra.mrb[0].mxu0 %v359
    %v938 = vpop.f32.mrb[0].mxu0
    %v939 = vadd.f32 %v865, %v938
    %v940 = vpop.f32.mrb[0].mxu0
    %941 = vmatprep.mubr.f32.mxu0 0.0
    %942 = vmatmul.mubr.f32.gmra.mrb[0].mxu0 %v362
    %v943 = vpop.f32.mrb[0].mxu0
    %v944 = vadd.f32 %v865, %v943
    %v945 = vpop.f32.mrb[0].mxu0
    %946 = vdwg.mxu0
    %s947 = scalar_lea.vmem %s12, 32
    %v948 = vld [vmem:[%s947] sm:$0xff]
    %v949 = vld [vmem:[%s947 + $0x8] sm:$0xff]
    %v950 = vld [vmem:[%s947 + $0x10] sm:$0xff]
    %v951 = vld [vmem:[%s947 + $0x18] sm:$0xff]
    %s952 = scalar_lea.vmem %s13, 1
    %v953 = vld [vmem:[%s952] sm:$0x1]
    %v955 = vlaneseq
    %v956 = vshrl.u32 %v955, 7
    %v957 = vsub.s32 0, %v956
    %v958 = vrot.slane %v953, %v957
    %960 = vmatprep.subr.mxu0 0.0
    %961 = vmatpush1.msra.mxu0 %v948
    %962 = vmatprep.subr.mxu0 0.0
    %963 = vmatpush1.msra.mxu0 %v949
    %964 = vmatprep.subr.mxu0 0.0
    %965 = vmatpush1.msra.mxu0 %v950
    %966 = vmatprep.subr.mxu0 0.0
    %967 = vmatpush1.msra.mxu0 %v951
    %968 = vmatprep.subr.mxu0 0.0
    %969 = vmatpush1.msra.mxu0 0.0
    %970 = vmatprep.subr.mxu0 0.0
    %971 = vmatpush1.msra.mxu0 0.0
    %972 = vmatprep.subr.mxu0 0.0
    %973 = vmatpush1.msra.mxu0 0.0
    %974 = vmatprep.subr.mxu0 0.0
    %975 = vmatpush1.msra.mxu0 0.0
    %976 = vmatprep.subr.mxu0 0.0
    %977 = vmatpush1.msra.mxu0 0.0
    %978 = vmatprep.subr.mxu0 0.0
    %979 = vmatpush1.msra.mxu0 0.0
    %980 = vmatprep.subr.mxu0 0.0
    %981 = vmatpush1.msra.mxu0 0.0
    %982 = vmatprep.subr.mxu0 0.0
    %983 = vmatpush1.msra.mxu0 0.0
    %984 = vmatprep.subr.mxu0 0.0
    %985 = vmatpush1.msra.mxu0 0.0
    %986 = vmatprep.subr.mxu0 0.0
    %987 = vmatpush1.msra.mxu0 0.0
    %988 = vmatprep.subr.mxu0 0.0
    %989 = vmatpush1.msra.mxu0 0.0
    %990 = vmatprep.subr.mxu0 0.0
    %991 = vmatpush1.msra.mxu0 0.0
    %992 = vmatprep.subr.mxu0 0.0
    %993 = vmatpush1.msra.mxu0 0.0
    %994 = vmatprep.subr.mxu0 0.0
    %995 = vmatpush1.msra.mxu0 0.0
    %996 = vmatprep.subr.mxu0 0.0
    %997 = vmatpush1.msra.mxu0 0.0
    %998 = vmatprep.subr.mxu0 0.0
    %999 = vmatpush1.msra.mxu0 0.0
    %1000 = vmatprep.subr.mxu0 0.0
    %1001 = vmatpush1.msra.mxu0 0.0
    %1002 = vmatprep.subr.mxu0 0.0
    %1003 = vmatpush1.msra.mxu0 0.0
    %1004 = vmatprep.subr.mxu0 0.0
    %1005 = vmatpush1.msra.mxu0 0.0
    %1006 = vmatprep.subr.mxu0 0.0
    %1007 = vmatpush1.msra.mxu0 0.0
    %1008 = vmatprep.subr.mxu0 0.0
    %1009 = vmatpush1.msra.mxu0 0.0
    %1010 = vmatprep.subr.mxu0 0.0
    %1011 = vmatpush1.msra.mxu0 0.0
    %1012 = vmatprep.subr.mxu0 0.0
    %1013 = vmatpush1.msra.mxu0 0.0
    %1014 = vmatprep.subr.mxu0 0.0
    %1015 = vmatpush1.msra.mxu0 0.0
    %1016 = vmatprep.subr.mxu0 0.0
    %1017 = vmatpush1.msra.mxu0 0.0
    %1018 = vmatprep.subr.mxu0 0.0
    %1019 = vmatpush1.msra.mxu0 0.0
    %1020 = vmatprep.subr.mxu0 0.0
    %1021 = vmatpush1.msra.mxu0 0.0
    %1022 = vmatprep.subr.mxu0 0.0
    %1023 = vmatpush1.msra.mxu0 0.0
    %1024 = vmatprep.mubr.f32.mxu0 0.0
    %1025 = vmatmul.mubr.f32.gmra.mrb[0].mxu0 %v356
    %v1026 = vpop.f32.mrb[0].mxu0
    %v1027 = vadd.f32 %v958, %v1026
    %v1028 = vpop.f32.mrb[0].mxu0
    %1029 = vmatprep.mubr.f32.mxu0 0.0
    %1030 = vmatmul.mubr.f32.gmra.mrb[0].mxu0 %v359
    %v1031 = vpop.f32.mrb[0].mxu0
    %v1032 = vadd.f32 %v958, %v1031
    %v1033 = vpop.f32.mrb[0].mxu0
    %1034 = vmatprep.mubr.f32.mxu0 0.0
    %1035 = vmatmul.mubr.f32.gmra.mrb[0].mxu0 %v362
    %v1036 = vpop.f32.mrb[0].mxu0
    %v1037 = vadd.f32 %v958, %v1036
    %v1038 = vpop.f32.mrb[0].mxu0
    %1039 = vdwg.mxu0
    %s1040 = scalar_lea.vmem %s14, 32
    %v1041 = vld [vmem:[%s1040] sm:$0xff]
    %v1042 = vld [vmem:[%s1040 + $0x8] sm:$0xff]
    %v1043 = vld [vmem:[%s1040 + $0x10] sm:$0xff]
    %v1044 = vld [vmem:[%s1040 + $0x18] sm:$0xff]
    %s1045 = scalar_lea.vmem %s15, 1
    %v1046 = vld [vmem:[%s1045] sm:$0x1]
    %v1048 = vlaneseq
    %v1049 = vshrl.u32 %v1048, 7
    %v1050 = vsub.s32 0, %v1049
    %v1051 = vrot.slane %v1046, %v1050
    %1053 = vmatprep.subr.mxu0 0.0
    %1054 = vmatpush1.msra.mxu0 %v1041
    %1055 = vmatprep.subr.mxu0 0.0
    %1056 = vmatpush1.msra.mxu0 %v1042
    %1057 = vmatprep.subr.mxu0 0.0
    %1058 = vmatpush1.msra.mxu0 %v1043
    %1059 = vmatprep.subr.mxu0 0.0
    %1060 = vmatpush1.msra.mxu0 %v1044
    %1061 = vmatprep.subr.mxu0 0.0
    %1062 = vmatpush1.msra.mxu0 0.0
    %1063 = vmatprep.subr.mxu0 0.0
    %1064 = vmatpush1.msra.mxu0 0.0
    %1065 = vmatprep.subr.mxu0 0.0
    %1066 = vmatpush1.msra.mxu0 0.0
    %1067 = vmatprep.subr.mxu0 0.0
    %1068 = vmatpush1.msra.mxu0 0.0
    %1069 = vmatprep.subr.mxu0 0.0
    %1070 = vmatpush1.msra.mxu0 0.0
    %1071 = vmatprep.subr.mxu0 0.0
    %1072 = vmatpush1.msra.mxu0 0.0
    %1073 = vmatprep.subr.mxu0 0.0
    %1074 = vmatpush1.msra.mxu0 0.0
    %1075 = vmatprep.subr.mxu0 0.0
    %1076 = vmatpush1.msra.mxu0 0.0
    %1077 = vmatprep.subr.mxu0 0.0
    %1078 = vmatpush1.msra.mxu0 0.0
    %1079 = vmatprep.subr.mxu0 0.0
    %1080 = vmatpush1.msra.mxu0 0.0
    %1081 = vmatprep.subr.mxu0 0.0
    %1082 = vmatpush1.msra.mxu0 0.0
    %1083 = vmatprep.subr.mxu0 0.0
    %1084 = vmatpush1.msra.mxu0 0.0
    %1085 = vmatprep.subr.mxu0 0.0
    %1086 = vmatpush1.msra.mxu0 0.0
    %1087 = vmatprep.subr.mxu0 0.0
    %1088 = vmatpush1.msra.mxu0 0.0
    %1089 = vmatprep.subr.mxu0 0.0
    %1090 = vmatpush1.msra.mxu0 0.0
    %1091 = vmatprep.subr.mxu0 0.0
    %1092 = vmatpush1.msra.mxu0 0.0
    %1093 = vmatprep.subr.mxu0 0.0
    %1094 = vmatpush1.msra.mxu0 0.0
    %1095 = vmatprep.subr.mxu0 0.0
    %1096 = vmatpush1.msra.mxu0 0.0
    %1097 = vmatprep.subr.mxu0 0.0
    %1098 = vmatpush1.msra.mxu0 0.0
    %1099 = vmatprep.subr.mxu0 0.0
    %1100 = vmatpush1.msra.mxu0 0.0
    %1101 = vmatprep.subr.mxu0 0.0
    %1102 = vmatpush1.msra.mxu0 0.0
    %1103 = vmatprep.subr.mxu0 0.0
    %1104 = vmatpush1.msra.mxu0 0.0
    %1105 = vmatprep.subr.mxu0 0.0
    %1106 = vmatpush1.msra.mxu0 0.0
    %1107 = vmatprep.subr.mxu0 0.0
    %1108 = vmatpush1.msra.mxu0 0.0
    %1109 = vmatprep.subr.mxu0 0.0
    %1110 = vmatpush1.msra.mxu0 0.0
    %1111 = vmatprep.subr.mxu0 0.0
    %1112 = vmatpush1.msra.mxu0 0.0
    %1113 = vmatprep.subr.mxu0 0.0
    %1114 = vmatpush1.msra.mxu0 0.0
    %1115 = vmatprep.subr.mxu0 0.0
    %1116 = vmatpush1.msra.mxu0 0.0
    %1117 = vmatprep.mubr.f32.mxu0 0.0
    %1118 = vmatmul.mubr.f32.gmra.mrb[0].mxu0 %v356
    %v1119 = vpop.f32.mrb[0].mxu0
    %v1120 = vadd.f32 %v1051, %v1119
    %v1121 = vpop.f32.mrb[0].mxu0
    %1122 = vmatprep.mubr.f32.mxu0 0.0
    %1123 = vmatmul.mubr.f32.gmra.mrb[0].mxu0 %v359
    %v1124 = vpop.f32.mrb[0].mxu0
    %v1125 = vadd.f32 %v1051, %v1124
    %v1126 = vpop.f32.mrb[0].mxu0
    %1127 = vmatprep.mubr.f32.mxu0 0.0
    %1128 = vmatmul.mubr.f32.gmra.mrb[0].mxu0 %v362
    %v1129 = vpop.f32.mrb[0].mxu0
    %v1130 = vadd.f32 %v1051, %v1129
    %v1131 = vpop.f32.mrb[0].mxu0
    %1132 = vdwg.mxu0
    %v1134 = vsel %vm626, %v934, 0
    %v1137 = vsel %vm626, %v939, 0
    %v1140 = vsel %vm626, %v944, 0
    %v1143 = vsel %vm626, %v1027, 0
    %v1146 = vsel %vm626, %v1032, 0
    %v1149 = vsel %vm626, %v1037, 0
    %1151 = vmatprep.subr.mxu0 0.0
    %1152 = vmatpush1.xpose.msra.mxu0 %v1143
    %1153 = vmatprep.subr.mxu0 0.0
    %1154 = vmatpush1.xpose.msra.mxu0 %v1146
    %1155 = vmatprep.subr.mxu0 0.0
    %1156 = vmatpush1.xpose.msra.mxu0 %v1149
    %1157 = vmatprep.subr.mxu0 0.0
    %1158 = vmatpush1.xpose.msra.mxu0 0.0
    %1159 = vmatprep.subr.mxu0 0.0
    %1160 = vmatpush1.xpose.msra.mxu0 0.0
    %1161 = vmatprep.subr.mxu0 0.0
    %1162 = vmatpush1.xpose.msra.mxu0 0.0
    %1163 = vmatprep.subr.mxu0 0.0
    %1164 = vmatpush1.xpose.msra.mxu0 0.0
    %1165 = vmatprep.subr.mxu0 0.0
    %1166 = vmatpush1.xpose.msra.mxu0 0.0
    %1167 = vmatprep.subr.mxu0 0.0
    %1168 = vmatpush1.xpose.msra.mxu0 0.0
    %1169 = vmatprep.subr.mxu0 0.0
    %1170 = vmatpush1.xpose.msra.mxu0 0.0
    %1171 = vmatprep.subr.mxu0 0.0
    %1172 = vmatpush1.xpose.msra.mxu0 0.0
    %1173 = vmatprep.subr.mxu0 0.0
    %1174 = vmatpush1.xpose.msra.mxu0 0.0
    %1175 = vmatprep.subr.mxu0 0.0
    %1176 = vmatpush1.xpose.msra.mxu0 0.0
    %1177 = vmatprep.subr.mxu0 0.0
    %1178 = vmatpush1.xpose.msra.mxu0 0.0
    %1179 = vmatprep.subr.mxu0 0.0
    %1180 = vmatpush1.xpose.msra.mxu0 0.0
    %1181 = vmatprep.subr.mxu0 0.0
    %1182 = vmatpush1.xpose.msra.mxu0 0.0
    %1183 = vmatprep.subr.mxu0 0.0
    %1184 = vmatpush1.xpose.msra.mxu0 0.0
    %1185 = vmatprep.subr.mxu0 0.0
    %1186 = vmatpush1.xpose.msra.mxu0 0.0
    %1187 = vmatprep.subr.mxu0 0.0
    %1188 = vmatpush1.xpose.msra.mxu0 0.0
    %1189 = vmatprep.subr.mxu0 0.0
    %1190 = vmatpush1.xpose.msra.mxu0 0.0
    %1191 = vmatprep.subr.mxu0 0.0
    %1192 = vmatpush1.xpose.msra.mxu0 0.0
    %1193 = vmatprep.subr.mxu0 0.0
    %1194 = vmatpush1.xpose.msra.mxu0 0.0
    %1195 = vmatprep.subr.mxu0 0.0
    %1196 = vmatpush1.xpose.msra.mxu0 0.0
    %1197 = vmatprep.subr.mxu0 0.0
    %1198 = vmatpush1.xpose.msra.mxu0 0.0
    %1199 = vmatprep.subr.mxu0 0.0
    %1200 = vmatpush1.xpose.msra.mxu0 0.0
    %1201 = vmatprep.subr.mxu0 0.0
    %1202 = vmatpush1.xpose.msra.mxu0 0.0
    %1203 = vmatprep.subr.mxu0 0.0
    %1204 = vmatpush1.xpose.msra.mxu0 0.0
    %1205 = vmatprep.subr.mxu0 0.0
    %1206 = vmatpush1.xpose.msra.mxu0 0.0
    %1207 = vmatprep.subr.mxu0 0.0
    %1208 = vmatpush1.xpose.msra.mxu0 0.0
    %1209 = vmatprep.subr.mxu0 0.0
    %1210 = vmatpush1.xpose.msra.mxu0 0.0
    %1211 = vmatprep.subr.mxu0 0.0
    %1212 = vmatpush1.xpose.msra.mxu0 0.0
    %1213 = vmatprep.subr.mxu0 0.0
    %1214 = vmatpush1.xpose.msra.mxu0 0.0
    %1215 = vmatprep.mubr.f32.mxu0 0.0
    %1216 = vmatmul.mubr.f32.gmra.mrb[0].mxu0 %v1134
    %v1217 = vpop.f32.mrb[0].mxu0
    %v1218 = vadd.f32 %v340, %v1217
    %v1219 = vpop.f32.mrb[0].mxu0
    %1220 = vmatprep.mubr.f32.mxu0 0.0
    %1221 = vmatmul.mubr.f32.gmra.mrb[0].mxu0 %v1137
    %v1222 = vpop.f32.mrb[0].mxu0
    %v1223 = vadd.f32 %v341, %v1222
    %v1224 = vpop.f32.mrb[0].mxu0
    %1225 = vmatprep.mubr.f32.mxu0 0.0
    %1226 = vmatmul.mubr.f32.gmra.mrb[0].mxu0 %v1140
    %v1227 = vpop.f32.mrb[0].mxu0
    %v1228 = vadd.f32 %v342, %v1227
    %v1229 = vpop.f32.mrb[0].mxu0
    %1230 = vdwg.mxu0
    %v1231 = vsel %vm725, %v1218, -inf
    %1232 = vmax.xlane.f32.xlu0 %v1231
    %v1233 = vpop.xlane.xlu0 %1232
    %v1234 = vsel %vm725, %v1223, -inf
    %1235 = vmax.xlane.f32.xlu0 %v1234
    %v1236 = vpop.xlane.xlu0 %1235
    %v1237 = vsel %vm732, %v1228, -inf
    %1238 = vmax.xlane.f32.xlu0 %v1237
    %v1239 = vpop.xlane.xlu0 %1238
    %v1240 = vsub.f32 %v1218, %v1233
    %v1241 = vsub.f32 %v1223, %v1236
    %v1242 = vsub.f32 %v1228, %v1239
    %v1243 = vmul.f32 %v1240, 1.442695
    %v1244 = vpow.pop %v1243
    %v1245 = vmul.f32 %v1241, 1.442695
    %v1246 = vpow.pop %v1245
    %v1247 = vmul.f32 %v1242, 1.442695
    %v1248 = vpow.pop %v1247
    %v1249 = vsel %vm725, %v1244, 0.0
    %1250 = vadd.xlane.f32.xlu0 %v1249
    %v1251 = vpop.xlane.xlu0 %1250
    %v1252 = vsel %vm725, %v1246, 0.0
    %1253 = vadd.xlane.f32.xlu0 %v1252
    %v1254 = vpop.xlane.xlu0 %1253
    %v1255 = vsel %vm732, %v1248, 0.0
    %1256 = vadd.xlane.f32.xlu0 %v1255
    %v1257 = vpop.xlane.xlu0 %1256
    %v1258 = vrcp.pop %v1251
    %v1259 = vrcp.pop %v1254
    %v1260 = vrcp.pop %v1257
    %v1262 = vsel %vm725, %v1244, 0
    %v1265 = vsel %vm725, %v1246, 0
    %v1268 = vsel %vm725, %v1248, 0
    %v1271 = vsel %vm766, %v1130, 0
    %1273 = vmatprep.subr.mxu0 0.0
    %1274 = vmatpush1.msra.mxu0 %v1120
    %1275 = vmatprep.subr.mxu0 0.0
    %1276 = vmatpush1.msra.mxu0 %v1125
    %1277 = vmatprep.subr.mxu0 0.0
    %1278 = vmatpush1.msra.mxu0 %v1271
    %1279 = vmatprep.subr.mxu0 0.0
    %1280 = vmatpush1.msra.mxu0 0.0
    %1281 = vmatprep.subr.mxu0 0.0
    %1282 = vmatpush1.msra.mxu0 0.0
    %1283 = vmatprep.subr.mxu0 0.0
    %1284 = vmatpush1.msra.mxu0 0.0
    %1285 = vmatprep.subr.mxu0 0.0
    %1286 = vmatpush1.msra.mxu0 0.0
    %1287 = vmatprep.subr.mxu0 0.0
    %1288 = vmatpush1.msra.mxu0 0.0
    %1289 = vmatprep.subr.mxu0 0.0
    %1290 = vmatpush1.msra.mxu0 0.0
    %1291 = vmatprep.subr.mxu0 0.0
    %1292 = vmatpush1.msra.mxu0 0.0
    %1293 = vmatprep.subr.mxu0 0.0
    %1294 = vmatpush1.msra.mxu0 0.0
    %1295 = vmatprep.subr.mxu0 0.0
    %1296 = vmatpush1.msra.mxu0 0.0
    %1297 = vmatprep.subr.mxu0 0.0
    %1298 = vmatpush1.msra.mxu0 0.0
    %1299 = vmatprep.subr.mxu0 0.0
    %1300 = vmatpush1.msra.mxu0 0.0
    %1301 = vmatprep.subr.mxu0 0.0
    %1302 = vmatpush1.msra.mxu0 0.0
    %1303 = vmatprep.subr.mxu0 0.0
    %1304 = vmatpush1.msra.mxu0 0.0
    %1305 = vmatprep.subr.mxu0 0.0
    %1306 = vmatpush1.msra.mxu0 0.0
    %1307 = vmatprep.subr.mxu0 0.0
    %1308 = vmatpush1.msra.mxu0 0.0
    %1309 = vmatprep.subr.mxu0 0.0
    %1310 = vmatpush1.msra.mxu0 0.0
    %1311 = vmatprep.subr.mxu0 0.0
    %1312 = vmatpush1.msra.mxu0 0.0
    %1313 = vmatprep.subr.mxu0 0.0
    %1314 = vmatpush1.msra.mxu0 0.0
    %1315 = vmatprep.subr.mxu0 0.0
    %1316 = vmatpush1.msra.mxu0 0.0
    %1317 = vmatprep.subr.mxu0 0.0
    %1318 = vmatpush1.msra.mxu0 0.0
    %1319 = vmatprep.subr.mxu0 0.0
    %1320 = vmatpush1.msra.mxu0 0.0
    %1321 = vmatprep.subr.mxu0 0.0
    %1322 = vmatpush1.msra.mxu0 0.0
    %1323 = vmatprep.subr.mxu0 0.0
    %1324 = vmatpush1.msra.mxu0 0.0
    %1325 = vmatprep.subr.mxu0 0.0
    %1326 = vmatpush1.msra.mxu0 0.0
    %1327 = vmatprep.subr.mxu0 0.0
    %1328 = vmatpush1.msra.mxu0 0.0
    %1329 = vmatprep.subr.mxu0 0.0
    %1330 = vmatpush1.msra.mxu0 0.0
    %1331 = vmatprep.subr.mxu0 0.0
    %1332 = vmatpush1.msra.mxu0 0.0
    %1333 = vmatprep.subr.mxu0 0.0
    %1334 = vmatpush1.msra.mxu0 0.0
    %1335 = vmatprep.subr.mxu0 0.0
    %1336 = vmatpush1.msra.mxu0 0.0
    %1337 = vmatprep.mubr.f32.mxu0 0.0
    %1338 = vmatmul.mubr.f32.gmra.mrb[0].mxu0 %v1262
    %v1339 = vpop.f32.mrb[0].mxu0
    %v1340 = vadd.f32 0.0, %v1339
    %v1341 = vpop.f32.mrb[0].mxu0
    %1342 = vmatprep.mubr.f32.mxu0 0.0
    %1343 = vmatmul.mubr.f32.gmra.mrb[0].mxu0 %v1265
    %v1344 = vpop.f32.mrb[0].mxu0
    %v1345 = vadd.f32 0.0, %v1344
    %v1346 = vpop.f32.mrb[0].mxu0
    %1347 = vmatprep.mubr.f32.mxu0 0.0
    %1348 = vmatmul.mubr.f32.gmra.mrb[0].mxu0 %v1268
    %v1349 = vpop.f32.mrb[0].mxu0
    %v1350 = vadd.f32 0.0, %v1349
    %v1351 = vpop.f32.mrb[0].mxu0
    %1352 = vdwg.mxu0
    %v1353 = vmul.f32 %v1340, %v1258
    %v1354 = vmul.f32 %v1345, %v1259
    %v1355 = vmul.f32 %v1350, %v1260
    %s1356 = scalar_lea.vmem %s16, 8
    %v1357 = vld [vmem:[%s1356] sm:$0xff]
    %v1359 = vsel %vm626, %v1353, 0
    %v1362 = vsel %vm626, %v1354, 0
    %v1365 = vsel %vm626, %v1355, 0
    %1367 = vmatprep.subr.mxu0 0.0
    %1368 = vmatpush1.msra.mxu0 %v1357
    %1369 = vmatprep.subr.mxu0 0.0
    %1370 = vmatpush1.msra.mxu0 0.0
    %1371 = vmatprep.subr.mxu0 0.0
    %1372 = vmatpush1.msra.mxu0 0.0
    %1373 = vmatprep.subr.mxu0 0.0
    %1374 = vmatpush1.msra.mxu0 0.0
    %1375 = vmatprep.subr.mxu0 0.0
    %1376 = vmatpush1.msra.mxu0 0.0
    %1377 = vmatprep.subr.mxu0 0.0
    %1378 = vmatpush1.msra.mxu0 0.0
    %1379 = vmatprep.subr.mxu0 0.0
    %1380 = vmatpush1.msra.mxu0 0.0
    %1381 = vmatprep.subr.mxu0 0.0
    %1382 = vmatpush1.msra.mxu0 0.0
    %1383 = vmatprep.subr.mxu0 0.0
    %1384 = vmatpush1.msra.mxu0 0.0
    %1385 = vmatprep.subr.mxu0 0.0
    %1386 = vmatpush1.msra.mxu0 0.0
    %1387 = vmatprep.subr.mxu0 0.0
    %1388 = vmatpush1.msra.mxu0 0.0
    %1389 = vmatprep.subr.mxu0 0.0
    %1390 = vmatpush1.msra.mxu0 0.0
    %1391 = vmatprep.subr.mxu0 0.0
    %1392 = vmatpush1.msra.mxu0 0.0
    %1393 = vmatprep.subr.mxu0 0.0
    %1394 = vmatpush1.msra.mxu0 0.0
    %1395 = vmatprep.subr.mxu0 0.0
    %1396 = vmatpush1.msra.mxu0 0.0
    %1397 = vmatprep.subr.mxu0 0.0
    %1398 = vmatpush1.msra.mxu0 0.0
    %1399 = vmatprep.subr.mxu0 0.0
    %1400 = vmatpush1.msra.mxu0 0.0
    %1401 = vmatprep.subr.mxu0 0.0
    %1402 = vmatpush1.msra.mxu0 0.0
    %1403 = vmatprep.subr.mxu0 0.0
    %1404 = vmatpush1.msra.mxu0 0.0
    %1405 = vmatprep.subr.mxu0 0.0
    %1406 = vmatpush1.msra.mxu0 0.0
    %1407 = vmatprep.subr.mxu0 0.0
    %1408 = vmatpush1.msra.mxu0 0.0
    %1409 = vmatprep.subr.mxu0 0.0
    %1410 = vmatpush1.msra.mxu0 0.0
    %1411 = vmatprep.subr.mxu0 0.0
    %1412 = vmatpush1.msra.mxu0 0.0
    %1413 = vmatprep.subr.mxu0 0.0
    %1414 = vmatpush1.msra.mxu0 0.0
    %1415 = vmatprep.subr.mxu0 0.0
    %1416 = vmatpush1.msra.mxu0 0.0
    %1417 = vmatprep.subr.mxu0 0.0
    %1418 = vmatpush1.msra.mxu0 0.0
    %1419 = vmatprep.subr.mxu0 0.0
    %1420 = vmatpush1.msra.mxu0 0.0
    %1421 = vmatprep.subr.mxu0 0.0
    %1422 = vmatpush1.msra.mxu0 0.0
    %1423 = vmatprep.subr.mxu0 0.0
    %1424 = vmatpush1.msra.mxu0 0.0
    %1425 = vmatprep.subr.mxu0 0.0
    %1426 = vmatpush1.msra.mxu0 0.0
    %1427 = vmatprep.subr.mxu0 0.0
    %1428 = vmatpush1.msra.mxu0 0.0
    %1429 = vmatprep.subr.mxu0 0.0
    %1430 = vmatpush1.msra.mxu0 0.0
    %1431 = vmatprep.mubr.f32.mxu0 0.0
    %1432 = vmatmul.mubr.f32.gmra.mrb[0].mxu0 %v1359
    %v1433 = vpop.f32.mrb[0].mxu0
    %v1434 = vadd.f32 0.0, %v1433
    %v1435 = vpop.f32.mrb[0].mxu0
    %1436 = vmatprep.mubr.f32.mxu0 0.0
    %1437 = vmatmul.mubr.f32.gmra.mrb[0].mxu0 %v1362
    %v1438 = vpop.f32.mrb[0].mxu0
    %v1439 = vadd.f32 0.0, %v1438
    %v1440 = vpop.f32.mrb[0].mxu0
    %1441 = vmatprep.mubr.f32.mxu0 0.0
    %1442 = vmatmul.mubr.f32.gmra.mrb[0].mxu0 %v1365
    %v1443 = vpop.f32.mrb[0].mxu0
    %v1444 = vadd.f32 0.0, %v1443
    %v1445 = vpop.f32.mrb[0].mxu0
    %1446 = vdwg.mxu0
    %v1448 = vsel %vm626, %v850, 0
    %v1451 = vsel %vm626, %v851, 0
    %v1454 = vsel %vm626, %v852, 0
    %1456 = vmatprep.subr.mxu0 0.0
    %1457 = vmatpush1.msra.mxu0 %v853
    %1458 = vmatprep.subr.mxu0 0.0
    %1459 = vmatpush1.msra.mxu0 0.0
    %1460 = vmatprep.subr.mxu0 0.0
    %1461 = vmatpush1.msra.mxu0 0.0
    %1462 = vmatprep.subr.mxu0 0.0
    %1463 = vmatpush1.msra.mxu0 0.0
    %1464 = vmatprep.subr.mxu0 0.0
    %1465 = vmatpush1.msra.mxu0 0.0
    %1466 = vmatprep.subr.mxu0 0.0
    %1467 = vmatpush1.msra.mxu0 0.0
    %1468 = vmatprep.subr.mxu0 0.0
    %1469 = vmatpush1.msra.mxu0 0.0
    %1470 = vmatprep.subr.mxu0 0.0
    %1471 = vmatpush1.msra.mxu0 0.0
    %1472 = vmatprep.subr.mxu0 0.0
    %1473 = vmatpush1.msra.mxu0 0.0
    %1474 = vmatprep.subr.mxu0 0.0
    %1475 = vmatpush1.msra.mxu0 0.0
    %1476 = vmatprep.subr.mxu0 0.0
    %1477 = vmatpush1.msra.mxu0 0.0
    %1478 = vmatprep.subr.mxu0 0.0
    %1479 = vmatpush1.msra.mxu0 0.0
    %1480 = vmatprep.subr.mxu0 0.0
    %1481 = vmatpush1.msra.mxu0 0.0
    %1482 = vmatprep.subr.mxu0 0.0
    %1483 = vmatpush1.msra.mxu0 0.0
    %1484 = vmatprep.subr.mxu0 0.0
    %1485 = vmatpush1.msra.mxu0 0.0
    %1486 = vmatprep.subr.mxu0 0.0
    %1487 = vmatpush1.msra.mxu0 0.0
    %1488 = vmatprep.subr.mxu0 0.0
    %1489 = vmatpush1.msra.mxu0 0.0
    %1490 = vmatprep.subr.mxu0 0.0
    %1491 = vmatpush1.msra.mxu0 0.0
    %1492 = vmatprep.subr.mxu0 0.0
    %1493 = vmatpush1.msra.mxu0 0.0
    %1494 = vmatprep.subr.mxu0 0.0
    %1495 = vmatpush1.msra.mxu0 0.0
    %1496 = vmatprep.subr.mxu0 0.0
    %1497 = vmatpush1.msra.mxu0 0.0
    %1498 = vmatprep.subr.mxu0 0.0
    %1499 = vmatpush1.msra.mxu0 0.0
    %1500 = vmatprep.subr.mxu0 0.0
    %1501 = vmatpush1.msra.mxu0 0.0
    %1502 = vmatprep.subr.mxu0 0.0
    %1503 = vmatpush1.msra.mxu0 0.0
    %1504 = vmatprep.subr.mxu0 0.0
    %1505 = vmatpush1.msra.mxu0 0.0
    %1506 = vmatprep.subr.mxu0 0.0
    %1507 = vmatpush1.msra.mxu0 0.0
    %1508 = vmatprep.subr.mxu0 0.0
    %1509 = vmatpush1.msra.mxu0 0.0
    %1510 = vmatprep.subr.mxu0 0.0
    %1511 = vmatpush1.msra.mxu0 0.0
    %1512 = vmatprep.subr.mxu0 0.0
    %1513 = vmatpush1.msra.mxu0 0.0
    %1514 = vmatprep.subr.mxu0 0.0
    %1515 = vmatpush1.msra.mxu0 0.0
    %1516 = vmatprep.subr.mxu0 0.0
    %1517 = vmatpush1.msra.mxu0 0.0
    %1518 = vmatprep.subr.mxu0 0.0
    %1519 = vmatpush1.msra.mxu0 0.0
    %1520 = vmatprep.mubr.f32.mxu0 0.0
    %1521 = vmatmul.mubr.f32.gmra.mrb[0].mxu0 %v1448
    %v1522 = vpop.f32.mrb[0].mxu0
    %v1523 = vadd.f32 %v1434, %v1522
    %v1524 = vpop.f32.mrb[0].mxu0
    %1525 = vmatprep.mubr.f32.mxu0 0.0
    %1526 = vmatmul.mubr.f32.gmra.mrb[0].mxu0 %v1451
    %v1527 = vpop.f32.mrb[0].mxu0
    %v1528 = vadd.f32 %v1439, %v1527
    %v1529 = vpop.f32.mrb[0].mxu0
    %1530 = vmatprep.mubr.f32.mxu0 0.0
    %1531 = vmatmul.mubr.f32.gmra.mrb[0].mxu0 %v1454
    %v1532 = vpop.f32.mrb[0].mxu0
    %v1533 = vadd.f32 %v1444, %v1532
    %v1534 = vpop.f32.mrb[0].mxu0
    %1535 = vdwg.mxu0
    %s1536 = scalar_lea.vmem %s10, 64
    %v1537 = vld [vmem:[%s1536] sm:$0xff]
    %v1538 = vld [vmem:[%s1536 + $0x8] sm:$0xff]
    %v1539 = vld [vmem:[%s1536 + $0x10] sm:$0xff]
    %v1540 = vld [vmem:[%s1536 + $0x18] sm:$0xff]
    %s1541 = scalar_lea.vmem %s11, 2
    %v1542 = vld [vmem:[%s1541] sm:$0x1]
    %v1544 = vlaneseq
    %v1545 = vshrl.u32 %v1544, 7
    %v1546 = vsub.s32 0, %v1545
    %v1547 = vrot.slane %v1542, %v1546
    %1549 = vmatprep.subr.mxu0 0.0
    %1550 = vmatpush1.msra.mxu0 %v1537
    %1551 = vmatprep.subr.mxu0 0.0
    %1552 = vmatpush1.msra.mxu0 %v1538
    %1553 = vmatprep.subr.mxu0 0.0
    %1554 = vmatpush1.msra.mxu0 %v1539
    %1555 = vmatprep.subr.mxu0 0.0
    %1556 = vmatpush1.msra.mxu0 %v1540
    %1557 = vmatprep.subr.mxu0 0.0
    %1558 = vmatpush1.msra.mxu0 0.0
    %1559 = vmatprep.subr.mxu0 0.0
    %1560 = vmatpush1.msra.mxu0 0.0
    %1561 = vmatprep.subr.mxu0 0.0
    %1562 = vmatpush1.msra.mxu0 0.0
    %1563 = vmatprep.subr.mxu0 0.0
    %1564 = vmatpush1.msra.mxu0 0.0
    %1565 = vmatprep.subr.mxu0 0.0
    %1566 = vmatpush1.msra.mxu0 0.0
    %1567 = vmatprep.subr.mxu0 0.0
    %1568 = vmatpush1.msra.mxu0 0.0
    %1569 = vmatprep.subr.mxu0 0.0
    %1570 = vmatpush1.msra.mxu0 0.0
    %1571 = vmatprep.subr.mxu0 0.0
    %1572 = vmatpush1.msra.mxu0 0.0
    %1573 = vmatprep.subr.mxu0 0.0
    %1574 = vmatpush1.msra.mxu0 0.0
    %1575 = vmatprep.subr.mxu0 0.0
    %1576 = vmatpush1.msra.mxu0 0.0
    %1577 = vmatprep.subr.mxu0 0.0
    %1578 = vmatpush1.msra.mxu0 0.0
    %1579 = vmatprep.subr.mxu0 0.0
    %1580 = vmatpush1.msra.mxu0 0.0
    %1581 = vmatprep.subr.mxu0 0.0
    %1582 = vmatpush1.msra.mxu0 0.0
    %1583 = vmatprep.subr.mxu0 0.0
    %1584 = vmatpush1.msra.mxu0 0.0
    %1585 = vmatprep.subr.mxu0 0.0
    %1586 = vmatpush1.msra.mxu0 0.0
    %1587 = vmatprep.subr.mxu0 0.0
    %1588 = vmatpush1.msra.mxu0 0.0
    %1589 = vmatprep.subr.mxu0 0.0
    %1590 = vmatpush1.msra.mxu0 0.0
    %1591 = vmatprep.subr.mxu0 0.0
    %1592 = vmatpush1.msra.mxu0 0.0
    %1593 = vmatprep.subr.mxu0 0.0
    %1594 = vmatpush1.msra.mxu0 0.0
    %1595 = vmatprep.subr.mxu0 0.0
    %1596 = vmatpush1.msra.mxu0 0.0
    %1597 = vmatprep.subr.mxu0 0.0
    %1598 = vmatpush1.msra.mxu0 0.0
    %1599 = vmatprep.subr.mxu0 0.0
    %1600 = vmatpush1.msra.mxu0 0.0
    %1601 = vmatprep.subr.mxu0 0.0
    %1602 = vmatpush1.msra.mxu0 0.0
    %1603 = vmatprep.subr.mxu0 0.0
    %1604 = vmatpush1.msra.mxu0 0.0
    %1605 = vmatprep.subr.mxu0 0.0
    %1606 = vmatpush1.msra.mxu0 0.0
    %1607 = vmatprep.subr.mxu0 0.0
    %1608 = vmatpush1.msra.mxu0 0.0
    %1609 = vmatprep.subr.mxu0 0.0
    %1610 = vmatpush1.msra.mxu0 0.0
    %1611 = vmatprep.subr.mxu0 0.0
    %1612 = vmatpush1.msra.mxu0 0.0
    %1613 = vmatprep.mubr.f32.mxu0 0.0
    %1614 = vmatmul.mubr.f32.gmra.mrb[0].mxu0 %v356
    %v1615 = vpop.f32.mrb[0].mxu0
    %v1616 = vadd.f32 %v1547, %v1615
    %v1617 = vpop.f32.mrb[0].mxu0
    %1618 = vmatprep.mubr.f32.mxu0 0.0
    %1619 = vmatmul.mubr.f32.gmra.mrb[0].mxu0 %v359
    %v1620 = vpop.f32.mrb[0].mxu0
    %v1621 = vadd.f32 %v1547, %v1620
    %v1622 = vpop.f32.mrb[0].mxu0
    %1623 = vmatprep.mubr.f32.mxu0 0.0
    %1624 = vmatmul.mubr.f32.gmra.mrb[0].mxu0 %v362
    %v1625 = vpop.f32.mrb[0].mxu0
    %v1626 = vadd.f32 %v1547, %v1625
    %v1627 = vpop.f32.mrb[0].mxu0
    %1628 = vdwg.mxu0
    %s1629 = scalar_lea.vmem %s12, 64
    %v1630 = vld [vmem:[%s1629] sm:$0xff]
    %v1631 = vld [vmem:[%s1629 + $0x8] sm:$0xff]
    %v1632 = vld [vmem:[%s1629 + $0x10] sm:$0xff]
    %v1633 = vld [vmem:[%s1629 + $0x18] sm:$0xff]
    %s1634 = scalar_lea.vmem %s13, 2
    %v1635 = vld [vmem:[%s1634] sm:$0x1]
    %v1637 = vlaneseq
    %v1638 = vshrl.u32 %v1637, 7
    %v1639 = vsub.s32 0, %v1638
    %v1640 = vrot.slane %v1635, %v1639
    %1642 = vmatprep.subr.mxu0 0.0
    %1643 = vmatpush1.msra.mxu0 %v1630
    %1644 = vmatprep.subr.mxu0 0.0
    %1645 = vmatpush1.msra.mxu0 %v1631
    %1646 = vmatprep.subr.mxu0 0.0
    %1647 = vmatpush1.msra.mxu0 %v1632
    %1648 = vmatprep.subr.mxu0 0.0
    %1649 = vmatpush1.msra.mxu0 %v1633
    %1650 = vmatprep.subr.mxu0 0.0
    %1651 = vmatpush1.msra.mxu0 0.0
    %1652 = vmatprep.subr.mxu0 0.0
    %1653 = vmatpush1.msra.mxu0 0.0
    %1654 = vmatprep.subr.mxu0 0.0
    %1655 = vmatpush1.msra.mxu0 0.0
    %1656 = vmatprep.subr.mxu0 0.0
    %1657 = vmatpush1.msra.mxu0 0.0
    %1658 = vmatprep.subr.mxu0 0.0
    %1659 = vmatpush1.msra.mxu0 0.0
    %1660 = vmatprep.subr.mxu0 0.0
    %1661 = vmatpush1.msra.mxu0 0.0
    %1662 = vmatprep.subr.mxu0 0.0
    %1663 = vmatpush1.msra.mxu0 0.0
    %1664 = vmatprep.subr.mxu0 0.0
    %1665 = vmatpush1.msra.mxu0 0.0
    %1666 = vmatprep.subr.mxu0 0.0
    %1667 = vmatpush1.msra.mxu0 0.0
    %1668 = vmatprep.subr.mxu0 0.0
    %1669 = vmatpush1.msra.mxu0 0.0
    %1670 = vmatprep.subr.mxu0 0.0
    %1671 = vmatpush1.msra.mxu0 0.0
    %1672 = vmatprep.subr.mxu0 0.0
    %1673 = vmatpush1.msra.mxu0 0.0
    %1674 = vmatprep.subr.mxu0 0.0
    %1675 = vmatpush1.msra.mxu0 0.0
    %1676 = vmatprep.subr.mxu0 0.0
    %1677 = vmatpush1.msra.mxu0 0.0
    %1678 = vmatprep.subr.mxu0 0.0
    %1679 = vmatpush1.msra.mxu0 0.0
    %1680 = vmatprep.subr.mxu0 0.0
    %1681 = vmatpush1.msra.mxu0 0.0
    %1682 = vmatprep.subr.mxu0 0.0
    %1683 = vmatpush1.msra.mxu0 0.0
    %1684 = vmatprep.subr.mxu0 0.0
    %1685 = vmatpush1.msra.mxu0 0.0
    %1686 = vmatprep.subr.mxu0 0.0
    %1687 = vmatpush1.msra.mxu0 0.0
    %1688 = vmatprep.subr.mxu0 0.0
    %1689 = vmatpush1.msra.mxu0 0.0
    %1690 = vmatprep.subr.mxu0 0.0
    %1691 = vmatpush1.msra.mxu0 0.0
    %1692 = vmatprep.subr.mxu0 0.0
    %1693 = vmatpush1.msra.mxu0 0.0
    %1694 = vmatprep.subr.mxu0 0.0
    %1695 = vmatpush1.msra.mxu0 0.0
    %1696 = vmatprep.subr.mxu0 0.0
    %1697 = vmatpush1.msra.mxu0 0.0
    %1698 = vmatprep.subr.mxu0 0.0
    %1699 = vmatpush1.msra.mxu0 0.0
    %1700 = vmatprep.subr.mxu0 0.0
    %1701 = vmatpush1.msra.mxu0 0.0
    %1702 = vmatprep.subr.mxu0 0.0
    %1703 = vmatpush1.msra.mxu0 0.0
    %1704 = vmatprep.subr.mxu0 0.0
    %1705 = vmatpush1.msra.mxu0 0.0
    %1706 = vmatprep.mubr.f32.mxu0 0.0
    %1707 = vmatmul.mubr.f32.gmra.mrb[0].mxu0 %v356
    %v1708 = vpop.f32.mrb[0].mxu0
    %v1709 = vadd.f32 %v1640, %v1708
    %v1710 = vpop.f32.mrb[0].mxu0
    %1711 = vmatprep.mubr.f32.mxu0 0.0
    %1712 = vmatmul.mubr.f32.gmra.mrb[0].mxu0 %v359
    %v1713 = vpop.f32.mrb[0].mxu0
    %v1714 = vadd.f32 %v1640, %v1713
    %v1715 = vpop.f32.mrb[0].mxu0
    %1716 = vmatprep.mubr.f32.mxu0 0.0
    %1717 = vmatmul.mubr.f32.gmra.mrb[0].mxu0 %v362
    %v1718 = vpop.f32.mrb[0].mxu0
    %v1719 = vadd.f32 %v1640, %v1718
    %v1720 = vpop.f32.mrb[0].mxu0
    %1721 = vdwg.mxu0
    %s1722 = scalar_lea.vmem %s14, 64
    %v1723 = vld [vmem:[%s1722] sm:$0xff]
    %v1724 = vld [vmem:[%s1722 + $0x8] sm:$0xff]
    %v1725 = vld [vmem:[%s1722 + $0x10] sm:$0xff]
    %v1726 = vld [vmem:[%s1722 + $0x18] sm:$0xff]
    %s1727 = scalar_lea.vmem %s15, 2
    %v1728 = vld [vmem:[%s1727] sm:$0x1]
    %v1730 = vlaneseq
    %v1731 = vshrl.u32 %v1730, 7
    %v1732 = vsub.s32 0, %v1731
    %v1733 = vrot.slane %v1728, %v1732
    %1735 = vmatprep.subr.mxu0 0.0
    %1736 = vmatpush1.msra.mxu0 %v1723
    %1737 = vmatprep.subr.mxu0 0.0
    %1738 = vmatpush1.msra.mxu0 %v1724
    %1739 = vmatprep.subr.mxu0 0.0
    %1740 = vmatpush1.msra.mxu0 %v1725
    %1741 = vmatprep.subr.mxu0 0.0
    %1742 = vmatpush1.msra.mxu0 %v1726
    %1743 = vmatprep.subr.mxu0 0.0
    %1744 = vmatpush1.msra.mxu0 0.0
    %1745 = vmatprep.subr.mxu0 0.0
    %1746 = vmatpush1.msra.mxu0 0.0
    %1747 = vmatprep.subr.mxu0 0.0
    %1748 = vmatpush1.msra.mxu0 0.0
    %1749 = vmatprep.subr.mxu0 0.0
    %1750 = vmatpush1.msra.mxu0 0.0
    %1751 = vmatprep.subr.mxu0 0.0
    %1752 = vmatpush1.msra.mxu0 0.0
    %1753 = vmatprep.subr.mxu0 0.0
    %1754 = vmatpush1.msra.mxu0 0.0
    %1755 = vmatprep.subr.mxu0 0.0
    %1756 = vmatpush1.msra.mxu0 0.0
    %1757 = vmatprep.subr.mxu0 0.0
    %1758 = vmatpush1.msra.mxu0 0.0
    %1759 = vmatprep.subr.mxu0 0.0
    %1760 = vmatpush1.msra.mxu0 0.0
    %1761 = vmatprep.subr.mxu0 0.0
    %1762 = vmatpush1.msra.mxu0 0.0
    %1763 = vmatprep.subr.mxu0 0.0
    %1764 = vmatpush1.msra.mxu0 0.0
    %1765 = vmatprep.subr.mxu0 0.0
    %1766 = vmatpush1.msra.mxu0 0.0
    %1767 = vmatprep.subr.mxu0 0.0
    %1768 = vmatpush1.msra.mxu0 0.0
    %1769 = vmatprep.subr.mxu0 0.0
    %1770 = vmatpush1.msra.mxu0 0.0
    %1771 = vmatprep.subr.mxu0 0.0
    %1772 = vmatpush1.msra.mxu0 0.0
    %1773 = vmatprep.subr.mxu0 0.0
    %1774 = vmatpush1.msra.mxu0 0.0
    %1775 = vmatprep.subr.mxu0 0.0
    %1776 = vmatpush1.msra.mxu0 0.0
    %1777 = vmatprep.subr.mxu0 0.0
    %1778 = vmatpush1.msra.mxu0 0.0
    %1779 = vmatprep.subr.mxu0 0.0
    %1780 = vmatpush1.msra.mxu0 0.0
    %1781 = vmatprep.subr.mxu0 0.0
    %1782 = vmatpush1.msra.mxu0 0.0
    %1783 = vmatprep.subr.mxu0 0.0
    %1784 = vmatpush1.msra.mxu0 0.0
    %1785 = vmatprep.subr.mxu0 0.0
    %1786 = vmatpush1.msra.mxu0 0.0
    %1787 = vmatprep.subr.mxu0 0.0
    %1788 = vmatpush1.msra.mxu0 0.0
    %1789 = vmatprep.subr.mxu0 0.0
    %1790 = vmatpush1.msra.mxu0 0.0
    %1791 = vmatprep.subr.mxu0 0.0
    %1792 = vmatpush1.msra.mxu0 0.0
    %1793 = vmatprep.subr.mxu0 0.0
    %1794 = vmatpush1.msra.mxu0 0.0
    %1795 = vmatprep.subr.mxu0 0.0
    %1796 = vmatpush1.msra.mxu0 0.0
    %1797 = vmatprep.subr.mxu0 0.0
    %1798 = vmatpush1.msra.mxu0 0.0
    %1799 = vmatprep.mubr.f32.mxu0 0.0
    %1800 = vmatmul.mubr.f32.gmra.mrb[0].mxu0 %v356
    %v1801 = vpop.f32.mrb[0].mxu0
    %v1802 = vadd.f32 %v1733, %v1801
    %v1803 = vpop.f32.mrb[0].mxu0
    %1804 = vmatprep.mubr.f32.mxu0 0.0
    %1805 = vmatmul.mubr.f32.gmra.mrb[0].mxu0 %v359
    %v1806 = vpop.f32.mrb[0].mxu0
    %v1807 = vadd.f32 %v1733, %v1806
    %v1808 = vpop.f32.mrb[0].mxu0
    %1809 = vmatprep.mubr.f32.mxu0 0.0
    %1810 = vmatmul.mubr.f32.gmra.mrb[0].mxu0 %v362
    %v1811 = vpop.f32.mrb[0].mxu0
    %v1812 = vadd.f32 %v1733, %v1811
    %v1813 = vpop.f32.mrb[0].mxu0
    %1814 = vdwg.mxu0
    %v1816 = vsel %vm626, %v1616, 0
    %v1819 = vsel %vm626, %v1621, 0
    %v1822 = vsel %vm626, %v1626, 0
    %v1825 = vsel %vm626, %v1709, 0
    %v1828 = vsel %vm626, %v1714, 0
    %v1831 = vsel %vm626, %v1719, 0
    %1833 = vmatprep.subr.mxu0 0.0
    %1834 = vmatpush1.xpose.msra.mxu0 %v1825
    %1835 = vmatprep.subr.mxu0 0.0
    %1836 = vmatpush1.xpose.msra.mxu0 %v1828
    %1837 = vmatprep.subr.mxu0 0.0
    %1838 = vmatpush1.xpose.msra.mxu0 %v1831
    %1839 = vmatprep.subr.mxu0 0.0
    %1840 = vmatpush1.xpose.msra.mxu0 0.0
    %1841 = vmatprep.subr.mxu0 0.0
    %1842 = vmatpush1.xpose.msra.mxu0 0.0
    %1843 = vmatprep.subr.mxu0 0.0
    %1844 = vmatpush1.xpose.msra.mxu0 0.0
    %1845 = vmatprep.subr.mxu0 0.0
    %1846 = vmatpush1.xpose.msra.mxu0 0.0
    %1847 = vmatprep.subr.mxu0 0.0
    %1848 = vmatpush1.xpose.msra.mxu0 0.0
    %1849 = vmatprep.subr.mxu0 0.0
    %1850 = vmatpush1.xpose.msra.mxu0 0.0
    %1851 = vmatprep.subr.mxu0 0.0
    %1852 = vmatpush1.xpose.msra.mxu0 0.0
    %1853 = vmatprep.subr.mxu0 0.0
    %1854 = vmatpush1.xpose.msra.mxu0 0.0
    %1855 = vmatprep.subr.mxu0 0.0
    %1856 = vmatpush1.xpose.msra.mxu0 0.0
    %1857 = vmatprep.subr.mxu0 0.0
    %1858 = vmatpush1.xpose.msra.mxu0 0.0
    %1859 = vmatprep.subr.mxu0 0.0
    %1860 = vmatpush1.xpose.msra.mxu0 0.0
    %1861 = vmatprep.subr.mxu0 0.0
    %1862 = vmatpush1.xpose.msra.mxu0 0.0
    %1863 = vmatprep.subr.mxu0 0.0
    %1864 = vmatpush1.xpose.msra.mxu0 0.0
    %1865 = vmatprep.subr.mxu0 0.0
    %1866 = vmatpush1.xpose.msra.mxu0 0.0
    %1867 = vmatprep.subr.mxu0 0.0
    %1868 = vmatpush1.xpose.msra.mxu0 0.0
    %1869 = vmatprep.subr.mxu0 0.0
    %1870 = vmatpush1.xpose.msra.mxu0 0.0
    %1871 = vmatprep.subr.mxu0 0.0
    %1872 = vmatpush1.xpose.msra.mxu0 0.0
    %1873 = vmatprep.subr.mxu0 0.0
    %1874 = vmatpush1.xpose.msra.mxu0 0.0
    %1875 = vmatprep.subr.mxu0 0.0
    %1876 = vmatpush1.xpose.msra.mxu0 0.0
    %1877 = vmatprep.subr.mxu0 0.0
    %1878 = vmatpush1.xpose.msra.mxu0 0.0
    %1879 = vmatprep.subr.mxu0 0.0
    %1880 = vmatpush1.xpose.msra.mxu0 0.0
    %1881 = vmatprep.subr.mxu0 0.0
    %1882 = vmatpush1.xpose.msra.mxu0 0.0
    %1883 = vmatprep.subr.mxu0 0.0
    %1884 = vmatpush1.xpose.msra.mxu0 0.0
    %1885 = vmatprep.subr.mxu0 0.0
    %1886 = vmatpush1.xpose.msra.mxu0 0.0
    %1887 = vmatprep.subr.mxu0 0.0
    %1888 = vmatpush1.xpose.msra.mxu0 0.0
    %1889 = vmatprep.subr.mxu0 0.0
    %1890 = vmatpush1.xpose.msra.mxu0 0.0
    %1891 = vmatprep.subr.mxu0 0.0
    %1892 = vmatpush1.xpose.msra.mxu0 0.0
    %1893 = vmatprep.subr.mxu0 0.0
    %1894 = vmatpush1.xpose.msra.mxu0 0.0
    %1895 = vmatprep.subr.mxu0 0.0
    %1896 = vmatpush1.xpose.msra.mxu0 0.0
    %1897 = vmatprep.mubr.f32.mxu0 0.0
    %1898 = vmatmul.mubr.f32.gmra.mrb[0].mxu0 %v1816
    %v1899 = vpop.f32.mrb[0].mxu0
    %v1900 = vadd.f32 %v340, %v1899
    %v1901 = vpop.f32.mrb[0].mxu0
    %1902 = vmatprep.mubr.f32.mxu0 0.0
    %1903 = vmatmul.mubr.f32.gmra.mrb[0].mxu0 %v1819
    %v1904 = vpop.f32.mrb[0].mxu0
    %v1905 = vadd.f32 %v341, %v1904
    %v1906 = vpop.f32.mrb[0].mxu0
    %1907 = vmatprep.mubr.f32.mxu0 0.0
    %1908 = vmatmul.mubr.f32.gmra.mrb[0].mxu0 %v1822
    %v1909 = vpop.f32.mrb[0].mxu0
    %v1910 = vadd.f32 %v342, %v1909
    %v1911 = vpop.f32.mrb[0].mxu0
    %1912 = vdwg.mxu0
    %v1913 = vsel %vm725, %v1900, -inf
    %1914 = vmax.xlane.f32.xlu0 %v1913
    %v1915 = vpop.xlane.xlu0 %1914
    %v1916 = vsel %vm725, %v1905, -inf
    %1917 = vmax.xlane.f32.xlu0 %v1916
    %v1918 = vpop.xlane.xlu0 %1917
    %v1919 = vsel %vm732, %v1910, -inf
    %1920 = vmax.xlane.f32.xlu0 %v1919
    %v1921 = vpop.xlane.xlu0 %1920
    %v1922 = vsub.f32 %v1900, %v1915
    %v1923 = vsub.f32 %v1905, %v1918
    %v1924 = vsub.f32 %v1910, %v1921
    %v1925 = vmul.f32 %v1922, 1.442695
    %v1926 = vpow.pop %v1925
    %v1927 = vmul.f32 %v1923, 1.442695
    %v1928 = vpow.pop %v1927
    %v1929 = vmul.f32 %v1924, 1.442695
    %v1930 = vpow.pop %v1929
    %v1931 = vsel %vm725, %v1926, 0.0
    %1932 = vadd.xlane.f32.xlu0 %v1931
    %v1933 = vpop.xlane.xlu0 %1932
    %v1934 = vsel %vm725, %v1928, 0.0
    %1935 = vadd.xlane.f32.xlu0 %v1934
    %v1936 = vpop.xlane.xlu0 %1935
    %v1937 = vsel %vm732, %v1930, 0.0
    %1938 = vadd.xlane.f32.xlu0 %v1937
    %v1939 = vpop.xlane.xlu0 %1938
    %v1940 = vrcp.pop %v1933
    %v1941 = vrcp.pop %v1936
    %v1942 = vrcp.pop %v1939
    %v1944 = vsel %vm725, %v1926, 0
    %v1947 = vsel %vm725, %v1928, 0
    %v1950 = vsel %vm725, %v1930, 0
    %v1953 = vsel %vm766, %v1812, 0
    %1955 = vmatprep.subr.mxu0 0.0
    %1956 = vmatpush1.msra.mxu0 %v1802
    %1957 = vmatprep.subr.mxu0 0.0
    %1958 = vmatpush1.msra.mxu0 %v1807
    %1959 = vmatprep.subr.mxu0 0.0
    %1960 = vmatpush1.msra.mxu0 %v1953
    %1961 = vmatprep.subr.mxu0 0.0
    %1962 = vmatpush1.msra.mxu0 0.0
    %1963 = vmatprep.subr.mxu0 0.0
    %1964 = vmatpush1.msra.mxu0 0.0
    %1965 = vmatprep.subr.mxu0 0.0
    %1966 = vmatpush1.msra.mxu0 0.0
    %1967 = vmatprep.subr.mxu0 0.0
    %1968 = vmatpush1.msra.mxu0 0.0
    %1969 = vmatprep.subr.mxu0 0.0
    %1970 = vmatpush1.msra.mxu0 0.0
    %1971 = vmatprep.subr.mxu0 0.0
    %1972 = vmatpush1.msra.mxu0 0.0
    %1973 = vmatprep.subr.mxu0 0.0
    %1974 = vmatpush1.msra.mxu0 0.0
    %1975 = vmatprep.subr.mxu0 0.0
    %1976 = vmatpush1.msra.mxu0 0.0
    %1977 = vmatprep.subr.mxu0 0.0
    %1978 = vmatpush1.msra.mxu0 0.0
    %1979 = vmatprep.subr.mxu0 0.0
    %1980 = vmatpush1.msra.mxu0 0.0
    %1981 = vmatprep.subr.mxu0 0.0
    %1982 = vmatpush1.msra.mxu0 0.0
    %1983 = vmatprep.subr.mxu0 0.0
    %1984 = vmatpush1.msra.mxu0 0.0
    %1985 = vmatprep.subr.mxu0 0.0
    %1986 = vmatpush1.msra.mxu0 0.0
    %1987 = vmatprep.subr.mxu0 0.0
    %1988 = vmatpush1.msra.mxu0 0.0
    %1989 = vmatprep.subr.mxu0 0.0
    %1990 = vmatpush1.msra.mxu0 0.0
    %1991 = vmatprep.subr.mxu0 0.0
    %1992 = vmatpush1.msra.mxu0 0.0
    %1993 = vmatprep.subr.mxu0 0.0
    %1994 = vmatpush1.msra.mxu0 0.0
    %1995 = vmatprep.subr.mxu0 0.0
    %1996 = vmatpush1.msra.mxu0 0.0
    %1997 = vmatprep.subr.mxu0 0.0
    %1998 = vmatpush1.msra.mxu0 0.0
    %1999 = vmatprep.subr.mxu0 0.0
    %2000 = vmatpush1.msra.mxu0 0.0
    %2001 = vmatprep.subr.mxu0 0.0
    %2002 = vmatpush1.msra.mxu0 0.0
    %2003 = vmatprep.subr.mxu0 0.0
    %2004 = vmatpush1.msra.mxu0 0.0
    %2005 = vmatprep.subr.mxu0 0.0
    %2006 = vmatpush1.msra.mxu0 0.0
    %2007 = vmatprep.subr.mxu0 0.0
    %2008 = vmatpush1.msra.mxu0 0.0
    %2009 = vmatprep.subr.mxu0 0.0
    %2010 = vmatpush1.msra.mxu0 0.0
    %2011 = vmatprep.subr.mxu0 0.0
    %2012 = vmatpush1.msra.mxu0 0.0
    %2013 = vmatprep.subr.mxu0 0.0
    %2014 = vmatpush1.msra.mxu0 0.0
    %2015 = vmatprep.subr.mxu0 0.0
    %2016 = vmatpush1.msra.mxu0 0.0
    %2017 = vmatprep.subr.mxu0 0.0
    %2018 = vmatpush1.msra.mxu0 0.0
    %2019 = vmatprep.mubr.f32.mxu0 0.0
    %2020 = vmatmul.mubr.f32.gmra.mrb[0].mxu0 %v1944
    %v2021 = vpop.f32.mrb[0].mxu0
    %v2022 = vadd.f32 0.0, %v2021
    %v2023 = vpop.f32.mrb[0].mxu0
    %2024 = vmatprep.mubr.f32.mxu0 0.0
    %2025 = vmatmul.mubr.f32.gmra.mrb[0].mxu0 %v1947
    %v2026 = vpop.f32.mrb[0].mxu0
    %v2027 = vadd.f32 0.0, %v2026
    %v2028 = vpop.f32.mrb[0].mxu0
    %2029 = vmatprep.mubr.f32.mxu0 0.0
    %2030 = vmatmul.mubr.f32.gmra.mrb[0].mxu0 %v1950
    %v2031 = vpop.f32.mrb[0].mxu0
    %v2032 = vadd.f32 0.0, %v2031
    %v2033 = vpop.f32.mrb[0].mxu0
    %2034 = vdwg.mxu0
    %v2035 = vmul.f32 %v2022, %v1940
    %v2036 = vmul.f32 %v2027, %v1941
    %v2037 = vmul.f32 %v2032, %v1942
    %s2038 = scalar_lea.vmem %s16, 16
    %v2039 = vld [vmem:[%s2038] sm:$0xff]
    %v2041 = vsel %vm626, %v2035, 0
    %v2044 = vsel %vm626, %v2036, 0
    %v2047 = vsel %vm626, %v2037, 0
    %2049 = vmatprep.subr.mxu0 0.0
    %2050 = vmatpush1.msra.mxu0 %v2039
    %2051 = vmatprep.subr.mxu0 0.0
    %2052 = vmatpush1.msra.mxu0 0.0
    %2053 = vmatprep.subr.mxu0 0.0
    %2054 = vmatpush1.msra.mxu0 0.0
    %2055 = vmatprep.subr.mxu0 0.0
    %2056 = vmatpush1.msra.mxu0 0.0
    %2057 = vmatprep.subr.mxu0 0.0
    %2058 = vmatpush1.msra.mxu0 0.0
    %2059 = vmatprep.subr.mxu0 0.0
    %2060 = vmatpush1.msra.mxu0 0.0
    %2061 = vmatprep.subr.mxu0 0.0
    %2062 = vmatpush1.msra.mxu0 0.0
    %2063 = vmatprep.subr.mxu0 0.0
    %2064 = vmatpush1.msra.mxu0 0.0
    %2065 = vmatprep.subr.mxu0 0.0
    %2066 = vmatpush1.msra.mxu0 0.0
    %2067 = vmatprep.subr.mxu0 0.0
    %2068 = vmatpush1.msra.mxu0 0.0
    %2069 = vmatprep.subr.mxu0 0.0
    %2070 = vmatpush1.msra.mxu0 0.0
    %2071 = vmatprep.subr.mxu0 0.0
    %2072 = vmatpush1.msra.mxu0 0.0
    %2073 = vmatprep.subr.mxu0 0.0
    %2074 = vmatpush1.msra.mxu0 0.0
    %2075 = vmatprep.subr.mxu0 0.0
    %2076 = vmatpush1.msra.mxu0 0.0
    %2077 = vmatprep.subr.mxu0 0.0
    %2078 = vmatpush1.msra.mxu0 0.0
    %2079 = vmatprep.subr.mxu0 0.0
    %2080 = vmatpush1.msra.mxu0 0.0
    %2081 = vmatprep.subr.mxu0 0.0
    %2082 = vmatpush1.msra.mxu0 0.0
    %2083 = vmatprep.subr.mxu0 0.0
    %2084 = vmatpush1.msra.mxu0 0.0
    %2085 = vmatprep.subr.mxu0 0.0
    %2086 = vmatpush1.msra.mxu0 0.0
    %2087 = vmatprep.subr.mxu0 0.0
    %2088 = vmatpush1.msra.mxu0 0.0
    %2089 = vmatprep.subr.mxu0 0.0
    %2090 = vmatpush1.msra.mxu0 0.0
    %2091 = vmatprep.subr.mxu0 0.0
    %2092 = vmatpush1.msra.mxu0 0.0
    %2093 = vmatprep.subr.mxu0 0.0
    %2094 = vmatpush1.msra.mxu0 0.0
    %2095 = vmatprep.subr.mxu0 0.0
    %2096 = vmatpush1.msra.mxu0 0.0
    %2097 = vmatprep.subr.mxu0 0.0
    %2098 = vmatpush1.msra.mxu0 0.0
    %2099 = vmatprep.subr.mxu0 0.0
    %2100 = vmatpush1.msra.mxu0 0.0
    %2101 = vmatprep.subr.mxu0 0.0
    %2102 = vmatpush1.msra.mxu0 0.0
    %2103 = vmatprep.subr.mxu0 0.0
    %2104 = vmatpush1.msra.mxu0 0.0
    %2105 = vmatprep.subr.mxu0 0.0
    %2106 = vmatpush1.msra.mxu0 0.0
    %2107 = vmatprep.subr.mxu0 0.0
    %2108 = vmatpush1.msra.mxu0 0.0
    %2109 = vmatprep.subr.mxu0 0.0
    %2110 = vmatpush1.msra.mxu0 0.0
    %2111 = vmatprep.subr.mxu0 0.0
    %2112 = vmatpush1.msra.mxu0 0.0
    %2113 = vmatprep.mubr.f32.mxu0 0.0
    %2114 = vmatmul.mubr.f32.gmra.mrb[0].mxu0 %v2041
    %v2115 = vpop.f32.mrb[0].mxu0
    %v2116 = vadd.f32 0.0, %v2115
    %v2117 = vpop.f32.mrb[0].mxu0
    %2118 = vmatprep.mubr.f32.mxu0 0.0
    %2119 = vmatmul.mubr.f32.gmra.mrb[0].mxu0 %v2044
    %v2120 = vpop.f32.mrb[0].mxu0
    %v2121 = vadd.f32 0.0, %v2120
    %v2122 = vpop.f32.mrb[0].mxu0
    %2123 = vmatprep.mubr.f32.mxu0 0.0
    %2124 = vmatmul.mubr.f32.gmra.mrb[0].mxu0 %v2047
    %v2125 = vpop.f32.mrb[0].mxu0
    %v2126 = vadd.f32 0.0, %v2125
    %v2127 = vpop.f32.mrb[0].mxu0
    %2128 = vdwg.mxu0
    %v2129 = vadd.f32 %v1523, %v2116
    %v2130 = vadd.f32 %v1528, %v2121
    %v2131 = vadd.f32 %v1533, %v2126
    %s2132 = scalar_lea.vmem %s10, 96
    %v2133 = vld [vmem:[%s2132] sm:$0xff]
    %v2134 = vld [vmem:[%s2132 + $0x8] sm:$0xff]
    %v2135 = vld [vmem:[%s2132 + $0x10] sm:$0xff]
    %v2136 = vld [vmem:[%s2132 + $0x18] sm:$0xff]
    %s2137 = scalar_lea.vmem %s11, 3
    %v2138 = vld [vmem:[%s2137] sm:$0x1]
    %v2140 = vlaneseq
    %v2141 = vshrl.u32 %v2140, 7
    %v2142 = vsub.s32 0, %v2141
    %v2143 = vrot.slane %v2138, %v2142
    %2145 = vmatprep.subr.mxu0 0.0
    %2146 = vmatpush1.msra.mxu0 %v2133
    %2147 = vmatprep.subr.mxu0 0.0
    %2148 = vmatpush1.msra.mxu0 %v2134
    %2149 = vmatprep.subr.mxu0 0.0
    %2150 = vmatpush1.msra.mxu0 %v2135
    %2151 = vmatprep.subr.mxu0 0.0
    %2152 = vmatpush1.msra.mxu0 %v2136
    %2153 = vmatprep.subr.mxu0 0.0
    %2154 = vmatpush1.msra.mxu0 0.0
    %2155 = vmatprep.subr.mxu0 0.0
    %2156 = vmatpush1.msra.mxu0 0.0
    %2157 = vmatprep.subr.mxu0 0.0
    %2158 = vmatpush1.msra.mxu0 0.0
    %2159 = vmatprep.subr.mxu0 0.0
    %2160 = vmatpush1.msra.mxu0 0.0
    %2161 = vmatprep.subr.mxu0 0.0
    %2162 = vmatpush1.msra.mxu0 0.0
    %2163 = vmatprep.subr.mxu0 0.0
    %2164 = vmatpush1.msra.mxu0 0.0
    %2165 = vmatprep.subr.mxu0 0.0
    %2166 = vmatpush1.msra.mxu0 0.0
    %2167 = vmatprep.subr.mxu0 0.0
    %2168 = vmatpush1.msra.mxu0 0.0
    %2169 = vmatprep.subr.mxu0 0.0
    %2170 = vmatpush1.msra.mxu0 0.0
    %2171 = vmatprep.subr.mxu0 0.0
    %2172 = vmatpush1.msra.mxu0 0.0
    %2173 = vmatprep.subr.mxu0 0.0
    %2174 = vmatpush1.msra.mxu0 0.0
    %2175 = vmatprep.subr.mxu0 0.0
    %2176 = vmatpush1.msra.mxu0 0.0
    %2177 = vmatprep.subr.mxu0 0.0
    %2178 = vmatpush1.msra.mxu0 0.0
    %2179 = vmatprep.subr.mxu0 0.0
    %2180 = vmatpush1.msra.mxu0 0.0
    %2181 = vmatprep.subr.mxu0 0.0
    %2182 = vmatpush1.msra.mxu0 0.0
    %2183 = vmatprep.subr.mxu0 0.0
    %2184 = vmatpush1.msra.mxu0 0.0
    %2185 = vmatprep.subr.mxu0 0.0
    %2186 = vmatpush1.msra.mxu0 0.0
    %2187 = vmatprep.subr.mxu0 0.0
    %2188 = vmatpush1.msra.mxu0 0.0
    %2189 = vmatprep.subr.mxu0 0.0
    %2190 = vmatpush1.msra.mxu0 0.0
    %2191 = vmatprep.subr.mxu0 0.0
    %2192 = vmatpush1.msra.mxu0 0.0
    %2193 = vmatprep.subr.mxu0 0.0
    %2194 = vmatpush1.msra.mxu0 0.0
    %2195 = vmatprep.subr.mxu0 0.0
    %2196 = vmatpush1.msra.mxu0 0.0
    %2197 = vmatprep.subr.mxu0 0.0
    %2198 = vmatpush1.msra.mxu0 0.0
    %2199 = vmatprep.subr.mxu0 0.0
    %2200 = vmatpush1.msra.mxu0 0.0
    %2201 = vmatprep.subr.mxu0 0.0
    %2202 = vmatpush1.msra.mxu0 0.0
    %2203 = vmatprep.subr.mxu0 0.0
    %2204 = vmatpush1.msra.mxu0 0.0
    %2205 = vmatprep.subr.mxu0 0.0
    %2206 = vmatpush1.msra.mxu0 0.0
    %2207 = vmatprep.subr.mxu0 0.0
    %2208 = vmatpush1.msra.mxu0 0.0
    %2209 = vmatprep.mubr.f32.mxu0 0.0
    %2210 = vmatmul.mubr.f32.gmra.mrb[0].mxu0 %v356
    %v2211 = vpop.f32.mrb[0].mxu0
    %v2212 = vadd.f32 %v2143, %v2211
    %v2213 = vpop.f32.mrb[0].mxu0
    %2214 = vmatprep.mubr.f32.mxu0 0.0
    %2215 = vmatmul.mubr.f32.gmra.mrb[0].mxu0 %v359
    %v2216 = vpop.f32.mrb[0].mxu0
    %v2217 = vadd.f32 %v2143, %v2216
    %v2218 = vpop.f32.mrb[0].mxu0
    %2219 = vmatprep.mubr.f32.mxu0 0.0
    %2220 = vmatmul.mubr.f32.gmra.mrb[0].mxu0 %v362
    %v2221 = vpop.f32.mrb[0].mxu0
    %v2222 = vadd.f32 %v2143, %v2221
    %v2223 = vpop.f32.mrb[0].mxu0
    %2224 = vdwg.mxu0
    %s2225 = scalar_lea.vmem %s12, 96
    %v2226 = vld [vmem:[%s2225] sm:$0xff]
    %v2227 = vld [vmem:[%s2225 + $0x8] sm:$0xff]
    %v2228 = vld [vmem:[%s2225 + $0x10] sm:$0xff]
    %v2229 = vld [vmem:[%s2225 + $0x18] sm:$0xff]
    %s2230 = scalar_lea.vmem %s13, 3
    %v2231 = vld [vmem:[%s2230] sm:$0x1]
    %v2233 = vlaneseq
    %v2234 = vshrl.u32 %v2233, 7
    %v2235 = vsub.s32 0, %v2234
    %v2236 = vrot.slane %v2231, %v2235
    %2238 = vmatprep.subr.mxu0 0.0
    %2239 = vmatpush1.msra.mxu0 %v2226
    %2240 = vmatprep.subr.mxu0 0.0
    %2241 = vmatpush1.msra.mxu0 %v2227
    %2242 = vmatprep.subr.mxu0 0.0
    %2243 = vmatpush1.msra.mxu0 %v2228
    %2244 = vmatprep.subr.mxu0 0.0
    %2245 = vmatpush1.msra.mxu0 %v2229
    %2246 = vmatprep.subr.mxu0 0.0
    %2247 = vmatpush1.msra.mxu0 0.0
    %2248 = vmatprep.subr.mxu0 0.0
    %2249 = vmatpush1.msra.mxu0 0.0
    %2250 = vmatprep.subr.mxu0 0.0
    %2251 = vmatpush1.msra.mxu0 0.0
    %2252 = vmatprep.subr.mxu0 0.0
    %2253 = vmatpush1.msra.mxu0 0.0
    %2254 = vmatprep.subr.mxu0 0.0
    %2255 = vmatpush1.msra.mxu0 0.0
    %2256 = vmatprep.subr.mxu0 0.0
    %2257 = vmatpush1.msra.mxu0 0.0
    %2258 = vmatprep.subr.mxu0 0.0
    %2259 = vmatpush1.msra.mxu0 0.0
    %2260 = vmatprep.subr.mxu0 0.0
    %2261 = vmatpush1.msra.mxu0 0.0
    %2262 = vmatprep.subr.mxu0 0.0
    %2263 = vmatpush1.msra.mxu0 0.0
    %2264 = vmatprep.subr.mxu0 0.0
    %2265 = vmatpush1.msra.mxu0 0.0
    %2266 = vmatprep.subr.mxu0 0.0
    %2267 = vmatpush1.msra.mxu0 0.0
    %2268 = vmatprep.subr.mxu0 0.0
    %2269 = vmatpush1.msra.mxu0 0.0
    %2270 = vmatprep.subr.mxu0 0.0
    %2271 = vmatpush1.msra.mxu0 0.0
    %2272 = vmatprep.subr.mxu0 0.0
    %2273 = vmatpush1.msra.mxu0 0.0
    %2274 = vmatprep.subr.mxu0 0.0
    %2275 = vmatpush1.msra.mxu0 0.0
    %2276 = vmatprep.subr.mxu0 0.0
    %2277 = vmatpush1.msra.mxu0 0.0
    %2278 = vmatprep.subr.mxu0 0.0
    %2279 = vmatpush1.msra.mxu0 0.0
    %2280 = vmatprep.subr.mxu0 0.0
    %2281 = vmatpush1.msra.mxu0 0.0
    %2282 = vmatprep.subr.mxu0 0.0
    %2283 = vmatpush1.msra.mxu0 0.0
    %2284 = vmatprep.subr.mxu0 0.0
    %2285 = vmatpush1.msra.mxu0 0.0
    %2286 = vmatprep.subr.mxu0 0.0
    %2287 = vmatpush1.msra.mxu0 0.0
    %2288 = vmatprep.subr.mxu0 0.0
    %2289 = vmatpush1.msra.mxu0 0.0
    %2290 = vmatprep.subr.mxu0 0.0
    %2291 = vmatpush1.msra.mxu0 0.0
    %2292 = vmatprep.subr.mxu0 0.0
    %2293 = vmatpush1.msra.mxu0 0.0
    %2294 = vmatprep.subr.mxu0 0.0
    %2295 = vmatpush1.msra.mxu0 0.0
    %2296 = vmatprep.subr.mxu0 0.0
    %2297 = vmatpush1.msra.mxu0 0.0
    %2298 = vmatprep.subr.mxu0 0.0
    %2299 = vmatpush1.msra.mxu0 0.0
    %2300 = vmatprep.subr.mxu0 0.0
    %2301 = vmatpush1.msra.mxu0 0.0
    %2302 = vmatprep.mubr.f32.mxu0 0.0
    %2303 = vmatmul.mubr.f32.gmra.mrb[0].mxu0 %v356
    %v2304 = vpop.f32.mrb[0].mxu0
    %v2305 = vadd.f32 %v2236, %v2304
    %v2306 = vpop.f32.mrb[0].mxu0
    %2307 = vmatprep.mubr.f32.mxu0 0.0
    %2308 = vmatmul.mubr.f32.gmra.mrb[0].mxu0 %v359
    %v2309 = vpop.f32.mrb[0].mxu0
    %v2310 = vadd.f32 %v2236, %v2309
    %v2311 = vpop.f32.mrb[0].mxu0
    %2312 = vmatprep.mubr.f32.mxu0 0.0
    %2313 = vmatmul.mubr.f32.gmra.mrb[0].mxu0 %v362
    %v2314 = vpop.f32.mrb[0].mxu0
    %v2315 = vadd.f32 %v2236, %v2314
    %v2316 = vpop.f32.mrb[0].mxu0
    %2317 = vdwg.mxu0
    %s2318 = scalar_lea.vmem %s14, 96
    %v2319 = vld [vmem:[%s2318] sm:$0xff]
    %v2320 = vld [vmem:[%s2318 + $0x8] sm:$0xff]
    %v2321 = vld [vmem:[%s2318 + $0x10] sm:$0xff]
    %v2322 = vld [vmem:[%s2318 + $0x18] sm:$0xff]
    %s2323 = scalar_lea.vmem %s15, 3
    %v2324 = vld [vmem:[%s2323] sm:$0x1]
    %v2326 = vlaneseq
    %v2327 = vshrl.u32 %v2326, 7
    %v2328 = vsub.s32 0, %v2327
    %v2329 = vrot.slane %v2324, %v2328
    %2331 = vmatprep.subr.mxu0 0.0
    %2332 = vmatpush1.msra.mxu0 %v2319
    %2333 = vmatprep.subr.mxu0 0.0
    %2334 = vmatpush1.msra.mxu0 %v2320
    %2335 = vmatprep.subr.mxu0 0.0
    %2336 = vmatpush1.msra.mxu0 %v2321
    %2337 = vmatprep.subr.mxu0 0.0
    %2338 = vmatpush1.msra.mxu0 %v2322
    %2339 = vmatprep.subr.mxu0 0.0
    %2340 = vmatpush1.msra.mxu0 0.0
    %2341 = vmatprep.subr.mxu0 0.0
    %2342 = vmatpush1.msra.mxu0 0.0
    %2343 = vmatprep.subr.mxu0 0.0
    %2344 = vmatpush1.msra.mxu0 0.0
    %2345 = vmatprep.subr.mxu0 0.0
    %2346 = vmatpush1.msra.mxu0 0.0
    %2347 = vmatprep.subr.mxu0 0.0
    %2348 = vmatpush1.msra.mxu0 0.0
    %2349 = vmatprep.subr.mxu0 0.0
    %2350 = vmatpush1.msra.mxu0 0.0
    %2351 = vmatprep.subr.mxu0 0.0
    %2352 = vmatpush1.msra.mxu0 0.0
    %2353 = vmatprep.subr.mxu0 0.0
    %2354 = vmatpush1.msra.mxu0 0.0
    %2355 = vmatprep.subr.mxu0 0.0
    %2356 = vmatpush1.msra.mxu0 0.0
    %2357 = vmatprep.subr.mxu0 0.0
    %2358 = vmatpush1.msra.mxu0 0.0
    %2359 = vmatprep.subr.mxu0 0.0
    %2360 = vmatpush1.msra.mxu0 0.0
    %2361 = vmatprep.subr.mxu0 0.0
    %2362 = vmatpush1.msra.mxu0 0.0
    %2363 = vmatprep.subr.mxu0 0.0
    %2364 = vmatpush1.msra.mxu0 0.0
    %2365 = vmatprep.subr.mxu0 0.0
    %2366 = vmatpush1.msra.mxu0 0.0
    %2367 = vmatprep.subr.mxu0 0.0
    %2368 = vmatpush1.msra.mxu0 0.0
    %2369 = vmatprep.subr.mxu0 0.0
    %2370 = vmatpush1.msra.mxu0 0.0
    %2371 = vmatprep.subr.mxu0 0.0
    %2372 = vmatpush1.msra.mxu0 0.0
    %2373 = vmatprep.subr.mxu0 0.0
    %2374 = vmatpush1.msra.mxu0 0.0
    %2375 = vmatprep.subr.mxu0 0.0
    %2376 = vmatpush1.msra.mxu0 0.0
    %2377 = vmatprep.subr.mxu0 0.0
    %2378 = vmatpush1.msra.mxu0 0.0
    %2379 = vmatprep.subr.mxu0 0.0
    %2380 = vmatpush1.msra.mxu0 0.0
    %2381 = vmatprep.subr.mxu0 0.0
    %2382 = vmatpush1.msra.mxu0 0.0
    %2383 = vmatprep.subr.mxu0 0.0
    %2384 = vmatpush1.msra.mxu0 0.0
    %2385 = vmatprep.subr.mxu0 0.0
    %2386 = vmatpush1.msra.mxu0 0.0
    %2387 = vmatprep.subr.mxu0 0.0
    %2388 = vmatpush1.msra.mxu0 0.0
    %2389 = vmatprep.subr.mxu0 0.0
    %2390 = vmatpush1.msra.mxu0 0.0
    %2391 = vmatprep.subr.mxu0 0.0
    %2392 = vmatpush1.msra.mxu0 0.0
    %2393 = vmatprep.subr.mxu0 0.0
    %2394 = vmatpush1.msra.mxu0 0.0
    %2395 = vmatprep.mubr.f32.mxu0 0.0
    %2396 = vmatmul.mubr.f32.gmra.mrb[0].mxu0 %v356
    %v2397 = vpop.f32.mrb[0].mxu0
    %v2398 = vadd.f32 %v2329, %v2397
    %v2399 = vpop.f32.mrb[0].mxu0
    %2400 = vmatprep.mubr.f32.mxu0 0.0
    %2401 = vmatmul.mubr.f32.gmra.mrb[0].mxu0 %v359
    %v2402 = vpop.f32.mrb[0].mxu0
    %v2403 = vadd.f32 %v2329, %v2402
    %v2404 = vpop.f32.mrb[0].mxu0
    %2405 = vmatprep.mubr.f32.mxu0 0.0
    %2406 = vmatmul.mubr.f32.gmra.mrb[0].mxu0 %v362
    %v2407 = vpop.f32.mrb[0].mxu0
    %v2408 = vadd.f32 %v2329, %v2407
    %v2409 = vpop.f32.mrb[0].mxu0
    %2410 = vdwg.mxu0
    %v2412 = vsel %vm626, %v2212, 0
    %v2415 = vsel %vm626, %v2217, 0
    %v2418 = vsel %vm626, %v2222, 0
    %v2421 = vsel %vm626, %v2305, 0
    %v2424 = vsel %vm626, %v2310, 0
    %v2427 = vsel %vm626, %v2315, 0
    %2429 = vmatprep.subr.mxu0 0.0
    %2430 = vmatpush1.xpose.msra.mxu0 %v2421
    %2431 = vmatprep.subr.mxu0 0.0
    %2432 = vmatpush1.xpose.msra.mxu0 %v2424
    %2433 = vmatprep.subr.mxu0 0.0
    %2434 = vmatpush1.xpose.msra.mxu0 %v2427
    %2435 = vmatprep.subr.mxu0 0.0
    %2436 = vmatpush1.xpose.msra.mxu0 0.0
    %2437 = vmatprep.subr.mxu0 0.0
    %2438 = vmatpush1.xpose.msra.mxu0 0.0
    %2439 = vmatprep.subr.mxu0 0.0
    %2440 = vmatpush1.xpose.msra.mxu0 0.0
    %2441 = vmatprep.subr.mxu0 0.0
    %2442 = vmatpush1.xpose.msra.mxu0 0.0
    %2443 = vmatprep.subr.mxu0 0.0
    %2444 = vmatpush1.xpose.msra.mxu0 0.0
    %2445 = vmatprep.subr.mxu0 0.0
    %2446 = vmatpush1.xpose.msra.mxu0 0.0
    %2447 = vmatprep.subr.mxu0 0.0
    %2448 = vmatpush1.xpose.msra.mxu0 0.0
    %2449 = vmatprep.subr.mxu0 0.0
    %2450 = vmatpush1.xpose.msra.mxu0 0.0
    %2451 = vmatprep.subr.mxu0 0.0
    %2452 = vmatpush1.xpose.msra.mxu0 0.0
    %2453 = vmatprep.subr.mxu0 0.0
    %2454 = vmatpush1.xpose.msra.mxu0 0.0
    %2455 = vmatprep.subr.mxu0 0.0
    %2456 = vmatpush1.xpose.msra.mxu0 0.0
    %2457 = vmatprep.subr.mxu0 0.0
    %2458 = vmatpush1.xpose.msra.mxu0 0.0
    %2459 = vmatprep.subr.mxu0 0.0
    %2460 = vmatpush1.xpose.msra.mxu0 0.0
    %2461 = vmatprep.subr.mxu0 0.0
    %2462 = vmatpush1.xpose.msra.mxu0 0.0
    %2463 = vmatprep.subr.mxu0 0.0
    %2464 = vmatpush1.xpose.msra.mxu0 0.0
    %2465 = vmatprep.subr.mxu0 0.0
    %2466 = vmatpush1.xpose.msra.mxu0 0.0
    %2467 = vmatprep.subr.mxu0 0.0
    %2468 = vmatpush1.xpose.msra.mxu0 0.0
    %2469 = vmatprep.subr.mxu0 0.0
    %2470 = vmatpush1.xpose.msra.mxu0 0.0
    %2471 = vmatprep.subr.mxu0 0.0
    %2472 = vmatpush1.xpose.msra.mxu0 0.0
    %2473 = vmatprep.subr.mxu0 0.0
    %2474 = vmatpush1.xpose.msra.mxu0 0.0
    %2475 = vmatprep.subr.mxu0 0.0
    %2476 = vmatpush1.xpose.msra.mxu0 0.0
    %2477 = vmatprep.subr.mxu0 0.0
    %2478 = vmatpush1.xpose.msra.mxu0 0.0
    %2479 = vmatprep.subr.mxu0 0.0
    %2480 = vmatpush1.xpose.msra.mxu0 0.0
    %2481 = vmatprep.subr.mxu0 0.0
    %2482 = vmatpush1.xpose.msra.mxu0 0.0
    %2483 = vmatprep.subr.mxu0 0.0
    %2484 = vmatpush1.xpose.msra.mxu0 0.0
    %2485 = vmatprep.subr.mxu0 0.0
    %2486 = vmatpush1.xpose.msra.mxu0 0.0
    %2487 = vmatprep.subr.mxu0 0.0
    %2488 = vmatpush1.xpose.msra.mxu0 0.0
    %2489 = vmatprep.subr.mxu0 0.0
    %2490 = vmatpush1.xpose.msra.mxu0 0.0
    %2491 = vmatprep.subr.mxu0 0.0
    %2492 = vmatpush1.xpose.msra.mxu0 0.0
    %2493 = vmatprep.mubr.f32.mxu0 0.0
    %2494 = vmatmul.mubr.f32.gmra.mrb[0].mxu0 %v2412
    %v2495 = vpop.f32.mrb[0].mxu0
    %v2496 = vadd.f32 %v340, %v2495
    %v2497 = vpop.f32.mrb[0].mxu0
    %2498 = vmatprep.mubr.f32.mxu0 0.0
    %2499 = vmatmul.mubr.f32.gmra.mrb[0].mxu0 %v2415
    %v2500 = vpop.f32.mrb[0].mxu0
    %v2501 = vadd.f32 %v341, %v2500
    %v2502 = vpop.f32.mrb[0].mxu0
    %2503 = vmatprep.mubr.f32.mxu0 0.0
    %2504 = vmatmul.mubr.f32.gmra.mrb[0].mxu0 %v2418
    %v2505 = vpop.f32.mrb[0].mxu0
    %v2506 = vadd.f32 %v342, %v2505
    %v2507 = vpop.f32.mrb[0].mxu0
    %2508 = vdwg.mxu0
    %v2509 = vsel %vm725, %v2496, -inf
    %2510 = vmax.xlane.f32.xlu0 %v2509
    %v2511 = vpop.xlane.xlu0 %2510
    %v2512 = vsel %vm725, %v2501, -inf
    %2513 = vmax.xlane.f32.xlu0 %v2512
    %v2514 = vpop.xlane.xlu0 %2513
    %v2515 = vsel %vm732, %v2506, -inf
    %2516 = vmax.xlane.f32.xlu0 %v2515
    %v2517 = vpop.xlane.xlu0 %2516
    %v2518 = vsub.f32 %v2496, %v2511
    %v2519 = vsub.f32 %v2501, %v2514
    %v2520 = vsub.f32 %v2506, %v2517
    %v2521 = vmul.f32 %v2518, 1.442695
    %v2522 = vpow.pop %v2521
    %v2523 = vmul.f32 %v2519, 1.442695
    %v2524 = vpow.pop %v2523
    %v2525 = vmul.f32 %v2520, 1.442695
    %v2526 = vpow.pop %v2525
    %v2527 = vsel %vm725, %v2522, 0.0
    %2528 = vadd.xlane.f32.xlu0 %v2527
    %v2529 = vpop.xlane.xlu0 %2528
    %v2530 = vsel %vm725, %v2524, 0.0
    %2531 = vadd.xlane.f32.xlu0 %v2530
    %v2532 = vpop.xlane.xlu0 %2531
    %v2533 = vsel %vm732, %v2526, 0.0
    %2534 = vadd.xlane.f32.xlu0 %v2533
    %v2535 = vpop.xlane.xlu0 %2534
    %v2536 = vrcp.pop %v2529
    %v2537 = vrcp.pop %v2532
    %v2538 = vrcp.pop %v2535
    %v2540 = vsel %vm725, %v2522, 0
    %v2543 = vsel %vm725, %v2524, 0
    %v2546 = vsel %vm725, %v2526, 0
    %v2549 = vsel %vm766, %v2408, 0
    %2551 = vmatprep.subr.mxu0 0.0
    %2552 = vmatpush1.msra.mxu0 %v2398
    %2553 = vmatprep.subr.mxu0 0.0
    %2554 = vmatpush1.msra.mxu0 %v2403
    %2555 = vmatprep.subr.mxu0 0.0
    %2556 = vmatpush1.msra.mxu0 %v2549
    %2557 = vmatprep.subr.mxu0 0.0
    %2558 = vmatpush1.msra.mxu0 0.0
    %2559 = vmatprep.subr.mxu0 0.0
    %2560 = vmatpush1.msra.mxu0 0.0
    %2561 = vmatprep.subr.mxu0 0.0
    %2562 = vmatpush1.msra.mxu0 0.0
    %2563 = vmatprep.subr.mxu0 0.0
    %2564 = vmatpush1.msra.mxu0 0.0
    %2565 = vmatprep.subr.mxu0 0.0
    %2566 = vmatpush1.msra.mxu0 0.0
    %2567 = vmatprep.subr.mxu0 0.0
    %2568 = vmatpush1.msra.mxu0 0.0
    %2569 = vmatprep.subr.mxu0 0.0
    %2570 = vmatpush1.msra.mxu0 0.0
    %2571 = vmatprep.subr.mxu0 0.0
    %2572 = vmatpush1.msra.mxu0 0.0
    %2573 = vmatprep.subr.mxu0 0.0
    %2574 = vmatpush1.msra.mxu0 0.0
    %2575 = vmatprep.subr.mxu0 0.0
    %2576 = vmatpush1.msra.mxu0 0.0
    %2577 = vmatprep.subr.mxu0 0.0
    %2578 = vmatpush1.msra.mxu0 0.0
    %2579 = vmatprep.subr.mxu0 0.0
    %2580 = vmatpush1.msra.mxu0 0.0
    %2581 = vmatprep.subr.mxu0 0.0
    %2582 = vmatpush1.msra.mxu0 0.0
    %2583 = vmatprep.subr.mxu0 0.0
    %2584 = vmatpush1.msra.mxu0 0.0
    %2585 = vmatprep.subr.mxu0 0.0
    %2586 = vmatpush1.msra.mxu0 0.0
    %2587 = vmatprep.subr.mxu0 0.0
    %2588 = vmatpush1.msra.mxu0 0.0
    %2589 = vmatprep.subr.mxu0 0.0
    %2590 = vmatpush1.msra.mxu0 0.0
    %2591 = vmatprep.subr.mxu0 0.0
    %2592 = vmatpush1.msra.mxu0 0.0
    %2593 = vmatprep.subr.mxu0 0.0
    %2594 = vmatpush1.msra.mxu0 0.0
    %2595 = vmatprep.subr.mxu0 0.0
    %2596 = vmatpush1.msra.mxu0 0.0
    %2597 = vmatprep.subr.mxu0 0.0
    %2598 = vmatpush1.msra.mxu0 0.0
    %2599 = vmatprep.subr.mxu0 0.0
    %2600 = vmatpush1.msra.mxu0 0.0
    %2601 = vmatprep.subr.mxu0 0.0
    %2602 = vmatpush1.msra.mxu0 0.0
    %2603 = vmatprep.subr.mxu0 0.0
    %2604 = vmatpush1.msra.mxu0 0.0
    %2605 = vmatprep.subr.mxu0 0.0
    %2606 = vmatpush1.msra.mxu0 0.0
    %2607 = vmatprep.subr.mxu0 0.0
    %2608 = vmatpush1.msra.mxu0 0.0
    %2609 = vmatprep.subr.mxu0 0.0
    %2610 = vmatpush1.msra.mxu0 0.0
    %2611 = vmatprep.subr.mxu0 0.0
    %2612 = vmatpush1.msra.mxu0 0.0
    %2613 = vmatprep.subr.mxu0 0.0
    %2614 = vmatpush1.msra.mxu0 0.0
    %2615 = vmatprep.mubr.f32.mxu0 0.0
    %2616 = vmatmul.mubr.f32.gmra.mrb[0].mxu0 %v2540
    %v2617 = vpop.f32.mrb[0].mxu0
    %v2618 = vadd.f32 0.0, %v2617
    %v2619 = vpop.f32.mrb[0].mxu0
    %2620 = vmatprep.mubr.f32.mxu0 0.0
    %2621 = vmatmul.mubr.f32.gmra.mrb[0].mxu0 %v2543
    %v2622 = vpop.f32.mrb[0].mxu0
    %v2623 = vadd.f32 0.0, %v2622
    %v2624 = vpop.f32.mrb[0].mxu0
    %2625 = vmatprep.mubr.f32.mxu0 0.0
    %2626 = vmatmul.mubr.f32.gmra.mrb[0].mxu0 %v2546
    %v2627 = vpop.f32.mrb[0].mxu0
    %v2628 = vadd.f32 0.0, %v2627
    %v2629 = vpop.f32.mrb[0].mxu0
    %2630 = vdwg.mxu0
    %v2631 = vmul.f32 %v2618, %v2536
    %v2632 = vmul.f32 %v2623, %v2537
    %v2633 = vmul.f32 %v2628, %v2538
    %s2634 = scalar_lea.vmem %s16, 24
    %v2635 = vld [vmem:[%s2634] sm:$0xff]
    %v2637 = vsel %vm626, %v2631, 0
    %v2640 = vsel %vm626, %v2632, 0
    %v2643 = vsel %vm626, %v2633, 0
    %2645 = vmatprep.subr.mxu0 0.0
    %2646 = vmatpush1.msra.mxu0 %v2635
    %2647 = vmatprep.subr.mxu0 0.0
    %2648 = vmatpush1.msra.mxu0 0.0
    %2649 = vmatprep.subr.mxu0 0.0
    %2650 = vmatpush1.msra.mxu0 0.0
    %2651 = vmatprep.subr.mxu0 0.0
    %2652 = vmatpush1.msra.mxu0 0.0
    %2653 = vmatprep.subr.mxu0 0.0
    %2654 = vmatpush1.msra.mxu0 0.0
    %2655 = vmatprep.subr.mxu0 0.0
    %2656 = vmatpush1.msra.mxu0 0.0
    %2657 = vmatprep.subr.mxu0 0.0
    %2658 = vmatpush1.msra.mxu0 0.0
    %2659 = vmatprep.subr.mxu0 0.0
    %2660 = vmatpush1.msra.mxu0 0.0
    %2661 = vmatprep.subr.mxu0 0.0
    %2662 = vmatpush1.msra.mxu0 0.0
    %2663 = vmatprep.subr.mxu0 0.0
    %2664 = vmatpush1.msra.mxu0 0.0
    %2665 = vmatprep.subr.mxu0 0.0
    %2666 = vmatpush1.msra.mxu0 0.0
    %2667 = vmatprep.subr.mxu0 0.0
    %2668 = vmatpush1.msra.mxu0 0.0
    %2669 = vmatprep.subr.mxu0 0.0
    %2670 = vmatpush1.msra.mxu0 0.0
    %2671 = vmatprep.subr.mxu0 0.0
    %2672 = vmatpush1.msra.mxu0 0.0
    %2673 = vmatprep.subr.mxu0 0.0
    %2674 = vmatpush1.msra.mxu0 0.0
    %2675 = vmatprep.subr.mxu0 0.0
    %2676 = vmatpush1.msra.mxu0 0.0
    %2677 = vmatprep.subr.mxu0 0.0
    %2678 = vmatpush1.msra.mxu0 0.0
    %2679 = vmatprep.subr.mxu0 0.0
    %2680 = vmatpush1.msra.mxu0 0.0
    %2681 = vmatprep.subr.mxu0 0.0
    %2682 = vmatpush1.msra.mxu0 0.0
    %2683 = vmatprep.subr.mxu0 0.0
    %2684 = vmatpush1.msra.mxu0 0.0
    %2685 = vmatprep.subr.mxu0 0.0
    %2686 = vmatpush1.msra.mxu0 0.0
    %2687 = vmatprep.subr.mxu0 0.0
    %2688 = vmatpush1.msra.mxu0 0.0
    %2689 = vmatprep.subr.mxu0 0.0
    %2690 = vmatpush1.msra.mxu0 0.0
    %2691 = vmatprep.subr.mxu0 0.0
    %2692 = vmatpush1.msra.mxu0 0.0
    %2693 = vmatprep.subr.mxu0 0.0
    %2694 = vmatpush1.msra.mxu0 0.0
    %2695 = vmatprep.subr.mxu0 0.0
    %2696 = vmatpush1.msra.mxu0 0.0
    %2697 = vmatprep.subr.mxu0 0.0
    %2698 = vmatpush1.msra.mxu0 0.0
    %2699 = vmatprep.subr.mxu0 0.0
    %2700 = vmatpush1.msra.mxu0 0.0
    %2701 = vmatprep.subr.mxu0 0.0
    %2702 = vmatpush1.msra.mxu0 0.0
    %2703 = vmatprep.subr.mxu0 0.0
    %2704 = vmatpush1.msra.mxu0 0.0
    %2705 = vmatprep.subr.mxu0 0.0
    %2706 = vmatpush1.msra.mxu0 0.0
    %2707 = vmatprep.subr.mxu0 0.0
    %2708 = vmatpush1.msra.mxu0 0.0
    %2709 = vmatprep.mubr.f32.mxu0 0.0
    %2710 = vmatmul.mubr.f32.gmra.mrb[0].mxu0 %v2637
    %v2711 = vpop.f32.mrb[0].mxu0
    %v2712 = vadd.f32 0.0, %v2711
    %v2713 = vpop.f32.mrb[0].mxu0
    %2714 = vmatprep.mubr.f32.mxu0 0.0
    %2715 = vmatmul.mubr.f32.gmra.mrb[0].mxu0 %v2640
    %v2716 = vpop.f32.mrb[0].mxu0
    %v2717 = vadd.f32 0.0, %v2716
    %v2718 = vpop.f32.mrb[0].mxu0
    %2719 = vmatprep.mubr.f32.mxu0 0.0
    %2720 = vmatmul.mubr.f32.gmra.mrb[0].mxu0 %v2643
    %v2721 = vpop.f32.mrb[0].mxu0
    %v2722 = vadd.f32 0.0, %v2721
    %v2723 = vpop.f32.mrb[0].mxu0
    %2724 = vdwg.mxu0
    %v2725 = vadd.f32 %v2129, %v2712
    %v2726 = vadd.f32 %v2130, %v2717
    %v2727 = vadd.f32 %v2131, %v2722
    %v2728 = vld [vmem:[%s17] sm:$0x1]
    %v2730 = vlaneseq
    %v2731 = vshrl.u32 %v2730, 7
    %v2732 = vsub.s32 0, %v2731
    %v2733 = vrot.slane %v2728, %v2732
    %v2735 = vadd.f32 %v2725, %v2733
    %v2736 = vadd.f32 %v2726, %v2733
    %v2737 = vadd.f32 %v2727, %v2733
    %v2738 = vadd.f32 %v337, %v2735
    %v2739 = vadd.f32 %v338, %v2736
    %v2740 = vadd.f32 %v339, %v2737
    %v2741 = vld [vmem:[%s18] sm:$0x1]
    %v2742 = vld [vmem:[%s19] sm:$0x1]
    %v2743 = vsel %vm354, %v2738, 0.0
    %2744 = vadd.xlane.f32.xlu0 %v2743
    %v2745 = vpop.xlane.xlu0 %2744
    %v2746 = vsel %vm354, %v2739, 0.0
    %2747 = vadd.xlane.f32.xlu0 %v2746
    %v2748 = vpop.xlane.xlu0 %2747
    %vm2749 = vcmask 254976
    %v2750 = vsel %vm2749, %v2740, 0.0
    %2751 = vadd.xlane.f32.xlu0 %v2750
    %v2752 = vpop.xlane.xlu0 %2751
    %v2753 = vrcp.pop 32.0
    %v2754 = vmul.f32 %v2745, %v2753
    %v2755 = vmul.f32 %v2748, %v2753
    %v2756 = vmul.f32 %v2752, %v2753
    %v2757 = vsub.f32 %v2738, %v2754
    %v2758 = vsub.f32 %v2739, %v2755
    %v2759 = vsub.f32 %v2740, %v2756
    %v2760 = vmul.f32 %v2757, %v2757
    %v2761 = vmul.f32 %v2758, %v2758
    %v2762 = vmul.f32 %v2759, %v2759
    %v2763 = vsel %vm354, %v2760, 0.0
    %2764 = vadd.xlane.f32.xlu0 %v2763
    %v2765 = vpop.xlane.xlu0 %2764
    %v2766 = vsel %vm354, %v2761, 0.0
    %2767 = vadd.xlane.f32.xlu0 %v2766
    %v2768 = vpop.xlane.xlu0 %2767
    %v2769 = vsel %vm2749, %v2762, 0.0
    %2770 = vadd.xlane.f32.xlu0 %v2769
    %v2771 = vpop.xlane.xlu0 %2770
    %v2772 = vmul.f32 %v2765, %v2753
    %v2773 = vmul.f32 %v2768, %v2753
    %v2774 = vmul.f32 %v2771, %v2753
    %v2775 = vadd.f32 %v2772, 1e-05
    %v2776 = vadd.f32 %v2773, 1e-05
    %v2777 = vadd.f32 %v2774, 1e-05
    %v2778 = vrsqrt.pop %v2775
    %v2779 = vrsqrt.pop %v2776
    %v2780 = vrsqrt.pop %v2777
    %v2781 = vmul.f32 %v2757, %v2778
    %v2782 = vmul.f32 %v2758, %v2779
    %v2783 = vmul.f32 %v2759, %v2780
    %v2785 = vlaneseq
    %v2786 = vshrl.u32 %v2785, 7
    %v2787 = vsub.s32 0, %v2786
    %v2788 = vrot.slane %v2741, %v2787
    %v2790 = vmul.f32 %v2781, %v2788
    %v2791 = vmul.f32 %v2782, %v2788
    %v2792 = vmul.f32 %v2783, %v2788
    %v2794 = vlaneseq
    %v2795 = vshrl.u32 %v2794, 7
    %v2796 = vsub.s32 0, %v2795
    %v2797 = vrot.slane %v2742, %v2796
    %v2799 = vadd.f32 %v2790, %v2797
    %v2800 = vadd.f32 %v2791, %v2797
    %v2801 = vadd.f32 %v2792, %v2797
    %v2802 = vld [vmem:[%s20] sm:$0xff]
    %v2803 = vld [vmem:[%s20 + $0x8] sm:$0xff]
    %v2804 = vld [vmem:[%s20 + $0x10] sm:$0xff]
    %v2805 = vld [vmem:[%s20 + $0x18] sm:$0xff]
    %v2806 = vld [vmem:[%s21] sm:$0x1]
    %v2808 = vlaneseq
    %v2809 = vshrl.u32 %v2808, 7
    %v2810 = vsub.s32 0, %v2809
    %v2811 = vrot.slane %v2806, %v2810
    %v2814 = vsel %vm354, %v2799, 0
    %v2817 = vsel %vm354, %v2800, 0
    %v2820 = vsel %vm354, %v2801, 0
    %2822 = vmatprep.subr.mxu0 0.0
    %2823 = vmatpush1.msra.mxu0 %v2802
    %2824 = vmatprep.subr.mxu0 0.0
    %2825 = vmatpush1.msra.mxu0 %v2803
    %2826 = vmatprep.subr.mxu0 0.0
    %2827 = vmatpush1.msra.mxu0 %v2804
    %2828 = vmatprep.subr.mxu0 0.0
    %2829 = vmatpush1.msra.mxu0 %v2805
    %2830 = vmatprep.subr.mxu0 0.0
    %2831 = vmatpush1.msra.mxu0 0.0
    %2832 = vmatprep.subr.mxu0 0.0
    %2833 = vmatpush1.msra.mxu0 0.0
    %2834 = vmatprep.subr.mxu0 0.0
    %2835 = vmatpush1.msra.mxu0 0.0
    %2836 = vmatprep.subr.mxu0 0.0
    %2837 = vmatpush1.msra.mxu0 0.0
    %2838 = vmatprep.subr.mxu0 0.0
    %2839 = vmatpush1.msra.mxu0 0.0
    %2840 = vmatprep.subr.mxu0 0.0
    %2841 = vmatpush1.msra.mxu0 0.0
    %2842 = vmatprep.subr.mxu0 0.0
    %2843 = vmatpush1.msra.mxu0 0.0
    %2844 = vmatprep.subr.mxu0 0.0
    %2845 = vmatpush1.msra.mxu0 0.0
    %2846 = vmatprep.subr.mxu0 0.0
    %2847 = vmatpush1.msra.mxu0 0.0
    %2848 = vmatprep.subr.mxu0 0.0
    %2849 = vmatpush1.msra.mxu0 0.0
    %2850 = vmatprep.subr.mxu0 0.0
    %2851 = vmatpush1.msra.mxu0 0.0
    %2852 = vmatprep.subr.mxu0 0.0
    %2853 = vmatpush1.msra.mxu0 0.0
    %2854 = vmatprep.subr.mxu0 0.0
    %2855 = vmatpush1.msra.mxu0 0.0
    %2856 = vmatprep.subr.mxu0 0.0
    %2857 = vmatpush1.msra.mxu0 0.0
    %2858 = vmatprep.subr.mxu0 0.0
    %2859 = vmatpush1.msra.mxu0 0.0
    %2860 = vmatprep.subr.mxu0 0.0
    %2861 = vmatpush1.msra.mxu0 0.0
    %2862 = vmatprep.subr.mxu0 0.0
    %2863 = vmatpush1.msra.mxu0 0.0
    %2864 = vmatprep.subr.mxu0 0.0
    %2865 = vmatpush1.msra.mxu0 0.0
    %2866 = vmatprep.subr.mxu0 0.0
    %2867 = vmatpush1.msra.mxu0 0.0
    %2868 = vmatprep.subr.mxu0 0.0
    %2869 = vmatpush1.msra.mxu0 0.0
    %2870 = vmatprep.subr.mxu0 0.0
    %2871 = vmatpush1.msra.mxu0 0.0
    %2872 = vmatprep.subr.mxu0 0.0
    %2873 = vmatpush1.msra.mxu0 0.0
    %2874 = vmatprep.subr.mxu0 0.0
    %2875 = vmatpush1.msra.mxu0 0.0
    %2876 = vmatprep.subr.mxu0 0.0
    %2877 = vmatpush1.msra.mxu0 0.0
    %2878 = vmatprep.subr.mxu0 0.0
    %2879 = vmatpush1.msra.mxu0 0.0
    %2880 = vmatprep.subr.mxu0 0.0
    %2881 = vmatpush1.msra.mxu0 0.0
    %2882 = vmatprep.subr.mxu0 0.0
    %2883 = vmatpush1.msra.mxu0 0.0
    %2884 = vmatprep.subr.mxu0 0.0
    %2885 = vmatpush1.msra.mxu0 0.0
    %2886 = vmatprep.mubr.f32.mxu0 0.0
    %2887 = vmatmul.mubr.f32.gmra.mrb[0].mxu0 %v2814
    %v2888 = vpop.f32.mrb[0].mxu0
    %v2889 = vadd.f32 %v2811, %v2888
    %v2890 = vpop.f32.mrb[0].mxu0
    %2891 = vmatprep.mubr.f32.mxu0 0.0
    %2892 = vmatmul.mubr.f32.gmra.mrb[0].mxu0 %v2817
    %v2893 = vpop.f32.mrb[0].mxu0
    %v2894 = vadd.f32 %v2811, %v2893
    %v2895 = vpop.f32.mrb[0].mxu0
    %2896 = vmatprep.mubr.f32.mxu0 0.0
    %2897 = vmatmul.mubr.f32.gmra.mrb[0].mxu0 %v2820
    %v2898 = vpop.f32.mrb[0].mxu0
    %v2899 = vadd.f32 %v2811, %v2898
    %v2900 = vpop.f32.mrb[0].mxu0
    %2901 = vdwg.mxu0
    %v2902 = vmax.f32 %v2889, 0.0
    %v2903 = vmax.f32 %v2894, 0.0
    %v2904 = vmax.f32 %v2899, 0.0
    %v2905 = vld [vmem:[%s22] sm:$0xff]
    %v2906 = vld [vmem:[%s22 + $0x8] sm:$0xff]
    %v2907 = vld [vmem:[%s22 + $0x10] sm:$0xff]
    %v2908 = vld [vmem:[%s22 + $0x18] sm:$0xff]
    %v2909 = vld [vmem:[%s22 + $0x20] sm:$0xff]
    %v2910 = vld [vmem:[%s22 + $0x28] sm:$0xff]
    %v2911 = vld [vmem:[%s22 + $0x30] sm:$0xff]
    %v2912 = vld [vmem:[%s22 + $0x38] sm:$0xff]
    %v2913 = vld [vmem:[%s23] sm:$0x1]
    %v2915 = vlaneseq
    %v2916 = vshrl.u32 %v2915, 7
    %v2917 = vsub.s32 0, %v2916
    %v2918 = vrot.slane %v2913, %v2917
    %v2921 = vsel %vm213, %v2902, 0
    %v2924 = vsel %vm213, %v2903, 0
    %v2927 = vsel %vm213, %v2904, 0
    %2929 = vmatprep.subr.mxu0 0.0
    %2930 = vmatpush1.msra.mxu0 %v2905
    %2931 = vmatprep.subr.mxu0 0.0
    %2932 = vmatpush1.msra.mxu0 %v2906
    %2933 = vmatprep.subr.mxu0 0.0
    %2934 = vmatpush1.msra.mxu0 %v2907
    %2935 = vmatprep.subr.mxu0 0.0
    %2936 = vmatpush1.msra.mxu0 %v2908
    %2937 = vmatprep.subr.mxu0 0.0
    %2938 = vmatpush1.msra.mxu0 %v2909
    %2939 = vmatprep.subr.mxu0 0.0
    %2940 = vmatpush1.msra.mxu0 %v2910
    %2941 = vmatprep.subr.mxu0 0.0
    %2942 = vmatpush1.msra.mxu0 %v2911
    %2943 = vmatprep.subr.mxu0 0.0
    %2944 = vmatpush1.msra.mxu0 %v2912
    %2945 = vmatprep.subr.mxu0 0.0
    %2946 = vmatpush1.msra.mxu0 0.0
    %2947 = vmatprep.subr.mxu0 0.0
    %2948 = vmatpush1.msra.mxu0 0.0
    %2949 = vmatprep.subr.mxu0 0.0
    %2950 = vmatpush1.msra.mxu0 0.0
    %2951 = vmatprep.subr.mxu0 0.0
    %2952 = vmatpush1.msra.mxu0 0.0
    %2953 = vmatprep.subr.mxu0 0.0
    %2954 = vmatpush1.msra.mxu0 0.0
    %2955 = vmatprep.subr.mxu0 0.0
    %2956 = vmatpush1.msra.mxu0 0.0
    %2957 = vmatprep.subr.mxu0 0.0
    %2958 = vmatpush1.msra.mxu0 0.0
    %2959 = vmatprep.subr.mxu0 0.0
    %2960 = vmatpush1.msra.mxu0 0.0
    %2961 = vmatprep.subr.mxu0 0.0
    %2962 = vmatpush1.msra.mxu0 0.0
    %2963 = vmatprep.subr.mxu0 0.0
    %2964 = vmatpush1.msra.mxu0 0.0
    %2965 = vmatprep.subr.mxu0 0.0
    %2966 = vmatpush1.msra.mxu0 0.0
    %2967 = vmatprep.subr.mxu0 0.0
    %2968 = vmatpush1.msra.mxu0 0.0
    %2969 = vmatprep.subr.mxu0 0.0
    %2970 = vmatpush1.msra.mxu0 0.0
    %2971 = vmatprep.subr.mxu0 0.0
    %2972 = vmatpush1.msra.mxu0 0.0
    %2973 = vmatprep.subr.mxu0 0.0
    %2974 = vmatpush1.msra.mxu0 0.0
    %2975 = vmatprep.subr.mxu0 0.0
    %2976 = vmatpush1.msra.mxu0 0.0
    %2977 = vmatprep.subr.mxu0 0.0
    %2978 = vmatpush1.msra.mxu0 0.0
    %2979 = vmatprep.subr.mxu0 0.0
    %2980 = vmatpush1.msra.mxu0 0.0
    %2981 = vmatprep.subr.mxu0 0.0
    %2982 = vmatpush1.msra.mxu0 0.0
    %2983 = vmatprep.subr.mxu0 0.0
    %2984 = vmatpush1.msra.mxu0 0.0
    %2985 = vmatprep.subr.mxu0 0.0
    %2986 = vmatpush1.msra.mxu0 0.0
    %2987 = vmatprep.subr.mxu0 0.0
    %2988 = vmatpush1.msra.mxu0 0.0
    %2989 = vmatprep.subr.mxu0 0.0
    %2990 = vmatpush1.msra.mxu0 0.0
    %2991 = vmatprep.subr.mxu0 0.0
    %2992 = vmatpush1.msra.mxu0 0.0
    %2993 = vmatprep.mubr.f32.mxu0 0.0
    %2994 = vmatmul.mubr.f32.gmra.mrb[0].mxu0 %v2921
    %v2995 = vpop.f32.mrb[0].mxu0
    %v2996 = vadd.f32 %v2918, %v2995
    %v2997 = vpop.f32.mrb[0].mxu0
    %2998 = vmatprep.mubr.f32.mxu0 0.0
    %2999 = vmatmul.mubr.f32.gmra.mrb[0].mxu0 %v2924
    %v3000 = vpop.f32.mrb[0].mxu0
    %v3001 = vadd.f32 %v2918, %v3000
    %v3002 = vpop.f32.mrb[0].mxu0
    %3003 = vmatprep.mubr.f32.mxu0 0.0
    %3004 = vmatmul.mubr.f32.gmra.mrb[0].mxu0 %v2927
    %v3005 = vpop.f32.mrb[0].mxu0
    %v3006 = vadd.f32 %v2918, %v3005
    %v3007 = vpop.f32.mrb[0].mxu0
    %3008 = vdwg.mxu0
    %v3009 = vadd.f32 %v2799, %v2996
    %v3010 = vadd.f32 %v2800, %v3001
    %v3011 = vadd.f32 %v2801, %v3006
    %v3012 = vld [vmem:[%s24] sm:$0x1]
    %v3013 = vld [vmem:[%s25] sm:$0x1]
    %v3014 = vsel %vm354, %v3009, 0.0
    %3015 = vadd.xlane.f32.xlu0 %v3014
    %v3016 = vpop.xlane.xlu0 %3015
    %v3017 = vsel %vm354, %v3010, 0.0
    %3018 = vadd.xlane.f32.xlu0 %v3017
    %v3019 = vpop.xlane.xlu0 %3018
    %v3020 = vsel %vm2749, %v3011, 0.0
    %3021 = vadd.xlane.f32.xlu0 %v3020
    %v3022 = vpop.xlane.xlu0 %3021
    %v3023 = vmul.f32 %v3016, %v2753
    %v3024 = vmul.f32 %v3019, %v2753
    %v3025 = vmul.f32 %v3022, %v2753
    %v3026 = vsub.f32 %v3009, %v3023
    %v3027 = vsub.f32 %v3010, %v3024
    %v3028 = vsub.f32 %v3011, %v3025
    %v3029 = vmul.f32 %v3026, %v3026
    %v3030 = vmul.f32 %v3027, %v3027
    %v3031 = vmul.f32 %v3028, %v3028
    %v3032 = vsel %vm354, %v3029, 0.0
    %3033 = vadd.xlane.f32.xlu0 %v3032
    %v3034 = vpop.xlane.xlu0 %3033
    %v3035 = vsel %vm354, %v3030, 0.0
    %3036 = vadd.xlane.f32.xlu0 %v3035
    %v3037 = vpop.xlane.xlu0 %3036
    %v3038 = vsel %vm2749, %v3031, 0.0
    %3039 = vadd.xlane.f32.xlu0 %v3038
    %v3040 = vpop.xlane.xlu0 %3039
    %v3041 = vmul.f32 %v3034, %v2753
    %v3042 = vmul.f32 %v3037, %v2753
    %v3043 = vmul.f32 %v3040, %v2753
    %v3044 = vadd.f32 %v3041, 1e-05
    %v3045 = vadd.f32 %v3042, 1e-05
    %v3046 = vadd.f32 %v3043, 1e-05
    %v3047 = vrsqrt.pop %v3044
    %v3048 = vrsqrt.pop %v3045
    %v3049 = vrsqrt.pop %v3046
    %v3050 = vmul.f32 %v3026, %v3047
    %v3051 = vmul.f32 %v3027, %v3048
    %v3052 = vmul.f32 %v3028, %v3049
    %v3054 = vlaneseq
    %v3055 = vshrl.u32 %v3054, 7
    %v3056 = vsub.s32 0, %v3055
    %v3057 = vrot.slane %v3012, %v3056
    %v3059 = vmul.f32 %v3050, %v3057
    %v3060 = vmul.f32 %v3051, %v3057
    %v3061 = vmul.f32 %v3052, %v3057
    %v3063 = vlaneseq
    %v3064 = vshrl.u32 %v3063, 7
    %v3065 = vsub.s32 0, %v3064
    %v3066 = vrot.slane %v3013, %v3065
    %v3068 = vadd.f32 %v3059, %v3066
    %v3069 = vadd.f32 %v3060, %v3066
    %v3070 = vadd.f32 %v3061, %v3066
    %s3071 = scalar_lea.vmem %s10, 128
    %v3072 = vld [vmem:[%s3071] sm:$0xff]
    %v3073 = vld [vmem:[%s3071 + $0x8] sm:$0xff]
    %v3074 = vld [vmem:[%s3071 + $0x10] sm:$0xff]
    %v3075 = vld [vmem:[%s3071 + $0x18] sm:$0xff]
    %s3076 = scalar_lea.vmem %s11, 4
    %v3077 = vld [vmem:[%s3076] sm:$0x1]
    %v3079 = vlaneseq
    %v3080 = vshrl.u32 %v3079, 7
    %v3081 = vsub.s32 0, %v3080
    %v3082 = vrot.slane %v3077, %v3081
    %v3085 = vsel %vm354, %v3068, 0
    %v3088 = vsel %vm354, %v3069, 0
    %v3091 = vsel %vm354, %v3070, 0
    %3093 = vmatprep.subr.mxu0 0.0
    %3094 = vmatpush1.msra.mxu0 %v3072
    %3095 = vmatprep.subr.mxu0 0.0
    %3096 = vmatpush1.msra.mxu0 %v3073
    %3097 = vmatprep.subr.mxu0 0.0
    %3098 = vmatpush1.msra.mxu0 %v3074
    %3099 = vmatprep.subr.mxu0 0.0
    %3100 = vmatpush1.msra.mxu0 %v3075
    %3101 = vmatprep.subr.mxu0 0.0
    %3102 = vmatpush1.msra.mxu0 0.0
    %3103 = vmatprep.subr.mxu0 0.0
    %3104 = vmatpush1.msra.mxu0 0.0
    %3105 = vmatprep.subr.mxu0 0.0
    %3106 = vmatpush1.msra.mxu0 0.0
    %3107 = vmatprep.subr.mxu0 0.0
    %3108 = vmatpush1.msra.mxu0 0.0
    %3109 = vmatprep.subr.mxu0 0.0
    %3110 = vmatpush1.msra.mxu0 0.0
    %3111 = vmatprep.subr.mxu0 0.0
    %3112 = vmatpush1.msra.mxu0 0.0
    %3113 = vmatprep.subr.mxu0 0.0
    %3114 = vmatpush1.msra.mxu0 0.0
    %3115 = vmatprep.subr.mxu0 0.0
    %3116 = vmatpush1.msra.mxu0 0.0
    %3117 = vmatprep.subr.mxu0 0.0
    %3118 = vmatpush1.msra.mxu0 0.0
    %3119 = vmatprep.subr.mxu0 0.0
    %3120 = vmatpush1.msra.mxu0 0.0
    %3121 = vmatprep.subr.mxu0 0.0
    %3122 = vmatpush1.msra.mxu0 0.0
    %3123 = vmatprep.subr.mxu0 0.0
    %3124 = vmatpush1.msra.mxu0 0.0
    %3125 = vmatprep.subr.mxu0 0.0
    %3126 = vmatpush1.msra.mxu0 0.0
    %3127 = vmatprep.subr.mxu0 0.0
    %3128 = vmatpush1.msra.mxu0 0.0
    %3129 = vmatprep.subr.mxu0 0.0
    %3130 = vmatpush1.msra.mxu0 0.0
    %3131 = vmatprep.subr.mxu0 0.0
    %3132 = vmatpush1.msra.mxu0 0.0
    %3133 = vmatprep.subr.mxu0 0.0
    %3134 = vmatpush1.msra.mxu0 0.0
    %3135 = vmatprep.subr.mxu0 0.0
    %3136 = vmatpush1.msra.mxu0 0.0
    %3137 = vmatprep.subr.mxu0 0.0
    %3138 = vmatpush1.msra.mxu0 0.0
    %3139 = vmatprep.subr.mxu0 0.0
    %3140 = vmatpush1.msra.mxu0 0.0
    %3141 = vmatprep.subr.mxu0 0.0
    %3142 = vmatpush1.msra.mxu0 0.0
    %3143 = vmatprep.subr.mxu0 0.0
    %3144 = vmatpush1.msra.mxu0 0.0
    %3145 = vmatprep.subr.mxu0 0.0
    %3146 = vmatpush1.msra.mxu0 0.0
    %3147 = vmatprep.subr.mxu0 0.0
    %3148 = vmatpush1.msra.mxu0 0.0
    %3149 = vmatprep.subr.mxu0 0.0
    %3150 = vmatpush1.msra.mxu0 0.0
    %3151 = vmatprep.subr.mxu0 0.0
    %3152 = vmatpush1.msra.mxu0 0.0
    %3153 = vmatprep.subr.mxu0 0.0
    %3154 = vmatpush1.msra.mxu0 0.0
    %3155 = vmatprep.subr.mxu0 0.0
    %3156 = vmatpush1.msra.mxu0 0.0
    %3157 = vmatprep.mubr.f32.mxu0 0.0
    %3158 = vmatmul.mubr.f32.gmra.mrb[0].mxu0 %v3085
    %v3159 = vpop.f32.mrb[0].mxu0
    %v3160 = vadd.f32 %v3082, %v3159
    %v3161 = vpop.f32.mrb[0].mxu0
    %3162 = vmatprep.mubr.f32.mxu0 0.0
    %3163 = vmatmul.mubr.f32.gmra.mrb[0].mxu0 %v3088
    %v3164 = vpop.f32.mrb[0].mxu0
    %v3165 = vadd.f32 %v3082, %v3164
    %v3166 = vpop.f32.mrb[0].mxu0
    %3167 = vmatprep.mubr.f32.mxu0 0.0
    %3168 = vmatmul.mubr.f32.gmra.mrb[0].mxu0 %v3091
    %v3169 = vpop.f32.mrb[0].mxu0
    %v3170 = vadd.f32 %v3082, %v3169
    %v3171 = vpop.f32.mrb[0].mxu0
    %3172 = vdwg.mxu0
    %s3173 = scalar_lea.vmem %s12, 128
    %v3174 = vld [vmem:[%s3173] sm:$0xff]
    %v3175 = vld [vmem:[%s3173 + $0x8] sm:$0xff]
    %v3176 = vld [vmem:[%s3173 + $0x10] sm:$0xff]
    %v3177 = vld [vmem:[%s3173 + $0x18] sm:$0xff]
    %s3178 = scalar_lea.vmem %s13, 4
    %v3179 = vld [vmem:[%s3178] sm:$0x1]
    %v3181 = vlaneseq
    %v3182 = vshrl.u32 %v3181, 7
    %v3183 = vsub.s32 0, %v3182
    %v3184 = vrot.slane %v3179, %v3183
    %3186 = vmatprep.subr.mxu0 0.0
    %3187 = vmatpush1.msra.mxu0 %v3174
    %3188 = vmatprep.subr.mxu0 0.0
    %3189 = vmatpush1.msra.mxu0 %v3175
    %3190 = vmatprep.subr.mxu0 0.0
    %3191 = vmatpush1.msra.mxu0 %v3176
    %3192 = vmatprep.subr.mxu0 0.0
    %3193 = vmatpush1.msra.mxu0 %v3177
    %3194 = vmatprep.subr.mxu0 0.0
    %3195 = vmatpush1.msra.mxu0 0.0
    %3196 = vmatprep.subr.mxu0 0.0
    %3197 = vmatpush1.msra.mxu0 0.0
    %3198 = vmatprep.subr.mxu0 0.0
    %3199 = vmatpush1.msra.mxu0 0.0
    %3200 = vmatprep.subr.mxu0 0.0
    %3201 = vmatpush1.msra.mxu0 0.0
    %3202 = vmatprep.subr.mxu0 0.0
    %3203 = vmatpush1.msra.mxu0 0.0
    %3204 = vmatprep.subr.mxu0 0.0
    %3205 = vmatpush1.msra.mxu0 0.0
    %3206 = vmatprep.subr.mxu0 0.0
    %3207 = vmatpush1.msra.mxu0 0.0
    %3208 = vmatprep.subr.mxu0 0.0
    %3209 = vmatpush1.msra.mxu0 0.0
    %3210 = vmatprep.subr.mxu0 0.0
    %3211 = vmatpush1.msra.mxu0 0.0
    %3212 = vmatprep.subr.mxu0 0.0
    %3213 = vmatpush1.msra.mxu0 0.0
    %3214 = vmatprep.subr.mxu0 0.0
    %3215 = vmatpush1.msra.mxu0 0.0
    %3216 = vmatprep.subr.mxu0 0.0
    %3217 = vmatpush1.msra.mxu0 0.0
    %3218 = vmatprep.subr.mxu0 0.0
    %3219 = vmatpush1.msra.mxu0 0.0
    %3220 = vmatprep.subr.mxu0 0.0
    %3221 = vmatpush1.msra.mxu0 0.0
    %3222 = vmatprep.subr.mxu0 0.0
    %3223 = vmatpush1.msra.mxu0 0.0
    %3224 = vmatprep.subr.mxu0 0.0
    %3225 = vmatpush1.msra.mxu0 0.0
    %3226 = vmatprep.subr.mxu0 0.0
    %3227 = vmatpush1.msra.mxu0 0.0
    %3228 = vmatprep.subr.mxu0 0.0
    %3229 = vmatpush1.msra.mxu0 0.0
    %3230 = vmatprep.subr.mxu0 0.0
    %3231 = vmatpush1.msra.mxu0 0.0
    %3232 = vmatprep.subr.mxu0 0.0
    %3233 = vmatpush1.msra.mxu0 0.0
    %3234 = vmatprep.subr.mxu0 0.0
    %3235 = vmatpush1.msra.mxu0 0.0
    %3236 = vmatprep.subr.mxu0 0.0
    %3237 = vmatpush1.msra.mxu0 0.0
    %3238 = vmatprep.subr.mxu0 0.0
    %3239 = vmatpush1.msra.mxu0 0.0
    %3240 = vmatprep.subr.mxu0 0.0
    %3241 = vmatpush1.msra.mxu0 0.0
    %3242 = vmatprep.subr.mxu0 0.0
    %3243 = vmatpush1.msra.mxu0 0.0
    %3244 = vmatprep.subr.mxu0 0.0
    %3245 = vmatpush1.msra.mxu0 0.0
    %3246 = vmatprep.subr.mxu0 0.0
    %3247 = vmatpush1.msra.mxu0 0.0
    %3248 = vmatprep.subr.mxu0 0.0
    %3249 = vmatpush1.msra.mxu0 0.0
    %3250 = vmatprep.mubr.f32.mxu0 0.0
    %3251 = vmatmul.mubr.f32.gmra.mrb[0].mxu0 %v3085
    %v3252 = vpop.f32.mrb[0].mxu0
    %v3253 = vadd.f32 %v3184, %v3252
    %v3254 = vpop.f32.mrb[0].mxu0
    %3255 = vmatprep.mubr.f32.mxu0 0.0
    %3256 = vmatmul.mubr.f32.gmra.mrb[0].mxu0 %v3088
    %v3257 = vpop.f32.mrb[0].mxu0
    %v3258 = vadd.f32 %v3184, %v3257
    %v3259 = vpop.f32.mrb[0].mxu0
    %3260 = vmatprep.mubr.f32.mxu0 0.0
    %3261 = vmatmul.mubr.f32.gmra.mrb[0].mxu0 %v3091
    %v3262 = vpop.f32.mrb[0].mxu0
    %v3263 = vadd.f32 %v3184, %v3262
    %v3264 = vpop.f32.mrb[0].mxu0
    %3265 = vdwg.mxu0
    %s3266 = scalar_lea.vmem %s14, 128
    %v3267 = vld [vmem:[%s3266] sm:$0xff]
    %v3268 = vld [vmem:[%s3266 + $0x8] sm:$0xff]
    %v3269 = vld [vmem:[%s3266 + $0x10] sm:$0xff]
    %v3270 = vld [vmem:[%s3266 + $0x18] sm:$0xff]
    %s3271 = scalar_lea.vmem %s15, 4
    %v3272 = vld [vmem:[%s3271] sm:$0x1]
    %v3274 = vlaneseq
    %v3275 = vshrl.u32 %v3274, 7
    %v3276 = vsub.s32 0, %v3275
    %v3277 = vrot.slane %v3272, %v3276
    %3279 = vmatprep.subr.mxu0 0.0
    %3280 = vmatpush1.msra.mxu0 %v3267
    %3281 = vmatprep.subr.mxu0 0.0
    %3282 = vmatpush1.msra.mxu0 %v3268
    %3283 = vmatprep.subr.mxu0 0.0
    %3284 = vmatpush1.msra.mxu0 %v3269
    %3285 = vmatprep.subr.mxu0 0.0
    %3286 = vmatpush1.msra.mxu0 %v3270
    %3287 = vmatprep.subr.mxu0 0.0
    %3288 = vmatpush1.msra.mxu0 0.0
    %3289 = vmatprep.subr.mxu0 0.0
    %3290 = vmatpush1.msra.mxu0 0.0
    %3291 = vmatprep.subr.mxu0 0.0
    %3292 = vmatpush1.msra.mxu0 0.0
    %3293 = vmatprep.subr.mxu0 0.0
    %3294 = vmatpush1.msra.mxu0 0.0
    %3295 = vmatprep.subr.mxu0 0.0
    %3296 = vmatpush1.msra.mxu0 0.0
    %3297 = vmatprep.subr.mxu0 0.0
    %3298 = vmatpush1.msra.mxu0 0.0
    %3299 = vmatprep.subr.mxu0 0.0
    %3300 = vmatpush1.msra.mxu0 0.0
    %3301 = vmatprep.subr.mxu0 0.0
    %3302 = vmatpush1.msra.mxu0 0.0
    %3303 = vmatprep.subr.mxu0 0.0
    %3304 = vmatpush1.msra.mxu0 0.0
    %3305 = vmatprep.subr.mxu0 0.0
    %3306 = vmatpush1.msra.mxu0 0.0
    %3307 = vmatprep.subr.mxu0 0.0
    %3308 = vmatpush1.msra.mxu0 0.0
    %3309 = vmatprep.subr.mxu0 0.0
    %3310 = vmatpush1.msra.mxu0 0.0
    %3311 = vmatprep.subr.mxu0 0.0
    %3312 = vmatpush1.msra.mxu0 0.0
    %3313 = vmatprep.subr.mxu0 0.0
    %3314 = vmatpush1.msra.mxu0 0.0
    %3315 = vmatprep.subr.mxu0 0.0
    %3316 = vmatpush1.msra.mxu0 0.0
    %3317 = vmatprep.subr.mxu0 0.0
    %3318 = vmatpush1.msra.mxu0 0.0
    %3319 = vmatprep.subr.mxu0 0.0
    %3320 = vmatpush1.msra.mxu0 0.0
    %3321 = vmatprep.subr.mxu0 0.0
    %3322 = vmatpush1.msra.mxu0 0.0
    %3323 = vmatprep.subr.mxu0 0.0
    %3324 = vmatpush1.msra.mxu0 0.0
    %3325 = vmatprep.subr.mxu0 0.0
    %3326 = vmatpush1.msra.mxu0 0.0
    %3327 = vmatprep.subr.mxu0 0.0
    %3328 = vmatpush1.msra.mxu0 0.0
    %3329 = vmatprep.subr.mxu0 0.0
    %3330 = vmatpush1.msra.mxu0 0.0
    %3331 = vmatprep.subr.mxu0 0.0
    %3332 = vmatpush1.msra.mxu0 0.0
    %3333 = vmatprep.subr.mxu0 0.0
    %3334 = vmatpush1.msra.mxu0 0.0
    %3335 = vmatprep.subr.mxu0 0.0
    %3336 = vmatpush1.msra.mxu0 0.0
    %3337 = vmatprep.subr.mxu0 0.0
    %3338 = vmatpush1.msra.mxu0 0.0
    %3339 = vmatprep.subr.mxu0 0.0
    %3340 = vmatpush1.msra.mxu0 0.0
    %3341 = vmatprep.subr.mxu0 0.0
    %3342 = vmatpush1.msra.mxu0 0.0
    %3343 = vmatprep.mubr.f32.mxu0 0.0
    %3344 = vmatmul.mubr.f32.gmra.mrb[0].mxu0 %v3085
    %v3345 = vpop.f32.mrb[0].mxu0
    %v3346 = vadd.f32 %v3277, %v3345
    %v3347 = vpop.f32.mrb[0].mxu0
    %3348 = vmatprep.mubr.f32.mxu0 0.0
    %3349 = vmatmul.mubr.f32.gmra.mrb[0].mxu0 %v3088
    %v3350 = vpop.f32.mrb[0].mxu0
    %v3351 = vadd.f32 %v3277, %v3350
    %v3352 = vpop.f32.mrb[0].mxu0
    %3353 = vmatprep.mubr.f32.mxu0 0.0
    %3354 = vmatmul.mubr.f32.gmra.mrb[0].mxu0 %v3091
    %v3355 = vpop.f32.mrb[0].mxu0
    %v3356 = vadd.f32 %v3277, %v3355
    %v3357 = vpop.f32.mrb[0].mxu0
    %3358 = vdwg.mxu0
    %v3360 = vsel %vm626, %v3160, 0
    %v3363 = vsel %vm626, %v3165, 0
    %v3366 = vsel %vm626, %v3170, 0
    %v3369 = vsel %vm626, %v3253, 0
    %v3372 = vsel %vm626, %v3258, 0
    %v3375 = vsel %vm626, %v3263, 0
    %3377 = vmatprep.subr.mxu0 0.0
    %3378 = vmatpush1.xpose.msra.mxu0 %v3369
    %3379 = vmatprep.subr.mxu0 0.0
    %3380 = vmatpush1.xpose.msra.mxu0 %v3372
    %3381 = vmatprep.subr.mxu0 0.0
    %3382 = vmatpush1.xpose.msra.mxu0 %v3375
    %3383 = vmatprep.subr.mxu0 0.0
    %3384 = vmatpush1.xpose.msra.mxu0 0.0
    %3385 = vmatprep.subr.mxu0 0.0
    %3386 = vmatpush1.xpose.msra.mxu0 0.0
    %3387 = vmatprep.subr.mxu0 0.0
    %3388 = vmatpush1.xpose.msra.mxu0 0.0
    %3389 = vmatprep.subr.mxu0 0.0
    %3390 = vmatpush1.xpose.msra.mxu0 0.0
    %3391 = vmatprep.subr.mxu0 0.0
    %3392 = vmatpush1.xpose.msra.mxu0 0.0
    %3393 = vmatprep.subr.mxu0 0.0
    %3394 = vmatpush1.xpose.msra.mxu0 0.0
    %3395 = vmatprep.subr.mxu0 0.0
    %3396 = vmatpush1.xpose.msra.mxu0 0.0
    %3397 = vmatprep.subr.mxu0 0.0
    %3398 = vmatpush1.xpose.msra.mxu0 0.0
    %3399 = vmatprep.subr.mxu0 0.0
    %3400 = vmatpush1.xpose.msra.mxu0 0.0
    %3401 = vmatprep.subr.mxu0 0.0
    %3402 = vmatpush1.xpose.msra.mxu0 0.0
    %3403 = vmatprep.subr.mxu0 0.0
    %3404 = vmatpush1.xpose.msra.mxu0 0.0
    %3405 = vmatprep.subr.mxu0 0.0
    %3406 = vmatpush1.xpose.msra.mxu0 0.0
    %3407 = vmatprep.subr.mxu0 0.0
    %3408 = vmatpush1.xpose.msra.mxu0 0.0
    %3409 = vmatprep.subr.mxu0 0.0
    %3410 = vmatpush1.xpose.msra.mxu0 0.0
    %3411 = vmatprep.subr.mxu0 0.0
    %3412 = vmatpush1.xpose.msra.mxu0 0.0
    %3413 = vmatprep.subr.mxu0 0.0
    %3414 = vmatpush1.xpose.msra.mxu0 0.0
    %3415 = vmatprep.subr.mxu0 0.0
    %3416 = vmatpush1.xpose.msra.mxu0 0.0
    %3417 = vmatprep.subr.mxu0 0.0
    %3418 = vmatpush1.xpose.msra.mxu0 0.0
    %3419 = vmatprep.subr.mxu0 0.0
    %3420 = vmatpush1.xpose.msra.mxu0 0.0
    %3421 = vmatprep.subr.mxu0 0.0
    %3422 = vmatpush1.xpose.msra.mxu0 0.0
    %3423 = vmatprep.subr.mxu0 0.0
    %3424 = vmatpush1.xpose.msra.mxu0 0.0
    %3425 = vmatprep.subr.mxu0 0.0
    %3426 = vmatpush1.xpose.msra.mxu0 0.0
    %3427 = vmatprep.subr.mxu0 0.0
    %3428 = vmatpush1.xpose.msra.mxu0 0.0
    %3429 = vmatprep.subr.mxu0 0.0
    %3430 = vmatpush1.xpose.msra.mxu0 0.0
    %3431 = vmatprep.subr.mxu0 0.0
    %3432 = vmatpush1.xpose.msra.mxu0 0.0
    %3433 = vmatprep.subr.mxu0 0.0
    %3434 = vmatpush1.xpose.msra.mxu0 0.0
    %3435 = vmatprep.subr.mxu0 0.0
    %3436 = vmatpush1.xpose.msra.mxu0 0.0
    %3437 = vmatprep.subr.mxu0 0.0
    %3438 = vmatpush1.xpose.msra.mxu0 0.0
    %3439 = vmatprep.subr.mxu0 0.0
    %3440 = vmatpush1.xpose.msra.mxu0 0.0
    %3441 = vmatprep.mubr.f32.mxu0 0.0
    %3442 = vmatmul.mubr.f32.gmra.mrb[0].mxu0 %v3360
    %v3443 = vpop.f32.mrb[0].mxu0
    %v3444 = vadd.f32 %v340, %v3443
    %v3445 = vpop.f32.mrb[0].mxu0
    %3446 = vmatprep.mubr.f32.mxu0 0.0
    %3447 = vmatmul.mubr.f32.gmra.mrb[0].mxu0 %v3363
    %v3448 = vpop.f32.mrb[0].mxu0
    %v3449 = vadd.f32 %v341, %v3448
    %v3450 = vpop.f32.mrb[0].mxu0
    %3451 = vmatprep.mubr.f32.mxu0 0.0
    %3452 = vmatmul.mubr.f32.gmra.mrb[0].mxu0 %v3366
    %v3453 = vpop.f32.mrb[0].mxu0
    %v3454 = vadd.f32 %v342, %v3453
    %v3455 = vpop.f32.mrb[0].mxu0
    %3456 = vdwg.mxu0
    %v3457 = vsel %vm725, %v3444, -inf
    %3458 = vmax.xlane.f32.xlu0 %v3457
    %v3459 = vpop.xlane.xlu0 %3458
    %v3460 = vsel %vm725, %v3449, -inf
    %3461 = vmax.xlane.f32.xlu0 %v3460
    %v3462 = vpop.xlane.xlu0 %3461
    %v3463 = vsel %vm732, %v3454, -inf
    %3464 = vmax.xlane.f32.xlu0 %v3463
    %v3465 = vpop.xlane.xlu0 %3464
    %v3466 = vsub.f32 %v3444, %v3459
    %v3467 = vsub.f32 %v3449, %v3462
    %v3468 = vsub.f32 %v3454, %v3465
    %v3469 = vmul.f32 %v3466, 1.442695
    %v3470 = vpow.pop %v3469
    %v3471 = vmul.f32 %v3467, 1.442695
    %v3472 = vpow.pop %v3471
    %v3473 = vmul.f32 %v3468, 1.442695
    %v3474 = vpow.pop %v3473
    %v3475 = vsel %vm725, %v3470, 0.0
    %3476 = vadd.xlane.f32.xlu0 %v3475
    %v3477 = vpop.xlane.xlu0 %3476
    %v3478 = vsel %vm725, %v3472, 0.0
    %3479 = vadd.xlane.f32.xlu0 %v3478
    %v3480 = vpop.xlane.xlu0 %3479
    %v3481 = vsel %vm732, %v3474, 0.0
    %3482 = vadd.xlane.f32.xlu0 %v3481
    %v3483 = vpop.xlane.xlu0 %3482
    %v3484 = vrcp.pop %v3477
    %v3485 = vrcp.pop %v3480
    %v3486 = vrcp.pop %v3483
    %v3488 = vsel %vm725, %v3470, 0
    %v3491 = vsel %vm725, %v3472, 0
    %v3494 = vsel %vm725, %v3474, 0
    %v3497 = vsel %vm766, %v3356, 0
    %3499 = vmatprep.subr.mxu0 0.0
    %3500 = vmatpush1.msra.mxu0 %v3346
    %3501 = vmatprep.subr.mxu0 0.0
    %3502 = vmatpush1.msra.mxu0 %v3351
    %3503 = vmatprep.subr.mxu0 0.0
    %3504 = vmatpush1.msra.mxu0 %v3497
    %3505 = vmatprep.subr.mxu0 0.0
    %3506 = vmatpush1.msra.mxu0 0.0
    %3507 = vmatprep.subr.mxu0 0.0
    %3508 = vmatpush1.msra.mxu0 0.0
    %3509 = vmatprep.subr.mxu0 0.0
    %3510 = vmatpush1.msra.mxu0 0.0
    %3511 = vmatprep.subr.mxu0 0.0
    %3512 = vmatpush1.msra.mxu0 0.0
    %3513 = vmatprep.subr.mxu0 0.0
    %3514 = vmatpush1.msra.mxu0 0.0
    %3515 = vmatprep.subr.mxu0 0.0
    %3516 = vmatpush1.msra.mxu0 0.0
    %3517 = vmatprep.subr.mxu0 0.0
    %3518 = vmatpush1.msra.mxu0 0.0
    %3519 = vmatprep.subr.mxu0 0.0
    %3520 = vmatpush1.msra.mxu0 0.0
    %3521 = vmatprep.subr.mxu0 0.0
    %3522 = vmatpush1.msra.mxu0 0.0
    %3523 = vmatprep.subr.mxu0 0.0
    %3524 = vmatpush1.msra.mxu0 0.0
    %3525 = vmatprep.subr.mxu0 0.0
    %3526 = vmatpush1.msra.mxu0 0.0
    %3527 = vmatprep.subr.mxu0 0.0
    %3528 = vmatpush1.msra.mxu0 0.0
    %3529 = vmatprep.subr.mxu0 0.0
    %3530 = vmatpush1.msra.mxu0 0.0
    %3531 = vmatprep.subr.mxu0 0.0
    %3532 = vmatpush1.msra.mxu0 0.0
    %3533 = vmatprep.subr.mxu0 0.0
    %3534 = vmatpush1.msra.mxu0 0.0
    %3535 = vmatprep.subr.mxu0 0.0
    %3536 = vmatpush1.msra.mxu0 0.0
    %3537 = vmatprep.subr.mxu0 0.0
    %3538 = vmatpush1.msra.mxu0 0.0
    %3539 = vmatprep.subr.mxu0 0.0
    %3540 = vmatpush1.msra.mxu0 0.0
    %3541 = vmatprep.subr.mxu0 0.0
    %3542 = vmatpush1.msra.mxu0 0.0
    %3543 = vmatprep.subr.mxu0 0.0
    %3544 = vmatpush1.msra.mxu0 0.0
    %3545 = vmatprep.subr.mxu0 0.0
    %3546 = vmatpush1.msra.mxu0 0.0
    %3547 = vmatprep.subr.mxu0 0.0
    %3548 = vmatpush1.msra.mxu0 0.0
    %3549 = vmatprep.subr.mxu0 0.0
    %3550 = vmatpush1.msra.mxu0 0.0
    %3551 = vmatprep.subr.mxu0 0.0
    %3552 = vmatpush1.msra.mxu0 0.0
    %3553 = vmatprep.subr.mxu0 0.0
    %3554 = vmatpush1.msra.mxu0 0.0
    %3555 = vmatprep.subr.mxu0 0.0
    %3556 = vmatpush1.msra.mxu0 0.0
    %3557 = vmatprep.subr.mxu0 0.0
    %3558 = vmatpush1.msra.mxu0 0.0
    %3559 = vmatprep.subr.mxu0 0.0
    %3560 = vmatpush1.msra.mxu0 0.0
    %3561 = vmatprep.subr.mxu0 0.0
    %3562 = vmatpush1.msra.mxu0 0.0
    %3563 = vmatprep.mubr.f32.mxu0 0.0
    %3564 = vmatmul.mubr.f32.gmra.mrb[0].mxu0 %v3488
    %v3565 = vpop.f32.mrb[0].mxu0
    %v3566 = vadd.f32 0.0, %v3565
    %v3567 = vpop.f32.mrb[0].mxu0
    %3568 = vmatprep.mubr.f32.mxu0 0.0
    %3569 = vmatmul.mubr.f32.gmra.mrb[0].mxu0 %v3491
    %v3570 = vpop.f32.mrb[0].mxu0
    %v3571 = vadd.f32 0.0, %v3570
    %v3572 = vpop.f32.mrb[0].mxu0
    %3573 = vmatprep.mubr.f32.mxu0 0.0
    %3574 = vmatmul.mubr.f32.gmra.mrb[0].mxu0 %v3494
    %v3575 = vpop.f32.mrb[0].mxu0
    %v3576 = vadd.f32 0.0, %v3575
    %v3577 = vpop.f32.mrb[0].mxu0
    %3578 = vdwg.mxu0
    %v3579 = vmul.f32 %v3566, %v3484
    %v3580 = vmul.f32 %v3571, %v3485
    %v3581 = vmul.f32 %v3576, %v3486
    %s3582 = scalar_lea.vmem %s16, 32
    %v3583 = vld [vmem:[%s3582] sm:$0xff]
    %s3584 = scalar_lea.vmem %s10, 160
    %v3585 = vld [vmem:[%s3584] sm:$0xff]
    %v3586 = vld [vmem:[%s3584 + $0x8] sm:$0xff]
    %v3587 = vld [vmem:[%s3584 + $0x10] sm:$0xff]
    %v3588 = vld [vmem:[%s3584 + $0x18] sm:$0xff]
    %s3589 = scalar_lea.vmem %s11, 5
    %v3590 = vld [vmem:[%s3589] sm:$0x1]
    %v3592 = vlaneseq
    %v3593 = vshrl.u32 %v3592, 7
    %v3594 = vsub.s32 0, %v3593
    %v3595 = vrot.slane %v3590, %v3594
    %3597 = vmatprep.subr.mxu0 0.0
    %3598 = vmatpush1.msra.mxu0 %v3585
    %3599 = vmatprep.subr.mxu0 0.0
    %3600 = vmatpush1.msra.mxu0 %v3586
    %3601 = vmatprep.subr.mxu0 0.0
    %3602 = vmatpush1.msra.mxu0 %v3587
    %3603 = vmatprep.subr.mxu0 0.0
    %3604 = vmatpush1.msra.mxu0 %v3588
    %3605 = vmatprep.subr.mxu0 0.0
    %3606 = vmatpush1.msra.mxu0 0.0
    %3607 = vmatprep.subr.mxu0 0.0
    %3608 = vmatpush1.msra.mxu0 0.0
    %3609 = vmatprep.subr.mxu0 0.0
    %3610 = vmatpush1.msra.mxu0 0.0
    %3611 = vmatprep.subr.mxu0 0.0
    %3612 = vmatpush1.msra.mxu0 0.0
    %3613 = vmatprep.subr.mxu0 0.0
    %3614 = vmatpush1.msra.mxu0 0.0
    %3615 = vmatprep.subr.mxu0 0.0
    %3616 = vmatpush1.msra.mxu0 0.0
    %3617 = vmatprep.subr.mxu0 0.0
    %3618 = vmatpush1.msra.mxu0 0.0
    %3619 = vmatprep.subr.mxu0 0.0
    %3620 = vmatpush1.msra.mxu0 0.0
    %3621 = vmatprep.subr.mxu0 0.0
    %3622 = vmatpush1.msra.mxu0 0.0
    %3623 = vmatprep.subr.mxu0 0.0
    %3624 = vmatpush1.msra.mxu0 0.0
    %3625 = vmatprep.subr.mxu0 0.0
    %3626 = vmatpush1.msra.mxu0 0.0
    %3627 = vmatprep.subr.mxu0 0.0
    %3628 = vmatpush1.msra.mxu0 0.0
    %3629 = vmatprep.subr.mxu0 0.0
    %3630 = vmatpush1.msra.mxu0 0.0
    %3631 = vmatprep.subr.mxu0 0.0
    %3632 = vmatpush1.msra.mxu0 0.0
    %3633 = vmatprep.subr.mxu0 0.0
    %3634 = vmatpush1.msra.mxu0 0.0
    %3635 = vmatprep.subr.mxu0 0.0
    %3636 = vmatpush1.msra.mxu0 0.0
    %3637 = vmatprep.subr.mxu0 0.0
    %3638 = vmatpush1.msra.mxu0 0.0
    %3639 = vmatprep.subr.mxu0 0.0
    %3640 = vmatpush1.msra.mxu0 0.0
    %3641 = vmatprep.subr.mxu0 0.0
    %3642 = vmatpush1.msra.mxu0 0.0
    %3643 = vmatprep.subr.mxu0 0.0
    %3644 = vmatpush1.msra.mxu0 0.0
    %3645 = vmatprep.subr.mxu0 0.0
    %3646 = vmatpush1.msra.mxu0 0.0
    %3647 = vmatprep.subr.mxu0 0.0
    %3648 = vmatpush1.msra.mxu0 0.0
    %3649 = vmatprep.subr.mxu0 0.0
    %3650 = vmatpush1.msra.mxu0 0.0
    %3651 = vmatprep.subr.mxu0 0.0
    %3652 = vmatpush1.msra.mxu0 0.0
    %3653 = vmatprep.subr.mxu0 0.0
    %3654 = vmatpush1.msra.mxu0 0.0
    %3655 = vmatprep.subr.mxu0 0.0
    %3656 = vmatpush1.msra.mxu0 0.0
    %3657 = vmatprep.subr.mxu0 0.0
    %3658 = vmatpush1.msra.mxu0 0.0
    %3659 = vmatprep.subr.mxu0 0.0
    %3660 = vmatpush1.msra.mxu0 0.0
    %3661 = vmatprep.mubr.f32.mxu0 0.0
    %3662 = vmatmul.mubr.f32.gmra.mrb[0].mxu0 %v3085
    %v3663 = vpop.f32.mrb[0].mxu0
    %v3664 = vadd.f32 %v3595, %v3663
    %v3665 = vpop.f32.mrb[0].mxu0
    %3666 = vmatprep.mubr.f32.mxu0 0.0
    %3667 = vmatmul.mubr.f32.gmra.mrb[0].mxu0 %v3088
    %v3668 = vpop.f32.mrb[0].mxu0
    %v3669 = vadd.f32 %v3595, %v3668
    %v3670 = vpop.f32.mrb[0].mxu0
    %3671 = vmatprep.mubr.f32.mxu0 0.0
    %3672 = vmatmul.mubr.f32.gmra.mrb[0].mxu0 %v3091
    %v3673 = vpop.f32.mrb[0].mxu0
    %v3674 = vadd.f32 %v3595, %v3673
    %v3675 = vpop.f32.mrb[0].mxu0
    %3676 = vdwg.mxu0
    %s3677 = scalar_lea.vmem %s12, 160
    %v3678 = vld [vmem:[%s3677] sm:$0xff]
    %v3679 = vld [vmem:[%s3677 + $0x8] sm:$0xff]
    %v3680 = vld [vmem:[%s3677 + $0x10] sm:$0xff]
    %v3681 = vld [vmem:[%s3677 + $0x18] sm:$0xff]
    %s3682 = scalar_lea.vmem %s13, 5
    %v3683 = vld [vmem:[%s3682] sm:$0x1]
    %v3685 = vlaneseq
    %v3686 = vshrl.u32 %v3685, 7
    %v3687 = vsub.s32 0, %v3686
    %v3688 = vrot.slane %v3683, %v3687
    %3690 = vmatprep.subr.mxu0 0.0
    %3691 = vmatpush1.msra.mxu0 %v3678
    %3692 = vmatprep.subr.mxu0 0.0
    %3693 = vmatpush1.msra.mxu0 %v3679
    %3694 = vmatprep.subr.mxu0 0.0
    %3695 = vmatpush1.msra.mxu0 %v3680
    %3696 = vmatprep.subr.mxu0 0.0
    %3697 = vmatpush1.msra.mxu0 %v3681
    %3698 = vmatprep.subr.mxu0 0.0
    %3699 = vmatpush1.msra.mxu0 0.0
    %3700 = vmatprep.subr.mxu0 0.0
    %3701 = vmatpush1.msra.mxu0 0.0
    %3702 = vmatprep.subr.mxu0 0.0
    %3703 = vmatpush1.msra.mxu0 0.0
    %3704 = vmatprep.subr.mxu0 0.0
    %3705 = vmatpush1.msra.mxu0 0.0
    %3706 = vmatprep.subr.mxu0 0.0
    %3707 = vmatpush1.msra.mxu0 0.0
    %3708 = vmatprep.subr.mxu0 0.0
    %3709 = vmatpush1.msra.mxu0 0.0
    %3710 = vmatprep.subr.mxu0 0.0
    %3711 = vmatpush1.msra.mxu0 0.0
    %3712 = vmatprep.subr.mxu0 0.0
    %3713 = vmatpush1.msra.mxu0 0.0
    %3714 = vmatprep.subr.mxu0 0.0
    %3715 = vmatpush1.msra.mxu0 0.0
    %3716 = vmatprep.subr.mxu0 0.0
    %3717 = vmatpush1.msra.mxu0 0.0
    %3718 = vmatprep.subr.mxu0 0.0
    %3719 = vmatpush1.msra.mxu0 0.0
    %3720 = vmatprep.subr.mxu0 0.0
    %3721 = vmatpush1.msra.mxu0 0.0
    %3722 = vmatprep.subr.mxu0 0.0
    %3723 = vmatpush1.msra.mxu0 0.0
    %3724 = vmatprep.subr.mxu0 0.0
    %3725 = vmatpush1.msra.mxu0 0.0
    %3726 = vmatprep.subr.mxu0 0.0
    %3727 = vmatpush1.msra.mxu0 0.0
    %3728 = vmatprep.subr.mxu0 0.0
    %3729 = vmatpush1.msra.mxu0 0.0
    %3730 = vmatprep.subr.mxu0 0.0
    %3731 = vmatpush1.msra.mxu0 0.0
    %3732 = vmatprep.subr.mxu0 0.0
    %3733 = vmatpush1.msra.mxu0 0.0
    %3734 = vmatprep.subr.mxu0 0.0
    %3735 = vmatpush1.msra.mxu0 0.0
    %3736 = vmatprep.subr.mxu0 0.0
    %3737 = vmatpush1.msra.mxu0 0.0
    %3738 = vmatprep.subr.mxu0 0.0
    %3739 = vmatpush1.msra.mxu0 0.0
    %3740 = vmatprep.subr.mxu0 0.0
    %3741 = vmatpush1.msra.mxu0 0.0
    %3742 = vmatprep.subr.mxu0 0.0
    %3743 = vmatpush1.msra.mxu0 0.0
    %3744 = vmatprep.subr.mxu0 0.0
    %3745 = vmatpush1.msra.mxu0 0.0
    %3746 = vmatprep.subr.mxu0 0.0
    %3747 = vmatpush1.msra.mxu0 0.0
    %3748 = vmatprep.subr.mxu0 0.0
    %3749 = vmatpush1.msra.mxu0 0.0
    %3750 = vmatprep.subr.mxu0 0.0
    %3751 = vmatpush1.msra.mxu0 0.0
    %3752 = vmatprep.subr.mxu0 0.0
    %3753 = vmatpush1.msra.mxu0 0.0
    %3754 = vmatprep.mubr.f32.mxu0 0.0
    %3755 = vmatmul.mubr.f32.gmra.mrb[0].mxu0 %v3085
    %v3756 = vpop.f32.mrb[0].mxu0
    %v3757 = vadd.f32 %v3688, %v3756
    %v3758 = vpop.f32.mrb[0].mxu0
    %3759 = vmatprep.mubr.f32.mxu0 0.0
    %3760 = vmatmul.mubr.f32.gmra.mrb[0].mxu0 %v3088
    %v3761 = vpop.f32.mrb[0].mxu0
    %v3762 = vadd.f32 %v3688, %v3761
    %v3763 = vpop.f32.mrb[0].mxu0
    %3764 = vmatprep.mubr.f32.mxu0 0.0
    %3765 = vmatmul.mubr.f32.gmra.mrb[0].mxu0 %v3091
    %v3766 = vpop.f32.mrb[0].mxu0
    %v3767 = vadd.f32 %v3688, %v3766
    %v3768 = vpop.f32.mrb[0].mxu0
    %3769 = vdwg.mxu0
    %s3770 = scalar_lea.vmem %s14, 160
    %v3771 = vld [vmem:[%s3770] sm:$0xff]
    %v3772 = vld [vmem:[%s3770 + $0x8] sm:$0xff]
    %v3773 = vld [vmem:[%s3770 + $0x10] sm:$0xff]
    %v3774 = vld [vmem:[%s3770 + $0x18] sm:$0xff]
    %s3775 = scalar_lea.vmem %s15, 5
    %v3776 = vld [vmem:[%s3775] sm:$0x1]
    %v3778 = vlaneseq
    %v3779 = vshrl.u32 %v3778, 7
    %v3780 = vsub.s32 0, %v3779
    %v3781 = vrot.slane %v3776, %v3780
    %3783 = vmatprep.subr.mxu0 0.0
    %3784 = vmatpush1.msra.mxu0 %v3771
    %3785 = vmatprep.subr.mxu0 0.0
    %3786 = vmatpush1.msra.mxu0 %v3772
    %3787 = vmatprep.subr.mxu0 0.0
    %3788 = vmatpush1.msra.mxu0 %v3773
    %3789 = vmatprep.subr.mxu0 0.0
    %3790 = vmatpush1.msra.mxu0 %v3774
    %3791 = vmatprep.subr.mxu0 0.0
    %3792 = vmatpush1.msra.mxu0 0.0
    %3793 = vmatprep.subr.mxu0 0.0
    %3794 = vmatpush1.msra.mxu0 0.0
    %3795 = vmatprep.subr.mxu0 0.0
    %3796 = vmatpush1.msra.mxu0 0.0
    %3797 = vmatprep.subr.mxu0 0.0
    %3798 = vmatpush1.msra.mxu0 0.0
    %3799 = vmatprep.subr.mxu0 0.0
    %3800 = vmatpush1.msra.mxu0 0.0
    %3801 = vmatprep.subr.mxu0 0.0
    %3802 = vmatpush1.msra.mxu0 0.0
    %3803 = vmatprep.subr.mxu0 0.0
    %3804 = vmatpush1.msra.mxu0 0.0
    %3805 = vmatprep.subr.mxu0 0.0
    %3806 = vmatpush1.msra.mxu0 0.0
    %3807 = vmatprep.subr.mxu0 0.0
    %3808 = vmatpush1.msra.mxu0 0.0
    %3809 = vmatprep.subr.mxu0 0.0
    %3810 = vmatpush1.msra.mxu0 0.0
    %3811 = vmatprep.subr.mxu0 0.0
    %3812 = vmatpush1.msra.mxu0 0.0
    %3813 = vmatprep.subr.mxu0 0.0
    %3814 = vmatpush1.msra.mxu0 0.0
    %3815 = vmatprep.subr.mxu0 0.0
    %3816 = vmatpush1.msra.mxu0 0.0
    %3817 = vmatprep.subr.mxu0 0.0
    %3818 = vmatpush1.msra.mxu0 0.0
    %3819 = vmatprep.subr.mxu0 0.0
    %3820 = vmatpush1.msra.mxu0 0.0
    %3821 = vmatprep.subr.mxu0 0.0
    %3822 = vmatpush1.msra.mxu0 0.0
    %3823 = vmatprep.subr.mxu0 0.0
    %3824 = vmatpush1.msra.mxu0 0.0
    %3825 = vmatprep.subr.mxu0 0.0
    %3826 = vmatpush1.msra.mxu0 0.0
    %3827 = vmatprep.subr.mxu0 0.0
    %3828 = vmatpush1.msra.mxu0 0.0
    %3829 = vmatprep.subr.mxu0 0.0
    %3830 = vmatpush1.msra.mxu0 0.0
    %3831 = vmatprep.subr.mxu0 0.0
    %3832 = vmatpush1.msra.mxu0 0.0
    %3833 = vmatprep.subr.mxu0 0.0
    %3834 = vmatpush1.msra.mxu0 0.0
    %3835 = vmatprep.subr.mxu0 0.0
    %3836 = vmatpush1.msra.mxu0 0.0
    %3837 = vmatprep.subr.mxu0 0.0
    %3838 = vmatpush1.msra.mxu0 0.0
    %3839 = vmatprep.subr.mxu0 0.0
    %3840 = vmatpush1.msra.mxu0 0.0
    %3841 = vmatprep.subr.mxu0 0.0
    %3842 = vmatpush1.msra.mxu0 0.0
    %3843 = vmatprep.subr.mxu0 0.0
    %3844 = vmatpush1.msra.mxu0 0.0
    %3845 = vmatprep.subr.mxu0 0.0
    %3846 = vmatpush1.msra.mxu0 0.0
    %3847 = vmatprep.mubr.f32.mxu0 0.0
    %3848 = vmatmul.mubr.f32.gmra.mrb[0].mxu0 %v3085
    %v3849 = vpop.f32.mrb[0].mxu0
    %v3850 = vadd.f32 %v3781, %v3849
    %v3851 = vpop.f32.mrb[0].mxu0
    %3852 = vmatprep.mubr.f32.mxu0 0.0
    %3853 = vmatmul.mubr.f32.gmra.mrb[0].mxu0 %v3088
    %v3854 = vpop.f32.mrb[0].mxu0
    %v3855 = vadd.f32 %v3781, %v3854
    %v3856 = vpop.f32.mrb[0].mxu0
    %3857 = vmatprep.mubr.f32.mxu0 0.0
    %3858 = vmatmul.mubr.f32.gmra.mrb[0].mxu0 %v3091
    %v3859 = vpop.f32.mrb[0].mxu0
    %v3860 = vadd.f32 %v3781, %v3859
    %v3861 = vpop.f32.mrb[0].mxu0
    %3862 = vdwg.mxu0
    %v3864 = vsel %vm626, %v3664, 0
    %v3867 = vsel %vm626, %v3669, 0
    %v3870 = vsel %vm626, %v3674, 0
    %v3873 = vsel %vm626, %v3757, 0
    %v3876 = vsel %vm626, %v3762, 0
    %v3879 = vsel %vm626, %v3767, 0
    %3881 = vmatprep.subr.mxu0 0.0
    %3882 = vmatpush1.xpose.msra.mxu0 %v3873
    %3883 = vmatprep.subr.mxu0 0.0
    %3884 = vmatpush1.xpose.msra.mxu0 %v3876
    %3885 = vmatprep.subr.mxu0 0.0
    %3886 = vmatpush1.xpose.msra.mxu0 %v3879
    %3887 = vmatprep.subr.mxu0 0.0
    %3888 = vmatpush1.xpose.msra.mxu0 0.0
    %3889 = vmatprep.subr.mxu0 0.0
    %3890 = vmatpush1.xpose.msra.mxu0 0.0
    %3891 = vmatprep.subr.mxu0 0.0
    %3892 = vmatpush1.xpose.msra.mxu0 0.0
    %3893 = vmatprep.subr.mxu0 0.0
    %3894 = vmatpush1.xpose.msra.mxu0 0.0
    %3895 = vmatprep.subr.mxu0 0.0
    %3896 = vmatpush1.xpose.msra.mxu0 0.0
    %3897 = vmatprep.subr.mxu0 0.0
    %3898 = vmatpush1.xpose.msra.mxu0 0.0
    %3899 = vmatprep.subr.mxu0 0.0
    %3900 = vmatpush1.xpose.msra.mxu0 0.0
    %3901 = vmatprep.subr.mxu0 0.0
    %3902 = vmatpush1.xpose.msra.mxu0 0.0
    %3903 = vmatprep.subr.mxu0 0.0
    %3904 = vmatpush1.xpose.msra.mxu0 0.0
    %3905 = vmatprep.subr.mxu0 0.0
    %3906 = vmatpush1.xpose.msra.mxu0 0.0
    %3907 = vmatprep.subr.mxu0 0.0
    %3908 = vmatpush1.xpose.msra.mxu0 0.0
    %3909 = vmatprep.subr.mxu0 0.0
    %3910 = vmatpush1.xpose.msra.mxu0 0.0
    %3911 = vmatprep.subr.mxu0 0.0
    %3912 = vmatpush1.xpose.msra.mxu0 0.0
    %3913 = vmatprep.subr.mxu0 0.0
    %3914 = vmatpush1.xpose.msra.mxu0 0.0
    %3915 = vmatprep.subr.mxu0 0.0
    %3916 = vmatpush1.xpose.msra.mxu0 0.0
    %3917 = vmatprep.subr.mxu0 0.0
    %3918 = vmatpush1.xpose.msra.mxu0 0.0
    %3919 = vmatprep.subr.mxu0 0.0
    %3920 = vmatpush1.xpose.msra.mxu0 0.0
    %3921 = vmatprep.subr.mxu0 0.0
    %3922 = vmatpush1.xpose.msra.mxu0 0.0
    %3923 = vmatprep.subr.mxu0 0.0
    %3924 = vmatpush1.xpose.msra.mxu0 0.0
    %3925 = vmatprep.subr.mxu0 0.0
    %3926 = vmatpush1.xpose.msra.mxu0 0.0
    %3927 = vmatprep.subr.mxu0 0.0
    %3928 = vmatpush1.xpose.msra.mxu0 0.0
    %3929 = vmatprep.subr.mxu0 0.0
    %3930 = vmatpush1.xpose.msra.mxu0 0.0
    %3931 = vmatprep.subr.mxu0 0.0
    %3932 = vmatpush1.xpose.msra.mxu0 0.0
    %3933 = vmatprep.subr.mxu0 0.0
    %3934 = vmatpush1.xpose.msra.mxu0 0.0
    %3935 = vmatprep.subr.mxu0 0.0
    %3936 = vmatpush1.xpose.msra.mxu0 0.0
    %3937 = vmatprep.subr.mxu0 0.0
    %3938 = vmatpush1.xpose.msra.mxu0 0.0
    %3939 = vmatprep.subr.mxu0 0.0
    %3940 = vmatpush1.xpose.msra.mxu0 0.0
    %3941 = vmatprep.subr.mxu0 0.0
    %3942 = vmatpush1.xpose.msra.mxu0 0.0
    %3943 = vmatprep.subr.mxu0 0.0
    %3944 = vmatpush1.xpose.msra.mxu0 0.0
    %3945 = vmatprep.mubr.f32.mxu0 0.0
    %3946 = vmatmul.mubr.f32.gmra.mrb[0].mxu0 %v3864
    %v3947 = vpop.f32.mrb[0].mxu0
    %v3948 = vadd.f32 %v340, %v3947
    %v3949 = vpop.f32.mrb[0].mxu0
    %3950 = vmatprep.mubr.f32.mxu0 0.0
    %3951 = vmatmul.mubr.f32.gmra.mrb[0].mxu0 %v3867
    %v3952 = vpop.f32.mrb[0].mxu0
    %v3953 = vadd.f32 %v341, %v3952
    %v3954 = vpop.f32.mrb[0].mxu0
    %3955 = vmatprep.mubr.f32.mxu0 0.0
    %3956 = vmatmul.mubr.f32.gmra.mrb[0].mxu0 %v3870
    %v3957 = vpop.f32.mrb[0].mxu0
    %v3958 = vadd.f32 %v342, %v3957
    %v3959 = vpop.f32.mrb[0].mxu0
    %3960 = vdwg.mxu0
    %v3961 = vsel %vm725, %v3948, -inf
    %3962 = vmax.xlane.f32.xlu0 %v3961
    %v3963 = vpop.xlane.xlu0 %3962
    %v3964 = vsel %vm725, %v3953, -inf
    %3965 = vmax.xlane.f32.xlu0 %v3964
    %v3966 = vpop.xlane.xlu0 %3965
    %v3967 = vsel %vm732, %v3958, -inf
    %3968 = vmax.xlane.f32.xlu0 %v3967
    %v3969 = vpop.xlane.xlu0 %3968
    %v3970 = vsub.f32 %v3948, %v3963
    %v3971 = vsub.f32 %v3953, %v3966
    %v3972 = vsub.f32 %v3958, %v3969
    %v3973 = vmul.f32 %v3970, 1.442695
    %v3974 = vpow.pop %v3973
    %v3975 = vmul.f32 %v3971, 1.442695
    %v3976 = vpow.pop %v3975
    %v3977 = vmul.f32 %v3972, 1.442695
    %v3978 = vpow.pop %v3977
    %v3979 = vsel %vm725, %v3974, 0.0
    %3980 = vadd.xlane.f32.xlu0 %v3979
    %v3981 = vpop.xlane.xlu0 %3980
    %v3982 = vsel %vm725, %v3976, 0.0
    %3983 = vadd.xlane.f32.xlu0 %v3982
    %v3984 = vpop.xlane.xlu0 %3983
    %v3985 = vsel %vm732, %v3978, 0.0
    %3986 = vadd.xlane.f32.xlu0 %v3985
    %v3987 = vpop.xlane.xlu0 %3986
    %v3988 = vrcp.pop %v3981
    %v3989 = vrcp.pop %v3984
    %v3990 = vrcp.pop %v3987
    %v3992 = vsel %vm725, %v3974, 0
    %v3995 = vsel %vm725, %v3976, 0
    %v3998 = vsel %vm725, %v3978, 0
    %v4001 = vsel %vm766, %v3860, 0
    %4003 = vmatprep.subr.mxu0 0.0
    %4004 = vmatpush1.msra.mxu0 %v3850
    %4005 = vmatprep.subr.mxu0 0.0
    %4006 = vmatpush1.msra.mxu0 %v3855
    %4007 = vmatprep.subr.mxu0 0.0
    %4008 = vmatpush1.msra.mxu0 %v4001
    %4009 = vmatprep.subr.mxu0 0.0
    %4010 = vmatpush1.msra.mxu0 0.0
    %4011 = vmatprep.subr.mxu0 0.0
    %4012 = vmatpush1.msra.mxu0 0.0
    %4013 = vmatprep.subr.mxu0 0.0
    %4014 = vmatpush1.msra.mxu0 0.0
    %4015 = vmatprep.subr.mxu0 0.0
    %4016 = vmatpush1.msra.mxu0 0.0
    %4017 = vmatprep.subr.mxu0 0.0
    %4018 = vmatpush1.msra.mxu0 0.0
    %4019 = vmatprep.subr.mxu0 0.0
    %4020 = vmatpush1.msra.mxu0 0.0
    %4021 = vmatprep.subr.mxu0 0.0
    %4022 = vmatpush1.msra.mxu0 0.0
    %4023 = vmatprep.subr.mxu0 0.0
    %4024 = vmatpush1.msra.mxu0 0.0
    %4025 = vmatprep.subr.mxu0 0.0
    %4026 = vmatpush1.msra.mxu0 0.0
    %4027 = vmatprep.subr.mxu0 0.0
    %4028 = vmatpush1.msra.mxu0 0.0
    %4029 = vmatprep.subr.mxu0 0.0
    %4030 = vmatpush1.msra.mxu0 0.0
    %4031 = vmatprep.subr.mxu0 0.0
    %4032 = vmatpush1.msra.mxu0 0.0
    %4033 = vmatprep.subr.mxu0 0.0
    %4034 = vmatpush1.msra.mxu0 0.0
    %4035 = vmatprep.subr.mxu0 0.0
    %4036 = vmatpush1.msra.mxu0 0.0
    %4037 = vmatprep.subr.mxu0 0.0
    %4038 = vmatpush1.msra.mxu0 0.0
    %4039 = vmatprep.subr.mxu0 0.0
    %4040 = vmatpush1.msra.mxu0 0.0
    %4041 = vmatprep.subr.mxu0 0.0
    %4042 = vmatpush1.msra.mxu0 0.0
    %4043 = vmatprep.subr.mxu0 0.0
    %4044 = vmatpush1.msra.mxu0 0.0
    %4045 = vmatprep.subr.mxu0 0.0
    %4046 = vmatpush1.msra.mxu0 0.0
    %4047 = vmatprep.subr.mxu0 0.0
    %4048 = vmatpush1.msra.mxu0 0.0
    %4049 = vmatprep.subr.mxu0 0.0
    %4050 = vmatpush1.msra.mxu0 0.0
    %4051 = vmatprep.subr.mxu0 0.0
    %4052 = vmatpush1.msra.mxu0 0.0
    %4053 = vmatprep.subr.mxu0 0.0
    %4054 = vmatpush1.msra.mxu0 0.0
    %4055 = vmatprep.subr.mxu0 0.0
    %4056 = vmatpush1.msra.mxu0 0.0
    %4057 = vmatprep.subr.mxu0 0.0
    %4058 = vmatpush1.msra.mxu0 0.0
    %4059 = vmatprep.subr.mxu0 0.0
    %4060 = vmatpush1.msra.mxu0 0.0
    %4061 = vmatprep.subr.mxu0 0.0
    %4062 = vmatpush1.msra.mxu0 0.0
    %4063 = vmatprep.subr.mxu0 0.0
    %4064 = vmatpush1.msra.mxu0 0.0
    %4065 = vmatprep.subr.mxu0 0.0
    %4066 = vmatpush1.msra.mxu0 0.0
    %4067 = vmatprep.mubr.f32.mxu0 0.0
    %4068 = vmatmul.mubr.f32.gmra.mrb[0].mxu0 %v3992
    %v4069 = vpop.f32.mrb[0].mxu0
    %v4070 = vadd.f32 0.0, %v4069
    %v4071 = vpop.f32.mrb[0].mxu0
    %4072 = vmatprep.mubr.f32.mxu0 0.0
    %4073 = vmatmul.mubr.f32.gmra.mrb[0].mxu0 %v3995
    %v4074 = vpop.f32.mrb[0].mxu0
    %v4075 = vadd.f32 0.0, %v4074
    %v4076 = vpop.f32.mrb[0].mxu0
    %4077 = vmatprep.mubr.f32.mxu0 0.0
    %4078 = vmatmul.mubr.f32.gmra.mrb[0].mxu0 %v3998
    %v4079 = vpop.f32.mrb[0].mxu0
    %v4080 = vadd.f32 0.0, %v4079
    %v4081 = vpop.f32.mrb[0].mxu0
    %4082 = vdwg.mxu0
    %v4083 = vmul.f32 %v4070, %v3988
    %v4084 = vmul.f32 %v4075, %v3989
    %v4085 = vmul.f32 %v4080, %v3990
    %s4086 = scalar_lea.vmem %s16, 40
    %v4087 = vld [vmem:[%s4086] sm:$0xff]
    %v4089 = vsel %vm626, %v4083, 0
    %v4092 = vsel %vm626, %v4084, 0
    %v4095 = vsel %vm626, %v4085, 0
    %4097 = vmatprep.subr.mxu0 0.0
    %4098 = vmatpush1.msra.mxu0 %v4087
    %4099 = vmatprep.subr.mxu0 0.0
    %4100 = vmatpush1.msra.mxu0 0.0
    %4101 = vmatprep.subr.mxu0 0.0
    %4102 = vmatpush1.msra.mxu0 0.0
    %4103 = vmatprep.subr.mxu0 0.0
    %4104 = vmatpush1.msra.mxu0 0.0
    %4105 = vmatprep.subr.mxu0 0.0
    %4106 = vmatpush1.msra.mxu0 0.0
    %4107 = vmatprep.subr.mxu0 0.0
    %4108 = vmatpush1.msra.mxu0 0.0
    %4109 = vmatprep.subr.mxu0 0.0
    %4110 = vmatpush1.msra.mxu0 0.0
    %4111 = vmatprep.subr.mxu0 0.0
    %4112 = vmatpush1.msra.mxu0 0.0
    %4113 = vmatprep.subr.mxu0 0.0
    %4114 = vmatpush1.msra.mxu0 0.0
    %4115 = vmatprep.subr.mxu0 0.0
    %4116 = vmatpush1.msra.mxu0 0.0
    %4117 = vmatprep.subr.mxu0 0.0
    %4118 = vmatpush1.msra.mxu0 0.0
    %4119 = vmatprep.subr.mxu0 0.0
    %4120 = vmatpush1.msra.mxu0 0.0
    %4121 = vmatprep.subr.mxu0 0.0
    %4122 = vmatpush1.msra.mxu0 0.0
    %4123 = vmatprep.subr.mxu0 0.0
    %4124 = vmatpush1.msra.mxu0 0.0
    %4125 = vmatprep.subr.mxu0 0.0
    %4126 = vmatpush1.msra.mxu0 0.0
    %4127 = vmatprep.subr.mxu0 0.0
    %4128 = vmatpush1.msra.mxu0 0.0
    %4129 = vmatprep.subr.mxu0 0.0
    %4130 = vmatpush1.msra.mxu0 0.0
    %4131 = vmatprep.subr.mxu0 0.0
    %4132 = vmatpush1.msra.mxu0 0.0
    %4133 = vmatprep.subr.mxu0 0.0
    %4134 = vmatpush1.msra.mxu0 0.0
    %4135 = vmatprep.subr.mxu0 0.0
    %4136 = vmatpush1.msra.mxu0 0.0
    %4137 = vmatprep.subr.mxu0 0.0
    %4138 = vmatpush1.msra.mxu0 0.0
    %4139 = vmatprep.subr.mxu0 0.0
    %4140 = vmatpush1.msra.mxu0 0.0
    %4141 = vmatprep.subr.mxu0 0.0
    %4142 = vmatpush1.msra.mxu0 0.0
    %4143 = vmatprep.subr.mxu0 0.0
    %4144 = vmatpush1.msra.mxu0 0.0
    %4145 = vmatprep.subr.mxu0 0.0
    %4146 = vmatpush1.msra.mxu0 0.0
    %4147 = vmatprep.subr.mxu0 0.0
    %4148 = vmatpush1.msra.mxu0 0.0
    %4149 = vmatprep.subr.mxu0 0.0
    %4150 = vmatpush1.msra.mxu0 0.0
    %4151 = vmatprep.subr.mxu0 0.0
    %4152 = vmatpush1.msra.mxu0 0.0
    %4153 = vmatprep.subr.mxu0 0.0
    %4154 = vmatpush1.msra.mxu0 0.0
    %4155 = vmatprep.subr.mxu0 0.0
    %4156 = vmatpush1.msra.mxu0 0.0
    %4157 = vmatprep.subr.mxu0 0.0
    %4158 = vmatpush1.msra.mxu0 0.0
    %4159 = vmatprep.subr.mxu0 0.0
    %4160 = vmatpush1.msra.mxu0 0.0
    %4161 = vmatprep.mubr.f32.mxu0 0.0
    %4162 = vmatmul.mubr.f32.gmra.mrb[0].mxu0 %v4089
    %v4163 = vpop.f32.mrb[0].mxu0
    %v4164 = vadd.f32 0.0, %v4163
    %v4165 = vpop.f32.mrb[0].mxu0
    %4166 = vmatprep.mubr.f32.mxu0 0.0
    %4167 = vmatmul.mubr.f32.gmra.mrb[0].mxu0 %v4092
    %v4168 = vpop.f32.mrb[0].mxu0
    %v4169 = vadd.f32 0.0, %v4168
    %v4170 = vpop.f32.mrb[0].mxu0
    %4171 = vmatprep.mubr.f32.mxu0 0.0
    %4172 = vmatmul.mubr.f32.gmra.mrb[0].mxu0 %v4095
    %v4173 = vpop.f32.mrb[0].mxu0
    %v4174 = vadd.f32 0.0, %v4173
    %v4175 = vpop.f32.mrb[0].mxu0
    %4176 = vdwg.mxu0
    %v4178 = vsel %vm626, %v3579, 0
    %v4181 = vsel %vm626, %v3580, 0
    %v4184 = vsel %vm626, %v3581, 0
    %4186 = vmatprep.subr.mxu0 0.0
    %4187 = vmatpush1.msra.mxu0 %v3583
    %4188 = vmatprep.subr.mxu0 0.0
    %4189 = vmatpush1.msra.mxu0 0.0
    %4190 = vmatprep.subr.mxu0 0.0
    %4191 = vmatpush1.msra.mxu0 0.0
    %4192 = vmatprep.subr.mxu0 0.0
    %4193 = vmatpush1.msra.mxu0 0.0
    %4194 = vmatprep.subr.mxu0 0.0
    %4195 = vmatpush1.msra.mxu0 0.0
    %4196 = vmatprep.subr.mxu0 0.0
    %4197 = vmatpush1.msra.mxu0 0.0
    %4198 = vmatprep.subr.mxu0 0.0
    %4199 = vmatpush1.msra.mxu0 0.0
    %4200 = vmatprep.subr.mxu0 0.0
    %4201 = vmatpush1.msra.mxu0 0.0
    %4202 = vmatprep.subr.mxu0 0.0
    %4203 = vmatpush1.msra.mxu0 0.0
    %4204 = vmatprep.subr.mxu0 0.0
    %4205 = vmatpush1.msra.mxu0 0.0
    %4206 = vmatprep.subr.mxu0 0.0
    %4207 = vmatpush1.msra.mxu0 0.0
    %4208 = vmatprep.subr.mxu0 0.0
    %4209 = vmatpush1.msra.mxu0 0.0
    %4210 = vmatprep.subr.mxu0 0.0
    %4211 = vmatpush1.msra.mxu0 0.0
    %4212 = vmatprep.subr.mxu0 0.0
    %4213 = vmatpush1.msra.mxu0 0.0
    %4214 = vmatprep.subr.mxu0 0.0
    %4215 = vmatpush1.msra.mxu0 0.0
    %4216 = vmatprep.subr.mxu0 0.0
    %4217 = vmatpush1.msra.mxu0 0.0
    %4218 = vmatprep.subr.mxu0 0.0
    %4219 = vmatpush1.msra.mxu0 0.0
    %4220 = vmatprep.subr.mxu0 0.0
    %4221 = vmatpush1.msra.mxu0 0.0
    %4222 = vmatprep.subr.mxu0 0.0
    %4223 = vmatpush1.msra.mxu0 0.0
    %4224 = vmatprep.subr.mxu0 0.0
    %4225 = vmatpush1.msra.mxu0 0.0
    %4226 = vmatprep.subr.mxu0 0.0
    %4227 = vmatpush1.msra.mxu0 0.0
    %4228 = vmatprep.subr.mxu0 0.0
    %4229 = vmatpush1.msra.mxu0 0.0
    %4230 = vmatprep.subr.mxu0 0.0
    %4231 = vmatpush1.msra.mxu0 0.0
    %4232 = vmatprep.subr.mxu0 0.0
    %4233 = vmatpush1.msra.mxu0 0.0
    %4234 = vmatprep.subr.mxu0 0.0
    %4235 = vmatpush1.msra.mxu0 0.0
    %4236 = vmatprep.subr.mxu0 0.0
    %4237 = vmatpush1.msra.mxu0 0.0
    %4238 = vmatprep.subr.mxu0 0.0
    %4239 = vmatpush1.msra.mxu0 0.0
    %4240 = vmatprep.subr.mxu0 0.0
    %4241 = vmatpush1.msra.mxu0 0.0
    %4242 = vmatprep.subr.mxu0 0.0
    %4243 = vmatpush1.msra.mxu0 0.0
    %4244 = vmatprep.subr.mxu0 0.0
    %4245 = vmatpush1.msra.mxu0 0.0
    %4246 = vmatprep.subr.mxu0 0.0
    %4247 = vmatpush1.msra.mxu0 0.0
    %4248 = vmatprep.subr.mxu0 0.0
    %4249 = vmatpush1.msra.mxu0 0.0
    %4250 = vmatprep.mubr.f32.mxu0 0.0
    %4251 = vmatmul.mubr.f32.gmra.mrb[0].mxu0 %v4178
    %v4252 = vpop.f32.mrb[0].mxu0
    %v4253 = vadd.f32 %v4164, %v4252
    %v4254 = vpop.f32.mrb[0].mxu0
    %4255 = vmatprep.mubr.f32.mxu0 0.0
    %4256 = vmatmul.mubr.f32.gmra.mrb[0].mxu0 %v4181
    %v4257 = vpop.f32.mrb[0].mxu0
    %v4258 = vadd.f32 %v4169, %v4257
    %v4259 = vpop.f32.mrb[0].mxu0
    %4260 = vmatprep.mubr.f32.mxu0 0.0
    %4261 = vmatmul.mubr.f32.gmra.mrb[0].mxu0 %v4184
    %v4262 = vpop.f32.mrb[0].mxu0
    %v4263 = vadd.f32 %v4174, %v4262
    %v4264 = vpop.f32.mrb[0].mxu0
    %4265 = vdwg.mxu0
    %s4266 = scalar_lea.vmem %s10, 192
    %v4267 = vld [vmem:[%s4266] sm:$0xff]
    %v4268 = vld [vmem:[%s4266 + $0x8] sm:$0xff]
    %v4269 = vld [vmem:[%s4266 + $0x10] sm:$0xff]
    %v4270 = vld [vmem:[%s4266 + $0x18] sm:$0xff]
    %s4271 = scalar_lea.vmem %s11, 6
    %v4272 = vld [vmem:[%s4271] sm:$0x1]
    %v4274 = vlaneseq
    %v4275 = vshrl.u32 %v4274, 7
    %v4276 = vsub.s32 0, %v4275
    %v4277 = vrot.slane %v4272, %v4276
    %4279 = vmatprep.subr.mxu0 0.0
    %4280 = vmatpush1.msra.mxu0 %v4267
    %4281 = vmatprep.subr.mxu0 0.0
    %4282 = vmatpush1.msra.mxu0 %v4268
    %4283 = vmatprep.subr.mxu0 0.0
    %4284 = vmatpush1.msra.mxu0 %v4269
    %4285 = vmatprep.subr.mxu0 0.0
    %4286 = vmatpush1.msra.mxu0 %v4270
    %4287 = vmatprep.subr.mxu0 0.0
    %4288 = vmatpush1.msra.mxu0 0.0
    %4289 = vmatprep.subr.mxu0 0.0
    %4290 = vmatpush1.msra.mxu0 0.0
    %4291 = vmatprep.subr.mxu0 0.0
    %4292 = vmatpush1.msra.mxu0 0.0
    %4293 = vmatprep.subr.mxu0 0.0
    %4294 = vmatpush1.msra.mxu0 0.0
    %4295 = vmatprep.subr.mxu0 0.0
    %4296 = vmatpush1.msra.mxu0 0.0
    %4297 = vmatprep.subr.mxu0 0.0
    %4298 = vmatpush1.msra.mxu0 0.0
    %4299 = vmatprep.subr.mxu0 0.0
    %4300 = vmatpush1.msra.mxu0 0.0
    %4301 = vmatprep.subr.mxu0 0.0
    %4302 = vmatpush1.msra.mxu0 0.0
    %4303 = vmatprep.subr.mxu0 0.0
    %4304 = vmatpush1.msra.mxu0 0.0
    %4305 = vmatprep.subr.mxu0 0.0
    %4306 = vmatpush1.msra.mxu0 0.0
    %4307 = vmatprep.subr.mxu0 0.0
    %4308 = vmatpush1.msra.mxu0 0.0
    %4309 = vmatprep.subr.mxu0 0.0
    %4310 = vmatpush1.msra.mxu0 0.0
    %4311 = vmatprep.subr.mxu0 0.0
    %4312 = vmatpush1.msra.mxu0 0.0
    %4313 = vmatprep.subr.mxu0 0.0
    %4314 = vmatpush1.msra.mxu0 0.0
    %4315 = vmatprep.subr.mxu0 0.0
    %4316 = vmatpush1.msra.mxu0 0.0
    %4317 = vmatprep.subr.mxu0 0.0
    %4318 = vmatpush1.msra.mxu0 0.0
    %4319 = vmatprep.subr.mxu0 0.0
    %4320 = vmatpush1.msra.mxu0 0.0
    %4321 = vmatprep.subr.mxu0 0.0
    %4322 = vmatpush1.msra.mxu0 0.0
    %4323 = vmatprep.subr.mxu0 0.0
    %4324 = vmatpush1.msra.mxu0 0.0
    %4325 = vmatprep.subr.mxu0 0.0
    %4326 = vmatpush1.msra.mxu0 0.0
    %4327 = vmatprep.subr.mxu0 0.0
    %4328 = vmatpush1.msra.mxu0 0.0
    %4329 = vmatprep.subr.mxu0 0.0
    %4330 = vmatpush1.msra.mxu0 0.0
    %4331 = vmatprep.subr.mxu0 0.0
    %4332 = vmatpush1.msra.mxu0 0.0
    %4333 = vmatprep.subr.mxu0 0.0
    %4334 = vmatpush1.msra.mxu0 0.0
    %4335 = vmatprep.subr.mxu0 0.0
    %4336 = vmatpush1.msra.mxu0 0.0
    %4337 = vmatprep.subr.mxu0 0.0
    %4338 = vmatpush1.msra.mxu0 0.0
    %4339 = vmatprep.subr.mxu0 0.0
    %4340 = vmatpush1.msra.mxu0 0.0
    %4341 = vmatprep.subr.mxu0 0.0
    %4342 = vmatpush1.msra.mxu0 0.0
    %4343 = vmatprep.mubr.f32.mxu0 0.0
    %4344 = vmatmul.mubr.f32.gmra.mrb[0].mxu0 %v3085
    %v4345 = vpop.f32.mrb[0].mxu0
    %v4346 = vadd.f32 %v4277, %v4345
    %v4347 = vpop.f32.mrb[0].mxu0
    %4348 = vmatprep.mubr.f32.mxu0 0.0
    %4349 = vmatmul.mubr.f32.gmra.mrb[0].mxu0 %v3088
    %v4350 = vpop.f32.mrb[0].mxu0
    %v4351 = vadd.f32 %v4277, %v4350
    %v4352 = vpop.f32.mrb[0].mxu0
    %4353 = vmatprep.mubr.f32.mxu0 0.0
    %4354 = vmatmul.mubr.f32.gmra.mrb[0].mxu0 %v3091
    %v4355 = vpop.f32.mrb[0].mxu0
    %v4356 = vadd.f32 %v4277, %v4355
    %v4357 = vpop.f32.mrb[0].mxu0
    %4358 = vdwg.mxu0
    %s4359 = scalar_lea.vmem %s12, 192
    %v4360 = vld [vmem:[%s4359] sm:$0xff]
    %v4361 = vld [vmem:[%s4359 + $0x8] sm:$0xff]
    %v4362 = vld [vmem:[%s4359 + $0x10] sm:$0xff]
    %v4363 = vld [vmem:[%s4359 + $0x18] sm:$0xff]
    %s4364 = scalar_lea.vmem %s13, 6
    %v4365 = vld [vmem:[%s4364] sm:$0x1]
    %v4367 = vlaneseq
    %v4368 = vshrl.u32 %v4367, 7
    %v4369 = vsub.s32 0, %v4368
    %v4370 = vrot.slane %v4365, %v4369
    %4372 = vmatprep.subr.mxu0 0.0
    %4373 = vmatpush1.msra.mxu0 %v4360
    %4374 = vmatprep.subr.mxu0 0.0
    %4375 = vmatpush1.msra.mxu0 %v4361
    %4376 = vmatprep.subr.mxu0 0.0
    %4377 = vmatpush1.msra.mxu0 %v4362
    %4378 = vmatprep.subr.mxu0 0.0
    %4379 = vmatpush1.msra.mxu0 %v4363
    %4380 = vmatprep.subr.mxu0 0.0
    %4381 = vmatpush1.msra.mxu0 0.0
    %4382 = vmatprep.subr.mxu0 0.0
    %4383 = vmatpush1.msra.mxu0 0.0
    %4384 = vmatprep.subr.mxu0 0.0
    %4385 = vmatpush1.msra.mxu0 0.0
    %4386 = vmatprep.subr.mxu0 0.0
    %4387 = vmatpush1.msra.mxu0 0.0
    %4388 = vmatprep.subr.mxu0 0.0
    %4389 = vmatpush1.msra.mxu0 0.0
    %4390 = vmatprep.subr.mxu0 0.0
    %4391 = vmatpush1.msra.mxu0 0.0
    %4392 = vmatprep.subr.mxu0 0.0
    %4393 = vmatpush1.msra.mxu0 0.0
    %4394 = vmatprep.subr.mxu0 0.0
    %4395 = vmatpush1.msra.mxu0 0.0
    %4396 = vmatprep.subr.mxu0 0.0
    %4397 = vmatpush1.msra.mxu0 0.0
    %4398 = vmatprep.subr.mxu0 0.0
    %4399 = vmatpush1.msra.mxu0 0.0
    %4400 = vmatprep.subr.mxu0 0.0
    %4401 = vmatpush1.msra.mxu0 0.0
    %4402 = vmatprep.subr.mxu0 0.0
    %4403 = vmatpush1.msra.mxu0 0.0
    %4404 = vmatprep.subr.mxu0 0.0
    %4405 = vmatpush1.msra.mxu0 0.0
    %4406 = vmatprep.subr.mxu0 0.0
    %4407 = vmatpush1.msra.mxu0 0.0
    %4408 = vmatprep.subr.mxu0 0.0
    %4409 = vmatpush1.msra.mxu0 0.0
    %4410 = vmatprep.subr.mxu0 0.0
    %4411 = vmatpush1.msra.mxu0 0.0
    %4412 = vmatprep.subr.mxu0 0.0
    %4413 = vmatpush1.msra.mxu0 0.0
    %4414 = vmatprep.subr.mxu0 0.0
    %4415 = vmatpush1.msra.mxu0 0.0
    %4416 = vmatprep.subr.mxu0 0.0
    %4417 = vmatpush1.msra.mxu0 0.0
    %4418 = vmatprep.subr.mxu0 0.0
    %4419 = vmatpush1.msra.mxu0 0.0
    %4420 = vmatprep.subr.mxu0 0.0
    %4421 = vmatpush1.msra.mxu0 0.0
    %4422 = vmatprep.subr.mxu0 0.0
    %4423 = vmatpush1.msra.mxu0 0.0
    %4424 = vmatprep.subr.mxu0 0.0
    %4425 = vmatpush1.msra.mxu0 0.0
    %4426 = vmatprep.subr.mxu0 0.0
    %4427 = vmatpush1.msra.mxu0 0.0
    %4428 = vmatprep.subr.mxu0 0.0
    %4429 = vmatpush1.msra.mxu0 0.0
    %4430 = vmatprep.subr.mxu0 0.0
    %4431 = vmatpush1.msra.mxu0 0.0
    %4432 = vmatprep.subr.mxu0 0.0
    %4433 = vmatpush1.msra.mxu0 0.0
    %4434 = vmatprep.subr.mxu0 0.0
    %4435 = vmatpush1.msra.mxu0 0.0
    %4436 = vmatprep.mubr.f32.mxu0 0.0
    %4437 = vmatmul.mubr.f32.gmra.mrb[0].mxu0 %v3085
    %v4438 = vpop.f32.mrb[0].mxu0
    %v4439 = vadd.f32 %v4370, %v4438
    %v4440 = vpop.f32.mrb[0].mxu0
    %4441 = vmatprep.mubr.f32.mxu0 0.0
    %4442 = vmatmul.mubr.f32.gmra.mrb[0].mxu0 %v3088
    %v4443 = vpop.f32.mrb[0].mxu0
    %v4444 = vadd.f32 %v4370, %v4443
    %v4445 = vpop.f32.mrb[0].mxu0
    %4446 = vmatprep.mubr.f32.mxu0 0.0
    %4447 = vmatmul.mubr.f32.gmra.mrb[0].mxu0 %v3091
    %v4448 = vpop.f32.mrb[0].mxu0
    %v4449 = vadd.f32 %v4370, %v4448
    %v4450 = vpop.f32.mrb[0].mxu0
    %4451 = vdwg.mxu0
    %s4452 = scalar_lea.vmem %s14, 192
    %v4453 = vld [vmem:[%s4452] sm:$0xff]
    %v4454 = vld [vmem:[%s4452 + $0x8] sm:$0xff]
    %v4455 = vld [vmem:[%s4452 + $0x10] sm:$0xff]
    %v4456 = vld [vmem:[%s4452 + $0x18] sm:$0xff]
    %s4457 = scalar_lea.vmem %s15, 6
    %v4458 = vld [vmem:[%s4457] sm:$0x1]
    %v4460 = vlaneseq
    %v4461 = vshrl.u32 %v4460, 7
    %v4462 = vsub.s32 0, %v4461
    %v4463 = vrot.slane %v4458, %v4462
    %4465 = vmatprep.subr.mxu0 0.0
    %4466 = vmatpush1.msra.mxu0 %v4453
    %4467 = vmatprep.subr.mxu0 0.0
    %4468 = vmatpush1.msra.mxu0 %v4454
    %4469 = vmatprep.subr.mxu0 0.0
    %4470 = vmatpush1.msra.mxu0 %v4455
    %4471 = vmatprep.subr.mxu0 0.0
    %4472 = vmatpush1.msra.mxu0 %v4456
    %4473 = vmatprep.subr.mxu0 0.0
    %4474 = vmatpush1.msra.mxu0 0.0
    %4475 = vmatprep.subr.mxu0 0.0
    %4476 = vmatpush1.msra.mxu0 0.0
    %4477 = vmatprep.subr.mxu0 0.0
    %4478 = vmatpush1.msra.mxu0 0.0
    %4479 = vmatprep.subr.mxu0 0.0
    %4480 = vmatpush1.msra.mxu0 0.0
    %4481 = vmatprep.subr.mxu0 0.0
    %4482 = vmatpush1.msra.mxu0 0.0
    %4483 = vmatprep.subr.mxu0 0.0
    %4484 = vmatpush1.msra.mxu0 0.0
    %4485 = vmatprep.subr.mxu0 0.0
    %4486 = vmatpush1.msra.mxu0 0.0
    %4487 = vmatprep.subr.mxu0 0.0
    %4488 = vmatpush1.msra.mxu0 0.0
    %4489 = vmatprep.subr.mxu0 0.0
    %4490 = vmatpush1.msra.mxu0 0.0
    %4491 = vmatprep.subr.mxu0 0.0
    %4492 = vmatpush1.msra.mxu0 0.0
    %4493 = vmatprep.subr.mxu0 0.0
    %4494 = vmatpush1.msra.mxu0 0.0
    %4495 = vmatprep.subr.mxu0 0.0
    %4496 = vmatpush1.msra.mxu0 0.0
    %4497 = vmatprep.subr.mxu0 0.0
    %4498 = vmatpush1.msra.mxu0 0.0
    %4499 = vmatprep.subr.mxu0 0.0
    %4500 = vmatpush1.msra.mxu0 0.0
    %4501 = vmatprep.subr.mxu0 0.0
    %4502 = vmatpush1.msra.mxu0 0.0
    %4503 = vmatprep.subr.mxu0 0.0
    %4504 = vmatpush1.msra.mxu0 0.0
    %4505 = vmatprep.subr.mxu0 0.0
    %4506 = vmatpush1.msra.mxu0 0.0
    %4507 = vmatprep.subr.mxu0 0.0
    %4508 = vmatpush1.msra.mxu0 0.0
    %4509 = vmatprep.subr.mxu0 0.0
    %4510 = vmatpush1.msra.mxu0 0.0
    %4511 = vmatprep.subr.mxu0 0.0
    %4512 = vmatpush1.msra.mxu0 0.0
    %4513 = vmatprep.subr.mxu0 0.0
    %4514 = vmatpush1.msra.mxu0 0.0
    %4515 = vmatprep.subr.mxu0 0.0
    %4516 = vmatpush1.msra.mxu0 0.0
    %4517 = vmatprep.subr.mxu0 0.0
    %4518 = vmatpush1.msra.mxu0 0.0
    %4519 = vmatprep.subr.mxu0 0.0
    %4520 = vmatpush1.msra.mxu0 0.0
    %4521 = vmatprep.subr.mxu0 0.0
    %4522 = vmatpush1.msra.mxu0 0.0
    %4523 = vmatprep.subr.mxu0 0.0
    %4524 = vmatpush1.msra.mxu0 0.0
    %4525 = vmatprep.subr.mxu0 0.0
    %4526 = vmatpush1.msra.mxu0 0.0
    %4527 = vmatprep.subr.mxu0 0.0
    %4528 = vmatpush1.msra.mxu0 0.0
    %4529 = vmatprep.mubr.f32.mxu0 0.0
    %4530 = vmatmul.mubr.f32.gmra.mrb[0].mxu0 %v3085
    %v4531 = vpop.f32.mrb[0].mxu0
    %v4532 = vadd.f32 %v4463, %v4531
    %v4533 = vpop.f32.mrb[0].mxu0
    %4534 = vmatprep.mubr.f32.mxu0 0.0
    %4535 = vmatmul.mubr.f32.gmra.mrb[0].mxu0 %v3088
    %v4536 = vpop.f32.mrb[0].mxu0
    %v4537 = vadd.f32 %v4463, %v4536
    %v4538 = vpop.f32.mrb[0].mxu0
    %4539 = vmatprep.mubr.f32.mxu0 0.0
    %4540 = vmatmul.mubr.f32.gmra.mrb[0].mxu0 %v3091
    %v4541 = vpop.f32.mrb[0].mxu0
    %v4542 = vadd.f32 %v4463, %v4541
    %v4543 = vpop.f32.mrb[0].mxu0
    %4544 = vdwg.mxu0
    %v4546 = vsel %vm626, %v4346, 0
    %v4549 = vsel %vm626, %v4351, 0
    %v4552 = vsel %vm626, %v4356, 0
    %v4555 = vsel %vm626, %v4439, 0
    %v4558 = vsel %vm626, %v4444, 0
    %v4561 = vsel %vm626, %v4449, 0
    %4563 = vmatprep.subr.mxu0 0.0
    %4564 = vmatpush1.xpose.msra.mxu0 %v4555
    %4565 = vmatprep.subr.mxu0 0.0
    %4566 = vmatpush1.xpose.msra.mxu0 %v4558
    %4567 = vmatprep.subr.mxu0 0.0
    %4568 = vmatpush1.xpose.msra.mxu0 %v4561
    %4569 = vmatprep.subr.mxu0 0.0
    %4570 = vmatpush1.xpose.msra.mxu0 0.0
    %4571 = vmatprep.subr.mxu0 0.0
    %4572 = vmatpush1.xpose.msra.mxu0 0.0
    %4573 = vmatprep.subr.mxu0 0.0
    %4574 = vmatpush1.xpose.msra.mxu0 0.0
    %4575 = vmatprep.subr.mxu0 0.0
    %4576 = vmatpush1.xpose.msra.mxu0 0.0
    %4577 = vmatprep.subr.mxu0 0.0
    %4578 = vmatpush1.xpose.msra.mxu0 0.0
    %4579 = vmatprep.subr.mxu0 0.0
    %4580 = vmatpush1.xpose.msra.mxu0 0.0
    %4581 = vmatprep.subr.mxu0 0.0
    %4582 = vmatpush1.xpose.msra.mxu0 0.0
    %4583 = vmatprep.subr.mxu0 0.0
    %4584 = vmatpush1.xpose.msra.mxu0 0.0
    %4585 = vmatprep.subr.mxu0 0.0
    %4586 = vmatpush1.xpose.msra.mxu0 0.0
    %4587 = vmatprep.subr.mxu0 0.0
    %4588 = vmatpush1.xpose.msra.mxu0 0.0
    %4589 = vmatprep.subr.mxu0 0.0
    %4590 = vmatpush1.xpose.msra.mxu0 0.0
    %4591 = vmatprep.subr.mxu0 0.0
    %4592 = vmatpush1.xpose.msra.mxu0 0.0
    %4593 = vmatprep.subr.mxu0 0.0
    %4594 = vmatpush1.xpose.msra.mxu0 0.0
    %4595 = vmatprep.subr.mxu0 0.0
    %4596 = vmatpush1.xpose.msra.mxu0 0.0
    %4597 = vmatprep.subr.mxu0 0.0
    %4598 = vmatpush1.xpose.msra.mxu0 0.0
    %4599 = vmatprep.subr.mxu0 0.0
    %4600 = vmatpush1.xpose.msra.mxu0 0.0
    %4601 = vmatprep.subr.mxu0 0.0
    %4602 = vmatpush1.xpose.msra.mxu0 0.0
    %4603 = vmatprep.subr.mxu0 0.0
    %4604 = vmatpush1.xpose.msra.mxu0 0.0
    %4605 = vmatprep.subr.mxu0 0.0
    %4606 = vmatpush1.xpose.msra.mxu0 0.0
    %4607 = vmatprep.subr.mxu0 0.0
    %4608 = vmatpush1.xpose.msra.mxu0 0.0
    %4609 = vmatprep.subr.mxu0 0.0
    %4610 = vmatpush1.xpose.msra.mxu0 0.0
    %4611 = vmatprep.subr.mxu0 0.0
    %4612 = vmatpush1.xpose.msra.mxu0 0.0
    %4613 = vmatprep.subr.mxu0 0.0
    %4614 = vmatpush1.xpose.msra.mxu0 0.0
    %4615 = vmatprep.subr.mxu0 0.0
    %4616 = vmatpush1.xpose.msra.mxu0 0.0
    %4617 = vmatprep.subr.mxu0 0.0
    %4618 = vmatpush1.xpose.msra.mxu0 0.0
    %4619 = vmatprep.subr.mxu0 0.0
    %4620 = vmatpush1.xpose.msra.mxu0 0.0
    %4621 = vmatprep.subr.mxu0 0.0
    %4622 = vmatpush1.xpose.msra.mxu0 0.0
    %4623 = vmatprep.subr.mxu0 0.0
    %4624 = vmatpush1.xpose.msra.mxu0 0.0
    %4625 = vmatprep.subr.mxu0 0.0
    %4626 = vmatpush1.xpose.msra.mxu0 0.0
    %4627 = vmatprep.mubr.f32.mxu0 0.0
    %4628 = vmatmul.mubr.f32.gmra.mrb[0].mxu0 %v4546
    %v4629 = vpop.f32.mrb[0].mxu0
    %v4630 = vadd.f32 %v340, %v4629
    %v4631 = vpop.f32.mrb[0].mxu0
    %4632 = vmatprep.mubr.f32.mxu0 0.0
    %4633 = vmatmul.mubr.f32.gmra.mrb[0].mxu0 %v4549
    %v4634 = vpop.f32.mrb[0].mxu0
    %v4635 = vadd.f32 %v341, %v4634
    %v4636 = vpop.f32.mrb[0].mxu0
    %4637 = vmatprep.mubr.f32.mxu0 0.0
    %4638 = vmatmul.mubr.f32.gmra.mrb[0].mxu0 %v4552
    %v4639 = vpop.f32.mrb[0].mxu0
    %v4640 = vadd.f32 %v342, %v4639
    %v4641 = vpop.f32.mrb[0].mxu0
    %4642 = vdwg.mxu0
    %v4643 = vsel %vm725, %v4630, -inf
    %4644 = vmax.xlane.f32.xlu0 %v4643
    %v4645 = vpop.xlane.xlu0 %4644
    %v4646 = vsel %vm725, %v4635, -inf
    %4647 = vmax.xlane.f32.xlu0 %v4646
    %v4648 = vpop.xlane.xlu0 %4647
    %v4649 = vsel %vm732, %v4640, -inf
    %4650 = vmax.xlane.f32.xlu0 %v4649
    %v4651 = vpop.xlane.xlu0 %4650
    %v4652 = vsub.f32 %v4630, %v4645
    %v4653 = vsub.f32 %v4635, %v4648
    %v4654 = vsub.f32 %v4640, %v4651
    %v4655 = vmul.f32 %v4652, 1.442695
    %v4656 = vpow.pop %v4655
    %v4657 = vmul.f32 %v4653, 1.442695
    %v4658 = vpow.pop %v4657
    %v4659 = vmul.f32 %v4654, 1.442695
    %v4660 = vpow.pop %v4659
    %v4661 = vsel %vm725, %v4656, 0.0
    %4662 = vadd.xlane.f32.xlu0 %v4661
    %v4663 = vpop.xlane.xlu0 %4662
    %v4664 = vsel %vm725, %v4658, 0.0
    %4665 = vadd.xlane.f32.xlu0 %v4664
    %v4666 = vpop.xlane.xlu0 %4665
    %v4667 = vsel %vm732, %v4660, 0.0
    %4668 = vadd.xlane.f32.xlu0 %v4667
    %v4669 = vpop.xlane.xlu0 %4668
    %v4670 = vrcp.pop %v4663
    %v4671 = vrcp.pop %v4666
    %v4672 = vrcp.pop %v4669
    %v4674 = vsel %vm725, %v4656, 0
    %v4677 = vsel %vm725, %v4658, 0
    %v4680 = vsel %vm725, %v4660, 0
    %v4683 = vsel %vm766, %v4542, 0
    %4685 = vmatprep.subr.mxu0 0.0
    %4686 = vmatpush1.msra.mxu0 %v4532
    %4687 = vmatprep.subr.mxu0 0.0
    %4688 = vmatpush1.msra.mxu0 %v4537
    %4689 = vmatprep.subr.mxu0 0.0
    %4690 = vmatpush1.msra.mxu0 %v4683
    %4691 = vmatprep.subr.mxu0 0.0
    %4692 = vmatpush1.msra.mxu0 0.0
    %4693 = vmatprep.subr.mxu0 0.0
    %4694 = vmatpush1.msra.mxu0 0.0
    %4695 = vmatprep.subr.mxu0 0.0
    %4696 = vmatpush1.msra.mxu0 0.0
    %4697 = vmatprep.subr.mxu0 0.0
    %4698 = vmatpush1.msra.mxu0 0.0
    %4699 = vmatprep.subr.mxu0 0.0
    %4700 = vmatpush1.msra.mxu0 0.0
    %4701 = vmatprep.subr.mxu0 0.0
    %4702 = vmatpush1.msra.mxu0 0.0
    %4703 = vmatprep.subr.mxu0 0.0
    %4704 = vmatpush1.msra.mxu0 0.0
    %4705 = vmatprep.subr.mxu0 0.0
    %4706 = vmatpush1.msra.mxu0 0.0
    %4707 = vmatprep.subr.mxu0 0.0
    %4708 = vmatpush1.msra.mxu0 0.0
    %4709 = vmatprep.subr.mxu0 0.0
    %4710 = vmatpush1.msra.mxu0 0.0
    %4711 = vmatprep.subr.mxu0 0.0
    %4712 = vmatpush1.msra.mxu0 0.0
    %4713 = vmatprep.subr.mxu0 0.0
    %4714 = vmatpush1.msra.mxu0 0.0
    %4715 = vmatprep.subr.mxu0 0.0
    %4716 = vmatpush1.msra.mxu0 0.0
    %4717 = vmatprep.subr.mxu0 0.0
    %4718 = vmatpush1.msra.mxu0 0.0
    %4719 = vmatprep.subr.mxu0 0.0
    %4720 = vmatpush1.msra.mxu0 0.0
    %4721 = vmatprep.subr.mxu0 0.0
    %4722 = vmatpush1.msra.mxu0 0.0
    %4723 = vmatprep.subr.mxu0 0.0
    %4724 = vmatpush1.msra.mxu0 0.0
    %4725 = vmatprep.subr.mxu0 0.0
    %4726 = vmatpush1.msra.mxu0 0.0
    %4727 = vmatprep.subr.mxu0 0.0
    %4728 = vmatpush1.msra.mxu0 0.0
    %4729 = vmatprep.subr.mxu0 0.0
    %4730 = vmatpush1.msra.mxu0 0.0
    %4731 = vmatprep.subr.mxu0 0.0
    %4732 = vmatpush1.msra.mxu0 0.0
    %4733 = vmatprep.subr.mxu0 0.0
    %4734 = vmatpush1.msra.mxu0 0.0
    %4735 = vmatprep.subr.mxu0 0.0
    %4736 = vmatpush1.msra.mxu0 0.0
    %4737 = vmatprep.subr.mxu0 0.0
    %4738 = vmatpush1.msra.mxu0 0.0
    %4739 = vmatprep.subr.mxu0 0.0
    %4740 = vmatpush1.msra.mxu0 0.0
    %4741 = vmatprep.subr.mxu0 0.0
    %4742 = vmatpush1.msra.mxu0 0.0
    %4743 = vmatprep.subr.mxu0 0.0
    %4744 = vmatpush1.msra.mxu0 0.0
    %4745 = vmatprep.subr.mxu0 0.0
    %4746 = vmatpush1.msra.mxu0 0.0
    %4747 = vmatprep.subr.mxu0 0.0
    %4748 = vmatpush1.msra.mxu0 0.0
    %4749 = vmatprep.mubr.f32.mxu0 0.0
    %4750 = vmatmul.mubr.f32.gmra.mrb[0].mxu0 %v4674
    %v4751 = vpop.f32.mrb[0].mxu0
    %v4752 = vadd.f32 0.0, %v4751
    %v4753 = vpop.f32.mrb[0].mxu0
    %4754 = vmatprep.mubr.f32.mxu0 0.0
    %4755 = vmatmul.mubr.f32.gmra.mrb[0].mxu0 %v4677
    %v4756 = vpop.f32.mrb[0].mxu0
    %v4757 = vadd.f32 0.0, %v4756
    %v4758 = vpop.f32.mrb[0].mxu0
    %4759 = vmatprep.mubr.f32.mxu0 0.0
    %4760 = vmatmul.mubr.f32.gmra.mrb[0].mxu0 %v4680
    %v4761 = vpop.f32.mrb[0].mxu0
    %v4762 = vadd.f32 0.0, %v4761
    %v4763 = vpop.f32.mrb[0].mxu0
    %4764 = vdwg.mxu0
    %v4765 = vmul.f32 %v4752, %v4670
    %v4766 = vmul.f32 %v4757, %v4671
    %v4767 = vmul.f32 %v4762, %v4672
    %s4768 = scalar_lea.vmem %s16, 48
    %v4769 = vld [vmem:[%s4768] sm:$0xff]
    %v4771 = vsel %vm626, %v4765, 0
    %v4774 = vsel %vm626, %v4766, 0
    %v4777 = vsel %vm626, %v4767, 0
    %4779 = vmatprep.subr.mxu0 0.0
    %4780 = vmatpush1.msra.mxu0 %v4769
    %4781 = vmatprep.subr.mxu0 0.0
    %4782 = vmatpush1.msra.mxu0 0.0
    %4783 = vmatprep.subr.mxu0 0.0
    %4784 = vmatpush1.msra.mxu0 0.0
    %4785 = vmatprep.subr.mxu0 0.0
    %4786 = vmatpush1.msra.mxu0 0.0
    %4787 = vmatprep.subr.mxu0 0.0
    %4788 = vmatpush1.msra.mxu0 0.0
    %4789 = vmatprep.subr.mxu0 0.0
    %4790 = vmatpush1.msra.mxu0 0.0
    %4791 = vmatprep.subr.mxu0 0.0
    %4792 = vmatpush1.msra.mxu0 0.0
    %4793 = vmatprep.subr.mxu0 0.0
    %4794 = vmatpush1.msra.mxu0 0.0
    %4795 = vmatprep.subr.mxu0 0.0
    %4796 = vmatpush1.msra.mxu0 0.0
    %4797 = vmatprep.subr.mxu0 0.0
    %4798 = vmatpush1.msra.mxu0 0.0
    %4799 = vmatprep.subr.mxu0 0.0
    %4800 = vmatpush1.msra.mxu0 0.0
    %4801 = vmatprep.subr.mxu0 0.0
    %4802 = vmatpush1.msra.mxu0 0.0
    %4803 = vmatprep.subr.mxu0 0.0
    %4804 = vmatpush1.msra.mxu0 0.0
    %4805 = vmatprep.subr.mxu0 0.0
    %4806 = vmatpush1.msra.mxu0 0.0
    %4807 = vmatprep.subr.mxu0 0.0
    %4808 = vmatpush1.msra.mxu0 0.0
    %4809 = vmatprep.subr.mxu0 0.0
    %4810 = vmatpush1.msra.mxu0 0.0
    %4811 = vmatprep.subr.mxu0 0.0
    %4812 = vmatpush1.msra.mxu0 0.0
    %4813 = vmatprep.subr.mxu0 0.0
    %4814 = vmatpush1.msra.mxu0 0.0
    %4815 = vmatprep.subr.mxu0 0.0
    %4816 = vmatpush1.msra.mxu0 0.0
    %4817 = vmatprep.subr.mxu0 0.0
    %4818 = vmatpush1.msra.mxu0 0.0
    %4819 = vmatprep.subr.mxu0 0.0
    %4820 = vmatpush1.msra.mxu0 0.0
    %4821 = vmatprep.subr.mxu0 0.0
    %4822 = vmatpush1.msra.mxu0 0.0
    %4823 = vmatprep.subr.mxu0 0.0
    %4824 = vmatpush1.msra.mxu0 0.0
    %4825 = vmatprep.subr.mxu0 0.0
    %4826 = vmatpush1.msra.mxu0 0.0
    %4827 = vmatprep.subr.mxu0 0.0
    %4828 = vmatpush1.msra.mxu0 0.0
    %4829 = vmatprep.subr.mxu0 0.0
    %4830 = vmatpush1.msra.mxu0 0.0
    %4831 = vmatprep.subr.mxu0 0.0
    %4832 = vmatpush1.msra.mxu0 0.0
    %4833 = vmatprep.subr.mxu0 0.0
    %4834 = vmatpush1.msra.mxu0 0.0
    %4835 = vmatprep.subr.mxu0 0.0
    %4836 = vmatpush1.msra.mxu0 0.0
    %4837 = vmatprep.subr.mxu0 0.0
    %4838 = vmatpush1.msra.mxu0 0.0
    %4839 = vmatprep.subr.mxu0 0.0
    %4840 = vmatpush1.msra.mxu0 0.0
    %4841 = vmatprep.subr.mxu0 0.0
    %4842 = vmatpush1.msra.mxu0 0.0
    %4843 = vmatprep.mubr.f32.mxu0 0.0
    %4844 = vmatmul.mubr.f32.gmra.mrb[0].mxu0 %v4771
    %v4845 = vpop.f32.mrb[0].mxu0
    %v4846 = vadd.f32 0.0, %v4845
    %v4847 = vpop.f32.mrb[0].mxu0
    %4848 = vmatprep.mubr.f32.mxu0 0.0
    %4849 = vmatmul.mubr.f32.gmra.mrb[0].mxu0 %v4774
    %v4850 = vpop.f32.mrb[0].mxu0
    %v4851 = vadd.f32 0.0, %v4850
    %v4852 = vpop.f32.mrb[0].mxu0
    %4853 = vmatprep.mubr.f32.mxu0 0.0
    %4854 = vmatmul.mubr.f32.gmra.mrb[0].mxu0 %v4777
    %v4855 = vpop.f32.mrb[0].mxu0
    %v4856 = vadd.f32 0.0, %v4855
    %v4857 = vpop.f32.mrb[0].mxu0
    %4858 = vdwg.mxu0
    %v4859 = vadd.f32 %v4253, %v4846
    %v4860 = vadd.f32 %v4258, %v4851
    %v4861 = vadd.f32 %v4263, %v4856
    %s4862 = scalar_lea.vmem %s10, 224
    %v4863 = vld [vmem:[%s4862] sm:$0xff]
    %v4864 = vld [vmem:[%s4862 + $0x8] sm:$0xff]
    %v4865 = vld [vmem:[%s4862 + $0x10] sm:$0xff]
    %v4866 = vld [vmem:[%s4862 + $0x18] sm:$0xff]
    %s4867 = scalar_lea.vmem %s11, 7
    %v4868 = vld [vmem:[%s4867] sm:$0x1]
    %v4870 = vlaneseq
    %v4871 = vshrl.u32 %v4870, 7
    %v4872 = vsub.s32 0, %v4871
    %v4873 = vrot.slane %v4868, %v4872
    %4875 = vmatprep.subr.mxu0 0.0
    %4876 = vmatpush1.msra.mxu0 %v4863
    %4877 = vmatprep.subr.mxu0 0.0
    %4878 = vmatpush1.msra.mxu0 %v4864
    %4879 = vmatprep.subr.mxu0 0.0
    %4880 = vmatpush1.msra.mxu0 %v4865
    %4881 = vmatprep.subr.mxu0 0.0
    %4882 = vmatpush1.msra.mxu0 %v4866
    %4883 = vmatprep.subr.mxu0 0.0
    %4884 = vmatpush1.msra.mxu0 0.0
    %4885 = vmatprep.subr.mxu0 0.0
    %4886 = vmatpush1.msra.mxu0 0.0
    %4887 = vmatprep.subr.mxu0 0.0
    %4888 = vmatpush1.msra.mxu0 0.0
    %4889 = vmatprep.subr.mxu0 0.0
    %4890 = vmatpush1.msra.mxu0 0.0
    %4891 = vmatprep.subr.mxu0 0.0
    %4892 = vmatpush1.msra.mxu0 0.0
    %4893 = vmatprep.subr.mxu0 0.0
    %4894 = vmatpush1.msra.mxu0 0.0
    %4895 = vmatprep.subr.mxu0 0.0
    %4896 = vmatpush1.msra.mxu0 0.0
    %4897 = vmatprep.subr.mxu0 0.0
    %4898 = vmatpush1.msra.mxu0 0.0
    %4899 = vmatprep.subr.mxu0 0.0
    %4900 = vmatpush1.msra.mxu0 0.0
    %4901 = vmatprep.subr.mxu0 0.0
    %4902 = vmatpush1.msra.mxu0 0.0
    %4903 = vmatprep.subr.mxu0 0.0
    %4904 = vmatpush1.msra.mxu0 0.0
    %4905 = vmatprep.subr.mxu0 0.0
    %4906 = vmatpush1.msra.mxu0 0.0
    %4907 = vmatprep.subr.mxu0 0.0
    %4908 = vmatpush1.msra.mxu0 0.0
    %4909 = vmatprep.subr.mxu0 0.0
    %4910 = vmatpush1.msra.mxu0 0.0
    %4911 = vmatprep.subr.mxu0 0.0
    %4912 = vmatpush1.msra.mxu0 0.0
    %4913 = vmatprep.subr.mxu0 0.0
    %4914 = vmatpush1.msra.mxu0 0.0
    %4915 = vmatprep.subr.mxu0 0.0
    %4916 = vmatpush1.msra.mxu0 0.0
    %4917 = vmatprep.subr.mxu0 0.0
    %4918 = vmatpush1.msra.mxu0 0.0
    %4919 = vmatprep.subr.mxu0 0.0
    %4920 = vmatpush1.msra.mxu0 0.0
    %4921 = vmatprep.subr.mxu0 0.0
    %4922 = vmatpush1.msra.mxu0 0.0
    %4923 = vmatprep.subr.mxu0 0.0
    %4924 = vmatpush1.msra.mxu0 0.0
    %4925 = vmatprep.subr.mxu0 0.0
    %4926 = vmatpush1.msra.mxu0 0.0
    %4927 = vmatprep.subr.mxu0 0.0
    %4928 = vmatpush1.msra.mxu0 0.0
    %4929 = vmatprep.subr.mxu0 0.0
    %4930 = vmatpush1.msra.mxu0 0.0
    %4931 = vmatprep.subr.mxu0 0.0
    %4932 = vmatpush1.msra.mxu0 0.0
    %4933 = vmatprep.subr.mxu0 0.0
    %4934 = vmatpush1.msra.mxu0 0.0
    %4935 = vmatprep.subr.mxu0 0.0
    %4936 = vmatpush1.msra.mxu0 0.0
    %4937 = vmatprep.subr.mxu0 0.0
    %4938 = vmatpush1.msra.mxu0 0.0
    %4939 = vmatprep.mubr.f32.mxu0 0.0
    %4940 = vmatmul.mubr.f32.gmra.mrb[0].mxu0 %v3085
    %v4941 = vpop.f32.mrb[0].mxu0
    %v4942 = vadd.f32 %v4873, %v4941
    %v4943 = vpop.f32.mrb[0].mxu0
    %4944 = vmatprep.mubr.f32.mxu0 0.0
    %4945 = vmatmul.mubr.f32.gmra.mrb[0].mxu0 %v3088
    %v4946 = vpop.f32.mrb[0].mxu0
    %v4947 = vadd.f32 %v4873, %v4946
    %v4948 = vpop.f32.mrb[0].mxu0
    %4949 = vmatprep.mubr.f32.mxu0 0.0
    %4950 = vmatmul.mubr.f32.gmra.mrb[0].mxu0 %v3091
    %v4951 = vpop.f32.mrb[0].mxu0
    %v4952 = vadd.f32 %v4873, %v4951
    %v4953 = vpop.f32.mrb[0].mxu0
    %4954 = vdwg.mxu0
    %s4955 = scalar_lea.vmem %s12, 224
    %v4956 = vld [vmem:[%s4955] sm:$0xff]
    %v4957 = vld [vmem:[%s4955 + $0x8] sm:$0xff]
    %v4958 = vld [vmem:[%s4955 + $0x10] sm:$0xff]
    %v4959 = vld [vmem:[%s4955 + $0x18] sm:$0xff]
    %s4960 = scalar_lea.vmem %s13, 7
    %v4961 = vld [vmem:[%s4960] sm:$0x1]
    %v4963 = vlaneseq
    %v4964 = vshrl.u32 %v4963, 7
    %v4965 = vsub.s32 0, %v4964
    %v4966 = vrot.slane %v4961, %v4965
    %4968 = vmatprep.subr.mxu0 0.0
    %4969 = vmatpush1.msra.mxu0 %v4956
    %4970 = vmatprep.subr.mxu0 0.0
    %4971 = vmatpush1.msra.mxu0 %v4957
    %4972 = vmatprep.subr.mxu0 0.0
    %4973 = vmatpush1.msra.mxu0 %v4958
    %4974 = vmatprep.subr.mxu0 0.0
    %4975 = vmatpush1.msra.mxu0 %v4959
    %4976 = vmatprep.subr.mxu0 0.0
    %4977 = vmatpush1.msra.mxu0 0.0
    %4978 = vmatprep.subr.mxu0 0.0
    %4979 = vmatpush1.msra.mxu0 0.0
    %4980 = vmatprep.subr.mxu0 0.0
    %4981 = vmatpush1.msra.mxu0 0.0
    %4982 = vmatprep.subr.mxu0 0.0
    %4983 = vmatpush1.msra.mxu0 0.0
    %4984 = vmatprep.subr.mxu0 0.0
    %4985 = vmatpush1.msra.mxu0 0.0
    %4986 = vmatprep.subr.mxu0 0.0
    %4987 = vmatpush1.msra.mxu0 0.0
    %4988 = vmatprep.subr.mxu0 0.0
    %4989 = vmatpush1.msra.mxu0 0.0
    %4990 = vmatprep.subr.mxu0 0.0
    %4991 = vmatpush1.msra.mxu0 0.0
    %4992 = vmatprep.subr.mxu0 0.0
    %4993 = vmatpush1.msra.mxu0 0.0
    %4994 = vmatprep.subr.mxu0 0.0
    %4995 = vmatpush1.msra.mxu0 0.0
    %4996 = vmatprep.subr.mxu0 0.0
    %4997 = vmatpush1.msra.mxu0 0.0
    %4998 = vmatprep.subr.mxu0 0.0
    %4999 = vmatpush1.msra.mxu0 0.0
    %5000 = vmatprep.subr.mxu0 0.0
    %5001 = vmatpush1.msra.mxu0 0.0
    %5002 = vmatprep.subr.mxu0 0.0
    %5003 = vmatpush1.msra.mxu0 0.0
    %5004 = vmatprep.subr.mxu0 0.0
    %5005 = vmatpush1.msra.mxu0 0.0
    %5006 = vmatprep.subr.mxu0 0.0
    %5007 = vmatpush1.msra.mxu0 0.0
    %5008 = vmatprep.subr.mxu0 0.0
    %5009 = vmatpush1.msra.mxu0 0.0
    %5010 = vmatprep.subr.mxu0 0.0
    %5011 = vmatpush1.msra.mxu0 0.0
    %5012 = vmatprep.subr.mxu0 0.0
    %5013 = vmatpush1.msra.mxu0 0.0
    %5014 = vmatprep.subr.mxu0 0.0
    %5015 = vmatpush1.msra.mxu0 0.0
    %5016 = vmatprep.subr.mxu0 0.0
    %5017 = vmatpush1.msra.mxu0 0.0
    %5018 = vmatprep.subr.mxu0 0.0
    %5019 = vmatpush1.msra.mxu0 0.0
    %5020 = vmatprep.subr.mxu0 0.0
    %5021 = vmatpush1.msra.mxu0 0.0
    %5022 = vmatprep.subr.mxu0 0.0
    %5023 = vmatpush1.msra.mxu0 0.0
    %5024 = vmatprep.subr.mxu0 0.0
    %5025 = vmatpush1.msra.mxu0 0.0
    %5026 = vmatprep.subr.mxu0 0.0
    %5027 = vmatpush1.msra.mxu0 0.0
    %5028 = vmatprep.subr.mxu0 0.0
    %5029 = vmatpush1.msra.mxu0 0.0
    %5030 = vmatprep.subr.mxu0 0.0
    %5031 = vmatpush1.msra.mxu0 0.0
    %5032 = vmatprep.mubr.f32.mxu0 0.0
    %5033 = vmatmul.mubr.f32.gmra.mrb[0].mxu0 %v3085
    %v5034 = vpop.f32.mrb[0].mxu0
    %v5035 = vadd.f32 %v4966, %v5034
    %v5036 = vpop.f32.mrb[0].mxu0
    %5037 = vmatprep.mubr.f32.mxu0 0.0
    %5038 = vmatmul.mubr.f32.gmra.mrb[0].mxu0 %v3088
    %v5039 = vpop.f32.mrb[0].mxu0
    %v5040 = vadd.f32 %v4966, %v5039
    %v5041 = vpop.f32.mrb[0].mxu0
    %5042 = vmatprep.mubr.f32.mxu0 0.0
    %5043 = vmatmul.mubr.f32.gmra.mrb[0].mxu0 %v3091
    %v5044 = vpop.f32.mrb[0].mxu0
    %v5045 = vadd.f32 %v4966, %v5044
    %v5046 = vpop.f32.mrb[0].mxu0
    %5047 = vdwg.mxu0
    %s5048 = scalar_lea.vmem %s14, 224
    %v5049 = vld [vmem:[%s5048] sm:$0xff]
    %v5050 = vld [vmem:[%s5048 + $0x8] sm:$0xff]
    %v5051 = vld [vmem:[%s5048 + $0x10] sm:$0xff]
    %v5052 = vld [vmem:[%s5048 + $0x18] sm:$0xff]
    %s5053 = scalar_lea.vmem %s15, 7
    %v5054 = vld [vmem:[%s5053] sm:$0x1]
    %v5056 = vlaneseq
    %v5057 = vshrl.u32 %v5056, 7
    %v5058 = vsub.s32 0, %v5057
    %v5059 = vrot.slane %v5054, %v5058
    %5061 = vmatprep.subr.mxu0 0.0
    %5062 = vmatpush1.msra.mxu0 %v5049
    %5063 = vmatprep.subr.mxu0 0.0
    %5064 = vmatpush1.msra.mxu0 %v5050
    %5065 = vmatprep.subr.mxu0 0.0
    %5066 = vmatpush1.msra.mxu0 %v5051
    %5067 = vmatprep.subr.mxu0 0.0
    %5068 = vmatpush1.msra.mxu0 %v5052
    %5069 = vmatprep.subr.mxu0 0.0
    %5070 = vmatpush1.msra.mxu0 0.0
    %5071 = vmatprep.subr.mxu0 0.0
    %5072 = vmatpush1.msra.mxu0 0.0
    %5073 = vmatprep.subr.mxu0 0.0
    %5074 = vmatpush1.msra.mxu0 0.0
    %5075 = vmatprep.subr.mxu0 0.0
    %5076 = vmatpush1.msra.mxu0 0.0
    %5077 = vmatprep.subr.mxu0 0.0
    %5078 = vmatpush1.msra.mxu0 0.0
    %5079 = vmatprep.subr.mxu0 0.0
    %5080 = vmatpush1.msra.mxu0 0.0
    %5081 = vmatprep.subr.mxu0 0.0
    %5082 = vmatpush1.msra.mxu0 0.0
    %5083 = vmatprep.subr.mxu0 0.0
    %5084 = vmatpush1.msra.mxu0 0.0
    %5085 = vmatprep.subr.mxu0 0.0
    %5086 = vmatpush1.msra.mxu0 0.0
    %5087 = vmatprep.subr.mxu0 0.0
    %5088 = vmatpush1.msra.mxu0 0.0
    %5089 = vmatprep.subr.mxu0 0.0
    %5090 = vmatpush1.msra.mxu0 0.0
    %5091 = vmatprep.subr.mxu0 0.0
    %5092 = vmatpush1.msra.mxu0 0.0
    %5093 = vmatprep.subr.mxu0 0.0
    %5094 = vmatpush1.msra.mxu0 0.0
    %5095 = vmatprep.subr.mxu0 0.0
    %5096 = vmatpush1.msra.mxu0 0.0
    %5097 = vmatprep.subr.mxu0 0.0
    %5098 = vmatpush1.msra.mxu0 0.0
    %5099 = vmatprep.subr.mxu0 0.0
    %5100 = vmatpush1.msra.mxu0 0.0
    %5101 = vmatprep.subr.mxu0 0.0
    %5102 = vmatpush1.msra.mxu0 0.0
    %5103 = vmatprep.subr.mxu0 0.0
    %5104 = vmatpush1.msra.mxu0 0.0
    %5105 = vmatprep.subr.mxu0 0.0
    %5106 = vmatpush1.msra.mxu0 0.0
    %5107 = vmatprep.subr.mxu0 0.0
    %5108 = vmatpush1.msra.mxu0 0.0
    %5109 = vmatprep.subr.mxu0 0.0
    %5110 = vmatpush1.msra.mxu0 0.0
    %5111 = vmatprep.subr.mxu0 0.0
    %5112 = vmatpush1.msra.mxu0 0.0
    %5113 = vmatprep.subr.mxu0 0.0
    %5114 = vmatpush1.msra.mxu0 0.0
    %5115 = vmatprep.subr.mxu0 0.0
    %5116 = vmatpush1.msra.mxu0 0.0
    %5117 = vmatprep.subr.mxu0 0.0
    %5118 = vmatpush1.msra.mxu0 0.0
    %5119 = vmatprep.subr.mxu0 0.0
    %5120 = vmatpush1.msra.mxu0 0.0
    %5121 = vmatprep.subr.mxu0 0.0
    %5122 = vmatpush1.msra.mxu0 0.0
    %5123 = vmatprep.subr.mxu0 0.0
    %5124 = vmatpush1.msra.mxu0 0.0
    %5125 = vmatprep.mubr.f32.mxu0 0.0
    %5126 = vmatmul.mubr.f32.gmra.mrb[0].mxu0 %v3085
    %v5127 = vpop.f32.mrb[0].mxu0
    %v5128 = vadd.f32 %v5059, %v5127
    %v5129 = vpop.f32.mrb[0].mxu0
    %5130 = vmatprep.mubr.f32.mxu0 0.0
    %5131 = vmatmul.mubr.f32.gmra.mrb[0].mxu0 %v3088
    %v5132 = vpop.f32.mrb[0].mxu0
    %v5133 = vadd.f32 %v5059, %v5132
    %v5134 = vpop.f32.mrb[0].mxu0
    %5135 = vmatprep.mubr.f32.mxu0 0.0
    %5136 = vmatmul.mubr.f32.gmra.mrb[0].mxu0 %v3091
    %v5137 = vpop.f32.mrb[0].mxu0
    %v5138 = vadd.f32 %v5059, %v5137
    %v5139 = vpop.f32.mrb[0].mxu0
    %5140 = vdwg.mxu0
    %v5142 = vsel %vm626, %v4942, 0
    %v5145 = vsel %vm626, %v4947, 0
    %v5148 = vsel %vm626, %v4952, 0
    %v5151 = vsel %vm626, %v5035, 0
    %v5154 = vsel %vm626, %v5040, 0
    %v5157 = vsel %vm626, %v5045, 0
    %5159 = vmatprep.subr.mxu0 0.0
    %5160 = vmatpush1.xpose.msra.mxu0 %v5151
    %5161 = vmatprep.subr.mxu0 0.0
    %5162 = vmatpush1.xpose.msra.mxu0 %v5154
    %5163 = vmatprep.subr.mxu0 0.0
    %5164 = vmatpush1.xpose.msra.mxu0 %v5157
    %5165 = vmatprep.subr.mxu0 0.0
    %5166 = vmatpush1.xpose.msra.mxu0 0.0
    %5167 = vmatprep.subr.mxu0 0.0
    %5168 = vmatpush1.xpose.msra.mxu0 0.0
    %5169 = vmatprep.subr.mxu0 0.0
    %5170 = vmatpush1.xpose.msra.mxu0 0.0
    %5171 = vmatprep.subr.mxu0 0.0
    %5172 = vmatpush1.xpose.msra.mxu0 0.0
    %5173 = vmatprep.subr.mxu0 0.0
    %5174 = vmatpush1.xpose.msra.mxu0 0.0
    %5175 = vmatprep.subr.mxu0 0.0
    %5176 = vmatpush1.xpose.msra.mxu0 0.0
    %5177 = vmatprep.subr.mxu0 0.0
    %5178 = vmatpush1.xpose.msra.mxu0 0.0
    %5179 = vmatprep.subr.mxu0 0.0
    %5180 = vmatpush1.xpose.msra.mxu0 0.0
    %5181 = vmatprep.subr.mxu0 0.0
    %5182 = vmatpush1.xpose.msra.mxu0 0.0
    %5183 = vmatprep.subr.mxu0 0.0
    %5184 = vmatpush1.xpose.msra.mxu0 0.0
    %5185 = vmatprep.subr.mxu0 0.0
    %5186 = vmatpush1.xpose.msra.mxu0 0.0
    %5187 = vmatprep.subr.mxu0 0.0
    %5188 = vmatpush1.xpose.msra.mxu0 0.0
    %5189 = vmatprep.subr.mxu0 0.0
    %5190 = vmatpush1.xpose.msra.mxu0 0.0
    %5191 = vmatprep.subr.mxu0 0.0
    %5192 = vmatpush1.xpose.msra.mxu0 0.0
    %5193 = vmatprep.subr.mxu0 0.0
    %5194 = vmatpush1.xpose.msra.mxu0 0.0
    %5195 = vmatprep.subr.mxu0 0.0
    %5196 = vmatpush1.xpose.msra.mxu0 0.0
    %5197 = vmatprep.subr.mxu0 0.0
    %5198 = vmatpush1.xpose.msra.mxu0 0.0
    %5199 = vmatprep.subr.mxu0 0.0
    %5200 = vmatpush1.xpose.msra.mxu0 0.0
    %5201 = vmatprep.subr.mxu0 0.0
    %5202 = vmatpush1.xpose.msra.mxu0 0.0
    %5203 = vmatprep.subr.mxu0 0.0
    %5204 = vmatpush1.xpose.msra.mxu0 0.0
    %5205 = vmatprep.subr.mxu0 0.0
    %5206 = vmatpush1.xpose.msra.mxu0 0.0
    %5207 = vmatprep.subr.mxu0 0.0
    %5208 = vmatpush1.xpose.msra.mxu0 0.0
    %5209 = vmatprep.subr.mxu0 0.0
    %5210 = vmatpush1.xpose.msra.mxu0 0.0
    %5211 = vmatprep.subr.mxu0 0.0
    %5212 = vmatpush1.xpose.msra.mxu0 0.0
    %5213 = vmatprep.subr.mxu0 0.0
    %5214 = vmatpush1.xpose.msra.mxu0 0.0
    %5215 = vmatprep.subr.mxu0 0.0
    %5216 = vmatpush1.xpose.msra.mxu0 0.0
    %5217 = vmatprep.subr.mxu0 0.0
    %5218 = vmatpush1.xpose.msra.mxu0 0.0
    %5219 = vmatprep.subr.mxu0 0.0
    %5220 = vmatpush1.xpose.msra.mxu0 0.0
    %5221 = vmatprep.subr.mxu0 0.0
    %5222 = vmatpush1.xpose.msra.mxu0 0.0
    %5223 = vmatprep.mubr.f32.mxu0 0.0
    %5224 = vmatmul.mubr.f32.gmra.mrb[0].mxu0 %v5142
    %v5225 = vpop.f32.mrb[0].mxu0
    %v5226 = vadd.f32 %v340, %v5225
    %v5227 = vpop.f32.mrb[0].mxu0
    %5228 = vmatprep.mubr.f32.mxu0 0.0
    %5229 = vmatmul.mubr.f32.gmra.mrb[0].mxu0 %v5145
    %v5230 = vpop.f32.mrb[0].mxu0
    %v5231 = vadd.f32 %v341, %v5230
    %v5232 = vpop.f32.mrb[0].mxu0
    %5233 = vmatprep.mubr.f32.mxu0 0.0
    %5234 = vmatmul.mubr.f32.gmra.mrb[0].mxu0 %v5148
    %v5235 = vpop.f32.mrb[0].mxu0
    %v5236 = vadd.f32 %v342, %v5235
    %v5237 = vpop.f32.mrb[0].mxu0
    %5238 = vdwg.mxu0
    %v5239 = vsel %vm725, %v5226, -inf
    %5240 = vmax.xlane.f32.xlu0 %v5239
    %v5241 = vpop.xlane.xlu0 %5240
    %v5242 = vsel %vm725, %v5231, -inf
    %5243 = vmax.xlane.f32.xlu0 %v5242
    %v5244 = vpop.xlane.xlu0 %5243
    %v5245 = vsel %vm732, %v5236, -inf
    %5246 = vmax.xlane.f32.xlu0 %v5245
    %v5247 = vpop.xlane.xlu0 %5246
    %v5248 = vsub.f32 %v5226, %v5241
    %v5249 = vsub.f32 %v5231, %v5244
    %v5250 = vsub.f32 %v5236, %v5247
    %v5251 = vmul.f32 %v5248, 1.442695
    %v5252 = vpow.pop %v5251
    %v5253 = vmul.f32 %v5249, 1.442695
    %v5254 = vpow.pop %v5253
    %v5255 = vmul.f32 %v5250, 1.442695
    %v5256 = vpow.pop %v5255
    %v5257 = vsel %vm725, %v5252, 0.0
    %5258 = vadd.xlane.f32.xlu0 %v5257
    %v5259 = vpop.xlane.xlu0 %5258
    %v5260 = vsel %vm725, %v5254, 0.0
    %5261 = vadd.xlane.f32.xlu0 %v5260
    %v5262 = vpop.xlane.xlu0 %5261
    %v5263 = vsel %vm732, %v5256, 0.0
    %5264 = vadd.xlane.f32.xlu0 %v5263
    %v5265 = vpop.xlane.xlu0 %5264
    %v5266 = vrcp.pop %v5259
    %v5267 = vrcp.pop %v5262
    %v5268 = vrcp.pop %v5265
    %v5270 = vsel %vm725, %v5252, 0
    %v5273 = vsel %vm725, %v5254, 0
    %v5276 = vsel %vm725, %v5256, 0
    %v5279 = vsel %vm766, %v5138, 0
    %5281 = vmatprep.subr.mxu0 0.0
    %5282 = vmatpush1.msra.mxu0 %v5128
    %5283 = vmatprep.subr.mxu0 0.0
    %5284 = vmatpush1.msra.mxu0 %v5133
    %5285 = vmatprep.subr.mxu0 0.0
    %5286 = vmatpush1.msra.mxu0 %v5279
    %5287 = vmatprep.subr.mxu0 0.0
    %5288 = vmatpush1.msra.mxu0 0.0
    %5289 = vmatprep.subr.mxu0 0.0
    %5290 = vmatpush1.msra.mxu0 0.0
    %5291 = vmatprep.subr.mxu0 0.0
    %5292 = vmatpush1.msra.mxu0 0.0
    %5293 = vmatprep.subr.mxu0 0.0
    %5294 = vmatpush1.msra.mxu0 0.0
    %5295 = vmatprep.subr.mxu0 0.0
    %5296 = vmatpush1.msra.mxu0 0.0
    %5297 = vmatprep.subr.mxu0 0.0
    %5298 = vmatpush1.msra.mxu0 0.0
    %5299 = vmatprep.subr.mxu0 0.0
    %5300 = vmatpush1.msra.mxu0 0.0
    %5301 = vmatprep.subr.mxu0 0.0
    %5302 = vmatpush1.msra.mxu0 0.0
    %5303 = vmatprep.subr.mxu0 0.0
    %5304 = vmatpush1.msra.mxu0 0.0
    %5305 = vmatprep.subr.mxu0 0.0
    %5306 = vmatpush1.msra.mxu0 0.0
    %5307 = vmatprep.subr.mxu0 0.0
    %5308 = vmatpush1.msra.mxu0 0.0
    %5309 = vmatprep.subr.mxu0 0.0
    %5310 = vmatpush1.msra.mxu0 0.0
    %5311 = vmatprep.subr.mxu0 0.0
    %5312 = vmatpush1.msra.mxu0 0.0
    %5313 = vmatprep.subr.mxu0 0.0
    %5314 = vmatpush1.msra.mxu0 0.0
    %5315 = vmatprep.subr.mxu0 0.0
    %5316 = vmatpush1.msra.mxu0 0.0
    %5317 = vmatprep.subr.mxu0 0.0
    %5318 = vmatpush1.msra.mxu0 0.0
    %5319 = vmatprep.subr.mxu0 0.0
    %5320 = vmatpush1.msra.mxu0 0.0
    %5321 = vmatprep.subr.mxu0 0.0
    %5322 = vmatpush1.msra.mxu0 0.0
    %5323 = vmatprep.subr.mxu0 0.0
    %5324 = vmatpush1.msra.mxu0 0.0
    %5325 = vmatprep.subr.mxu0 0.0
    %5326 = vmatpush1.msra.mxu0 0.0
    %5327 = vmatprep.subr.mxu0 0.0
    %5328 = vmatpush1.msra.mxu0 0.0
    %5329 = vmatprep.subr.mxu0 0.0
    %5330 = vmatpush1.msra.mxu0 0.0
    %5331 = vmatprep.subr.mxu0 0.0
    %5332 = vmatpush1.msra.mxu0 0.0
    %5333 = vmatprep.subr.mxu0 0.0
    %5334 = vmatpush1.msra.mxu0 0.0
    %5335 = vmatprep.subr.mxu0 0.0
    %5336 = vmatpush1.msra.mxu0 0.0
    %5337 = vmatprep.subr.mxu0 0.0
    %5338 = vmatpush1.msra.mxu0 0.0
    %5339 = vmatprep.subr.mxu0 0.0
    %5340 = vmatpush1.msra.mxu0 0.0
    %5341 = vmatprep.subr.mxu0 0.0
    %5342 = vmatpush1.msra.mxu0 0.0
    %5343 = vmatprep.subr.mxu0 0.0
    %5344 = vmatpush1.msra.mxu0 0.0
    %5345 = vmatprep.mubr.f32.mxu0 0.0
    %5346 = vmatmul.mubr.f32.gmra.mrb[0].mxu0 %v5270
    %v5347 = vpop.f32.mrb[0].mxu0
    %v5348 = vadd.f32 0.0, %v5347
    %v5349 = vpop.f32.mrb[0].mxu0
    %5350 = vmatprep.mubr.f32.mxu0 0.0
    %5351 = vmatmul.mubr.f32.gmra.mrb[0].mxu0 %v5273
    %v5352 = vpop.f32.mrb[0].mxu0
    %v5353 = vadd.f32 0.0, %v5352
    %v5354 = vpop.f32.mrb[0].mxu0
    %5355 = vmatprep.mubr.f32.mxu0 0.0
    %5356 = vmatmul.mubr.f32.gmra.mrb[0].mxu0 %v5276
    %v5357 = vpop.f32.mrb[0].mxu0
    %v5358 = vadd.f32 0.0, %v5357
    %v5359 = vpop.f32.mrb[0].mxu0
    %5360 = vdwg.mxu0
    %v5361 = vmul.f32 %v5348, %v5266
    %v5362 = vmul.f32 %v5353, %v5267
    %v5363 = vmul.f32 %v5358, %v5268
    %s5364 = scalar_lea.vmem %s16, 56
    %v5365 = vld [vmem:[%s5364] sm:$0xff]
    %v5367 = vsel %vm626, %v5361, 0
    %v5370 = vsel %vm626, %v5362, 0
    %v5373 = vsel %vm626, %v5363, 0
    %5375 = vmatprep.subr.mxu0 0.0
    %5376 = vmatpush1.msra.mxu0 %v5365
    %5377 = vmatprep.subr.mxu0 0.0
    %5378 = vmatpush1.msra.mxu0 0.0
    %5379 = vmatprep.subr.mxu0 0.0
    %5380 = vmatpush1.msra.mxu0 0.0
    %5381 = vmatprep.subr.mxu0 0.0
    %5382 = vmatpush1.msra.mxu0 0.0
    %5383 = vmatprep.subr.mxu0 0.0
    %5384 = vmatpush1.msra.mxu0 0.0
    %5385 = vmatprep.subr.mxu0 0.0
    %5386 = vmatpush1.msra.mxu0 0.0
    %5387 = vmatprep.subr.mxu0 0.0
    %5388 = vmatpush1.msra.mxu0 0.0
    %5389 = vmatprep.subr.mxu0 0.0
    %5390 = vmatpush1.msra.mxu0 0.0
    %5391 = vmatprep.subr.mxu0 0.0
    %5392 = vmatpush1.msra.mxu0 0.0
    %5393 = vmatprep.subr.mxu0 0.0
    %5394 = vmatpush1.msra.mxu0 0.0
    %5395 = vmatprep.subr.mxu0 0.0
    %5396 = vmatpush1.msra.mxu0 0.0
    %5397 = vmatprep.subr.mxu0 0.0
    %5398 = vmatpush1.msra.mxu0 0.0
    %5399 = vmatprep.subr.mxu0 0.0
    %5400 = vmatpush1.msra.mxu0 0.0
    %5401 = vmatprep.subr.mxu0 0.0
    %5402 = vmatpush1.msra.mxu0 0.0
    %5403 = vmatprep.subr.mxu0 0.0
    %5404 = vmatpush1.msra.mxu0 0.0
    %5405 = vmatprep.subr.mxu0 0.0
    %5406 = vmatpush1.msra.mxu0 0.0
    %5407 = vmatprep.subr.mxu0 0.0
    %5408 = vmatpush1.msra.mxu0 0.0
    %5409 = vmatprep.subr.mxu0 0.0
    %5410 = vmatpush1.msra.mxu0 0.0
    %5411 = vmatprep.subr.mxu0 0.0
    %5412 = vmatpush1.msra.mxu0 0.0
    %5413 = vmatprep.subr.mxu0 0.0
    %5414 = vmatpush1.msra.mxu0 0.0
    %5415 = vmatprep.subr.mxu0 0.0
    %5416 = vmatpush1.msra.mxu0 0.0
    %5417 = vmatprep.subr.mxu0 0.0
    %5418 = vmatpush1.msra.mxu0 0.0
    %5419 = vmatprep.subr.mxu0 0.0
    %5420 = vmatpush1.msra.mxu0 0.0
    %5421 = vmatprep.subr.mxu0 0.0
    %5422 = vmatpush1.msra.mxu0 0.0
    %5423 = vmatprep.subr.mxu0 0.0
    %5424 = vmatpush1.msra.mxu0 0.0
    %5425 = vmatprep.subr.mxu0 0.0
    %5426 = vmatpush1.msra.mxu0 0.0
    %5427 = vmatprep.subr.mxu0 0.0
    %5428 = vmatpush1.msra.mxu0 0.0
    %5429 = vmatprep.subr.mxu0 0.0
    %5430 = vmatpush1.msra.mxu0 0.0
    %5431 = vmatprep.subr.mxu0 0.0
    %5432 = vmatpush1.msra.mxu0 0.0
    %5433 = vmatprep.subr.mxu0 0.0
    %5434 = vmatpush1.msra.mxu0 0.0
    %5435 = vmatprep.subr.mxu0 0.0
    %5436 = vmatpush1.msra.mxu0 0.0
    %5437 = vmatprep.subr.mxu0 0.0
    %5438 = vmatpush1.msra.mxu0 0.0
    %5439 = vmatprep.mubr.f32.mxu0 0.0
    %5440 = vmatmul.mubr.f32.gmra.mrb[0].mxu0 %v5367
    %v5441 = vpop.f32.mrb[0].mxu0
    %v5442 = vadd.f32 0.0, %v5441
    %v5443 = vpop.f32.mrb[0].mxu0
    %5444 = vmatprep.mubr.f32.mxu0 0.0
    %5445 = vmatmul.mubr.f32.gmra.mrb[0].mxu0 %v5370
    %v5446 = vpop.f32.mrb[0].mxu0
    %v5447 = vadd.f32 0.0, %v5446
    %v5448 = vpop.f32.mrb[0].mxu0
    %5449 = vmatprep.mubr.f32.mxu0 0.0
    %5450 = vmatmul.mubr.f32.gmra.mrb[0].mxu0 %v5373
    %v5451 = vpop.f32.mrb[0].mxu0
    %v5452 = vadd.f32 0.0, %v5451
    %v5453 = vpop.f32.mrb[0].mxu0
    %5454 = vdwg.mxu0
    %v5455 = vadd.f32 %v4859, %v5442
    %v5456 = vadd.f32 %v4860, %v5447
    %v5457 = vadd.f32 %v4861, %v5452
    %s5458 = scalar_lea.vmem %s17, 1
    %v5459 = vld [vmem:[%s5458] sm:$0x1]
    %v5461 = vlaneseq
    %v5462 = vshrl.u32 %v5461, 7
    %v5463 = vsub.s32 0, %v5462
    %v5464 = vrot.slane %v5459, %v5463
    %v5466 = vadd.f32 %v5455, %v5464
    %v5467 = vadd.f32 %v5456, %v5464
    %v5468 = vadd.f32 %v5457, %v5464
    %v5469 = vadd.f32 %v3068, %v5466
    %v5470 = vadd.f32 %v3069, %v5467
    %v5471 = vadd.f32 %v3070, %v5468
    %s5472 = scalar_lea.vmem %s18, 1
    %v5473 = vld [vmem:[%s5472] sm:$0x1]
    %s5474 = scalar_lea.vmem %s19, 1
    %v5475 = vld [vmem:[%s5474] sm:$0x1]
    %v5476 = vsel %vm354, %v5469, 0.0
    %5477 = vadd.xlane.f32.xlu0 %v5476
    %v5478 = vpop.xlane.xlu0 %5477
    %v5479 = vsel %vm354, %v5470, 0.0
    %5480 = vadd.xlane.f32.xlu0 %v5479
    %v5481 = vpop.xlane.xlu0 %5480
    %v5482 = vsel %vm2749, %v5471, 0.0
    %5483 = vadd.xlane.f32.xlu0 %v5482
    %v5484 = vpop.xlane.xlu0 %5483
    %v5485 = vmul.f32 %v5478, %v2753
    %v5486 = vmul.f32 %v5481, %v2753
    %v5487 = vmul.f32 %v5484, %v2753
    %v5488 = vsub.f32 %v5469, %v5485
    %v5489 = vsub.f32 %v5470, %v5486
    %v5490 = vsub.f32 %v5471, %v5487
    %v5491 = vmul.f32 %v5488, %v5488
    %v5492 = vmul.f32 %v5489, %v5489
    %v5493 = vmul.f32 %v5490, %v5490
    %v5494 = vsel %vm354, %v5491, 0.0
    %5495 = vadd.xlane.f32.xlu0 %v5494
    %v5496 = vpop.xlane.xlu0 %5495
    %v5497 = vsel %vm354, %v5492, 0.0
    %5498 = vadd.xlane.f32.xlu0 %v5497
    %v5499 = vpop.xlane.xlu0 %5498
    %v5500 = vsel %vm2749, %v5493, 0.0
    %5501 = vadd.xlane.f32.xlu0 %v5500
    %v5502 = vpop.xlane.xlu0 %5501
    %v5503 = vmul.f32 %v5496, %v2753
    %v5504 = vmul.f32 %v5499, %v2753
    %v5505 = vmul.f32 %v5502, %v2753
    %v5506 = vadd.f32 %v5503, 1e-05
    %v5507 = vadd.f32 %v5504, 1e-05
    %v5508 = vadd.f32 %v5505, 1e-05
    %v5509 = vrsqrt.pop %v5506
    %v5510 = vrsqrt.pop %v5507
    %v5511 = vrsqrt.pop %v5508
    %v5512 = vmul.f32 %v5488, %v5509
    %v5513 = vmul.f32 %v5489, %v5510
    %v5514 = vmul.f32 %v5490, %v5511
    %v5516 = vlaneseq
    %v5517 = vshrl.u32 %v5516, 7
    %v5518 = vsub.s32 0, %v5517
    %v5519 = vrot.slane %v5473, %v5518
    %v5521 = vmul.f32 %v5512, %v5519
    %v5522 = vmul.f32 %v5513, %v5519
    %v5523 = vmul.f32 %v5514, %v5519
    %v5525 = vlaneseq
    %v5526 = vshrl.u32 %v5525, 7
    %v5527 = vsub.s32 0, %v5526
    %v5528 = vrot.slane %v5475, %v5527
    %v5530 = vadd.f32 %v5521, %v5528
    %v5531 = vadd.f32 %v5522, %v5528
    %v5532 = vadd.f32 %v5523, %v5528
    %s5533 = scalar_lea.vmem %s20, 32
    %v5534 = vld [vmem:[%s5533] sm:$0xff]
    %v5535 = vld [vmem:[%s5533 + $0x8] sm:$0xff]
    %v5536 = vld [vmem:[%s5533 + $0x10] sm:$0xff]
    %v5537 = vld [vmem:[%s5533 + $0x18] sm:$0xff]
    %s5538 = scalar_lea.vmem %s21, 1
    %v5539 = vld [vmem:[%s5538] sm:$0x1]
    %v5541 = vlaneseq
    %v5542 = vshrl.u32 %v5541, 7
    %v5543 = vsub.s32 0, %v5542
    %v5544 = vrot.slane %v5539, %v5543
    %v5547 = vsel %vm354, %v5530, 0
    %v5550 = vsel %vm354, %v5531, 0
    %v5553 = vsel %vm354, %v5532, 0
    %5555 = vmatprep.subr.mxu0 0.0
    %5556 = vmatpush1.msra.mxu0 %v5534
    %5557 = vmatprep.subr.mxu0 0.0
    %5558 = vmatpush1.msra.mxu0 %v5535
    %5559 = vmatprep.subr.mxu0 0.0
    %5560 = vmatpush1.msra.mxu0 %v5536
    %5561 = vmatprep.subr.mxu0 0.0
    %5562 = vmatpush1.msra.mxu0 %v5537
    %5563 = vmatprep.subr.mxu0 0.0
    %5564 = vmatpush1.msra.mxu0 0.0
    %5565 = vmatprep.subr.mxu0 0.0
    %5566 = vmatpush1.msra.mxu0 0.0
    %5567 = vmatprep.subr.mxu0 0.0
    %5568 = vmatpush1.msra.mxu0 0.0
    %5569 = vmatprep.subr.mxu0 0.0
    %5570 = vmatpush1.msra.mxu0 0.0
    %5571 = vmatprep.subr.mxu0 0.0
    %5572 = vmatpush1.msra.mxu0 0.0
    %5573 = vmatprep.subr.mxu0 0.0
    %5574 = vmatpush1.msra.mxu0 0.0
    %5575 = vmatprep.subr.mxu0 0.0
    %5576 = vmatpush1.msra.mxu0 0.0
    %5577 = vmatprep.subr.mxu0 0.0
    %5578 = vmatpush1.msra.mxu0 0.0
    %5579 = vmatprep.subr.mxu0 0.0
    %5580 = vmatpush1.msra.mxu0 0.0
    %5581 = vmatprep.subr.mxu0 0.0
    %5582 = vmatpush1.msra.mxu0 0.0
    %5583 = vmatprep.subr.mxu0 0.0
    %5584 = vmatpush1.msra.mxu0 0.0
    %5585 = vmatprep.subr.mxu0 0.0
    %5586 = vmatpush1.msra.mxu0 0.0
    %5587 = vmatprep.subr.mxu0 0.0
    %5588 = vmatpush1.msra.mxu0 0.0
    %5589 = vmatprep.subr.mxu0 0.0
    %5590 = vmatpush1.msra.mxu0 0.0
    %5591 = vmatprep.subr.mxu0 0.0
    %5592 = vmatpush1.msra.mxu0 0.0
    %5593 = vmatprep.subr.mxu0 0.0
    %5594 = vmatpush1.msra.mxu0 0.0
    %5595 = vmatprep.subr.mxu0 0.0
    %5596 = vmatpush1.msra.mxu0 0.0
    %5597 = vmatprep.subr.mxu0 0.0
    %5598 = vmatpush1.msra.mxu0 0.0
    %5599 = vmatprep.subr.mxu0 0.0
    %5600 = vmatpush1.msra.mxu0 0.0
    %5601 = vmatprep.subr.mxu0 0.0
    %5602 = vmatpush1.msra.mxu0 0.0
    %5603 = vmatprep.subr.mxu0 0.0
    %5604 = vmatpush1.msra.mxu0 0.0
    %5605 = vmatprep.subr.mxu0 0.0
    %5606 = vmatpush1.msra.mxu0 0.0
    %5607 = vmatprep.subr.mxu0 0.0
    %5608 = vmatpush1.msra.mxu0 0.0
    %5609 = vmatprep.subr.mxu0 0.0
    %5610 = vmatpush1.msra.mxu0 0.0
    %5611 = vmatprep.subr.mxu0 0.0
    %5612 = vmatpush1.msra.mxu0 0.0
    %5613 = vmatprep.subr.mxu0 0.0
    %5614 = vmatpush1.msra.mxu0 0.0
    %5615 = vmatprep.subr.mxu0 0.0
    %5616 = vmatpush1.msra.mxu0 0.0
    %5617 = vmatprep.subr.mxu0 0.0
    %5618 = vmatpush1.msra.mxu0 0.0
    %5619 = vmatprep.mubr.f32.mxu0 0.0
    %5620 = vmatmul.mubr.f32.gmra.mrb[0].mxu0 %v5547
    %v5621 = vpop.f32.mrb[0].mxu0
    %v5622 = vadd.f32 %v5544, %v5621
    %v5623 = vpop.f32.mrb[0].mxu0
    %5624 = vmatprep.mubr.f32.mxu0 0.0
    %5625 = vmatmul.mubr.f32.gmra.mrb[0].mxu0 %v5550
    %v5626 = vpop.f32.mrb[0].mxu0
    %v5627 = vadd.f32 %v5544, %v5626
    %v5628 = vpop.f32.mrb[0].mxu0
    %5629 = vmatprep.mubr.f32.mxu0 0.0
    %5630 = vmatmul.mubr.f32.gmra.mrb[0].mxu0 %v5553
    %v5631 = vpop.f32.mrb[0].mxu0
    %v5632 = vadd.f32 %v5544, %v5631
    %v5633 = vpop.f32.mrb[0].mxu0
    %5634 = vdwg.mxu0
    %v5635 = vmax.f32 %v5622, 0.0
    %v5636 = vmax.f32 %v5627, 0.0
    %v5637 = vmax.f32 %v5632, 0.0
    %s5638 = scalar_lea.vmem %s22, 64
    %v5639 = vld [vmem:[%s5638] sm:$0xff]
    %v5640 = vld [vmem:[%s5638 + $0x8] sm:$0xff]
    %v5641 = vld [vmem:[%s5638 + $0x10] sm:$0xff]
    %v5642 = vld [vmem:[%s5638 + $0x18] sm:$0xff]
    %v5643 = vld [vmem:[%s5638 + $0x20] sm:$0xff]
    %v5644 = vld [vmem:[%s5638 + $0x28] sm:$0xff]
    %v5645 = vld [vmem:[%s5638 + $0x30] sm:$0xff]
    %v5646 = vld [vmem:[%s5638 + $0x38] sm:$0xff]
    %s5647 = scalar_lea.vmem %s23, 1
    %v5648 = vld [vmem:[%s5647] sm:$0x1]
    %v5650 = vlaneseq
    %v5651 = vshrl.u32 %v5650, 7
    %v5652 = vsub.s32 0, %v5651
    %v5653 = vrot.slane %v5648, %v5652
    %v5656 = vsel %vm213, %v5635, 0
    %v5659 = vsel %vm213, %v5636, 0
    %v5662 = vsel %vm213, %v5637, 0
    %5664 = vmatprep.subr.mxu0 0.0
    %5665 = vmatpush1.msra.mxu0 %v5639
    %5666 = vmatprep.subr.mxu0 0.0
    %5667 = vmatpush1.msra.mxu0 %v5640
    %5668 = vmatprep.subr.mxu0 0.0
    %5669 = vmatpush1.msra.mxu0 %v5641
    %5670 = vmatprep.subr.mxu0 0.0
    %5671 = vmatpush1.msra.mxu0 %v5642
    %5672 = vmatprep.subr.mxu0 0.0
    %5673 = vmatpush1.msra.mxu0 %v5643
    %5674 = vmatprep.subr.mxu0 0.0
    %5675 = vmatpush1.msra.mxu0 %v5644
    %5676 = vmatprep.subr.mxu0 0.0
    %5677 = vmatpush1.msra.mxu0 %v5645
    %5678 = vmatprep.subr.mxu0 0.0
    %5679 = vmatpush1.msra.mxu0 %v5646
    %5680 = vmatprep.subr.mxu0 0.0
    %5681 = vmatpush1.msra.mxu0 0.0
    %5682 = vmatprep.subr.mxu0 0.0
    %5683 = vmatpush1.msra.mxu0 0.0
    %5684 = vmatprep.subr.mxu0 0.0
    %5685 = vmatpush1.msra.mxu0 0.0
    %5686 = vmatprep.subr.mxu0 0.0
    %5687 = vmatpush1.msra.mxu0 0.0
    %5688 = vmatprep.subr.mxu0 0.0
    %5689 = vmatpush1.msra.mxu0 0.0
    %5690 = vmatprep.subr.mxu0 0.0
    %5691 = vmatpush1.msra.mxu0 0.0
    %5692 = vmatprep.subr.mxu0 0.0
    %5693 = vmatpush1.msra.mxu0 0.0
    %5694 = vmatprep.subr.mxu0 0.0
    %5695 = vmatpush1.msra.mxu0 0.0
    %5696 = vmatprep.subr.mxu0 0.0
    %5697 = vmatpush1.msra.mxu0 0.0
    %5698 = vmatprep.subr.mxu0 0.0
    %5699 = vmatpush1.msra.mxu0 0.0
    %5700 = vmatprep.subr.mxu0 0.0
    %5701 = vmatpush1.msra.mxu0 0.0
    %5702 = vmatprep.subr.mxu0 0.0
    %5703 = vmatpush1.msra.mxu0 0.0
    %5704 = vmatprep.subr.mxu0 0.0
    %5705 = vmatpush1.msra.mxu0 0.0
    %5706 = vmatprep.subr.mxu0 0.0
    %5707 = vmatpush1.msra.mxu0 0.0
    %5708 = vmatprep.subr.mxu0 0.0
    %5709 = vmatpush1.msra.mxu0 0.0
    %5710 = vmatprep.subr.mxu0 0.0
    %5711 = vmatpush1.msra.mxu0 0.0
    %5712 = vmatprep.subr.mxu0 0.0
    %5713 = vmatpush1.msra.mxu0 0.0
    %5714 = vmatprep.subr.mxu0 0.0
    %5715 = vmatpush1.msra.mxu0 0.0
    %5716 = vmatprep.subr.mxu0 0.0
    %5717 = vmatpush1.msra.mxu0 0.0
    %5718 = vmatprep.subr.mxu0 0.0
    %5719 = vmatpush1.msra.mxu0 0.0
    %5720 = vmatprep.subr.mxu0 0.0
    %5721 = vmatpush1.msra.mxu0 0.0
    %5722 = vmatprep.subr.mxu0 0.0
    %5723 = vmatpush1.msra.mxu0 0.0
    %5724 = vmatprep.subr.mxu0 0.0
    %5725 = vmatpush1.msra.mxu0 0.0
    %5726 = vmatprep.subr.mxu0 0.0
    %5727 = vmatpush1.msra.mxu0 0.0
    %5728 = vmatprep.mubr.f32.mxu0 0.0
    %5729 = vmatmul.mubr.f32.gmra.mrb[0].mxu0 %v5656
    %v5730 = vpop.f32.mrb[0].mxu0
    %v5731 = vadd.f32 %v5653, %v5730
    %v5732 = vpop.f32.mrb[0].mxu0
    %5733 = vmatprep.mubr.f32.mxu0 0.0
    %5734 = vmatmul.mubr.f32.gmra.mrb[0].mxu0 %v5659
    %v5735 = vpop.f32.mrb[0].mxu0
    %v5736 = vadd.f32 %v5653, %v5735
    %v5737 = vpop.f32.mrb[0].mxu0
    %5738 = vmatprep.mubr.f32.mxu0 0.0
    %5739 = vmatmul.mubr.f32.gmra.mrb[0].mxu0 %v5662
    %v5740 = vpop.f32.mrb[0].mxu0
    %v5741 = vadd.f32 %v5653, %v5740
    %v5742 = vpop.f32.mrb[0].mxu0
    %5743 = vdwg.mxu0
    %v5744 = vadd.f32 %v5530, %v5731
    %v5745 = vadd.f32 %v5531, %v5736
    %v5746 = vadd.f32 %v5532, %v5741
    %s5747 = scalar_lea.vmem %s24, 1
    %v5748 = vld [vmem:[%s5747] sm:$0x1]
    %s5749 = scalar_lea.vmem %s25, 1
    %v5750 = vld [vmem:[%s5749] sm:$0x1]
    %v5751 = vsel %vm354, %v5744, 0.0
    %5752 = vadd.xlane.f32.xlu0 %v5751
    %v5753 = vpop.xlane.xlu0 %5752
    %v5754 = vsel %vm354, %v5745, 0.0
    %5755 = vadd.xlane.f32.xlu0 %v5754
    %v5756 = vpop.xlane.xlu0 %5755
    %v5757 = vsel %vm2749, %v5746, 0.0
    %5758 = vadd.xlane.f32.xlu0 %v5757
    %v5759 = vpop.xlane.xlu0 %5758
    %v5760 = vmul.f32 %v5753, %v2753
    %v5761 = vmul.f32 %v5756, %v2753
    %v5762 = vmul.f32 %v5759, %v2753
    %v5763 = vsub.f32 %v5744, %v5760
    %v5764 = vsub.f32 %v5745, %v5761
    %v5765 = vsub.f32 %v5746, %v5762
    %v5766 = vmul.f32 %v5763, %v5763
    %v5767 = vmul.f32 %v5764, %v5764
    %v5768 = vmul.f32 %v5765, %v5765
    %v5769 = vsel %vm354, %v5766, 0.0
    %5770 = vadd.xlane.f32.xlu0 %v5769
    %v5771 = vpop.xlane.xlu0 %5770
    %v5772 = vsel %vm354, %v5767, 0.0
    %5773 = vadd.xlane.f32.xlu0 %v5772
    %v5774 = vpop.xlane.xlu0 %5773
    %v5775 = vsel %vm2749, %v5768, 0.0
    %5776 = vadd.xlane.f32.xlu0 %v5775
    %v5777 = vpop.xlane.xlu0 %5776
    %v5778 = vmul.f32 %v5771, %v2753
    %v5779 = vmul.f32 %v5774, %v2753
    %v5780 = vmul.f32 %v5777, %v2753
    %v5781 = vadd.f32 %v5778, 1e-05
    %v5782 = vadd.f32 %v5779, 1e-05
    %v5783 = vadd.f32 %v5780, 1e-05
    %v5784 = vrsqrt.pop %v5781
    %v5785 = vrsqrt.pop %v5782
    %v5786 = vrsqrt.pop %v5783
    %v5787 = vmul.f32 %v5763, %v5784
    %v5788 = vmul.f32 %v5764, %v5785
    %v5789 = vmul.f32 %v5765, %v5786
    %v5791 = vlaneseq
    %v5792 = vshrl.u32 %v5791, 7
    %v5793 = vsub.s32 0, %v5792
    %v5794 = vrot.slane %v5748, %v5793
    %v5796 = vmul.f32 %v5787, %v5794
    %v5797 = vmul.f32 %v5788, %v5794
    %v5798 = vmul.f32 %v5789, %v5794
    %v5800 = vlaneseq
    %v5801 = vshrl.u32 %v5800, 7
    %v5802 = vsub.s32 0, %v5801
    %v5803 = vrot.slane %v5750, %v5802
    %v5805 = vadd.f32 %v5796, %v5803
    %v5806 = vadd.f32 %v5797, %v5803
    %v5807 = vadd.f32 %v5798, %v5803
    %v5808 = vld [vmem:[%s5] sm:$0x3]
    %v5810 = vsel %vm725, %v5808, 0
    %v5813 = vsel %vm766, %v5807, 0
    %5815 = vmatprep.subr.mxu0 0.0
    %5816 = vmatpush1.msra.mxu0 %v5805
    %5817 = vmatprep.subr.mxu0 0.0
    %5818 = vmatpush1.msra.mxu0 %v5806
    %5819 = vmatprep.subr.mxu0 0.0
    %5820 = vmatpush1.msra.mxu0 %v5813
    %5821 = vmatprep.subr.mxu0 0.0
    %5822 = vmatpush1.msra.mxu0 0.0
    %5823 = vmatprep.subr.mxu0 0.0
    %5824 = vmatpush1.msra.mxu0 0.0
    %5825 = vmatprep.subr.mxu0 0.0
    %5826 = vmatpush1.msra.mxu0 0.0
    %5827 = vmatprep.subr.mxu0 0.0
    %5828 = vmatpush1.msra.mxu0 0.0
    %5829 = vmatprep.subr.mxu0 0.0
    %5830 = vmatpush1.msra.mxu0 0.0
    %5831 = vmatprep.subr.mxu0 0.0
    %5832 = vmatpush1.msra.mxu0 0.0
    %5833 = vmatprep.subr.mxu0 0.0
    %5834 = vmatpush1.msra.mxu0 0.0
    %5835 = vmatprep.subr.mxu0 0.0
    %5836 = vmatpush1.msra.mxu0 0.0
    %5837 = vmatprep.subr.mxu0 0.0
    %5838 = vmatpush1.msra.mxu0 0.0
    %5839 = vmatprep.subr.mxu0 0.0
    %5840 = vmatpush1.msra.mxu0 0.0
    %5841 = vmatprep.subr.mxu0 0.0
    %5842 = vmatpush1.msra.mxu0 0.0
    %5843 = vmatprep.subr.mxu0 0.0
    %5844 = vmatpush1.msra.mxu0 0.0
    %5845 = vmatprep.subr.mxu0 0.0
    %5846 = vmatpush1.msra.mxu0 0.0
    %5847 = vmatprep.subr.mxu0 0.0
    %5848 = vmatpush1.msra.mxu0 0.0
    %5849 = vmatprep.subr.mxu0 0.0
    %5850 = vmatpush1.msra.mxu0 0.0
    %5851 = vmatprep.subr.mxu0 0.0
    %5852 = vmatpush1.msra.mxu0 0.0
    %5853 = vmatprep.subr.mxu0 0.0
    %5854 = vmatpush1.msra.mxu0 0.0
    %5855 = vmatprep.subr.mxu0 0.0
    %5856 = vmatpush1.msra.mxu0 0.0
    %5857 = vmatprep.subr.mxu0 0.0
    %5858 = vmatpush1.msra.mxu0 0.0
    %5859 = vmatprep.subr.mxu0 0.0
    %5860 = vmatpush1.msra.mxu0 0.0
    %5861 = vmatprep.subr.mxu0 0.0
    %5862 = vmatpush1.msra.mxu0 0.0
    %5863 = vmatprep.subr.mxu0 0.0
    %5864 = vmatpush1.msra.mxu0 0.0
    %5865 = vmatprep.subr.mxu0 0.0
    %5866 = vmatpush1.msra.mxu0 0.0
    %5867 = vmatprep.subr.mxu0 0.0
    %5868 = vmatpush1.msra.mxu0 0.0
    %5869 = vmatprep.subr.mxu0 0.0
    %5870 = vmatpush1.msra.mxu0 0.0
    %5871 = vmatprep.subr.mxu0 0.0
    %5872 = vmatpush1.msra.mxu0 0.0
    %5873 = vmatprep.subr.mxu0 0.0
    %5874 = vmatpush1.msra.mxu0 0.0
    %5875 = vmatprep.subr.mxu0 0.0
    %5876 = vmatpush1.msra.mxu0 0.0
    %5877 = vmatprep.subr.mxu0 0.0
    %5878 = vmatpush1.msra.mxu0 0.0
    %5879 = vmatprep.mubr.f32.mxu0 0.0
    %5880 = vmatmul.mubr.f32.gmra.mrb[0].mxu0 %v5810
    %v5881 = vpop.f32.mrb[0].mxu0
    %v5882 = vadd.f32 0.0, %v5881
    %v5883 = vpop.f32.mrb[0].mxu0
    %5884 = vdwg.mxu0
    %v5885 = vld [vmem:[%s26] sm:$0xff]
    %v5886 = vld [vmem:[%s26 + $0x8] sm:$0xff]
    %v5887 = vld [vmem:[%s26 + $0x10] sm:$0xff]
    %v5888 = vld [vmem:[%s26 + $0x18] sm:$0xff]
    %v5889 = vld [vmem:[%s27] sm:$0x1]
    %v5891 = vlaneseq
    %v5892 = vshrl.u32 %v5891, 7
    %v5893 = vsub.s32 0, %v5892
    %v5894 = vrot.slane %v5889, %v5893
    %v5897 = vsel %vm354, %v5882, 0
    %5899 = vmatprep.subr.mxu0 0.0
    %5900 = vmatpush1.msra.mxu0 %v5885
    %5901 = vmatprep.subr.mxu0 0.0
    %5902 = vmatpush1.msra.mxu0 %v5886
    %5903 = vmatprep.subr.mxu0 0.0
    %5904 = vmatpush1.msra.mxu0 %v5887
    %5905 = vmatprep.subr.mxu0 0.0
    %5906 = vmatpush1.msra.mxu0 %v5888
    %5907 = vmatprep.subr.mxu0 0.0
    %5908 = vmatpush1.msra.mxu0 0.0
    %5909 = vmatprep.subr.mxu0 0.0
    %5910 = vmatpush1.msra.mxu0 0.0
    %5911 = vmatprep.subr.mxu0 0.0
    %5912 = vmatpush1.msra.mxu0 0.0
    %5913 = vmatprep.subr.mxu0 0.0
    %5914 = vmatpush1.msra.mxu0 0.0
    %5915 = vmatprep.subr.mxu0 0.0
    %5916 = vmatpush1.msra.mxu0 0.0
    %5917 = vmatprep.subr.mxu0 0.0
    %5918 = vmatpush1.msra.mxu0 0.0
    %5919 = vmatprep.subr.mxu0 0.0
    %5920 = vmatpush1.msra.mxu0 0.0
    %5921 = vmatprep.subr.mxu0 0.0
    %5922 = vmatpush1.msra.mxu0 0.0
    %5923 = vmatprep.subr.mxu0 0.0
    %5924 = vmatpush1.msra.mxu0 0.0
    %5925 = vmatprep.subr.mxu0 0.0
    %5926 = vmatpush1.msra.mxu0 0.0
    %5927 = vmatprep.subr.mxu0 0.0
    %5928 = vmatpush1.msra.mxu0 0.0
    %5929 = vmatprep.subr.mxu0 0.0
    %5930 = vmatpush1.msra.mxu0 0.0
    %5931 = vmatprep.subr.mxu0 0.0
    %5932 = vmatpush1.msra.mxu0 0.0
    %5933 = vmatprep.subr.mxu0 0.0
    %5934 = vmatpush1.msra.mxu0 0.0
    %5935 = vmatprep.subr.mxu0 0.0
    %5936 = vmatpush1.msra.mxu0 0.0
    %5937 = vmatprep.subr.mxu0 0.0
    %5938 = vmatpush1.msra.mxu0 0.0
    %5939 = vmatprep.subr.mxu0 0.0
    %5940 = vmatpush1.msra.mxu0 0.0
    %5941 = vmatprep.subr.mxu0 0.0
    %5942 = vmatpush1.msra.mxu0 0.0
    %5943 = vmatprep.subr.mxu0 0.0
    %5944 = vmatpush1.msra.mxu0 0.0
    %5945 = vmatprep.subr.mxu0 0.0
    %5946 = vmatpush1.msra.mxu0 0.0
    %5947 = vmatprep.subr.mxu0 0.0
    %5948 = vmatpush1.msra.mxu0 0.0
    %5949 = vmatprep.subr.mxu0 0.0
    %5950 = vmatpush1.msra.mxu0 0.0
    %5951 = vmatprep.subr.mxu0 0.0
    %5952 = vmatpush1.msra.mxu0 0.0
    %5953 = vmatprep.subr.mxu0 0.0
    %5954 = vmatpush1.msra.mxu0 0.0
    %5955 = vmatprep.subr.mxu0 0.0
    %5956 = vmatpush1.msra.mxu0 0.0
    %5957 = vmatprep.subr.mxu0 0.0
    %5958 = vmatpush1.msra.mxu0 0.0
    %5959 = vmatprep.subr.mxu0 0.0
    %5960 = vmatpush1.msra.mxu0 0.0
    %5961 = vmatprep.subr.mxu0 0.0
    %5962 = vmatpush1.msra.mxu0 0.0
    %5963 = vmatprep.mubr.f32.mxu0 0.0
    %5964 = vmatmul.mubr.f32.gmra.mrb[0].mxu0 %v5897
    %v5965 = vpop.f32.mrb[0].mxu0
    %v5966 = vadd.f32 %v5894, %v5965
    %v5967 = vpop.f32.mrb[0].mxu0
    %5968 = vdwg.mxu0
    %vm5969 = vcmask 74752
    %5970 = vst.msk [vmem:[#allocation2] sm:$0x3] %vm5969, %v5966
    // Predicated region
    $region114: #{transformer_forward.1} parent=1 // pred_check
      _
    $region115: #{transformer_forward.1} parent=1 // pred_check_branch
      %5972 = sbr.rel (0) target = $region117
    $region116: #{transformer_forward.1} parent=1 // pred_region
      %s5974 = ssub.s32 32, 32
      %5975 = vsyncadd [#allocation3], %s5974
      %s5977 = sshll.u32 [#allocation2], 4
      %s5978 = int_to_ptr.vmem [resolvable:$true] %s5977
      %5980 = dma.vmem_to_hbm [thread:$0]  %s5978, 32, %s28, [#allocation3]
    $region117: #{transformer_forward.1} parent=1 // pred_fallthru
      _
    // Predicated region
    $region118: #{transformer_forward.1} parent=1 // pred_check
      _
    $region119: #{transformer_forward.1} parent=1 // pred_check_branch
      %5982 = sbr.rel (0) target = $region121
    $region120: #{transformer_forward.1} parent=1 // pred_region
      %5983 = dma.done [#allocation3], 32
    $region121: #{transformer_forward.1} parent=1 // pred_fallthru
      _
    %5984 = vsyncpa [#allocation3], 1

</llo_original>
